<compile_context>
chip_gen: v7x
topology: tpu7x:2x2x1
jax: 0.10.0
libtpu: 0.0.40
codegen_flags: <defaults>
</compile_context>

<pallas_src>
import jax
import jax.numpy as jnp
from jax import lax
from jax.experimental import pallas as pl
from jax.experimental.pallas import tpu as pltpu


# ----------------------------------------------------------------------------
# Pallas kernel: the whole decoder MLP for one tile of points.
# ----------------------------------------------------------------------------
def decoder_kernel(p_ref, c_ref,
                   wp_ref, bp_ref,          # fc_p            (dim,H), (1,H)  f32
                   wcw_ref, bc_ref,         # fused fc_c      (c_dim,5H) cd, (5,H) f32
                   w0_ref, b0_ref,          # ResnetBlockFC.fc_0 (5,H,H) cd, (5,H) f32
                   w1_ref, b1_ref,          # ResnetBlockFC.fc_1 (5,H,H) cd, (5,H) f32
                   wout_ref, bout_ref,      # fc_out          (1,H) f32, (1,1) f32
                   out_ref):                # (1, tile_n) lane-dense row
    p = p_ref[...].astype(jnp.float32)      # (TN, dim)
    c = c_ref[...]                          # (TN, c_dim), compute dtype (bf16)
    cd = w0_ref.dtype                       # compute dtype for MXU operands

    # fc_p on the VPU: dim is tiny (3), a K=dim MXU matmul is almost all padding.
    wp = wp_ref[...]                        # (dim, H) f32
    net = bp_ref[...] + p[:, 0:1] * wp[0:1, :]
    for d in range(1, p.shape[1]):
        net = net + p[:, d:d + 1] * wp[d:d + 1, :]          # (TN, H) f32

    # All n_blocks fc_c projections fused into one wide MXU matmul
    # (K=c_dim padding amortized once, N=5*H fills the 256-wide MXU).
    cc = jnp.dot(c, wcw_ref[...], preferred_element_type=jnp.float32)  # (TN, 5H)

    H = wp.shape[1]
    n_blocks = w0_ref.shape[0]
    for i in range(n_blocks):
        # net = net + fc_c[i](c)
        net = net + cc[:, i * H:(i + 1) * H] + bc_ref[i:i + 1, :]
        # ResnetBlockFC: dx = fc_1(relu(fc_0(relu(net)))); net = net + dx
        h = jnp.dot(jnp.maximum(net, 0.0).astype(cd), w0_ref[i],
                    preferred_element_type=jnp.float32) + b0_ref[i:i + 1, :]
        dx = jnp.dot(jnp.maximum(h, 0.0).astype(cd), w1_ref[i],
                     preferred_element_type=jnp.float32) + b1_ref[i:i + 1, :]
        net = net + dx

    # fc_out (out_dim == 1), lane-dense: (1,H) contracted with (TN,H) on the
    # last dim -> (1, TN) row (same pattern as q @ k.T), kept in f32.
    out_row = lax.dot_general(
        wout_ref[...], jnp.maximum(net, 0.0),
        dimension_numbers=(((1,), (1,)), ((), ())),
        preferred_element_type=jnp.float32)                  # (1, TN)
    out_ref[...] = (out_row + bout_ref[...]).astype(out_ref.dtype)


def local_decoder_pallas(p_flat, c_flat, params, *, tile_n=512,
                         compute_dtype=jnp.bfloat16):
    """Runs the decoder MLP on flattened points.  Returns (N,) for out_dim==1."""
    N, dim = p_flat.shape
    c_dim = c_flat.shape[1]
    hidden = params["wp"].shape[1]
    n_blocks = params["w0"].shape[0]
    assert params["wout"].shape == (1, hidden)   # TODO(synk): out_dim > 1 path (generic lane-dense) not implemented.
    assert hidden % 128 == 0                     # wide fc_c slices land on lane boundaries

    num_tiles = pl.cdiv(N, tile_n)
    n_pad = num_tiles * tile_n
    if n_pad != N:                               # zero-pad tail tile; sliced off below
        p_flat = jnp.pad(p_flat, ((0, n_pad - N), (0, 0)))
        c_flat = jnp.pad(c_flat, ((0, n_pad - N), (0, 0)))

    # Kernel-friendly weight layouts / dtypes (done once, outside the kernel).
    wc_wide = jnp.transpose(params["wc"], (1, 0, 2)).reshape(c_dim, n_blocks * hidden)
    wc_wide = wc_wide.astype(compute_dtype)
    w0 = params["w0"].astype(compute_dtype)
    w1 = params["w1"].astype(compute_dtype)
    c_in = c_flat.astype(compute_dtype)          # halves the dominant per-tile DMA

    def full_spec(arr):
        r = arr.ndim
        return pl.BlockSpec(arr.shape, lambda i, _r=r: (0,) * _r)

    in_specs = [
        pl.BlockSpec((tile_n, dim), lambda i: (i, 0)),
        pl.BlockSpec((tile_n, c_dim), lambda i: (i, 0)),
        full_spec(params["wp"]), full_spec(params["bp"]),
        full_spec(wc_wide), full_spec(params["bc"]),
        full_spec(w0), full_spec(params["b0"]),
        full_spec(w1), full_spec(params["b1"]),
        full_spec(params["wout"]), full_spec(params["bout"]),
    ]
    # Lane-dense output: (1, N_pad) row, each grid step writes one (1, tile_n) slab.
    out_specs = pl.BlockSpec((1, tile_n), lambda i: (0, i))

    out = pl.pallas_call(
        decoder_kernel,
        grid=(num_tiles,),
        in_specs=in_specs,
        out_specs=out_specs,
        out_shape=jax.ShapeDtypeStruct((1, n_pad), jnp.float32),
        compiler_params=pltpu.CompilerParams(dimension_semantics=("parallel",)),
    )(p_flat, c_in,
      params["wp"], params["bp"], wc_wide, params["bc"],
      w0, params["b0"], w1, params["b1"],
      params["wout"], params["bout"])
    return out.reshape(n_pad)[:N]


# ----------------------------------------------------------------------------
# JAX glue: coordinate normalization + bilinear plane sampling (grid_sample).
# ----------------------------------------------------------------------------
def normalize_coordinate(p, padding, plane):
    if plane == "xz":
        xy = jnp.stack([p[..., 0], p[..., 2]], axis=-1)
    elif plane == "xy":
        xy = jnp.stack([p[..., 0], p[..., 1]], axis=-1)
    else:  # 'yz'
        xy = jnp.stack([p[..., 1], p[..., 2]], axis=-1)
    xy = xy / (1 + padding + 10e-6) + 0.5
    xy = jnp.clip(xy, 0.0, 1 - 10e-6)    # elementwise equivalent of ConvONets clamp
    return xy


def sample_plane_feature(p, c, plane, padding):
    """Matches F.grid_sample(c, vgrid, mode='bilinear', padding_mode='border',
    align_corners=True).squeeze(-1).  c: (B, C, H, W) NCHW;  returns (B, C, T)."""
    B, C, H, W = c.shape
    xy = normalize_coordinate(p, padding, plane)          # (B, T, 2) in [0, 1)
    vgrid = 2.0 * xy - 1.0
    x, y = vgrid[..., 0], vgrid[..., 1]                   # x -> W axis, y -> H axis
    ix = jnp.clip((x + 1.0) * 0.5 * (W - 1), 0.0, W - 1)
    iy = jnp.clip((y + 1.0) * 0.5 * (H - 1), 0.0, H - 1)
    ix0 = jnp.floor(ix).astype(jnp.int32)
    iy0 = jnp.floor(iy).astype(jnp.int32)
    ix1 = jnp.clip(ix0 + 1, 0, W - 1)
    iy1 = jnp.clip(iy0 + 1, 0, H - 1)
    wx = (ix - ix0)[:, None, :]                           # (B, 1, T)
    wy = (iy - iy0)[:, None, :]

    def gather(iy_, ix_):
        return jax.vmap(lambda cb, iyb, ixb: cb[:, iyb, ixb])(c, iy_, ix_)  # (B, C, T)

    c00 = gather(iy0, ix0)
    c01 = gather(iy0, ix1)
    c10 = gather(iy1, ix0)
    c11 = gather(iy1, ix1)
    return (c00 * (1 - wx) * (1 - wy) + c01 * wx * (1 - wy)
            + c10 * (1 - wx) * wy + c11 * wx * wy)


# ----------------------------------------------------------------------------
# Deterministic parameter init (shapes follow the module __init__).
# NOTE: ResnetBlockFC zero-inits fc_1.weight; we use small random values so the
# kernel exercises non-trivial compute (init values need not match a checkpoint).
# ----------------------------------------------------------------------------
def init_params(key, dim, c_dim, hidden, n_blocks, out_dim):
    assert out_dim == 1
    ks = jax.random.split(key, 10)

    def lin(k, fi, fo, *batch):
        return (jax.random.normal(k, (*batch, fi, fo), jnp.float32)
                / jnp.sqrt(jnp.float32(fi)))

    return {
        "wp":   lin(ks[0], dim, hidden),                                   # (dim, H)
        "bp":   0.01 * jax.random.normal(ks[1], (1, hidden), jnp.float32),
        "wc":   lin(ks[2], c_dim, hidden, n_blocks),                       # (nb, c_dim, H)
        "bc":   0.01 * jax.random.normal(ks[3], (n_blocks, hidden), jnp.float32),
        "w0":   lin(ks[4], hidden, hidden, n_blocks),
        "b0":   0.01 * jax.random.normal(ks[5], (n_blocks, hidden), jnp.float32),
        "w1":   lin(ks[6], hidden, hidden, n_blocks),
        "b1":   0.01 * jax.random.normal(ks[7], (n_blocks, hidden), jnp.float32),
        "wout": lin(ks[8], hidden, out_dim).T,                             # (1, H)
        "bout": 0.01 * jax.random.normal(ks[9], (1, 1), jnp.float32),
    }


def decoder_ref(p_flat, c_flat, params, compute_dtype=jnp.float32):
    """Pure-JAX reference.  compute_dtype mirrors the kernel's MXU-operand
    precision (bf16 inputs, f32 accumulation) when set to bfloat16."""
    cd = compute_dtype
    n_blocks = params["w0"].shape[0]
    c = c_flat.astype(cd)
    net = p_flat @ params["wp"] + params["bp"]
    for i in range(n_blocks):
        net = net + jnp.dot(c, params["wc"][i].astype(cd),
                            preferred_element_type=jnp.float32) + params["bc"][i:i + 1]
        h = jnp.dot(jnp.maximum(net, 0.0).astype(cd), params["w0"][i].astype(cd),
                    preferred_element_type=jnp.float32) + params["b0"][i:i + 1]
        dx = jnp.dot(jnp.maximum(h, 0.0).astype(cd), params["w1"][i].astype(cd),
                     preferred_element_type=jnp.float32) + params["b1"][i:i + 1]
        net = net + dx
    return jnp.maximum(net, 0.0) @ params["wout"].T + params["bout"]       # (N, 1)


if __name__ == "__main__":
    key = jax.random.PRNGKey(0)
    B, T, dim = 2, 1000, 3                 # T not a multiple of tile_n -> exercises pad path
    Cp, res = 32, 16                       # per-plane channels / plane resolution
    feature_keys = ["xz", "xy", "yz"]      # concat_feat=True
    c_dim = Cp * len(feature_keys)         # 96
    hidden, out_dim, padding = 128, 1, 0.1

    kp, k1, k2, k3, kw = jax.random.split(key, 5)
    p = jax.random.uniform(kp, (B, T, dim), jnp.float32) - 0.5     # unit cube points
    c_plane = {
        "xz": jax.random.normal(k1, (B, Cp, res, res), jnp.float32),
        "xy": jax.random.normal(k2, (B, Cp, res, res), jnp.float32),
        "yz": jax.random.normal(k3, (B, Cp, res, res), jnp.float32),
    }
    params = init_params(kw, dim, c_dim, hidden, 5, out_dim)

    # feature sampling (concat_feat=True): concat along channels, then (B, T, c_dim)
    # TODO(synk): 'grid' keys (trilinear 3D grid_sample) not exercised here; planes only.
    feats = [sample_plane_feature(p, c_plane[k], k, padding) for k in feature_keys]
    c = jnp.transpose(jnp.concatenate(feats, axis=1), (0, 2, 1))   # (B, T, c_dim)

    p_flat = p.reshape(B * T, dim)
    c_flat = c.reshape(B * T, c_dim)

    out_flat = local_decoder_pallas(p_flat, c_flat, params,
                                    tile_n=512, compute_dtype=jnp.bfloat16)
    out = out_flat.reshape(B, T)            # squeeze(-1) since out_dim == 1
    out = jax.block_until_ready(out)

    # 1) Tight check vs a reference with the identical mixed-precision policy
    #    (validates the Pallas implementation: tiling, fused fc_c, lane-dense out).
    ref_mixed = decoder_ref(p_flat, c_flat, params, jnp.bfloat16).reshape(B, T)
    err_impl = float(jnp.max(jnp.abs(out - ref_mixed)))
    assert err_impl < 1e-2, f"kernel vs mixed-precision reference mismatch: {err_impl}"

    # 2) Sanity band vs the pure-f32 reference (bounds the bf16-operand error).
    ref_f32 = decoder_ref(p_flat, c_flat, params, jnp.float32).reshape(B, T)
    err_fp = float(jnp.max(jnp.abs(out - ref_f32)))
    assert err_fp < 2e-1, f"bf16 compute deviates too far from f32 reference: {err_fp}"

    print("KERNEL_OK")
</pallas_src>

<mosaic_0001>
module attributes {stable_mosaic.version = 11 : i64} {
  func.func @decoder_kernel(%arg0: i32, %arg1: memref<512x3xf32, #tpu.memory_space<vmem>>, %arg2: memref<512x96xbf16, #tpu.memory_space<vmem>>, %arg3: memref<3x128xf32, #tpu.memory_space<vmem>>, %arg4: memref<1x128xf32, #tpu.memory_space<vmem>>, %arg5: memref<96x640xbf16, #tpu.memory_space<vmem>>, %arg6: memref<5x128xf32, #tpu.memory_space<vmem>>, %arg7: memref<5x128x128xbf16, #tpu.memory_space<vmem>>, %arg8: memref<5x128xf32, #tpu.memory_space<vmem>>, %arg9: memref<5x128x128xbf16, #tpu.memory_space<vmem>>, %arg10: memref<5x128xf32, #tpu.memory_space<vmem>>, %arg11: memref<1x128xf32, #tpu.memory_space<vmem>>, %arg12: memref<1x1xf32, #tpu.memory_space<vmem>>, %arg13: memref<1x512xf32, #tpu.memory_space<vmem>>) attributes {dimension_semantics = [#tpu.dimension_semantics<parallel>], iteration_bounds = array<i64: 4>, scalar_prefetch = 0 : i64, scratch_operands = 0 : i64, tpu.core_type = #tpu.core_type<tc>, window_params = [{transform_indices = @transform_0, window_bounds = array<i64: 512, 3>}, {transform_indices = @transform_1, window_bounds = array<i64: 512, 96>}, {pipeline_mode = #tpu.pipeline_mode<synchronous>, transform_indices = @transform_2, window_bounds = array<i64: 3, 128>}, {pipeline_mode = #tpu.pipeline_mode<synchronous>, transform_indices = @transform_3, window_bounds = array<i64: 1, 128>}, {pipeline_mode = #tpu.pipeline_mode<synchronous>, transform_indices = @transform_4, window_bounds = array<i64: 96, 640>}, {pipeline_mode = #tpu.pipeline_mode<synchronous>, transform_indices = @transform_5, window_bounds = array<i64: 5, 128>}, {pipeline_mode = #tpu.pipeline_mode<synchronous>, transform_indices = @transform_6, window_bounds = array<i64: 5, 128, 128>}, {pipeline_mode = #tpu.pipeline_mode<synchronous>, transform_indices = @transform_7, window_bounds = array<i64: 5, 128>}, {pipeline_mode = #tpu.pipeline_mode<synchronous>, transform_indices = @transform_8, window_bounds = array<i64: 5, 128, 128>}, {pipeline_mode = #tpu.pipeline_mode<synchronous>, transform_indices = @transform_9, window_bounds = array<i64: 5, 128>}, {pipeline_mode = #tpu.pipeline_mode<synchronous>, transform_indices = @transform_10, window_bounds = array<i64: 1, 128>}, {pipeline_mode = #tpu.pipeline_mode<synchronous>, transform_indices = @transform_11, window_bounds = array<i64: 1, 1>}, {transform_indices = @transform_12, window_bounds = array<i64: 1, 512>}]} {
    %c0 = arith.constant 0 : index
    %c0_0 = arith.constant 0 : index
    %0 = vector.load %arg1[%c0, %c0_0] : memref<512x3xf32, #tpu.memory_space<vmem>>, vector<512x3xf32>
    %c0_1 = arith.constant 0 : index
    %c0_2 = arith.constant 0 : index
    %1 = vector.load %arg2[%c0_1, %c0_2] : memref<512x96xbf16, #tpu.memory_space<vmem>>, vector<512x96xbf16>
    %c0_3 = arith.constant 0 : index
    %c0_4 = arith.constant 0 : index
    %2 = vector.load %arg3[%c0_3, %c0_4] : memref<3x128xf32, #tpu.memory_space<vmem>>, vector<3x128xf32>
    %c0_5 = arith.constant 0 : index
    %c0_6 = arith.constant 0 : index
    %3 = vector.load %arg4[%c0_5, %c0_6] : memref<1x128xf32, #tpu.memory_space<vmem>>, vector<1x128xf32>
    %4 = vector.extract_strided_slice %0 {offsets = [0, 0], sizes = [512, 1], strides = [1, 1]} : vector<512x3xf32> to vector<512x1xf32>
    %5 = vector.extract_strided_slice %2 {offsets = [0, 0], sizes = [1, 128], strides = [1, 1]} : vector<3x128xf32> to vector<1x128xf32>
    %6 = vector.broadcast %4 : vector<512x1xf32> to vector<512x128xf32>
    %7 = vector.broadcast %5 : vector<1x128xf32> to vector<512x128xf32>
    %8 = arith.mulf %6, %7 : vector<512x128xf32>
    %9 = vector.broadcast %3 : vector<1x128xf32> to vector<512x128xf32>
    %10 = arith.addf %9, %8 : vector<512x128xf32>
    %11 = vector.extract_strided_slice %0 {offsets = [0, 1], sizes = [512, 1], strides = [1, 1]} : vector<512x3xf32> to vector<512x1xf32>
    %12 = vector.extract_strided_slice %2 {offsets = [1, 0], sizes = [1, 128], strides = [1, 1]} : vector<3x128xf32> to vector<1x128xf32>
    %13 = vector.broadcast %11 : vector<512x1xf32> to vector<512x128xf32>
    %14 = vector.broadcast %12 : vector<1x128xf32> to vector<512x128xf32>
    %15 = arith.mulf %13, %14 : vector<512x128xf32>
    %16 = arith.addf %10, %15 : vector<512x128xf32>
    %17 = vector.extract_strided_slice %0 {offsets = [0, 2], sizes = [512, 1], strides = [1, 1]} : vector<512x3xf32> to vector<512x1xf32>
    %18 = vector.extract_strided_slice %2 {offsets = [2, 0], sizes = [1, 128], strides = [1, 1]} : vector<3x128xf32> to vector<1x128xf32>
    %19 = vector.broadcast %17 : vector<512x1xf32> to vector<512x128xf32>
    %20 = vector.broadcast %18 : vector<1x128xf32> to vector<512x128xf32>
    %21 = arith.mulf %19, %20 : vector<512x128xf32>
    %22 = arith.addf %16, %21 : vector<512x128xf32>
    %c0_7 = arith.constant 0 : index
    %c0_8 = arith.constant 0 : index
    %23 = vector.load %arg5[%c0_7, %c0_8] : memref<96x640xbf16, #tpu.memory_space<vmem>>, vector<96x640xbf16>
    %cst = arith.constant dense<0.000000e+00> : vector<512x640xf32>
    %24 = tpu.matmul %1, %23, %cst {dimension_numbers = #tpu.dot_dimension_numbers<[1], [0], [0], [1], [0, 0, 1, 1], [], []>} : vector<512x96xbf16>, vector<96x640xbf16>, vector<512x640xf32> -> vector<512x640xf32>
    %25 = vector.extract_strided_slice %24 {offsets = [0, 0], sizes = [512, 128], strides = [1, 1]} : vector<512x640xf32> to vector<512x128xf32>
    %26 = arith.addf %22, %25 : vector<512x128xf32>
    %c0_9 = arith.constant 0 : index
    %c0_10 = arith.constant 0 : index
    %27 = vector.load %arg6[%c0_9, %c0_10] : memref<5x128xf32, #tpu.memory_space<vmem>>, vector<1x128xf32>
    %28 = vector.broadcast %27 : vector<1x128xf32> to vector<512x128xf32>
    %29 = arith.addf %26, %28 : vector<512x128xf32>
    %cst_11 = arith.constant 0.000000e+00 : f32
    %30 = vector.broadcast %cst_11 : f32 to vector<512x128xf32>
    %31 = arith.maximumf %29, %30 : vector<512x128xf32>
    %32 = arith.truncf %31 : vector<512x128xf32> to vector<512x128xbf16>
    %c0_12 = arith.constant 0 : index
    %c0_13 = arith.constant 0 : index
    %c0_14 = arith.constant 0 : index
    %33 = vector.load %arg7[%c0_12, %c0_13, %c0_14] : memref<5x128x128xbf16, #tpu.memory_space<vmem>>, vector<1x128x128xbf16>
    %34 = vector.shape_cast %33 : vector<1x128x128xbf16> to vector<128x128xbf16>
    %cst_15 = arith.constant dense<0.000000e+00> : vector<512x128xf32>
    %35 = tpu.matmul %32, %34, %cst_15 {dimension_numbers = #tpu.dot_dimension_numbers<[1], [0], [0], [1], [0, 0, 1, 1], [], []>} : vector<512x128xbf16>, vector<128x128xbf16>, vector<512x128xf32> -> vector<512x128xf32>
    %c0_16 = arith.constant 0 : index
    %c0_17 = arith.constant 0 : index
    %36 = vector.load %arg8[%c0_16, %c0_17] : memref<5x128xf32, #tpu.memory_space<vmem>>, vector<1x128xf32>
    %37 = vector.broadcast %36 : vector<1x128xf32> to vector<512x128xf32>
    %38 = arith.addf %35, %37 : vector<512x128xf32>
    %cst_18 = arith.constant 0.000000e+00 : f32
    %39 = vector.broadcast %cst_18 : f32 to vector<512x128xf32>
    %40 = arith.maximumf %38, %39 : vector<512x128xf32>
    %41 = arith.truncf %40 : vector<512x128xf32> to vector<512x128xbf16>
    %c0_19 = arith.constant 0 : index
    %c0_20 = arith.constant 0 : index
    %c0_21 = arith.constant 0 : index
    %42 = vector.load %arg9[%c0_19, %c0_20, %c0_21] : memref<5x128x128xbf16, #tpu.memory_space<vmem>>, vector<1x128x128xbf16>
    %43 = vector.shape_cast %42 : vector<1x128x128xbf16> to vector<128x128xbf16>
    %cst_22 = arith.constant dense<0.000000e+00> : vector<512x128xf32>
    %44 = tpu.matmul %41, %43, %cst_22 {dimension_numbers = #tpu.dot_dimension_numbers<[1], [0], [0], [1], [0, 0, 1, 1], [], []>} : vector<512x128xbf16>, vector<128x128xbf16>, vector<512x128xf32> -> vector<512x128xf32>
    %c0_23 = arith.constant 0 : index
    %c0_24 = arith.constant 0 : index
    %45 = vector.load %arg10[%c0_23, %c0_24] : memref<5x128xf32, #tpu.memory_space<vmem>>, vector<1x128xf32>
    %46 = vector.broadcast %45 : vector<1x128xf32> to vector<512x128xf32>
    %47 = arith.addf %44, %46 : vector<512x128xf32>
    %48 = arith.addf %29, %47 : vector<512x128xf32>
    %49 = vector.extract_strided_slice %24 {offsets = [0, 128], sizes = [512, 128], strides = [1, 1]} : vector<512x640xf32> to vector<512x128xf32>
    %50 = arith.addf %48, %49 : vector<512x128xf32>
    %c1 = arith.constant 1 : index
    %c0_25 = arith.constant 0 : index
    %51 = vector.load %arg6[%c1, %c0_25] : memref<5x128xf32, #tpu.memory_space<vmem>>, vector<1x128xf32>
    %52 = vector.broadcast %51 : vector<1x128xf32> to vector<512x128xf32>
    %53 = arith.addf %50, %52 : vector<512x128xf32>
    %cst_26 = arith.constant 0.000000e+00 : f32
    %54 = vector.broadcast %cst_26 : f32 to vector<512x128xf32>
    %55 = arith.maximumf %53, %54 : vector<512x128xf32>
    %56 = arith.truncf %55 : vector<512x128xf32> to vector<512x128xbf16>
    %c1_27 = arith.constant 1 : index
    %c0_28 = arith.constant 0 : index
    %c0_29 = arith.constant 0 : index
    %57 = vector.load %arg7[%c1_27, %c0_28, %c0_29] : memref<5x128x128xbf16, #tpu.memory_space<vmem>>, vector<1x128x128xbf16>
    %58 = vector.shape_cast %57 : vector<1x128x128xbf16> to vector<128x128xbf16>
    %cst_30 = arith.constant dense<0.000000e+00> : vector<512x128xf32>
    %59 = tpu.matmul %56, %58, %cst_30 {dimension_numbers = #tpu.dot_dimension_numbers<[1], [0], [0], [1], [0, 0, 1, 1], [], []>} : vector<512x128xbf16>, vector<128x128xbf16>, vector<512x128xf32> -> vector<512x128xf32>
    %c1_31 = arith.constant 1 : index
    %c0_32 = arith.constant 0 : index
    %60 = vector.load %arg8[%c1_31, %c0_32] : memref<5x128xf32, #tpu.memory_space<vmem>>, vector<1x128xf32>
    %61 = vector.broadcast %60 : vector<1x128xf32> to vector<512x128xf32>
    %62 = arith.addf %59, %61 : vector<512x128xf32>
    %cst_33 = arith.constant 0.000000e+00 : f32
    %63 = vector.broadcast %cst_33 : f32 to vector<512x128xf32>
    %64 = arith.maximumf %62, %63 : vector<512x128xf32>
    %65 = arith.truncf %64 : vector<512x128xf32> to vector<512x128xbf16>
    %c1_34 = arith.constant 1 : index
    %c0_35 = arith.constant 0 : index
    %c0_36 = arith.constant 0 : index
    %66 = vector.load %arg9[%c1_34, %c0_35, %c0_36] : memref<5x128x128xbf16, #tpu.memory_space<vmem>>, vector<1x128x128xbf16>
    %67 = vector.shape_cast %66 : vector<1x128x128xbf16> to vector<128x128xbf16>
    %cst_37 = arith.constant dense<0.000000e+00> : vector<512x128xf32>
    %68 = tpu.matmul %65, %67, %cst_37 {dimension_numbers = #tpu.dot_dimension_numbers<[1], [0], [0], [1], [0, 0, 1, 1], [], []>} : vector<512x128xbf16>, vector<128x128xbf16>, vector<512x128xf32> -> vector<512x128xf32>
    %c1_38 = arith.constant 1 : index
    %c0_39 = arith.constant 0 : index
    %69 = vector.load %arg10[%c1_38, %c0_39] : memref<5x128xf32, #tpu.memory_space<vmem>>, vector<1x128xf32>
    %70 = vector.broadcast %69 : vector<1x128xf32> to vector<512x128xf32>
    %71 = arith.addf %68, %70 : vector<512x128xf32>
    %72 = arith.addf %53, %71 : vector<512x128xf32>
    %73 = vector.extract_strided_slice %24 {offsets = [0, 256], sizes = [512, 128], strides = [1, 1]} : vector<512x640xf32> to vector<512x128xf32>
    %74 = arith.addf %72, %73 : vector<512x128xf32>
    %c2 = arith.constant 2 : index
    %c0_40 = arith.constant 0 : index
    %75 = vector.load %arg6[%c2, %c0_40] : memref<5x128xf32, #tpu.memory_space<vmem>>, vector<1x128xf32>
    %76 = vector.broadcast %75 : vector<1x128xf32> to vector<512x128xf32>
    %77 = arith.addf %74, %76 : vector<512x128xf32>
    %cst_41 = arith.constant 0.000000e+00 : f32
    %78 = vector.broadcast %cst_41 : f32 to vector<512x128xf32>
    %79 = arith.maximumf %77, %78 : vector<512x128xf32>
    %80 = arith.truncf %79 : vector<512x128xf32> to vector<512x128xbf16>
    %c2_42 = arith.constant 2 : index
    %c0_43 = arith.constant 0 : index
    %c0_44 = arith.constant 0 : index
    %81 = vector.load %arg7[%c2_42, %c0_43, %c0_44] : memref<5x128x128xbf16, #tpu.memory_space<vmem>>, vector<1x128x128xbf16>
    %82 = vector.shape_cast %81 : vector<1x128x128xbf16> to vector<128x128xbf16>
    %cst_45 = arith.constant dense<0.000000e+00> : vector<512x128xf32>
    %83 = tpu.matmul %80, %82, %cst_45 {dimension_numbers = #tpu.dot_dimension_numbers<[1], [0], [0], [1], [0, 0, 1, 1], [], []>} : vector<512x128xbf16>, vector<128x128xbf16>, vector<512x128xf32> -> vector<512x128xf32>
    %c2_46 = arith.constant 2 : index
    %c0_47 = arith.constant 0 : index
    %84 = vector.load %arg8[%c2_46, %c0_47] : memref<5x128xf32, #tpu.memory_space<vmem>>, vector<1x128xf32>
    %85 = vector.broadcast %84 : vector<1x128xf32> to vector<512x128xf32>
    %86 = arith.addf %83, %85 : vector<512x128xf32>
    %cst_48 = arith.constant 0.000000e+00 : f32
    %87 = vector.broadcast %cst_48 : f32 to vector<512x128xf32>
    %88 = arith.maximumf %86, %87 : vector<512x128xf32>
    %89 = arith.truncf %88 : vector<512x128xf32> to vector<512x128xbf16>
    %c2_49 = arith.constant 2 : index
    %c0_50 = arith.constant 0 : index
    %c0_51 = arith.constant 0 : index
    %90 = vector.load %arg9[%c2_49, %c0_50, %c0_51] : memref<5x128x128xbf16, #tpu.memory_space<vmem>>, vector<1x128x128xbf16>
    %91 = vector.shape_cast %90 : vector<1x128x128xbf16> to vector<128x128xbf16>
    %cst_52 = arith.constant dense<0.000000e+00> : vector<512x128xf32>
    %92 = tpu.matmul %89, %91, %cst_52 {dimension_numbers = #tpu.dot_dimension_numbers<[1], [0], [0], [1], [0, 0, 1, 1], [], []>} : vector<512x128xbf16>, vector<128x128xbf16>, vector<512x128xf32> -> vector<512x128xf32>
    %c2_53 = arith.constant 2 : index
    %c0_54 = arith.constant 0 : index
    %93 = vector.load %arg10[%c2_53, %c0_54] : memref<5x128xf32, #tpu.memory_space<vmem>>, vector<1x128xf32>
    %94 = vector.broadcast %93 : vector<1x128xf32> to vector<512x128xf32>
    %95 = arith.addf %92, %94 : vector<512x128xf32>
    %96 = arith.addf %77, %95 : vector<512x128xf32>
    %97 = vector.extract_strided_slice %24 {offsets = [0, 384], sizes = [512, 128], strides = [1, 1]} : vector<512x640xf32> to vector<512x128xf32>
    %98 = arith.addf %96, %97 : vector<512x128xf32>
    %c3 = arith.constant 3 : index
    %c0_55 = arith.constant 0 : index
    %99 = vector.load %arg6[%c3, %c0_55] : memref<5x128xf32, #tpu.memory_space<vmem>>, vector<1x128xf32>
    %100 = vector.broadcast %99 : vector<1x128xf32> to vector<512x128xf32>
    %101 = arith.addf %98, %100 : vector<512x128xf32>
    %cst_56 = arith.constant 0.000000e+00 : f32
    %102 = vector.broadcast %cst_56 : f32 to vector<512x128xf32>
    %103 = arith.maximumf %101, %102 : vector<512x128xf32>
    %104 = arith.truncf %103 : vector<512x128xf32> to vector<512x128xbf16>
    %c3_57 = arith.constant 3 : index
    %c0_58 = arith.constant 0 : index
    %c0_59 = arith.constant 0 : index
    %105 = vector.load %arg7[%c3_57, %c0_58, %c0_59] : memref<5x128x128xbf16, #tpu.memory_space<vmem>>, vector<1x128x128xbf16>
    %106 = vector.shape_cast %105 : vector<1x128x128xbf16> to vector<128x128xbf16>
    %cst_60 = arith.constant dense<0.000000e+00> : vector<512x128xf32>
    %107 = tpu.matmul %104, %106, %cst_60 {dimension_numbers = #tpu.dot_dimension_numbers<[1], [0], [0], [1], [0, 0, 1, 1], [], []>} : vector<512x128xbf16>, vector<128x128xbf16>, vector<512x128xf32> -> vector<512x128xf32>
    %c3_61 = arith.constant 3 : index
    %c0_62 = arith.constant 0 : index
    %108 = vector.load %arg8[%c3_61, %c0_62] : memref<5x128xf32, #tpu.memory_space<vmem>>, vector<1x128xf32>
    %109 = vector.broadcast %108 : vector<1x128xf32> to vector<512x128xf32>
    %110 = arith.addf %107, %109 : vector<512x128xf32>
    %cst_63 = arith.constant 0.000000e+00 : f32
    %111 = vector.broadcast %cst_63 : f32 to vector<512x128xf32>
    %112 = arith.maximumf %110, %111 : vector<512x128xf32>
    %113 = arith.truncf %112 : vector<512x128xf32> to vector<512x128xbf16>
    %c3_64 = arith.constant 3 : index
    %c0_65 = arith.constant 0 : index
    %c0_66 = arith.constant 0 : index
    %114 = vector.load %arg9[%c3_64, %c0_65, %c0_66] : memref<5x128x128xbf16, #tpu.memory_space<vmem>>, vector<1x128x128xbf16>
    %115 = vector.shape_cast %114 : vector<1x128x128xbf16> to vector<128x128xbf16>
    %cst_67 = arith.constant dense<0.000000e+00> : vector<512x128xf32>
    %116 = tpu.matmul %113, %115, %cst_67 {dimension_numbers = #tpu.dot_dimension_numbers<[1], [0], [0], [1], [0, 0, 1, 1], [], []>} : vector<512x128xbf16>, vector<128x128xbf16>, vector<512x128xf32> -> vector<512x128xf32>
    %c3_68 = arith.constant 3 : index
    %c0_69 = arith.constant 0 : index
    %117 = vector.load %arg10[%c3_68, %c0_69] : memref<5x128xf32, #tpu.memory_space<vmem>>, vector<1x128xf32>
    %118 = vector.broadcast %117 : vector<1x128xf32> to vector<512x128xf32>
    %119 = arith.addf %116, %118 : vector<512x128xf32>
    %120 = arith.addf %101, %119 : vector<512x128xf32>
    %121 = vector.extract_strided_slice %24 {offsets = [0, 512], sizes = [512, 128], strides = [1, 1]} : vector<512x640xf32> to vector<512x128xf32>
    %122 = arith.addf %120, %121 : vector<512x128xf32>
    %c4 = arith.constant 4 : index
    %c0_70 = arith.constant 0 : index
    %123 = vector.load %arg6[%c4, %c0_70] : memref<5x128xf32, #tpu.memory_space<vmem>>, vector<1x128xf32>
    %124 = vector.broadcast %123 : vector<1x128xf32> to vector<512x128xf32>
    %125 = arith.addf %122, %124 : vector<512x128xf32>
    %cst_71 = arith.constant 0.000000e+00 : f32
    %126 = vector.broadcast %cst_71 : f32 to vector<512x128xf32>
    %127 = arith.maximumf %125, %126 : vector<512x128xf32>
    %128 = arith.truncf %127 : vector<512x128xf32> to vector<512x128xbf16>
    %c4_72 = arith.constant 4 : index
    %c0_73 = arith.constant 0 : index
    %c0_74 = arith.constant 0 : index
    %129 = vector.load %arg7[%c4_72, %c0_73, %c0_74] : memref<5x128x128xbf16, #tpu.memory_space<vmem>>, vector<1x128x128xbf16>
    %130 = vector.shape_cast %129 : vector<1x128x128xbf16> to vector<128x128xbf16>
    %cst_75 = arith.constant dense<0.000000e+00> : vector<512x128xf32>
    %131 = tpu.matmul %128, %130, %cst_75 {dimension_numbers = #tpu.dot_dimension_numbers<[1], [0], [0], [1], [0, 0, 1, 1], [], []>} : vector<512x128xbf16>, vector<128x128xbf16>, vector<512x128xf32> -> vector<512x128xf32>
    %c4_76 = arith.constant 4 : index
    %c0_77 = arith.constant 0 : index
    %132 = vector.load %arg8[%c4_76, %c0_77] : memref<5x128xf32, #tpu.memory_space<vmem>>, vector<1x128xf32>
    %133 = vector.broadcast %132 : vector<1x128xf32> to vector<512x128xf32>
    %134 = arith.addf %131, %133 : vector<512x128xf32>
    %cst_78 = arith.constant 0.000000e+00 : f32
    %135 = vector.broadcast %cst_78 : f32 to vector<512x128xf32>
    %136 = arith.maximumf %134, %135 : vector<512x128xf32>
    %137 = arith.truncf %136 : vector<512x128xf32> to vector<512x128xbf16>
    %c4_79 = arith.constant 4 : index
    %c0_80 = arith.constant 0 : index
    %c0_81 = arith.constant 0 : index
    %138 = vector.load %arg9[%c4_79, %c0_80, %c0_81] : memref<5x128x128xbf16, #tpu.memory_space<vmem>>, vector<1x128x128xbf16>
    %139 = vector.shape_cast %138 : vector<1x128x128xbf16> to vector<128x128xbf16>
    %cst_82 = arith.constant dense<0.000000e+00> : vector<512x128xf32>
    %140 = tpu.matmul %137, %139, %cst_82 {dimension_numbers = #tpu.dot_dimension_numbers<[1], [0], [0], [1], [0, 0, 1, 1], [], []>} : vector<512x128xbf16>, vector<128x128xbf16>, vector<512x128xf32> -> vector<512x128xf32>
    %c4_83 = arith.constant 4 : index
    %c0_84 = arith.constant 0 : index
    %141 = vector.load %arg10[%c4_83, %c0_84] : memref<5x128xf32, #tpu.memory_space<vmem>>, vector<1x128xf32>
    %142 = vector.broadcast %141 : vector<1x128xf32> to vector<512x128xf32>
    %143 = arith.addf %140, %142 : vector<512x128xf32>
    %144 = arith.addf %125, %143 : vector<512x128xf32>
    %c0_85 = arith.constant 0 : index
    %c0_86 = arith.constant 0 : index
    %145 = vector.load %arg11[%c0_85, %c0_86] : memref<1x128xf32, #tpu.memory_space<vmem>>, vector<1x128xf32>
    %cst_87 = arith.constant 0.000000e+00 : f32
    %146 = vector.broadcast %cst_87 : f32 to vector<512x128xf32>
    %147 = arith.maximumf %144, %146 : vector<512x128xf32>
    %cst_88 = arith.constant dense<0.000000e+00> : vector<1x512xf32>
    %148 = tpu.matmul %145, %147, %cst_88 {dimension_numbers = #tpu.dot_dimension_numbers<[1], [1], [0], [0], [0, 0, 1, 0], [], []>} : vector<1x128xf32>, vector<512x128xf32>, vector<1x512xf32> -> vector<1x512xf32>
    %c0_89 = arith.constant 0 : index
    %c0_90 = arith.constant 0 : index
    %149 = vector.load %arg12[%c0_89, %c0_90] : memref<1x1xf32, #tpu.memory_space<vmem>>, vector<1x1xf32>
    %150 = vector.broadcast %149 : vector<1x1xf32> to vector<1x512xf32>
    %151 = arith.addf %148, %150 : vector<1x512xf32>
    %c0_91 = arith.constant 0 : index
    %c0_92 = arith.constant 0 : index
    %152 = vector.load %arg13[%c0_91, %c0_92] : memref<1x512xf32, #tpu.memory_space<vmem>>, vector<1x512xf32>
    tpu.vector_store %arg13[%c0_91, %c0_92], %151 {strides = array<i32>} : memref<1x512xf32, #tpu.memory_space<vmem>>, vector<1x512xf32>,
    return
  }
  func.func @transform_0(%arg0: i32) -> (i32, i32) {
    %c0_i32 = arith.constant 0 : i32
    %c0_i32_0 = arith.constant 0 : i32
    return %arg0, %c0_i32 : i32, i32
  }
  func.func @transform_1(%arg0: i32) -> (i32, i32) {
    %c0_i32 = arith.constant 0 : i32
    %c0_i32_0 = arith.constant 0 : i32
    return %arg0, %c0_i32 : i32, i32
  }
  func.func @transform_2(%arg0: i32) -> (i32, i32) {
    %c0_i32 = arith.constant 0 : i32
    %c0_i32_0 = arith.constant 0 : i32
    %c0_i32_1 = arith.constant 0 : i32
    return %c0_i32, %c0_i32_0 : i32, i32
  }
  func.func @transform_3(%arg0: i32) -> (i32, i32) {
    %c0_i32 = arith.constant 0 : i32
    %c0_i32_0 = arith.constant 0 : i32
    %c0_i32_1 = arith.constant 0 : i32
    return %c0_i32, %c0_i32_0 : i32, i32
  }
  func.func @transform_4(%arg0: i32) -> (i32, i32) {
    %c0_i32 = arith.constant 0 : i32
    %c0_i32_0 = arith.constant 0 : i32
    %c0_i32_1 = arith.constant 0 : i32
    return %c0_i32, %c0_i32_0 : i32, i32
  }
  func.func @transform_5(%arg0: i32) -> (i32, i32) {
    %c0_i32 = arith.constant 0 : i32
    %c0_i32_0 = arith.constant 0 : i32
    %c0_i32_1 = arith.constant 0 : i32
    return %c0_i32, %c0_i32_0 : i32, i32
  }
  func.func @transform_6(%arg0: i32) -> (i32, i32, i32) {
    %c0_i32 = arith.constant 0 : i32
    %c0_i32_0 = arith.constant 0 : i32
    %c0_i32_1 = arith.constant 0 : i32
    %c0_i32_2 = arith.constant 0 : i32
    return %c0_i32, %c0_i32_0, %c0_i32_1 : i32, i32, i32
  }
  func.func @transform_7(%arg0: i32) -> (i32, i32) {
    %c0_i32 = arith.constant 0 : i32
    %c0_i32_0 = arith.constant 0 : i32
    %c0_i32_1 = arith.constant 0 : i32
    return %c0_i32, %c0_i32_0 : i32, i32
  }
  func.func @transform_8(%arg0: i32) -> (i32, i32, i32) {
    %c0_i32 = arith.constant 0 : i32
    %c0_i32_0 = arith.constant 0 : i32
    %c0_i32_1 = arith.constant 0 : i32
    %c0_i32_2 = arith.constant 0 : i32
    return %c0_i32, %c0_i32_0, %c0_i32_1 : i32, i32, i32
  }
  func.func @transform_9(%arg0: i32) -> (i32, i32) {
    %c0_i32 = arith.constant 0 : i32
    %c0_i32_0 = arith.constant 0 : i32
    %c0_i32_1 = arith.constant 0 : i32
    return %c0_i32, %c0_i32_0 : i32, i32
  }
  func.func @transform_10(%arg0: i32) -> (i32, i32) {
    %c0_i32 = arith.constant 0 : i32
    %c0_i32_0 = arith.constant 0 : i32
    %c0_i32_1 = arith.constant 0 : i32
    return %c0_i32, %c0_i32_0 : i32, i32
  }
  func.func @transform_11(%arg0: i32) -> (i32, i32) {
    %c0_i32 = arith.constant 0 : i32
    %c0_i32_0 = arith.constant 0 : i32
    %c0_i32_1 = arith.constant 0 : i32
    return %c0_i32, %c0_i32_0 : i32, i32
  }
  func.func @transform_12(%arg0: i32) -> (i32, i32) {
    %c0_i32 = arith.constant 0 : i32
    %c0_i32_0 = arith.constant 0 : i32
    return %c0_i32, %arg0 : i32, i32
  }
}

</mosaic_0001>

<llo_original>
// kernel: tpu_custom_call.1
$region0: #{tpu_custom_call.1}
  #allocation0 [shape = 'u32[]', space=smem, size = 0x4, offset = 0x4, fixed_abs, tag = 'smem constant byte address 0x4 - core index']
  #allocation1 [shape = 'u32[144,128]{1,0:T(1,128)}', space=vmem, size = 0x12000, scoped, tag = 'internal scratch']
  #allocation2 [shape = 'f32[1,1]{1,0:T(1,128)S(1)}', space=vmem, size = 0x200, scoped, tag = 'scoped memory for tpu_custom_call.1']
  %s0 = inlined_call_operand.vmem [shape: f32[2048,3], index: 0, kind: input, shape index: {}]
  %s1 = inlined_call_operand.vmem [shape: bf16[2048,96], index: 1, kind: input, shape index: {}]
  %s2 = inlined_call_operand.vmem [shape: f32[3,128], index: 2, kind: input, shape index: {}]
  %s3 = inlined_call_operand.vmem [shape: f32[1,128], index: 3, kind: input, shape index: {}]
  %s4 = inlined_call_operand.vmem [shape: bf16[96,640], index: 4, kind: input, shape index: {}]
  %s5 = inlined_call_operand.vmem [shape: f32[5,128], index: 5, kind: input, shape index: {}]
  %s6 = inlined_call_operand.vmem [shape: bf16[5,128,128], index: 6, kind: input, shape index: {}]
  %s7 = inlined_call_operand.vmem [shape: f32[5,128], index: 7, kind: input, shape index: {}]
  %s8 = inlined_call_operand.vmem [shape: bf16[5,128,128], index: 8, kind: input, shape index: {}]
  %s9 = inlined_call_operand.vmem [shape: f32[5,128], index: 9, kind: input, shape index: {}]
  %s10 = inlined_call_operand.vmem [shape: f32[1,128], index: 10, kind: input, shape index: {}]
  %s11 = inlined_call_operand.<no memory space> [shape: f32[1,1], index: 11, kind: input, shape index: {}]
  %s12 = inlined_call_operand.hbm [shape: f32[1,2048], index: 12, kind: output, shape index: {}]
  %s13 = sld [smem:[#allocation0]]
  $region81: #{tpu_custom_call.1} parent=0
    _
  %s15 = ssub.s32 1, %s13
  %s16 = scalar_select 0, %s15, %s13
  %v17 = vstv %s11
  %18 = vst [vmem:[#allocation2] sm:$0x1] %v17
  $region1: #{tpu_custom_call.1} parent=0
    #allocation3 [shape = 'u8[4096]{0}', space=vmem, size = 0x1000, scoped, tag = 'output window, operand 0']
    #allocation4 [shape = 's32[2]{0}', space=sflag, size = 0x8, scoped, tag = 'scoped memory for tpu_custom_call.1']
    %19 = vsyncpa [#allocation4], 0
    %s20 = scalar_lea.sflag [#allocation4], 1
    %21 = vsyncpa %s20, 0
    loop: start=0, step=1, limit=6
    $region2: #{tpu_custom_call.1} parent=1 // loop_pre_header
      _
    $region3: #{tpu_custom_call.1} parent=1 // loop_header
      %s23 = sphi 0, %s27
      %p24 = scmp.ge.s32.totalorder %s23, 6
      %s33 = sphi 0, %s35
      %s36 = sphi 0, %s33
      %s37 = sphi 0, %s36
      %s53 = sphi 0, %s37
      %s59 = sphi 0, %s61
      %s62 = sphi 0, %s59
      %s63 = sphi 0, %s62
      %s79 = sphi 0, %s63
      %s83 = sphi 0, %s83
      %s85 = sphi 0, %s83
      %s86 = sphi 0, %s85
      %s100 = sphi 0, %s86
      %s104 = sphi 0, %s104
      %s106 = sphi 0, %s104
      %s107 = sphi 0, %s106
      %s121 = sphi 0, %s107
      %s125 = sphi 0, %s125
      %s127 = sphi 0, %s125
      %s128 = sphi 0, %s127
      %s142 = sphi 0, %s128
      %s146 = sphi 0, %s146
      %s148 = sphi 0, %s146
      %s149 = sphi 0, %s148
      %s163 = sphi 0, %s149
      %s167 = sphi 0, %s167
      %s169 = sphi 0, %s167
      %s170 = sphi 0, %s169
      %s184 = sphi 0, %s170
      %s188 = sphi 0, %s188
      %s190 = sphi 0, %s188
      %s191 = sphi 0, %s190
      %s205 = sphi 0, %s191
      %s209 = sphi 0, %s209
      %s211 = sphi 0, %s209
      %s212 = sphi 0, %s211
      %s226 = sphi 0, %s212
      %s230 = sphi 0, %s230
      %s232 = sphi 0, %s230
      %s233 = sphi 0, %s232
      %s247 = sphi 0, %s233
      %s251 = sphi 0, %s251
      %s253 = sphi 0, %s251
      %s254 = sphi 0, %s253
      %s268 = sphi 0, %s254
      %s272 = sphi 0, %s272
      %s274 = sphi 0, %s272
      %s275 = sphi 0, %s274
      %s289 = sphi 0, %s275
      %s295 = sphi 0, %s297
      %s298 = sphi 0, %s295
      %s299 = sphi 0, %s298
      %s315 = sphi 0, %s299
    $region4: #{tpu_custom_call.1} parent=1 // loop_header_branch
      %26 = sbr.rel (%p24) target = $region8
    $region5: #{tpu_custom_call.1} parent=1 // loop_body
      %s28 = ssub.s32 %s23, 1
      %s29 = ssub.s32 %s23, 2
      %s30 = sadd.s32 %s23, 1
      %s31 = ssub.s32 %s23, %s30
      %p32 = scmp.eq.s32.totalorder %s31, 0
      %s34 = sadd.s32 %s33, 1
      %s35 = scalar_select %p32, %s33, %s34
      %p38 = pneg %p32
      %p39 = scmp.eq.s32.totalorder %s23, 3
      %p40 = por %p38, %p39
      %p41 = scmp.ne.s32.totalorder %s33, %s36
      %p42 = scmp.eq.s32.totalorder %s23, 0
      %p43 = por %p41, %p42
      %p44 = scmp.ne.s32.totalorder %s33, %s36
      %p45 = scmp.eq.s32.totalorder %s28, 3
      %p46 = por %p44, %p45
      %p47 = scmp.ne.s32.totalorder %s36, %s37
      %p48 = scmp.eq.s32.totalorder %s28, 0
      %p49 = por %p47, %p48
      %p50 = scmp.ne.s32.totalorder %s36, %s37
      %p51 = scmp.eq.s32.totalorder %s29, 3
      %p52 = por %p50, %p51
      %p54 = scmp.ne.s32.totalorder %s37, %s53
      %p55 = scmp.eq.s32.totalorder %s29, 0
      %p56 = por %p54, %p55
      %s57 = ssub.s32 %s23, %s30
      %p58 = scmp.eq.s32.totalorder %s57, 0
      %s60 = sadd.s32 %s59, 1
      %s61 = scalar_select %p58, %s59, %s60
      %p64 = pneg %p58
      %p65 = scmp.eq.s32.totalorder %s23, 3
      %p66 = por %p64, %p65
      %p67 = scmp.ne.s32.totalorder %s59, %s62
      %p68 = scmp.eq.s32.totalorder %s23, 0
      %p69 = por %p67, %p68
      %p70 = scmp.ne.s32.totalorder %s59, %s62
      %p71 = scmp.eq.s32.totalorder %s28, 3
      %p72 = por %p70, %p71
      %p73 = scmp.ne.s32.totalorder %s62, %s63
      %p74 = scmp.eq.s32.totalorder %s28, 0
      %p75 = por %p73, %p74
      %p76 = scmp.ne.s32.totalorder %s62, %s63
      %p77 = scmp.eq.s32.totalorder %s29, 3
      %p78 = por %p76, %p77
      %p80 = scmp.ne.s32.totalorder %s63, %s79
      %p81 = scmp.eq.s32.totalorder %s29, 0
      %p82 = por %p80, %p81
      %s84 = sadd.s32 %s83, 1
      %p87 = scmp.eq.s32.totalorder %s23, 3
      %p88 = scmp.ne.s32.totalorder %s83, %s85
      %p89 = scmp.eq.s32.totalorder %s23, 0
      %p90 = por %p88, %p89
      %p91 = scmp.ne.s32.totalorder %s83, %s85
      %p92 = scmp.eq.s32.totalorder %s28, 3
      %p93 = por %p91, %p92
      %p94 = scmp.ne.s32.totalorder %s85, %s86
      %p95 = scmp.eq.s32.totalorder %s28, 0
      %p96 = por %p94, %p95
      %p97 = scmp.ne.s32.totalorder %s85, %s86
      %p98 = scmp.eq.s32.totalorder %s29, 3
      %p99 = por %p97, %p98
      %p101 = scmp.ne.s32.totalorder %s86, %s100
      %p102 = scmp.eq.s32.totalorder %s29, 0
      %p103 = por %p101, %p102
      %s105 = sadd.s32 %s104, 1
      %p108 = scmp.eq.s32.totalorder %s23, 3
      %p109 = scmp.ne.s32.totalorder %s104, %s106
      %p110 = scmp.eq.s32.totalorder %s23, 0
      %p111 = por %p109, %p110
      %p112 = scmp.ne.s32.totalorder %s104, %s106
      %p113 = scmp.eq.s32.totalorder %s28, 3
      %p114 = por %p112, %p113
      %p115 = scmp.ne.s32.totalorder %s106, %s107
      %p116 = scmp.eq.s32.totalorder %s28, 0
      %p117 = por %p115, %p116
      %p118 = scmp.ne.s32.totalorder %s106, %s107
      %p119 = scmp.eq.s32.totalorder %s29, 3
      %p120 = por %p118, %p119
      %p122 = scmp.ne.s32.totalorder %s107, %s121
      %p123 = scmp.eq.s32.totalorder %s29, 0
      %p124 = por %p122, %p123
      %s126 = sadd.s32 %s125, 1
      %p129 = scmp.eq.s32.totalorder %s23, 3
      %p130 = scmp.ne.s32.totalorder %s125, %s127
      %p131 = scmp.eq.s32.totalorder %s23, 0
      %p132 = por %p130, %p131
      %p133 = scmp.ne.s32.totalorder %s125, %s127
      %p134 = scmp.eq.s32.totalorder %s28, 3
      %p135 = por %p133, %p134
      %p136 = scmp.ne.s32.totalorder %s127, %s128
      %p137 = scmp.eq.s32.totalorder %s28, 0
      %p138 = por %p136, %p137
      %p139 = scmp.ne.s32.totalorder %s127, %s128
      %p140 = scmp.eq.s32.totalorder %s29, 3
      %p141 = por %p139, %p140
      %p143 = scmp.ne.s32.totalorder %s128, %s142
      %p144 = scmp.eq.s32.totalorder %s29, 0
      %p145 = por %p143, %p144
      %s147 = sadd.s32 %s146, 1
      %p150 = scmp.eq.s32.totalorder %s23, 3
      %p151 = scmp.ne.s32.totalorder %s146, %s148
      %p152 = scmp.eq.s32.totalorder %s23, 0
      %p153 = por %p151, %p152
      %p154 = scmp.ne.s32.totalorder %s146, %s148
      %p155 = scmp.eq.s32.totalorder %s28, 3
      %p156 = por %p154, %p155
      %p157 = scmp.ne.s32.totalorder %s148, %s149
      %p158 = scmp.eq.s32.totalorder %s28, 0
      %p159 = por %p157, %p158
      %p160 = scmp.ne.s32.totalorder %s148, %s149
      %p161 = scmp.eq.s32.totalorder %s29, 3
      %p162 = por %p160, %p161
      %p164 = scmp.ne.s32.totalorder %s149, %s163
      %p165 = scmp.eq.s32.totalorder %s29, 0
      %p166 = por %p164, %p165
      %s168 = sadd.s32 %s167, 1
      %p171 = scmp.eq.s32.totalorder %s23, 3
      %p172 = scmp.ne.s32.totalorder %s167, %s169
      %p173 = scmp.eq.s32.totalorder %s23, 0
      %p174 = por %p172, %p173
      %p175 = scmp.ne.s32.totalorder %s167, %s169
      %p176 = scmp.eq.s32.totalorder %s28, 3
      %p177 = por %p175, %p176
      %p178 = scmp.ne.s32.totalorder %s169, %s170
      %p179 = scmp.eq.s32.totalorder %s28, 0
      %p180 = por %p178, %p179
      %p181 = scmp.ne.s32.totalorder %s169, %s170
      %p182 = scmp.eq.s32.totalorder %s29, 3
      %p183 = por %p181, %p182
      %p185 = scmp.ne.s32.totalorder %s170, %s184
      %p186 = scmp.eq.s32.totalorder %s29, 0
      %p187 = por %p185, %p186
      %s189 = sadd.s32 %s188, 1
      %p192 = scmp.eq.s32.totalorder %s23, 3
      %p193 = scmp.ne.s32.totalorder %s188, %s190
      %p194 = scmp.eq.s32.totalorder %s23, 0
      %p195 = por %p193, %p194
      %p196 = scmp.ne.s32.totalorder %s188, %s190
      %p197 = scmp.eq.s32.totalorder %s28, 3
      %p198 = por %p196, %p197
      %p199 = scmp.ne.s32.totalorder %s190, %s191
      %p200 = scmp.eq.s32.totalorder %s28, 0
      %p201 = por %p199, %p200
      %p202 = scmp.ne.s32.totalorder %s190, %s191
      %p203 = scmp.eq.s32.totalorder %s29, 3
      %p204 = por %p202, %p203
      %p206 = scmp.ne.s32.totalorder %s191, %s205
      %p207 = scmp.eq.s32.totalorder %s29, 0
      %p208 = por %p206, %p207
      %s210 = sadd.s32 %s209, 1
      %p213 = scmp.eq.s32.totalorder %s23, 3
      %p214 = scmp.ne.s32.totalorder %s209, %s211
      %p215 = scmp.eq.s32.totalorder %s23, 0
      %p216 = por %p214, %p215
      %p217 = scmp.ne.s32.totalorder %s209, %s211
      %p218 = scmp.eq.s32.totalorder %s28, 3
      %p219 = por %p217, %p218
      %p220 = scmp.ne.s32.totalorder %s211, %s212
      %p221 = scmp.eq.s32.totalorder %s28, 0
      %p222 = por %p220, %p221
      %p223 = scmp.ne.s32.totalorder %s211, %s212
      %p224 = scmp.eq.s32.totalorder %s29, 3
      %p225 = por %p223, %p224
      %p227 = scmp.ne.s32.totalorder %s212, %s226
      %p228 = scmp.eq.s32.totalorder %s29, 0
      %p229 = por %p227, %p228
      %s231 = sadd.s32 %s230, 1
      %p234 = scmp.eq.s32.totalorder %s23, 3
      %p235 = scmp.ne.s32.totalorder %s230, %s232
      %p236 = scmp.eq.s32.totalorder %s23, 0
      %p237 = por %p235, %p236
      %p238 = scmp.ne.s32.totalorder %s230, %s232
      %p239 = scmp.eq.s32.totalorder %s28, 3
      %p240 = por %p238, %p239
      %p241 = scmp.ne.s32.totalorder %s232, %s233
      %p242 = scmp.eq.s32.totalorder %s28, 0
      %p243 = por %p241, %p242
      %p244 = scmp.ne.s32.totalorder %s232, %s233
      %p245 = scmp.eq.s32.totalorder %s29, 3
      %p246 = por %p244, %p245
      %p248 = scmp.ne.s32.totalorder %s233, %s247
      %p249 = scmp.eq.s32.totalorder %s29, 0
      %p250 = por %p248, %p249
      %s252 = sadd.s32 %s251, 1
      %p255 = scmp.eq.s32.totalorder %s23, 3
      %p256 = scmp.ne.s32.totalorder %s251, %s253
      %p257 = scmp.eq.s32.totalorder %s23, 0
      %p258 = por %p256, %p257
      %p259 = scmp.ne.s32.totalorder %s251, %s253
      %p260 = scmp.eq.s32.totalorder %s28, 3
      %p261 = por %p259, %p260
      %p262 = scmp.ne.s32.totalorder %s253, %s254
      %p263 = scmp.eq.s32.totalorder %s28, 0
      %p264 = por %p262, %p263
      %p265 = scmp.ne.s32.totalorder %s253, %s254
      %p266 = scmp.eq.s32.totalorder %s29, 3
      %p267 = por %p265, %p266
      %p269 = scmp.ne.s32.totalorder %s254, %s268
      %p270 = scmp.eq.s32.totalorder %s29, 0
      %p271 = por %p269, %p270
      %s273 = sadd.s32 %s272, 1
      %p276 = scmp.eq.s32.totalorder %s23, 3
      %p277 = scmp.ne.s32.totalorder %s272, %s274
      %p278 = scmp.eq.s32.totalorder %s23, 0
      %p279 = por %p277, %p278
      %p280 = scmp.ne.s32.totalorder %s272, %s274
      %p281 = scmp.eq.s32.totalorder %s28, 3
      %p282 = por %p280, %p281
      %p283 = scmp.ne.s32.totalorder %s274, %s275
      %p284 = scmp.eq.s32.totalorder %s28, 0
      %p285 = por %p283, %p284
      %p286 = scmp.ne.s32.totalorder %s274, %s275
      %p287 = scmp.eq.s32.totalorder %s29, 3
      %p288 = por %p286, %p287
      %p290 = scmp.ne.s32.totalorder %s275, %s289
      %p291 = scmp.eq.s32.totalorder %s29, 0
      %p292 = por %p290, %p291
      %s293 = ssub.s32 %s23, %s30
      %p294 = scmp.eq.s32.totalorder %s293, 0
      %s296 = sadd.s32 %s295, 1
      %s297 = scalar_select %p294, %s295, %s296
      %p300 = pneg %p294
      %p301 = scmp.eq.s32.totalorder %s23, 3
      %p302 = por %p300, %p301
      %p303 = scmp.ne.s32.totalorder %s295, %s298
      %p304 = scmp.eq.s32.totalorder %s23, 0
      %p305 = por %p303, %p304
      %p306 = scmp.ne.s32.totalorder %s295, %s298
      %p307 = scmp.eq.s32.totalorder %s28, 3
      %p308 = por %p306, %p307
      %p309 = scmp.ne.s32.totalorder %s298, %s299
      %p310 = scmp.eq.s32.totalorder %s28, 0
      %p311 = por %p309, %p310
      %p312 = scmp.ne.s32.totalorder %s298, %s299
      %p313 = scmp.eq.s32.totalorder %s29, 3
      %p314 = por %p312, %p313
      %p316 = scmp.ne.s32.totalorder %s299, %s315
      %p317 = scmp.eq.s32.totalorder %s29, 0
      %p318 = por %p316, %p317
      %p319 = scmp.le.s32.totalorder 1, %s23
      %p320 = scmp.lt.s32.totalorder %s23, 5
      %p321 = pnand %p319, %p320
      %p322 = pneg %p321
      // Predicated region
      $region9: #{tpu_custom_call.1} parent=5 // pred_check
        _
      $region10: #{tpu_custom_call.1} parent=5 // pred_check_branch
        %324 = sbr.rel (%p321) target = $region12
      $region11: #{tpu_custom_call.1} parent=5 // pred_region
        %s325 = ssub.s32 %s23, 1
        // Predicated region
        $region13: #{tpu_custom_call.1} parent=11 // pred_check
          %p326 = pneg %p96
        $region14: #{tpu_custom_call.1} parent=11 // pred_check_branch
          %328 = sbr.rel (%p326) target = $region16
        $region15: #{tpu_custom_call.1} parent=11 // pred_region
          _
        $region16: #{tpu_custom_call.1} parent=11 // pred_fallthru
          _
        // Predicated region
        $region17: #{tpu_custom_call.1} parent=11 // pred_check
          %p329 = pneg %p117
        $region18: #{tpu_custom_call.1} parent=11 // pred_check_branch
          %331 = sbr.rel (%p329) target = $region20
        $region19: #{tpu_custom_call.1} parent=11 // pred_region
          _
        $region20: #{tpu_custom_call.1} parent=11 // pred_fallthru
          _
        // Predicated region
        $region21: #{tpu_custom_call.1} parent=11 // pred_check
          %p332 = pneg %p138
        $region22: #{tpu_custom_call.1} parent=11 // pred_check_branch
          %334 = sbr.rel (%p332) target = $region24
        $region23: #{tpu_custom_call.1} parent=11 // pred_region
          _
        $region24: #{tpu_custom_call.1} parent=11 // pred_fallthru
          _
        // Predicated region
        $region25: #{tpu_custom_call.1} parent=11 // pred_check
          %p335 = pneg %p159
        $region26: #{tpu_custom_call.1} parent=11 // pred_check_branch
          %337 = sbr.rel (%p335) target = $region28
        $region27: #{tpu_custom_call.1} parent=11 // pred_region
          _
        $region28: #{tpu_custom_call.1} parent=11 // pred_fallthru
          _
        // Predicated region
        $region29: #{tpu_custom_call.1} parent=11 // pred_check
          %p338 = pneg %p180
        $region30: #{tpu_custom_call.1} parent=11 // pred_check_branch
          %340 = sbr.rel (%p338) target = $region32
        $region31: #{tpu_custom_call.1} parent=11 // pred_region
          _
        $region32: #{tpu_custom_call.1} parent=11 // pred_fallthru
          _
        // Predicated region
        $region33: #{tpu_custom_call.1} parent=11 // pred_check
          %p341 = pneg %p201
        $region34: #{tpu_custom_call.1} parent=11 // pred_check_branch
          %343 = sbr.rel (%p341) target = $region36
        $region35: #{tpu_custom_call.1} parent=11 // pred_region
          _
        $region36: #{tpu_custom_call.1} parent=11 // pred_fallthru
          _
        // Predicated region
        $region37: #{tpu_custom_call.1} parent=11 // pred_check
          %p344 = pneg %p222
        $region38: #{tpu_custom_call.1} parent=11 // pred_check_branch
          %346 = sbr.rel (%p344) target = $region40
        $region39: #{tpu_custom_call.1} parent=11 // pred_region
          _
        $region40: #{tpu_custom_call.1} parent=11 // pred_fallthru
          _
        // Predicated region
        $region41: #{tpu_custom_call.1} parent=11 // pred_check
          %p347 = pneg %p243
        $region42: #{tpu_custom_call.1} parent=11 // pred_check_branch
          %349 = sbr.rel (%p347) target = $region44
        $region43: #{tpu_custom_call.1} parent=11 // pred_region
          _
        $region44: #{tpu_custom_call.1} parent=11 // pred_fallthru
          _
        // Predicated region
        $region45: #{tpu_custom_call.1} parent=11 // pred_check
          %p350 = pneg %p264
        $region46: #{tpu_custom_call.1} parent=11 // pred_check_branch
          %352 = sbr.rel (%p350) target = $region48
        $region47: #{tpu_custom_call.1} parent=11 // pred_region
          _
        $region48: #{tpu_custom_call.1} parent=11 // pred_fallthru
          _
        // Predicated region
        $region49: #{tpu_custom_call.1} parent=11 // pred_check
          %p353 = pneg %p285
        $region50: #{tpu_custom_call.1} parent=11 // pred_check_branch
          %355 = sbr.rel (%p353) target = $region52
        $region51: #{tpu_custom_call.1} parent=11 // pred_region
          _
        $region52: #{tpu_custom_call.1} parent=11 // pred_fallthru
          _
      $region12: #{tpu_custom_call.1} parent=5 // pred_fallthru
        _
      %p356 = scmp.lt.s32.totalorder %s23, 4
      // Predicated region
      $region53: #{tpu_custom_call.1} parent=5 // pred_check
        %p357 = pneg %p356
      $region54: #{tpu_custom_call.1} parent=5 // pred_check_branch
        %359 = sbr.rel (%p357) target = $region56
      $region55: #{tpu_custom_call.1} parent=5 // pred_region
        // Predicated region
        $region57: #{tpu_custom_call.1} parent=55 // pred_check
          %p360 = pneg %p43
        $region58: #{tpu_custom_call.1} parent=55 // pred_check_branch
          %362 = sbr.rel (%p360) target = $region60
        $region59: #{tpu_custom_call.1} parent=55 // pred_region
          %s363 = smul.u32 64, %s23
          %p364 = scmp.lt.s32.totalorder %s363, 255
          %s365 = scalar_select %p364, %s363, 255
          %s366 = smul.addr %s365, 8
          %s367 = scalar_lea.vmem %s0, %s366
          %s368 = smul.u32 64, %s23
        $region60: #{tpu_custom_call.1} parent=55 // pred_fallthru
          _
        // Predicated region
        $region61: #{tpu_custom_call.1} parent=55 // pred_check
          %p369 = pneg %p69
        $region62: #{tpu_custom_call.1} parent=55 // pred_check_branch
          %371 = sbr.rel (%p369) target = $region64
        $region63: #{tpu_custom_call.1} parent=55 // pred_region
          %s372 = smul.u32 64, %s23
          %p373 = scmp.lt.s32.totalorder %s372, 255
          %s374 = scalar_select %p373, %s372, 255
          %s375 = smul.addr %s374, 4
          %s376 = scalar_lea.vmem %s1, %s375
          %s377 = smul.u32 64, %s23
        $region64: #{tpu_custom_call.1} parent=55 // pred_fallthru
          _
      $region56: #{tpu_custom_call.1} parent=5 // pred_fallthru
        _
      %p378 = scmp.le.s32.totalorder 1, %s23
      %p379 = scmp.lt.s32.totalorder %s23, 5
      %p380 = pnand %p378, %p379
      %p381 = pneg %p380
      // Predicated region
      $region65: #{tpu_custom_call.1} parent=5 // pred_check
        _
      $region66: #{tpu_custom_call.1} parent=5 // pred_check_branch
        %383 = sbr.rel (%p380) target = $region68
      $region67: #{tpu_custom_call.1} parent=5 // pred_region
        %s384 = ssub.s32 %s23, 1
        %s385 = smul.u32 64, %s28
        %p386 = scmp.lt.s32.totalorder %s385, 255
        %s387 = scalar_select %p386, %s385, 255
        %s388 = smul.addr %s387, 8
        %s389 = scalar_lea.vmem %s0, %s388
        %p390 = pneg %p49
        %p391 = pneg %p46
        %s392 = smul.u32 64, %s28
        %p393 = scmp.lt.s32.totalorder %s392, 255
        %s394 = scalar_select %p393, %s392, 255
        %s395 = smul.addr %s394, 4
        %s396 = scalar_lea.vmem %s1, %s395
        %p397 = pneg %p75
        %p398 = pneg %p72
        %p399 = pneg %p96
        %p400 = pneg %p93
        %p401 = pneg %p117
        %p402 = pneg %p114
        %p403 = pneg %p138
        %p404 = pneg %p135
        %p405 = pneg %p159
        %p406 = pneg %p156
        %p407 = pneg %p180
        %p408 = pneg %p177
        %p409 = pneg %p201
        %p410 = pneg %p198
        %p411 = pneg %p222
        %p412 = pneg %p219
        %p413 = pneg %p243
        %p414 = pneg %p240
        %p415 = pneg %p264
        %p416 = pneg %p261
        %p417 = pneg %p285
        %p418 = pneg %p282
        %p419 = pneg %p311
        %p420 = pneg %p308
        %s421 = sand.u32 %s298, 1
        %s422 = scalar_lea.sflag [#allocation4], %s421
        %s423 = sand.u32 %s298, 1
        %s424 = smul.addr %s423, 4
        %s425 = scalar_lea.vmem [#allocation3], %s424
        %s426 = smul.u32 64, %s28
        %p427 = scmp.lt.s32.totalorder %s426, 255
        %s428 = scalar_select %p427, %s426, 255
        %s429 = smul.addr %s428, 8
        %s430 = scalar_lea.vmem %s0, %s429
        %s431 = smul.u32 64, %s28
        %s432 = smul.u32 64, %s28
        %p433 = scmp.lt.s32.totalorder %s432, 255
        %s434 = scalar_select %p433, %s432, 255
        %s435 = smul.addr %s434, 4
        %s436 = scalar_lea.vmem %s1, %s435
        %s437 = smul.u32 64, %s28
        %s438 = smul.u32 4, %s28
        %v440 = vld [vmem:[%s430] sm:$0xff]
        %v441 = vld [vmem:[%s430 + $0x8] sm:$0xff]
        %v442 = vld [vmem:[%s430 + $0x10] sm:$0xff]
        %v443 = vld [vmem:[%s430 + $0x18] sm:$0xff]
        %v444 = vld [vmem:[%s430 + $0x20] sm:$0xff]
        %v445 = vld [vmem:[%s430 + $0x28] sm:$0xff]
        %v446 = vld [vmem:[%s430 + $0x30] sm:$0xff]
        %v447 = vld [vmem:[%s430 + $0x38] sm:$0xff]
        %v448 = vld [vmem:[%s430 + $0x40] sm:$0xff]
        %v449 = vld [vmem:[%s430 + $0x48] sm:$0xff]
        %v450 = vld [vmem:[%s430 + $0x50] sm:$0xff]
        %v451 = vld [vmem:[%s430 + $0x58] sm:$0xff]
        %v452 = vld [vmem:[%s430 + $0x60] sm:$0xff]
        %v453 = vld [vmem:[%s430 + $0x68] sm:$0xff]
        %v454 = vld [vmem:[%s430 + $0x70] sm:$0xff]
        %v455 = vld [vmem:[%s430 + $0x78] sm:$0xff]
        %v456 = vld [vmem:[%s430 + $0x80] sm:$0xff]
        %v457 = vld [vmem:[%s430 + $0x88] sm:$0xff]
        %v458 = vld [vmem:[%s430 + $0x90] sm:$0xff]
        %v459 = vld [vmem:[%s430 + $0x98] sm:$0xff]
        %v460 = vld [vmem:[%s430 + $0xa0] sm:$0xff]
        %v461 = vld [vmem:[%s430 + $0xa8] sm:$0xff]
        %v462 = vld [vmem:[%s430 + $0xb0] sm:$0xff]
        %v463 = vld [vmem:[%s430 + $0xb8] sm:$0xff]
        %v464 = vld [vmem:[%s430 + $0xc0] sm:$0xff]
        %v465 = vld [vmem:[%s430 + $0xc8] sm:$0xff]
        %v466 = vld [vmem:[%s430 + $0xd0] sm:$0xff]
        %v467 = vld [vmem:[%s430 + $0xd8] sm:$0xff]
        %v468 = vld [vmem:[%s430 + $0xe0] sm:$0xff]
        %v469 = vld [vmem:[%s430 + $0xe8] sm:$0xff]
        %v470 = vld [vmem:[%s430 + $0xf0] sm:$0xff]
        %v471 = vld [vmem:[%s430 + $0xf8] sm:$0xff]
        %v472 = vld [vmem:[%s430 + $0x100] sm:$0xff]
        %v473 = vld [vmem:[%s430 + $0x108] sm:$0xff]
        %v474 = vld [vmem:[%s430 + $0x110] sm:$0xff]
        %v475 = vld [vmem:[%s430 + $0x118] sm:$0xff]
        %v476 = vld [vmem:[%s430 + $0x120] sm:$0xff]
        %v477 = vld [vmem:[%s430 + $0x128] sm:$0xff]
        %v478 = vld [vmem:[%s430 + $0x130] sm:$0xff]
        %v479 = vld [vmem:[%s430 + $0x138] sm:$0xff]
        %v480 = vld [vmem:[%s430 + $0x140] sm:$0xff]
        %v481 = vld [vmem:[%s430 + $0x148] sm:$0xff]
        %v482 = vld [vmem:[%s430 + $0x150] sm:$0xff]
        %v483 = vld [vmem:[%s430 + $0x158] sm:$0xff]
        %v484 = vld [vmem:[%s430 + $0x160] sm:$0xff]
        %v485 = vld [vmem:[%s430 + $0x168] sm:$0xff]
        %v486 = vld [vmem:[%s430 + $0x170] sm:$0xff]
        %v487 = vld [vmem:[%s430 + $0x178] sm:$0xff]
        %v488 = vld [vmem:[%s430 + $0x180] sm:$0xff]
        %v489 = vld [vmem:[%s430 + $0x188] sm:$0xff]
        %v490 = vld [vmem:[%s430 + $0x190] sm:$0xff]
        %v491 = vld [vmem:[%s430 + $0x198] sm:$0xff]
        %v492 = vld [vmem:[%s430 + $0x1a0] sm:$0xff]
        %v493 = vld [vmem:[%s430 + $0x1a8] sm:$0xff]
        %v494 = vld [vmem:[%s430 + $0x1b0] sm:$0xff]
        %v495 = vld [vmem:[%s430 + $0x1b8] sm:$0xff]
        %v496 = vld [vmem:[%s430 + $0x1c0] sm:$0xff]
        %v497 = vld [vmem:[%s430 + $0x1c8] sm:$0xff]
        %v498 = vld [vmem:[%s430 + $0x1d0] sm:$0xff]
        %v499 = vld [vmem:[%s430 + $0x1d8] sm:$0xff]
        %v500 = vld [vmem:[%s430 + $0x1e0] sm:$0xff]
        %v501 = vld [vmem:[%s430 + $0x1e8] sm:$0xff]
        %v502 = vld [vmem:[%s430 + $0x1f0] sm:$0xff]
        %v503 = vld [vmem:[%s430 + $0x1f8] sm:$0xff]
        %v504 = vld [vmem:[%s436] sm:$0xf]
        %v505 = vld [vmem:[%s436 + $0x4] sm:$0xf]
        %v506 = vld [vmem:[%s436 + $0x8] sm:$0xf]
        %v507 = vld [vmem:[%s436 + $0xc] sm:$0xf]
        %v508 = vld [vmem:[%s436 + $0x10] sm:$0xf]
        %v509 = vld [vmem:[%s436 + $0x14] sm:$0xf]
        %v510 = vld [vmem:[%s436 + $0x18] sm:$0xf]
        %v511 = vld [vmem:[%s436 + $0x1c] sm:$0xf]
        %v512 = vld [vmem:[%s436 + $0x20] sm:$0xf]
        %v513 = vld [vmem:[%s436 + $0x24] sm:$0xf]
        %v514 = vld [vmem:[%s436 + $0x28] sm:$0xf]
        %v515 = vld [vmem:[%s436 + $0x2c] sm:$0xf]
        %v516 = vld [vmem:[%s436 + $0x30] sm:$0xf]
        %v517 = vld [vmem:[%s436 + $0x34] sm:$0xf]
        %v518 = vld [vmem:[%s436 + $0x38] sm:$0xf]
        %v519 = vld [vmem:[%s436 + $0x3c] sm:$0xf]
        %v520 = vld [vmem:[%s436 + $0x40] sm:$0xf]
        %v521 = vld [vmem:[%s436 + $0x44] sm:$0xf]
        %v522 = vld [vmem:[%s436 + $0x48] sm:$0xf]
        %v523 = vld [vmem:[%s436 + $0x4c] sm:$0xf]
        %v524 = vld [vmem:[%s436 + $0x50] sm:$0xf]
        %v525 = vld [vmem:[%s436 + $0x54] sm:$0xf]
        %v526 = vld [vmem:[%s436 + $0x58] sm:$0xf]
        %v527 = vld [vmem:[%s436 + $0x5c] sm:$0xf]
        %v528 = vld [vmem:[%s436 + $0x60] sm:$0xf]
        %v529 = vld [vmem:[%s436 + $0x64] sm:$0xf]
        %v530 = vld [vmem:[%s436 + $0x68] sm:$0xf]
        %v531 = vld [vmem:[%s436 + $0x6c] sm:$0xf]
        %v532 = vld [vmem:[%s436 + $0x70] sm:$0xf]
        %v533 = vld [vmem:[%s436 + $0x74] sm:$0xf]
        %v534 = vld [vmem:[%s436 + $0x78] sm:$0xf]
        %v535 = vld [vmem:[%s436 + $0x7c] sm:$0xf]
        %v536 = vld [vmem:[%s436 + $0x80] sm:$0xf]
        %v537 = vld [vmem:[%s436 + $0x84] sm:$0xf]
        %v538 = vld [vmem:[%s436 + $0x88] sm:$0xf]
        %v539 = vld [vmem:[%s436 + $0x8c] sm:$0xf]
        %v540 = vld [vmem:[%s436 + $0x90] sm:$0xf]
        %v541 = vld [vmem:[%s436 + $0x94] sm:$0xf]
        %v542 = vld [vmem:[%s436 + $0x98] sm:$0xf]
        %v543 = vld [vmem:[%s436 + $0x9c] sm:$0xf]
        %v544 = vld [vmem:[%s436 + $0xa0] sm:$0xf]
        %v545 = vld [vmem:[%s436 + $0xa4] sm:$0xf]
        %v546 = vld [vmem:[%s436 + $0xa8] sm:$0xf]
        %v547 = vld [vmem:[%s436 + $0xac] sm:$0xf]
        %v548 = vld [vmem:[%s436 + $0xb0] sm:$0xf]
        %v549 = vld [vmem:[%s436 + $0xb4] sm:$0xf]
        %v550 = vld [vmem:[%s436 + $0xb8] sm:$0xf]
        %v551 = vld [vmem:[%s436 + $0xbc] sm:$0xf]
        %v552 = vld [vmem:[%s436 + $0xc0] sm:$0xf]
        %v553 = vld [vmem:[%s436 + $0xc4] sm:$0xf]
        %v554 = vld [vmem:[%s436 + $0xc8] sm:$0xf]
        %v555 = vld [vmem:[%s436 + $0xcc] sm:$0xf]
        %v556 = vld [vmem:[%s436 + $0xd0] sm:$0xf]
        %v557 = vld [vmem:[%s436 + $0xd4] sm:$0xf]
        %v558 = vld [vmem:[%s436 + $0xd8] sm:$0xf]
        %v559 = vld [vmem:[%s436 + $0xdc] sm:$0xf]
        %v560 = vld [vmem:[%s436 + $0xe0] sm:$0xf]
        %v561 = vld [vmem:[%s436 + $0xe4] sm:$0xf]
        %v562 = vld [vmem:[%s436 + $0xe8] sm:$0xf]
        %v563 = vld [vmem:[%s436 + $0xec] sm:$0xf]
        %v564 = vld [vmem:[%s436 + $0xf0] sm:$0xf]
        %v565 = vld [vmem:[%s436 + $0xf4] sm:$0xf]
        %v566 = vld [vmem:[%s436 + $0xf8] sm:$0xf]
        %v567 = vld [vmem:[%s436 + $0xfc] sm:$0xf]
        %v568 = vld [vmem:[%s2] sm:$0x7]
        %v569 = vld [vmem:[%s3] sm:$0x1]
        %571 = vset.pattern.permute.xlu0 0
        %572 = vperm.xlu0 %571, %v440
        %v573 = vpop.permute.xlu0 %572
        %576 = vset.pattern.permute.xlu0 0
        %577 = vperm.xlu0 %576, %v441
        %v578 = vpop.permute.xlu0 %577
        %581 = vset.pattern.permute.xlu0 0
        %582 = vperm.xlu0 %581, %v442
        %v583 = vpop.permute.xlu0 %582
        %586 = vset.pattern.permute.xlu0 0
        %587 = vperm.xlu0 %586, %v443
        %v588 = vpop.permute.xlu0 %587
        %591 = vset.pattern.permute.xlu0 0
        %592 = vperm.xlu0 %591, %v444
        %v593 = vpop.permute.xlu0 %592
        %596 = vset.pattern.permute.xlu0 0
        %597 = vperm.xlu0 %596, %v445
        %v598 = vpop.permute.xlu0 %597
        %601 = vset.pattern.permute.xlu0 0
        %602 = vperm.xlu0 %601, %v446
        %v603 = vpop.permute.xlu0 %602
        %606 = vset.pattern.permute.xlu0 0
        %607 = vperm.xlu0 %606, %v447
        %v608 = vpop.permute.xlu0 %607
        %611 = vset.pattern.permute.xlu0 0
        %612 = vperm.xlu0 %611, %v448
        %v613 = vpop.permute.xlu0 %612
        %616 = vset.pattern.permute.xlu0 0
        %617 = vperm.xlu0 %616, %v449
        %v618 = vpop.permute.xlu0 %617
        %621 = vset.pattern.permute.xlu0 0
        %622 = vperm.xlu0 %621, %v450
        %v623 = vpop.permute.xlu0 %622
        %626 = vset.pattern.permute.xlu0 0
        %627 = vperm.xlu0 %626, %v451
        %v628 = vpop.permute.xlu0 %627
        %631 = vset.pattern.permute.xlu0 0
        %632 = vperm.xlu0 %631, %v452
        %v633 = vpop.permute.xlu0 %632
        %636 = vset.pattern.permute.xlu0 0
        %637 = vperm.xlu0 %636, %v453
        %v638 = vpop.permute.xlu0 %637
        %641 = vset.pattern.permute.xlu0 0
        %642 = vperm.xlu0 %641, %v454
        %v643 = vpop.permute.xlu0 %642
        %646 = vset.pattern.permute.xlu0 0
        %647 = vperm.xlu0 %646, %v455
        %v648 = vpop.permute.xlu0 %647
        %651 = vset.pattern.permute.xlu0 0
        %652 = vperm.xlu0 %651, %v456
        %v653 = vpop.permute.xlu0 %652
        %656 = vset.pattern.permute.xlu0 0
        %657 = vperm.xlu0 %656, %v457
        %v658 = vpop.permute.xlu0 %657
        %661 = vset.pattern.permute.xlu0 0
        %662 = vperm.xlu0 %661, %v458
        %v663 = vpop.permute.xlu0 %662
        %666 = vset.pattern.permute.xlu0 0
        %667 = vperm.xlu0 %666, %v459
        %v668 = vpop.permute.xlu0 %667
        %671 = vset.pattern.permute.xlu0 0
        %672 = vperm.xlu0 %671, %v460
        %v673 = vpop.permute.xlu0 %672
        %676 = vset.pattern.permute.xlu0 0
        %677 = vperm.xlu0 %676, %v461
        %v678 = vpop.permute.xlu0 %677
        %681 = vset.pattern.permute.xlu0 0
        %682 = vperm.xlu0 %681, %v462
        %v683 = vpop.permute.xlu0 %682
        %686 = vset.pattern.permute.xlu0 0
        %687 = vperm.xlu0 %686, %v463
        %v688 = vpop.permute.xlu0 %687
        %691 = vset.pattern.permute.xlu0 0
        %692 = vperm.xlu0 %691, %v464
        %v693 = vpop.permute.xlu0 %692
        %696 = vset.pattern.permute.xlu0 0
        %697 = vperm.xlu0 %696, %v465
        %v698 = vpop.permute.xlu0 %697
        %701 = vset.pattern.permute.xlu0 0
        %702 = vperm.xlu0 %701, %v466
        %v703 = vpop.permute.xlu0 %702
        %706 = vset.pattern.permute.xlu0 0
        %707 = vperm.xlu0 %706, %v467
        %v708 = vpop.permute.xlu0 %707
        %711 = vset.pattern.permute.xlu0 0
        %712 = vperm.xlu0 %711, %v468
        %v713 = vpop.permute.xlu0 %712
        %716 = vset.pattern.permute.xlu0 0
        %717 = vperm.xlu0 %716, %v469
        %v718 = vpop.permute.xlu0 %717
        %721 = vset.pattern.permute.xlu0 0
        %722 = vperm.xlu0 %721, %v470
        %v723 = vpop.permute.xlu0 %722
        %726 = vset.pattern.permute.xlu0 0
        %727 = vperm.xlu0 %726, %v471
        %v728 = vpop.permute.xlu0 %727
        %731 = vset.pattern.permute.xlu0 0
        %732 = vperm.xlu0 %731, %v472
        %v733 = vpop.permute.xlu0 %732
        %736 = vset.pattern.permute.xlu0 0
        %737 = vperm.xlu0 %736, %v473
        %v738 = vpop.permute.xlu0 %737
        %741 = vset.pattern.permute.xlu0 0
        %742 = vperm.xlu0 %741, %v474
        %v743 = vpop.permute.xlu0 %742
        %746 = vset.pattern.permute.xlu0 0
        %747 = vperm.xlu0 %746, %v475
        %v748 = vpop.permute.xlu0 %747
        %751 = vset.pattern.permute.xlu0 0
        %752 = vperm.xlu0 %751, %v476
        %v753 = vpop.permute.xlu0 %752
        %756 = vset.pattern.permute.xlu0 0
        %757 = vperm.xlu0 %756, %v477
        %v758 = vpop.permute.xlu0 %757
        %761 = vset.pattern.permute.xlu0 0
        %762 = vperm.xlu0 %761, %v478
        %v763 = vpop.permute.xlu0 %762
        %766 = vset.pattern.permute.xlu0 0
        %767 = vperm.xlu0 %766, %v479
        %v768 = vpop.permute.xlu0 %767
        %771 = vset.pattern.permute.xlu0 0
        %772 = vperm.xlu0 %771, %v480
        %v773 = vpop.permute.xlu0 %772
        %776 = vset.pattern.permute.xlu0 0
        %777 = vperm.xlu0 %776, %v481
        %v778 = vpop.permute.xlu0 %777
        %781 = vset.pattern.permute.xlu0 0
        %782 = vperm.xlu0 %781, %v482
        %v783 = vpop.permute.xlu0 %782
        %786 = vset.pattern.permute.xlu0 0
        %787 = vperm.xlu0 %786, %v483
        %v788 = vpop.permute.xlu0 %787
        %791 = vset.pattern.permute.xlu0 0
        %792 = vperm.xlu0 %791, %v484
        %v793 = vpop.permute.xlu0 %792
        %796 = vset.pattern.permute.xlu0 0
        %797 = vperm.xlu0 %796, %v485
        %v798 = vpop.permute.xlu0 %797
        %801 = vset.pattern.permute.xlu0 0
        %802 = vperm.xlu0 %801, %v486
        %v803 = vpop.permute.xlu0 %802
        %806 = vset.pattern.permute.xlu0 0
        %807 = vperm.xlu0 %806, %v487
        %v808 = vpop.permute.xlu0 %807
        %811 = vset.pattern.permute.xlu0 0
        %812 = vperm.xlu0 %811, %v488
        %v813 = vpop.permute.xlu0 %812
        %816 = vset.pattern.permute.xlu0 0
        %817 = vperm.xlu0 %816, %v489
        %v818 = vpop.permute.xlu0 %817
        %821 = vset.pattern.permute.xlu0 0
        %822 = vperm.xlu0 %821, %v490
        %v823 = vpop.permute.xlu0 %822
        %826 = vset.pattern.permute.xlu0 0
        %827 = vperm.xlu0 %826, %v491
        %v828 = vpop.permute.xlu0 %827
        %831 = vset.pattern.permute.xlu0 0
        %832 = vperm.xlu0 %831, %v492
        %v833 = vpop.permute.xlu0 %832
        %836 = vset.pattern.permute.xlu0 0
        %837 = vperm.xlu0 %836, %v493
        %v838 = vpop.permute.xlu0 %837
        %841 = vset.pattern.permute.xlu0 0
        %842 = vperm.xlu0 %841, %v494
        %v843 = vpop.permute.xlu0 %842
        %846 = vset.pattern.permute.xlu0 0
        %847 = vperm.xlu0 %846, %v495
        %v848 = vpop.permute.xlu0 %847
        %851 = vset.pattern.permute.xlu0 0
        %852 = vperm.xlu0 %851, %v496
        %v853 = vpop.permute.xlu0 %852
        %856 = vset.pattern.permute.xlu0 0
        %857 = vperm.xlu0 %856, %v497
        %v858 = vpop.permute.xlu0 %857
        %861 = vset.pattern.permute.xlu0 0
        %862 = vperm.xlu0 %861, %v498
        %v863 = vpop.permute.xlu0 %862
        %866 = vset.pattern.permute.xlu0 0
        %867 = vperm.xlu0 %866, %v499
        %v868 = vpop.permute.xlu0 %867
        %871 = vset.pattern.permute.xlu0 0
        %872 = vperm.xlu0 %871, %v500
        %v873 = vpop.permute.xlu0 %872
        %876 = vset.pattern.permute.xlu0 0
        %877 = vperm.xlu0 %876, %v501
        %v878 = vpop.permute.xlu0 %877
        %881 = vset.pattern.permute.xlu0 0
        %882 = vperm.xlu0 %881, %v502
        %v883 = vpop.permute.xlu0 %882
        %886 = vset.pattern.permute.xlu0 0
        %887 = vperm.xlu0 %886, %v503
        %v888 = vpop.permute.xlu0 %887
        %v890 = vlaneseq
        %v891 = vshrl.u32 %v890, 7
        %v892 = vsub.s32 0, %v891
        %v893 = vrot.slane %v568, %v892
        %v894 = vmul.f32 %v573, %v893
        %v895 = vmul.f32 %v578, %v893
        %v896 = vmul.f32 %v583, %v893
        %v897 = vmul.f32 %v588, %v893
        %v898 = vmul.f32 %v593, %v893
        %v899 = vmul.f32 %v598, %v893
        %v900 = vmul.f32 %v603, %v893
        %v901 = vmul.f32 %v608, %v893
        %v902 = vmul.f32 %v613, %v893
        %v903 = vmul.f32 %v618, %v893
        %v904 = vmul.f32 %v623, %v893
        %v905 = vmul.f32 %v628, %v893
        %v906 = vmul.f32 %v633, %v893
        %v907 = vmul.f32 %v638, %v893
        %v908 = vmul.f32 %v643, %v893
        %v909 = vmul.f32 %v648, %v893
        %v910 = vmul.f32 %v653, %v893
        %v911 = vmul.f32 %v658, %v893
        %v912 = vmul.f32 %v663, %v893
        %v913 = vmul.f32 %v668, %v893
        %v914 = vmul.f32 %v673, %v893
        %v915 = vmul.f32 %v678, %v893
        %v916 = vmul.f32 %v683, %v893
        %v917 = vmul.f32 %v688, %v893
        %v918 = vmul.f32 %v693, %v893
        %v919 = vmul.f32 %v698, %v893
        %v920 = vmul.f32 %v703, %v893
        %v921 = vmul.f32 %v708, %v893
        %v922 = vmul.f32 %v713, %v893
        %v923 = vmul.f32 %v718, %v893
        %v924 = vmul.f32 %v723, %v893
        %v925 = vmul.f32 %v728, %v893
        %v926 = vmul.f32 %v733, %v893
        %v927 = vmul.f32 %v738, %v893
        %v928 = vmul.f32 %v743, %v893
        %v929 = vmul.f32 %v748, %v893
        %v930 = vmul.f32 %v753, %v893
        %v931 = vmul.f32 %v758, %v893
        %v932 = vmul.f32 %v763, %v893
        %v933 = vmul.f32 %v768, %v893
        %v934 = vmul.f32 %v773, %v893
        %v935 = vmul.f32 %v778, %v893
        %v936 = vmul.f32 %v783, %v893
        %v937 = vmul.f32 %v788, %v893
        %v938 = vmul.f32 %v793, %v893
        %v939 = vmul.f32 %v798, %v893
        %v940 = vmul.f32 %v803, %v893
        %v941 = vmul.f32 %v808, %v893
        %v942 = vmul.f32 %v813, %v893
        %v943 = vmul.f32 %v818, %v893
        %v944 = vmul.f32 %v823, %v893
        %v945 = vmul.f32 %v828, %v893
        %v946 = vmul.f32 %v833, %v893
        %v947 = vmul.f32 %v838, %v893
        %v948 = vmul.f32 %v843, %v893
        %v949 = vmul.f32 %v848, %v893
        %v950 = vmul.f32 %v853, %v893
        %v951 = vmul.f32 %v858, %v893
        %v952 = vmul.f32 %v863, %v893
        %v953 = vmul.f32 %v868, %v893
        %v954 = vmul.f32 %v873, %v893
        %v955 = vmul.f32 %v878, %v893
        %v956 = vmul.f32 %v883, %v893
        %v957 = vmul.f32 %v888, %v893
        %v959 = vlaneseq
        %v960 = vshrl.u32 %v959, 7
        %v961 = vsub.s32 0, %v960
        %v962 = vrot.slane %v569, %v961
        %v964 = vadd.f32 %v962, %v894
        %v965 = vadd.f32 %v962, %v895
        %v966 = vadd.f32 %v962, %v896
        %v967 = vadd.f32 %v962, %v897
        %v968 = vadd.f32 %v962, %v898
        %v969 = vadd.f32 %v962, %v899
        %v970 = vadd.f32 %v962, %v900
        %v971 = vadd.f32 %v962, %v901
        %v972 = vadd.f32 %v962, %v902
        %v973 = vadd.f32 %v962, %v903
        %v974 = vadd.f32 %v962, %v904
        %v975 = vadd.f32 %v962, %v905
        %v976 = vadd.f32 %v962, %v906
        %v977 = vadd.f32 %v962, %v907
        %v978 = vadd.f32 %v962, %v908
        %v979 = vadd.f32 %v962, %v909
        %v980 = vadd.f32 %v962, %v910
        %v981 = vadd.f32 %v962, %v911
        %v982 = vadd.f32 %v962, %v912
        %v983 = vadd.f32 %v962, %v913
        %v984 = vadd.f32 %v962, %v914
        %v985 = vadd.f32 %v962, %v915
        %v986 = vadd.f32 %v962, %v916
        %v987 = vadd.f32 %v962, %v917
        %v988 = vadd.f32 %v962, %v918
        %v989 = vadd.f32 %v962, %v919
        %v990 = vadd.f32 %v962, %v920
        %v991 = vadd.f32 %v962, %v921
        %v992 = vadd.f32 %v962, %v922
        %v993 = vadd.f32 %v962, %v923
        %v994 = vadd.f32 %v962, %v924
        %v995 = vadd.f32 %v962, %v925
        %v996 = vadd.f32 %v962, %v926
        %v997 = vadd.f32 %v962, %v927
        %v998 = vadd.f32 %v962, %v928
        %v999 = vadd.f32 %v962, %v929
        %v1000 = vadd.f32 %v962, %v930
        %v1001 = vadd.f32 %v962, %v931
        %v1002 = vadd.f32 %v962, %v932
        %v1003 = vadd.f32 %v962, %v933
        %v1004 = vadd.f32 %v962, %v934
        %v1005 = vadd.f32 %v962, %v935
        %v1006 = vadd.f32 %v962, %v936
        %v1007 = vadd.f32 %v962, %v937
        %v1008 = vadd.f32 %v962, %v938
        %v1009 = vadd.f32 %v962, %v939
        %v1010 = vadd.f32 %v962, %v940
        %v1011 = vadd.f32 %v962, %v941
        %v1012 = vadd.f32 %v962, %v942
        %v1013 = vadd.f32 %v962, %v943
        %v1014 = vadd.f32 %v962, %v944
        %v1015 = vadd.f32 %v962, %v945
        %v1016 = vadd.f32 %v962, %v946
        %v1017 = vadd.f32 %v962, %v947
        %v1018 = vadd.f32 %v962, %v948
        %v1019 = vadd.f32 %v962, %v949
        %v1020 = vadd.f32 %v962, %v950
        %v1021 = vadd.f32 %v962, %v951
        %v1022 = vadd.f32 %v962, %v952
        %v1023 = vadd.f32 %v962, %v953
        %v1024 = vadd.f32 %v962, %v954
        %v1025 = vadd.f32 %v962, %v955
        %v1026 = vadd.f32 %v962, %v956
        %v1027 = vadd.f32 %v962, %v957
        %1028 = vset.pattern.permute.xlu0 1
        %1029 = vperm.xlu0 %1028, %v440
        %v1030 = vpop.permute.xlu0 %1029
        %1032 = vset.pattern.permute.xlu0 1
        %1033 = vperm.xlu0 %1032, %v441
        %v1034 = vpop.permute.xlu0 %1033
        %1036 = vset.pattern.permute.xlu0 1
        %1037 = vperm.xlu0 %1036, %v442
        %v1038 = vpop.permute.xlu0 %1037
        %1040 = vset.pattern.permute.xlu0 1
        %1041 = vperm.xlu0 %1040, %v443
        %v1042 = vpop.permute.xlu0 %1041
        %1044 = vset.pattern.permute.xlu0 1
        %1045 = vperm.xlu0 %1044, %v444
        %v1046 = vpop.permute.xlu0 %1045
        %1048 = vset.pattern.permute.xlu0 1
        %1049 = vperm.xlu0 %1048, %v445
        %v1050 = vpop.permute.xlu0 %1049
        %1052 = vset.pattern.permute.xlu0 1
        %1053 = vperm.xlu0 %1052, %v446
        %v1054 = vpop.permute.xlu0 %1053
        %1056 = vset.pattern.permute.xlu0 1
        %1057 = vperm.xlu0 %1056, %v447
        %v1058 = vpop.permute.xlu0 %1057
        %1060 = vset.pattern.permute.xlu0 1
        %1061 = vperm.xlu0 %1060, %v448
        %v1062 = vpop.permute.xlu0 %1061
        %1064 = vset.pattern.permute.xlu0 1
        %1065 = vperm.xlu0 %1064, %v449
        %v1066 = vpop.permute.xlu0 %1065
        %1068 = vset.pattern.permute.xlu0 1
        %1069 = vperm.xlu0 %1068, %v450
        %v1070 = vpop.permute.xlu0 %1069
        %1072 = vset.pattern.permute.xlu0 1
        %1073 = vperm.xlu0 %1072, %v451
        %v1074 = vpop.permute.xlu0 %1073
        %1076 = vset.pattern.permute.xlu0 1
        %1077 = vperm.xlu0 %1076, %v452
        %v1078 = vpop.permute.xlu0 %1077
        %1080 = vset.pattern.permute.xlu0 1
        %1081 = vperm.xlu0 %1080, %v453
        %v1082 = vpop.permute.xlu0 %1081
        %1084 = vset.pattern.permute.xlu0 1
        %1085 = vperm.xlu0 %1084, %v454
        %v1086 = vpop.permute.xlu0 %1085
        %1088 = vset.pattern.permute.xlu0 1
        %1089 = vperm.xlu0 %1088, %v455
        %v1090 = vpop.permute.xlu0 %1089
        %1092 = vset.pattern.permute.xlu0 1
        %1093 = vperm.xlu0 %1092, %v456
        %v1094 = vpop.permute.xlu0 %1093
        %1096 = vset.pattern.permute.xlu0 1
        %1097 = vperm.xlu0 %1096, %v457
        %v1098 = vpop.permute.xlu0 %1097
        %1100 = vset.pattern.permute.xlu0 1
        %1101 = vperm.xlu0 %1100, %v458
        %v1102 = vpop.permute.xlu0 %1101
        %1104 = vset.pattern.permute.xlu0 1
        %1105 = vperm.xlu0 %1104, %v459
        %v1106 = vpop.permute.xlu0 %1105
        %1108 = vset.pattern.permute.xlu0 1
        %1109 = vperm.xlu0 %1108, %v460
        %v1110 = vpop.permute.xlu0 %1109
        %1112 = vset.pattern.permute.xlu0 1
        %1113 = vperm.xlu0 %1112, %v461
        %v1114 = vpop.permute.xlu0 %1113
        %1116 = vset.pattern.permute.xlu0 1
        %1117 = vperm.xlu0 %1116, %v462
        %v1118 = vpop.permute.xlu0 %1117
        %1120 = vset.pattern.permute.xlu0 1
        %1121 = vperm.xlu0 %1120, %v463
        %v1122 = vpop.permute.xlu0 %1121
        %1124 = vset.pattern.permute.xlu0 1
        %1125 = vperm.xlu0 %1124, %v464
        %v1126 = vpop.permute.xlu0 %1125
        %1128 = vset.pattern.permute.xlu0 1
        %1129 = vperm.xlu0 %1128, %v465
        %v1130 = vpop.permute.xlu0 %1129
        %1132 = vset.pattern.permute.xlu0 1
        %1133 = vperm.xlu0 %1132, %v466
        %v1134 = vpop.permute.xlu0 %1133
        %1136 = vset.pattern.permute.xlu0 1
        %1137 = vperm.xlu0 %1136, %v467
        %v1138 = vpop.permute.xlu0 %1137
        %1140 = vset.pattern.permute.xlu0 1
        %1141 = vperm.xlu0 %1140, %v468
        %v1142 = vpop.permute.xlu0 %1141
        %1144 = vset.pattern.permute.xlu0 1
        %1145 = vperm.xlu0 %1144, %v469
        %v1146 = vpop.permute.xlu0 %1145
        %1148 = vset.pattern.permute.xlu0 1
        %1149 = vperm.xlu0 %1148, %v470
        %v1150 = vpop.permute.xlu0 %1149
        %1152 = vset.pattern.permute.xlu0 1
        %1153 = vperm.xlu0 %1152, %v471
        %v1154 = vpop.permute.xlu0 %1153
        %1156 = vset.pattern.permute.xlu0 1
        %1157 = vperm.xlu0 %1156, %v472
        %v1158 = vpop.permute.xlu0 %1157
        %1160 = vset.pattern.permute.xlu0 1
        %1161 = vperm.xlu0 %1160, %v473
        %v1162 = vpop.permute.xlu0 %1161
        %1164 = vset.pattern.permute.xlu0 1
        %1165 = vperm.xlu0 %1164, %v474
        %v1166 = vpop.permute.xlu0 %1165
        %1168 = vset.pattern.permute.xlu0 1
        %1169 = vperm.xlu0 %1168, %v475
        %v1170 = vpop.permute.xlu0 %1169
        %1172 = vset.pattern.permute.xlu0 1
        %1173 = vperm.xlu0 %1172, %v476
        %v1174 = vpop.permute.xlu0 %1173
        %1176 = vset.pattern.permute.xlu0 1
        %1177 = vperm.xlu0 %1176, %v477
        %v1178 = vpop.permute.xlu0 %1177
        %1180 = vset.pattern.permute.xlu0 1
        %1181 = vperm.xlu0 %1180, %v478
        %v1182 = vpop.permute.xlu0 %1181
        %1184 = vset.pattern.permute.xlu0 1
        %1185 = vperm.xlu0 %1184, %v479
        %v1186 = vpop.permute.xlu0 %1185
        %1188 = vset.pattern.permute.xlu0 1
        %1189 = vperm.xlu0 %1188, %v480
        %v1190 = vpop.permute.xlu0 %1189
        %1192 = vset.pattern.permute.xlu0 1
        %1193 = vperm.xlu0 %1192, %v481
        %v1194 = vpop.permute.xlu0 %1193
        %1196 = vset.pattern.permute.xlu0 1
        %1197 = vperm.xlu0 %1196, %v482
        %v1198 = vpop.permute.xlu0 %1197
        %1200 = vset.pattern.permute.xlu0 1
        %1201 = vperm.xlu0 %1200, %v483
        %v1202 = vpop.permute.xlu0 %1201
        %1204 = vset.pattern.permute.xlu0 1
        %1205 = vperm.xlu0 %1204, %v484
        %v1206 = vpop.permute.xlu0 %1205
        %1208 = vset.pattern.permute.xlu0 1
        %1209 = vperm.xlu0 %1208, %v485
        %v1210 = vpop.permute.xlu0 %1209
        %1212 = vset.pattern.permute.xlu0 1
        %1213 = vperm.xlu0 %1212, %v486
        %v1214 = vpop.permute.xlu0 %1213
        %1216 = vset.pattern.permute.xlu0 1
        %1217 = vperm.xlu0 %1216, %v487
        %v1218 = vpop.permute.xlu0 %1217
        %1220 = vset.pattern.permute.xlu0 1
        %1221 = vperm.xlu0 %1220, %v488
        %v1222 = vpop.permute.xlu0 %1221
        %1224 = vset.pattern.permute.xlu0 1
        %1225 = vperm.xlu0 %1224, %v489
        %v1226 = vpop.permute.xlu0 %1225
        %1228 = vset.pattern.permute.xlu0 1
        %1229 = vperm.xlu0 %1228, %v490
        %v1230 = vpop.permute.xlu0 %1229
        %1232 = vset.pattern.permute.xlu0 1
        %1233 = vperm.xlu0 %1232, %v491
        %v1234 = vpop.permute.xlu0 %1233
        %1236 = vset.pattern.permute.xlu0 1
        %1237 = vperm.xlu0 %1236, %v492
        %v1238 = vpop.permute.xlu0 %1237
        %1240 = vset.pattern.permute.xlu0 1
        %1241 = vperm.xlu0 %1240, %v493
        %v1242 = vpop.permute.xlu0 %1241
        %1244 = vset.pattern.permute.xlu0 1
        %1245 = vperm.xlu0 %1244, %v494
        %v1246 = vpop.permute.xlu0 %1245
        %1248 = vset.pattern.permute.xlu0 1
        %1249 = vperm.xlu0 %1248, %v495
        %v1250 = vpop.permute.xlu0 %1249
        %1252 = vset.pattern.permute.xlu0 1
        %1253 = vperm.xlu0 %1252, %v496
        %v1254 = vpop.permute.xlu0 %1253
        %1256 = vset.pattern.permute.xlu0 1
        %1257 = vperm.xlu0 %1256, %v497
        %v1258 = vpop.permute.xlu0 %1257
        %1260 = vset.pattern.permute.xlu0 1
        %1261 = vperm.xlu0 %1260, %v498
        %v1262 = vpop.permute.xlu0 %1261
        %1264 = vset.pattern.permute.xlu0 1
        %1265 = vperm.xlu0 %1264, %v499
        %v1266 = vpop.permute.xlu0 %1265
        %1268 = vset.pattern.permute.xlu0 1
        %1269 = vperm.xlu0 %1268, %v500
        %v1270 = vpop.permute.xlu0 %1269
        %1272 = vset.pattern.permute.xlu0 1
        %1273 = vperm.xlu0 %1272, %v501
        %v1274 = vpop.permute.xlu0 %1273
        %1276 = vset.pattern.permute.xlu0 1
        %1277 = vperm.xlu0 %1276, %v502
        %v1278 = vpop.permute.xlu0 %1277
        %1280 = vset.pattern.permute.xlu0 1
        %1281 = vperm.xlu0 %1280, %v503
        %v1282 = vpop.permute.xlu0 %1281
        %v1284 = vlaneseq
        %v1285 = vshrl.u32 %v1284, 7
        %v1286 = vsub.s32 1, %v1285
        %v1287 = vrot.slane %v568, %v1286
        %v1288 = vmul.f32 %v1030, %v1287
        %v1289 = vmul.f32 %v1034, %v1287
        %v1290 = vmul.f32 %v1038, %v1287
        %v1291 = vmul.f32 %v1042, %v1287
        %v1292 = vmul.f32 %v1046, %v1287
        %v1293 = vmul.f32 %v1050, %v1287
        %v1294 = vmul.f32 %v1054, %v1287
        %v1295 = vmul.f32 %v1058, %v1287
        %v1296 = vmul.f32 %v1062, %v1287
        %v1297 = vmul.f32 %v1066, %v1287
        %v1298 = vmul.f32 %v1070, %v1287
        %v1299 = vmul.f32 %v1074, %v1287
        %v1300 = vmul.f32 %v1078, %v1287
        %v1301 = vmul.f32 %v1082, %v1287
        %v1302 = vmul.f32 %v1086, %v1287
        %v1303 = vmul.f32 %v1090, %v1287
        %v1304 = vmul.f32 %v1094, %v1287
        %v1305 = vmul.f32 %v1098, %v1287
        %v1306 = vmul.f32 %v1102, %v1287
        %v1307 = vmul.f32 %v1106, %v1287
        %v1308 = vmul.f32 %v1110, %v1287
        %v1309 = vmul.f32 %v1114, %v1287
        %v1310 = vmul.f32 %v1118, %v1287
        %v1311 = vmul.f32 %v1122, %v1287
        %v1312 = vmul.f32 %v1126, %v1287
        %v1313 = vmul.f32 %v1130, %v1287
        %v1314 = vmul.f32 %v1134, %v1287
        %v1315 = vmul.f32 %v1138, %v1287
        %v1316 = vmul.f32 %v1142, %v1287
        %v1317 = vmul.f32 %v1146, %v1287
        %v1318 = vmul.f32 %v1150, %v1287
        %v1319 = vmul.f32 %v1154, %v1287
        %v1320 = vmul.f32 %v1158, %v1287
        %v1321 = vmul.f32 %v1162, %v1287
        %v1322 = vmul.f32 %v1166, %v1287
        %v1323 = vmul.f32 %v1170, %v1287
        %v1324 = vmul.f32 %v1174, %v1287
        %v1325 = vmul.f32 %v1178, %v1287
        %v1326 = vmul.f32 %v1182, %v1287
        %v1327 = vmul.f32 %v1186, %v1287
        %v1328 = vmul.f32 %v1190, %v1287
        %v1329 = vmul.f32 %v1194, %v1287
        %v1330 = vmul.f32 %v1198, %v1287
        %v1331 = vmul.f32 %v1202, %v1287
        %v1332 = vmul.f32 %v1206, %v1287
        %v1333 = vmul.f32 %v1210, %v1287
        %v1334 = vmul.f32 %v1214, %v1287
        %v1335 = vmul.f32 %v1218, %v1287
        %v1336 = vmul.f32 %v1222, %v1287
        %v1337 = vmul.f32 %v1226, %v1287
        %v1338 = vmul.f32 %v1230, %v1287
        %v1339 = vmul.f32 %v1234, %v1287
        %v1340 = vmul.f32 %v1238, %v1287
        %v1341 = vmul.f32 %v1242, %v1287
        %v1342 = vmul.f32 %v1246, %v1287
        %v1343 = vmul.f32 %v1250, %v1287
        %v1344 = vmul.f32 %v1254, %v1287
        %v1345 = vmul.f32 %v1258, %v1287
        %v1346 = vmul.f32 %v1262, %v1287
        %v1347 = vmul.f32 %v1266, %v1287
        %v1348 = vmul.f32 %v1270, %v1287
        %v1349 = vmul.f32 %v1274, %v1287
        %v1350 = vmul.f32 %v1278, %v1287
        %v1351 = vmul.f32 %v1282, %v1287
        %v1352 = vadd.f32 %v964, %v1288
        %v1353 = vadd.f32 %v965, %v1289
        %v1354 = vadd.f32 %v966, %v1290
        %v1355 = vadd.f32 %v967, %v1291
        %v1356 = vadd.f32 %v968, %v1292
        %v1357 = vadd.f32 %v969, %v1293
        %v1358 = vadd.f32 %v970, %v1294
        %v1359 = vadd.f32 %v971, %v1295
        %v1360 = vadd.f32 %v972, %v1296
        %v1361 = vadd.f32 %v973, %v1297
        %v1362 = vadd.f32 %v974, %v1298
        %v1363 = vadd.f32 %v975, %v1299
        %v1364 = vadd.f32 %v976, %v1300
        %v1365 = vadd.f32 %v977, %v1301
        %v1366 = vadd.f32 %v978, %v1302
        %v1367 = vadd.f32 %v979, %v1303
        %v1368 = vadd.f32 %v980, %v1304
        %v1369 = vadd.f32 %v981, %v1305
        %v1370 = vadd.f32 %v982, %v1306
        %v1371 = vadd.f32 %v983, %v1307
        %v1372 = vadd.f32 %v984, %v1308
        %v1373 = vadd.f32 %v985, %v1309
        %v1374 = vadd.f32 %v986, %v1310
        %v1375 = vadd.f32 %v987, %v1311
        %v1376 = vadd.f32 %v988, %v1312
        %v1377 = vadd.f32 %v989, %v1313
        %v1378 = vadd.f32 %v990, %v1314
        %v1379 = vadd.f32 %v991, %v1315
        %v1380 = vadd.f32 %v992, %v1316
        %v1381 = vadd.f32 %v993, %v1317
        %v1382 = vadd.f32 %v994, %v1318
        %v1383 = vadd.f32 %v995, %v1319
        %v1384 = vadd.f32 %v996, %v1320
        %v1385 = vadd.f32 %v997, %v1321
        %v1386 = vadd.f32 %v998, %v1322
        %v1387 = vadd.f32 %v999, %v1323
        %v1388 = vadd.f32 %v1000, %v1324
        %v1389 = vadd.f32 %v1001, %v1325
        %v1390 = vadd.f32 %v1002, %v1326
        %v1391 = vadd.f32 %v1003, %v1327
        %v1392 = vadd.f32 %v1004, %v1328
        %v1393 = vadd.f32 %v1005, %v1329
        %v1394 = vadd.f32 %v1006, %v1330
        %v1395 = vadd.f32 %v1007, %v1331
        %v1396 = vadd.f32 %v1008, %v1332
        %v1397 = vadd.f32 %v1009, %v1333
        %v1398 = vadd.f32 %v1010, %v1334
        %v1399 = vadd.f32 %v1011, %v1335
        %v1400 = vadd.f32 %v1012, %v1336
        %v1401 = vadd.f32 %v1013, %v1337
        %v1402 = vadd.f32 %v1014, %v1338
        %v1403 = vadd.f32 %v1015, %v1339
        %v1404 = vadd.f32 %v1016, %v1340
        %v1405 = vadd.f32 %v1017, %v1341
        %v1406 = vadd.f32 %v1018, %v1342
        %v1407 = vadd.f32 %v1019, %v1343
        %v1408 = vadd.f32 %v1020, %v1344
        %v1409 = vadd.f32 %v1021, %v1345
        %v1410 = vadd.f32 %v1022, %v1346
        %v1411 = vadd.f32 %v1023, %v1347
        %v1412 = vadd.f32 %v1024, %v1348
        %v1413 = vadd.f32 %v1025, %v1349
        %v1414 = vadd.f32 %v1026, %v1350
        %v1415 = vadd.f32 %v1027, %v1351
        %1416 = vset.pattern.permute.xlu0 2
        %1417 = vperm.xlu0 %1416, %v440
        %v1418 = vpop.permute.xlu0 %1417
        %1420 = vset.pattern.permute.xlu0 2
        %1421 = vperm.xlu0 %1420, %v441
        %v1422 = vpop.permute.xlu0 %1421
        %1424 = vset.pattern.permute.xlu0 2
        %1425 = vperm.xlu0 %1424, %v442
        %v1426 = vpop.permute.xlu0 %1425
        %1428 = vset.pattern.permute.xlu0 2
        %1429 = vperm.xlu0 %1428, %v443
        %v1430 = vpop.permute.xlu0 %1429
        %1432 = vset.pattern.permute.xlu0 2
        %1433 = vperm.xlu0 %1432, %v444
        %v1434 = vpop.permute.xlu0 %1433
        %1436 = vset.pattern.permute.xlu0 2
        %1437 = vperm.xlu0 %1436, %v445
        %v1438 = vpop.permute.xlu0 %1437
        %1440 = vset.pattern.permute.xlu0 2
        %1441 = vperm.xlu0 %1440, %v446
        %v1442 = vpop.permute.xlu0 %1441
        %1444 = vset.pattern.permute.xlu0 2
        %1445 = vperm.xlu0 %1444, %v447
        %v1446 = vpop.permute.xlu0 %1445
        %1448 = vset.pattern.permute.xlu0 2
        %1449 = vperm.xlu0 %1448, %v448
        %v1450 = vpop.permute.xlu0 %1449
        %1452 = vset.pattern.permute.xlu0 2
        %1453 = vperm.xlu0 %1452, %v449
        %v1454 = vpop.permute.xlu0 %1453
        %1456 = vset.pattern.permute.xlu0 2
        %1457 = vperm.xlu0 %1456, %v450
        %v1458 = vpop.permute.xlu0 %1457
        %1460 = vset.pattern.permute.xlu0 2
        %1461 = vperm.xlu0 %1460, %v451
        %v1462 = vpop.permute.xlu0 %1461
        %1464 = vset.pattern.permute.xlu0 2
        %1465 = vperm.xlu0 %1464, %v452
        %v1466 = vpop.permute.xlu0 %1465
        %1468 = vset.pattern.permute.xlu0 2
        %1469 = vperm.xlu0 %1468, %v453
        %v1470 = vpop.permute.xlu0 %1469
        %1472 = vset.pattern.permute.xlu0 2
        %1473 = vperm.xlu0 %1472, %v454
        %v1474 = vpop.permute.xlu0 %1473
        %1476 = vset.pattern.permute.xlu0 2
        %1477 = vperm.xlu0 %1476, %v455
        %v1478 = vpop.permute.xlu0 %1477
        %1480 = vset.pattern.permute.xlu0 2
        %1481 = vperm.xlu0 %1480, %v456
        %v1482 = vpop.permute.xlu0 %1481
        %1484 = vset.pattern.permute.xlu0 2
        %1485 = vperm.xlu0 %1484, %v457
        %v1486 = vpop.permute.xlu0 %1485
        %1488 = vset.pattern.permute.xlu0 2
        %1489 = vperm.xlu0 %1488, %v458
        %v1490 = vpop.permute.xlu0 %1489
        %1492 = vset.pattern.permute.xlu0 2
        %1493 = vperm.xlu0 %1492, %v459
        %v1494 = vpop.permute.xlu0 %1493
        %1496 = vset.pattern.permute.xlu0 2
        %1497 = vperm.xlu0 %1496, %v460
        %v1498 = vpop.permute.xlu0 %1497
        %1500 = vset.pattern.permute.xlu0 2
        %1501 = vperm.xlu0 %1500, %v461
        %v1502 = vpop.permute.xlu0 %1501
        %1504 = vset.pattern.permute.xlu0 2
        %1505 = vperm.xlu0 %1504, %v462
        %v1506 = vpop.permute.xlu0 %1505
        %1508 = vset.pattern.permute.xlu0 2
        %1509 = vperm.xlu0 %1508, %v463
        %v1510 = vpop.permute.xlu0 %1509
        %1512 = vset.pattern.permute.xlu0 2
        %1513 = vperm.xlu0 %1512, %v464
        %v1514 = vpop.permute.xlu0 %1513
        %1516 = vset.pattern.permute.xlu0 2
        %1517 = vperm.xlu0 %1516, %v465
        %v1518 = vpop.permute.xlu0 %1517
        %1520 = vset.pattern.permute.xlu0 2
        %1521 = vperm.xlu0 %1520, %v466
        %v1522 = vpop.permute.xlu0 %1521
        %1524 = vset.pattern.permute.xlu0 2
        %1525 = vperm.xlu0 %1524, %v467
        %v1526 = vpop.permute.xlu0 %1525
        %1528 = vset.pattern.permute.xlu0 2
        %1529 = vperm.xlu0 %1528, %v468
        %v1530 = vpop.permute.xlu0 %1529
        %1532 = vset.pattern.permute.xlu0 2
        %1533 = vperm.xlu0 %1532, %v469
        %v1534 = vpop.permute.xlu0 %1533
        %1536 = vset.pattern.permute.xlu0 2
        %1537 = vperm.xlu0 %1536, %v470
        %v1538 = vpop.permute.xlu0 %1537
        %1540 = vset.pattern.permute.xlu0 2
        %1541 = vperm.xlu0 %1540, %v471
        %v1542 = vpop.permute.xlu0 %1541
        %1544 = vset.pattern.permute.xlu0 2
        %1545 = vperm.xlu0 %1544, %v472
        %v1546 = vpop.permute.xlu0 %1545
        %1548 = vset.pattern.permute.xlu0 2
        %1549 = vperm.xlu0 %1548, %v473
        %v1550 = vpop.permute.xlu0 %1549
        %1552 = vset.pattern.permute.xlu0 2
        %1553 = vperm.xlu0 %1552, %v474
        %v1554 = vpop.permute.xlu0 %1553
        %1556 = vset.pattern.permute.xlu0 2
        %1557 = vperm.xlu0 %1556, %v475
        %v1558 = vpop.permute.xlu0 %1557
        %1560 = vset.pattern.permute.xlu0 2
        %1561 = vperm.xlu0 %1560, %v476
        %v1562 = vpop.permute.xlu0 %1561
        %1564 = vset.pattern.permute.xlu0 2
        %1565 = vperm.xlu0 %1564, %v477
        %v1566 = vpop.permute.xlu0 %1565
        %1568 = vset.pattern.permute.xlu0 2
        %1569 = vperm.xlu0 %1568, %v478
        %v1570 = vpop.permute.xlu0 %1569
        %1572 = vset.pattern.permute.xlu0 2
        %1573 = vperm.xlu0 %1572, %v479
        %v1574 = vpop.permute.xlu0 %1573
        %1576 = vset.pattern.permute.xlu0 2
        %1577 = vperm.xlu0 %1576, %v480
        %v1578 = vpop.permute.xlu0 %1577
        %1580 = vset.pattern.permute.xlu0 2
        %1581 = vperm.xlu0 %1580, %v481
        %v1582 = vpop.permute.xlu0 %1581
        %1584 = vset.pattern.permute.xlu0 2
        %1585 = vperm.xlu0 %1584, %v482
        %v1586 = vpop.permute.xlu0 %1585
        %1588 = vset.pattern.permute.xlu0 2
        %1589 = vperm.xlu0 %1588, %v483
        %v1590 = vpop.permute.xlu0 %1589
        %1592 = vset.pattern.permute.xlu0 2
        %1593 = vperm.xlu0 %1592, %v484
        %v1594 = vpop.permute.xlu0 %1593
        %1596 = vset.pattern.permute.xlu0 2
        %1597 = vperm.xlu0 %1596, %v485
        %v1598 = vpop.permute.xlu0 %1597
        %1600 = vset.pattern.permute.xlu0 2
        %1601 = vperm.xlu0 %1600, %v486
        %v1602 = vpop.permute.xlu0 %1601
        %1604 = vset.pattern.permute.xlu0 2
        %1605 = vperm.xlu0 %1604, %v487
        %v1606 = vpop.permute.xlu0 %1605
        %1608 = vset.pattern.permute.xlu0 2
        %1609 = vperm.xlu0 %1608, %v488
        %v1610 = vpop.permute.xlu0 %1609
        %1612 = vset.pattern.permute.xlu0 2
        %1613 = vperm.xlu0 %1612, %v489
        %v1614 = vpop.permute.xlu0 %1613
        %1616 = vset.pattern.permute.xlu0 2
        %1617 = vperm.xlu0 %1616, %v490
        %v1618 = vpop.permute.xlu0 %1617
        %1620 = vset.pattern.permute.xlu0 2
        %1621 = vperm.xlu0 %1620, %v491
        %v1622 = vpop.permute.xlu0 %1621
        %1624 = vset.pattern.permute.xlu0 2
        %1625 = vperm.xlu0 %1624, %v492
        %v1626 = vpop.permute.xlu0 %1625
        %1628 = vset.pattern.permute.xlu0 2
        %1629 = vperm.xlu0 %1628, %v493
        %v1630 = vpop.permute.xlu0 %1629
        %1632 = vset.pattern.permute.xlu0 2
        %1633 = vperm.xlu0 %1632, %v494
        %v1634 = vpop.permute.xlu0 %1633
        %1636 = vset.pattern.permute.xlu0 2
        %1637 = vperm.xlu0 %1636, %v495
        %v1638 = vpop.permute.xlu0 %1637
        %1640 = vset.pattern.permute.xlu0 2
        %1641 = vperm.xlu0 %1640, %v496
        %v1642 = vpop.permute.xlu0 %1641
        %1644 = vset.pattern.permute.xlu0 2
        %1645 = vperm.xlu0 %1644, %v497
        %v1646 = vpop.permute.xlu0 %1645
        %1648 = vset.pattern.permute.xlu0 2
        %1649 = vperm.xlu0 %1648, %v498
        %v1650 = vpop.permute.xlu0 %1649
        %1652 = vset.pattern.permute.xlu0 2
        %1653 = vperm.xlu0 %1652, %v499
        %v1654 = vpop.permute.xlu0 %1653
        %1656 = vset.pattern.permute.xlu0 2
        %1657 = vperm.xlu0 %1656, %v500
        %v1658 = vpop.permute.xlu0 %1657
        %1660 = vset.pattern.permute.xlu0 2
        %1661 = vperm.xlu0 %1660, %v501
        %v1662 = vpop.permute.xlu0 %1661
        %1664 = vset.pattern.permute.xlu0 2
        %1665 = vperm.xlu0 %1664, %v502
        %v1666 = vpop.permute.xlu0 %1665
        %1668 = vset.pattern.permute.xlu0 2
        %1669 = vperm.xlu0 %1668, %v503
        %v1670 = vpop.permute.xlu0 %1669
        %v1672 = vlaneseq
        %v1673 = vshrl.u32 %v1672, 7
        %v1674 = vsub.s32 2, %v1673
        %v1675 = vrot.slane %v568, %v1674
        %v1676 = vmul.f32 %v1418, %v1675
        %v1677 = vmul.f32 %v1422, %v1675
        %v1678 = vmul.f32 %v1426, %v1675
        %v1679 = vmul.f32 %v1430, %v1675
        %v1680 = vmul.f32 %v1434, %v1675
        %v1681 = vmul.f32 %v1438, %v1675
        %v1682 = vmul.f32 %v1442, %v1675
        %v1683 = vmul.f32 %v1446, %v1675
        %v1684 = vmul.f32 %v1450, %v1675
        %v1685 = vmul.f32 %v1454, %v1675
        %v1686 = vmul.f32 %v1458, %v1675
        %v1687 = vmul.f32 %v1462, %v1675
        %v1688 = vmul.f32 %v1466, %v1675
        %v1689 = vmul.f32 %v1470, %v1675
        %v1690 = vmul.f32 %v1474, %v1675
        %v1691 = vmul.f32 %v1478, %v1675
        %v1692 = vmul.f32 %v1482, %v1675
        %v1693 = vmul.f32 %v1486, %v1675
        %v1694 = vmul.f32 %v1490, %v1675
        %v1695 = vmul.f32 %v1494, %v1675
        %v1696 = vmul.f32 %v1498, %v1675
        %v1697 = vmul.f32 %v1502, %v1675
        %v1698 = vmul.f32 %v1506, %v1675
        %v1699 = vmul.f32 %v1510, %v1675
        %v1700 = vmul.f32 %v1514, %v1675
        %v1701 = vmul.f32 %v1518, %v1675
        %v1702 = vmul.f32 %v1522, %v1675
        %v1703 = vmul.f32 %v1526, %v1675
        %v1704 = vmul.f32 %v1530, %v1675
        %v1705 = vmul.f32 %v1534, %v1675
        %v1706 = vmul.f32 %v1538, %v1675
        %v1707 = vmul.f32 %v1542, %v1675
        %v1708 = vmul.f32 %v1546, %v1675
        %v1709 = vmul.f32 %v1550, %v1675
        %v1710 = vmul.f32 %v1554, %v1675
        %v1711 = vmul.f32 %v1558, %v1675
        %v1712 = vmul.f32 %v1562, %v1675
        %v1713 = vmul.f32 %v1566, %v1675
        %v1714 = vmul.f32 %v1570, %v1675
        %v1715 = vmul.f32 %v1574, %v1675
        %v1716 = vmul.f32 %v1578, %v1675
        %v1717 = vmul.f32 %v1582, %v1675
        %v1718 = vmul.f32 %v1586, %v1675
        %v1719 = vmul.f32 %v1590, %v1675
        %v1720 = vmul.f32 %v1594, %v1675
        %v1721 = vmul.f32 %v1598, %v1675
        %v1722 = vmul.f32 %v1602, %v1675
        %v1723 = vmul.f32 %v1606, %v1675
        %v1724 = vmul.f32 %v1610, %v1675
        %v1725 = vmul.f32 %v1614, %v1675
        %v1726 = vmul.f32 %v1618, %v1675
        %v1727 = vmul.f32 %v1622, %v1675
        %v1728 = vmul.f32 %v1626, %v1675
        %v1729 = vmul.f32 %v1630, %v1675
        %v1730 = vmul.f32 %v1634, %v1675
        %v1731 = vmul.f32 %v1638, %v1675
        %v1732 = vmul.f32 %v1642, %v1675
        %v1733 = vmul.f32 %v1646, %v1675
        %v1734 = vmul.f32 %v1650, %v1675
        %v1735 = vmul.f32 %v1654, %v1675
        %v1736 = vmul.f32 %v1658, %v1675
        %v1737 = vmul.f32 %v1662, %v1675
        %v1738 = vmul.f32 %v1666, %v1675
        %v1739 = vmul.f32 %v1670, %v1675
        %v1740 = vadd.f32 %v1352, %v1676
        %v1741 = vadd.f32 %v1353, %v1677
        %v1742 = vadd.f32 %v1354, %v1678
        %v1743 = vadd.f32 %v1355, %v1679
        %v1744 = vadd.f32 %v1356, %v1680
        %v1745 = vadd.f32 %v1357, %v1681
        %v1746 = vadd.f32 %v1358, %v1682
        %v1747 = vadd.f32 %v1359, %v1683
        %v1748 = vadd.f32 %v1360, %v1684
        %v1749 = vadd.f32 %v1361, %v1685
        %v1750 = vadd.f32 %v1362, %v1686
        %v1751 = vadd.f32 %v1363, %v1687
        %v1752 = vadd.f32 %v1364, %v1688
        %v1753 = vadd.f32 %v1365, %v1689
        %v1754 = vadd.f32 %v1366, %v1690
        %v1755 = vadd.f32 %v1367, %v1691
        %v1756 = vadd.f32 %v1368, %v1692
        %v1757 = vadd.f32 %v1369, %v1693
        %v1758 = vadd.f32 %v1370, %v1694
        %v1759 = vadd.f32 %v1371, %v1695
        %v1760 = vadd.f32 %v1372, %v1696
        %v1761 = vadd.f32 %v1373, %v1697
        %v1762 = vadd.f32 %v1374, %v1698
        %v1763 = vadd.f32 %v1375, %v1699
        %v1764 = vadd.f32 %v1376, %v1700
        %v1765 = vadd.f32 %v1377, %v1701
        %v1766 = vadd.f32 %v1378, %v1702
        %v1767 = vadd.f32 %v1379, %v1703
        %v1768 = vadd.f32 %v1380, %v1704
        %v1769 = vadd.f32 %v1381, %v1705
        %v1770 = vadd.f32 %v1382, %v1706
        %v1771 = vadd.f32 %v1383, %v1707
        %v1772 = vadd.f32 %v1384, %v1708
        %v1773 = vadd.f32 %v1385, %v1709
        %v1774 = vadd.f32 %v1386, %v1710
        %v1775 = vadd.f32 %v1387, %v1711
        %v1776 = vadd.f32 %v1388, %v1712
        %v1777 = vadd.f32 %v1389, %v1713
        %v1778 = vadd.f32 %v1390, %v1714
        %v1779 = vadd.f32 %v1391, %v1715
        %v1780 = vadd.f32 %v1392, %v1716
        %v1781 = vadd.f32 %v1393, %v1717
        %v1782 = vadd.f32 %v1394, %v1718
        %v1783 = vadd.f32 %v1395, %v1719
        %v1784 = vadd.f32 %v1396, %v1720
        %v1785 = vadd.f32 %v1397, %v1721
        %v1786 = vadd.f32 %v1398, %v1722
        %v1787 = vadd.f32 %v1399, %v1723
        %v1788 = vadd.f32 %v1400, %v1724
        %v1789 = vadd.f32 %v1401, %v1725
        %v1790 = vadd.f32 %v1402, %v1726
        %v1791 = vadd.f32 %v1403, %v1727
        %v1792 = vadd.f32 %v1404, %v1728
        %v1793 = vadd.f32 %v1405, %v1729
        %v1794 = vadd.f32 %v1406, %v1730
        %v1795 = vadd.f32 %v1407, %v1731
        %v1796 = vadd.f32 %v1408, %v1732
        %v1797 = vadd.f32 %v1409, %v1733
        %v1798 = vadd.f32 %v1410, %v1734
        %v1799 = vadd.f32 %v1411, %v1735
        %v1800 = vadd.f32 %v1412, %v1736
        %v1801 = vadd.f32 %v1413, %v1737
        %v1802 = vadd.f32 %v1414, %v1738
        %v1803 = vadd.f32 %v1415, %v1739
        %v1804 = vld [vmem:[%s4] sm:$0xff]
        %v1805 = vld [vmem:[%s4 + $0x8] sm:$0xff]
        %v1806 = vld [vmem:[%s4 + $0x10] sm:$0xf]
        %v1807 = vld [vmem:[%s4 + $0x14] sm:$0xff]
        %v1808 = vld [vmem:[%s4 + $0x1c] sm:$0xff]
        %v1809 = vld [vmem:[%s4 + $0x24] sm:$0xf]
        %v1810 = vld [vmem:[%s4 + $0x28] sm:$0xff]
        %v1811 = vld [vmem:[%s4 + $0x30] sm:$0xff]
        %v1812 = vld [vmem:[%s4 + $0x38] sm:$0xf]
        %v1813 = vld [vmem:[%s4 + $0x3c] sm:$0xff]
        %v1814 = vld [vmem:[%s4 + $0x44] sm:$0xff]
        %v1815 = vld [vmem:[%s4 + $0x4c] sm:$0xf]
        %v1816 = vld [vmem:[%s4 + $0x50] sm:$0xff]
        %v1817 = vld [vmem:[%s4 + $0x58] sm:$0xff]
        %v1818 = vld [vmem:[%s4 + $0x60] sm:$0xf]
        %v1819 = vld [vmem:[%s4 + $0x64] sm:$0xff]
        %v1820 = vld [vmem:[%s4 + $0x6c] sm:$0xff]
        %v1821 = vld [vmem:[%s4 + $0x74] sm:$0xf]
        %v1822 = vld [vmem:[%s4 + $0x78] sm:$0xff]
        %v1823 = vld [vmem:[%s4 + $0x80] sm:$0xff]
        %v1824 = vld [vmem:[%s4 + $0x88] sm:$0xf]
        %v1825 = vld [vmem:[%s4 + $0x8c] sm:$0xff]
        %v1826 = vld [vmem:[%s4 + $0x94] sm:$0xff]
        %v1827 = vld [vmem:[%s4 + $0x9c] sm:$0xf]
        %v1828 = vld [vmem:[%s4 + $0xa0] sm:$0xff]
        %v1829 = vld [vmem:[%s4 + $0xa8] sm:$0xff]
        %v1830 = vld [vmem:[%s4 + $0xb0] sm:$0xf]
        %v1831 = vld [vmem:[%s4 + $0xb4] sm:$0xff]
        %v1832 = vld [vmem:[%s4 + $0xbc] sm:$0xff]
        %v1833 = vld [vmem:[%s4 + $0xc4] sm:$0xf]
        %v1834 = vld [vmem:[%s4 + $0xc8] sm:$0xff]
        %v1835 = vld [vmem:[%s4 + $0xd0] sm:$0xff]
        %v1836 = vld [vmem:[%s4 + $0xd8] sm:$0xf]
        %v1837 = vld [vmem:[%s4 + $0xdc] sm:$0xff]
        %v1838 = vld [vmem:[%s4 + $0xe4] sm:$0xff]
        %v1839 = vld [vmem:[%s4 + $0xec] sm:$0xf]
        %v1904 = vunpack.c.l.b16 %v504
        %v1905 = vunpack.c.l.b16 %v505
        %v1906 = vunpack.c.l.b16 %v506
        %v1907 = vunpack.c.l.b16 %v507
        %v1908 = vunpack.c.l.b16 %v508
        %v1909 = vunpack.c.l.b16 %v509
        %v1910 = vunpack.c.l.b16 %v510
        %v1911 = vunpack.c.l.b16 %v511
        %v1912 = vunpack.c.l.b16 %v512
        %v1913 = vunpack.c.l.b16 %v513
        %v1914 = vunpack.c.l.b16 %v514
        %v1915 = vunpack.c.l.b16 %v515
        %v1916 = vunpack.c.l.b16 %v516
        %v1917 = vunpack.c.l.b16 %v517
        %v1918 = vunpack.c.l.b16 %v518
        %v1919 = vunpack.c.l.b16 %v519
        %v1920 = vunpack.c.l.b16 %v520
        %v1921 = vunpack.c.l.b16 %v521
        %v1922 = vunpack.c.l.b16 %v522
        %v1923 = vunpack.c.l.b16 %v523
        %v1924 = vunpack.c.l.b16 %v524
        %v1925 = vunpack.c.l.b16 %v525
        %v1926 = vunpack.c.l.b16 %v526
        %v1927 = vunpack.c.l.b16 %v527
        %v1928 = vunpack.c.l.b16 %v528
        %v1929 = vunpack.c.l.b16 %v529
        %v1930 = vunpack.c.l.b16 %v530
        %v1931 = vunpack.c.l.b16 %v531
        %v1932 = vunpack.c.l.b16 %v532
        %v1933 = vunpack.c.l.b16 %v533
        %v1934 = vunpack.c.l.b16 %v534
        %v1935 = vunpack.c.l.b16 %v535
        %v1936 = vunpack.c.l.b16 %v536
        %v1937 = vunpack.c.l.b16 %v537
        %v1938 = vunpack.c.l.b16 %v538
        %v1939 = vunpack.c.l.b16 %v539
        %v1940 = vunpack.c.l.b16 %v540
        %v1941 = vunpack.c.l.b16 %v541
        %v1942 = vunpack.c.l.b16 %v542
        %v1943 = vunpack.c.l.b16 %v543
        %v1944 = vunpack.c.l.b16 %v544
        %v1945 = vunpack.c.l.b16 %v545
        %v1946 = vunpack.c.l.b16 %v546
        %v1947 = vunpack.c.l.b16 %v547
        %v1948 = vunpack.c.l.b16 %v548
        %v1949 = vunpack.c.l.b16 %v549
        %v1950 = vunpack.c.l.b16 %v550
        %v1951 = vunpack.c.l.b16 %v551
        %v1952 = vunpack.c.l.b16 %v552
        %v1953 = vunpack.c.l.b16 %v553
        %v1954 = vunpack.c.l.b16 %v554
        %v1955 = vunpack.c.l.b16 %v555
        %v1956 = vunpack.c.l.b16 %v556
        %v1957 = vunpack.c.l.b16 %v557
        %v1958 = vunpack.c.l.b16 %v558
        %v1959 = vunpack.c.l.b16 %v559
        %v1960 = vunpack.c.l.b16 %v560
        %v1961 = vunpack.c.l.b16 %v561
        %v1962 = vunpack.c.l.b16 %v562
        %v1963 = vunpack.c.l.b16 %v563
        %v1964 = vunpack.c.l.b16 %v564
        %v1965 = vunpack.c.l.b16 %v565
        %v1966 = vunpack.c.l.b16 %v566
        %v1967 = vunpack.c.l.b16 %v567
        %v1968 = vpack.c.b16 %v1905, %v1904
        %v1969 = vpack.c.b16 %v1907, %v1906
        %v1970 = vpack.c.b16 %v1909, %v1908
        %v1971 = vpack.c.b16 %v1911, %v1910
        %v1972 = vpack.c.b16 %v1913, %v1912
        %v1973 = vpack.c.b16 %v1915, %v1914
        %v1974 = vpack.c.b16 %v1917, %v1916
        %v1975 = vpack.c.b16 %v1919, %v1918
        %v1976 = vpack.c.b16 %v1921, %v1920
        %v1977 = vpack.c.b16 %v1923, %v1922
        %v1978 = vpack.c.b16 %v1925, %v1924
        %v1979 = vpack.c.b16 %v1927, %v1926
        %v1980 = vpack.c.b16 %v1929, %v1928
        %v1981 = vpack.c.b16 %v1931, %v1930
        %v1982 = vpack.c.b16 %v1933, %v1932
        %v1983 = vpack.c.b16 %v1935, %v1934
        %v1984 = vpack.c.b16 %v1937, %v1936
        %v1985 = vpack.c.b16 %v1939, %v1938
        %v1986 = vpack.c.b16 %v1941, %v1940
        %v1987 = vpack.c.b16 %v1943, %v1942
        %v1988 = vpack.c.b16 %v1945, %v1944
        %v1989 = vpack.c.b16 %v1947, %v1946
        %v1990 = vpack.c.b16 %v1949, %v1948
        %v1991 = vpack.c.b16 %v1951, %v1950
        %v1992 = vpack.c.b16 %v1953, %v1952
        %v1993 = vpack.c.b16 %v1955, %v1954
        %v1994 = vpack.c.b16 %v1957, %v1956
        %v1995 = vpack.c.b16 %v1959, %v1958
        %v1996 = vpack.c.b16 %v1961, %v1960
        %v1997 = vpack.c.b16 %v1963, %v1962
        %v1998 = vpack.c.b16 %v1965, %v1964
        %v1999 = vpack.c.b16 %v1967, %v1966
        %v2036 = vunpack.c.l.b16 %v1804
        %v2037 = vunpack.c.h.b16 %v1804
        %v2038 = vunpack.c.l.b16 %v1805
        %v2039 = vunpack.c.h.b16 %v1805
        %v2040 = vunpack.c.l.b16 %v1806
        %v2041 = vunpack.c.l.b16 %v1807
        %v2042 = vunpack.c.h.b16 %v1807
        %v2043 = vunpack.c.l.b16 %v1808
        %v2044 = vunpack.c.h.b16 %v1808
        %v2045 = vunpack.c.l.b16 %v1809
        %v2046 = vunpack.c.l.b16 %v1810
        %v2047 = vunpack.c.h.b16 %v1810
        %v2048 = vunpack.c.l.b16 %v1811
        %v2049 = vunpack.c.h.b16 %v1811
        %v2050 = vunpack.c.l.b16 %v1812
        %v2051 = vunpack.c.l.b16 %v1813
        %v2052 = vunpack.c.h.b16 %v1813
        %v2053 = vunpack.c.l.b16 %v1814
        %v2054 = vunpack.c.h.b16 %v1814
        %v2055 = vunpack.c.l.b16 %v1815
        %v2056 = vunpack.c.l.b16 %v1816
        %v2057 = vunpack.c.h.b16 %v1816
        %v2058 = vunpack.c.l.b16 %v1817
        %v2059 = vunpack.c.h.b16 %v1817
        %v2060 = vunpack.c.l.b16 %v1818
        %v2061 = vunpack.c.l.b16 %v1819
        %v2062 = vunpack.c.h.b16 %v1819
        %v2063 = vunpack.c.l.b16 %v1820
        %v2064 = vunpack.c.h.b16 %v1820
        %v2065 = vunpack.c.l.b16 %v1821
        %v2066 = vunpack.c.l.b16 %v1822
        %v2067 = vunpack.c.h.b16 %v1822
        %v2068 = vunpack.c.l.b16 %v1823
        %v2069 = vunpack.c.h.b16 %v1823
        %v2070 = vunpack.c.l.b16 %v1824
        %v2071 = vunpack.c.l.b16 %v1825
        %v2072 = vunpack.c.h.b16 %v1825
        %v2073 = vunpack.c.l.b16 %v1826
        %v2074 = vunpack.c.h.b16 %v1826
        %v2075 = vunpack.c.l.b16 %v1827
        %v2076 = vunpack.c.l.b16 %v1828
        %v2077 = vunpack.c.h.b16 %v1828
        %v2078 = vunpack.c.l.b16 %v1829
        %v2079 = vunpack.c.h.b16 %v1829
        %v2080 = vunpack.c.l.b16 %v1830
        %v2081 = vunpack.c.l.b16 %v1831
        %v2082 = vunpack.c.h.b16 %v1831
        %v2083 = vunpack.c.l.b16 %v1832
        %v2084 = vunpack.c.h.b16 %v1832
        %v2085 = vunpack.c.l.b16 %v1833
        %v2086 = vunpack.c.l.b16 %v1834
        %v2087 = vunpack.c.h.b16 %v1834
        %v2088 = vunpack.c.l.b16 %v1835
        %v2089 = vunpack.c.h.b16 %v1835
        %v2090 = vunpack.c.l.b16 %v1836
        %v2091 = vunpack.c.l.b16 %v1837
        %v2092 = vunpack.c.h.b16 %v1837
        %v2093 = vunpack.c.l.b16 %v1838
        %v2094 = vunpack.c.h.b16 %v1838
        %v2095 = vunpack.c.l.b16 %v1839
        %v2096 = vpack.c.b16 %v2041, %v2036
        %v2097 = vpack.c.b16 %v2042, %v2037
        %v2098 = vpack.c.b16 %v2043, %v2038
        %v2099 = vpack.c.b16 %v2044, %v2039
        %v2100 = vpack.c.b16 %v2045, %v2040
        %v2101 = vpack.c.b16 %v2051, %v2046
        %v2102 = vpack.c.b16 %v2052, %v2047
        %v2103 = vpack.c.b16 %v2053, %v2048
        %v2104 = vpack.c.b16 %v2054, %v2049
        %v2105 = vpack.c.b16 %v2055, %v2050
        %v2106 = vpack.c.b16 %v2061, %v2056
        %v2107 = vpack.c.b16 %v2062, %v2057
        %v2108 = vpack.c.b16 %v2063, %v2058
        %v2109 = vpack.c.b16 %v2064, %v2059
        %v2110 = vpack.c.b16 %v2065, %v2060
        %v2111 = vpack.c.b16 %v2071, %v2066
        %v2112 = vpack.c.b16 %v2072, %v2067
        %v2113 = vpack.c.b16 %v2073, %v2068
        %v2114 = vpack.c.b16 %v2074, %v2069
        %v2115 = vpack.c.b16 %v2075, %v2070
        %v2116 = vpack.c.b16 %v2081, %v2076
        %v2117 = vpack.c.b16 %v2082, %v2077
        %v2118 = vpack.c.b16 %v2083, %v2078
        %v2119 = vpack.c.b16 %v2084, %v2079
        %v2120 = vpack.c.b16 %v2085, %v2080
        %v2121 = vpack.c.b16 %v2091, %v2086
        %v2122 = vpack.c.b16 %v2092, %v2087
        %v2123 = vpack.c.b16 %v2093, %v2088
        %v2124 = vpack.c.b16 %v2094, %v2089
        %v2125 = vpack.c.b16 %v2095, %v2090
        %vm2156 = vcmask 785408
        %v2158 = vsel %vm2156, %v1968, 0
        %v2161 = vsel %vm2156, %v1969, 0
        %v2164 = vsel %vm2156, %v1970, 0
        %v2167 = vsel %vm2156, %v1971, 0
        %v2170 = vsel %vm2156, %v1972, 0
        %v2173 = vsel %vm2156, %v1973, 0
        %v2176 = vsel %vm2156, %v1974, 0
        %v2179 = vsel %vm2156, %v1975, 0
        %v2182 = vsel %vm2156, %v1976, 0
        %v2185 = vsel %vm2156, %v1977, 0
        %v2188 = vsel %vm2156, %v1978, 0
        %v2191 = vsel %vm2156, %v1979, 0
        %v2194 = vsel %vm2156, %v1980, 0
        %v2197 = vsel %vm2156, %v1981, 0
        %v2200 = vsel %vm2156, %v1982, 0
        %v2203 = vsel %vm2156, %v1983, 0
        %v2206 = vsel %vm2156, %v1984, 0
        %v2209 = vsel %vm2156, %v1985, 0
        %v2212 = vsel %vm2156, %v1986, 0
        %v2215 = vsel %vm2156, %v1987, 0
        %v2218 = vsel %vm2156, %v1988, 0
        %v2221 = vsel %vm2156, %v1989, 0
        %v2224 = vsel %vm2156, %v1990, 0
        %v2227 = vsel %vm2156, %v1991, 0
        %v2230 = vsel %vm2156, %v1992, 0
        %v2233 = vsel %vm2156, %v1993, 0
        %v2236 = vsel %vm2156, %v1994, 0
        %v2239 = vsel %vm2156, %v1995, 0
        %v2242 = vsel %vm2156, %v1996, 0
        %v2245 = vsel %vm2156, %v1997, 0
        %v2248 = vsel %vm2156, %v1998, 0
        %v2251 = vsel %vm2156, %v1999, 0
        %2253 = vmatprep.subr.bf16.mxu0 %v2097
        %2254 = vmatpush1.bf16.msra.mxu0 %v2096
        %2255 = vmatprep.subr.bf16.mxu0 %v2102
        %2256 = vmatpush1.bf16.msra.mxu0 %v2101
        %2257 = vmatprep.subr.bf16.mxu0 %v2107
        %2258 = vmatpush1.bf16.msra.mxu0 %v2106
        %2259 = vmatprep.subr.bf16.mxu0 %v2112
        %2260 = vmatpush1.bf16.msra.mxu0 %v2111
        %2261 = vmatprep.subr.bf16.mxu0 %v2117
        %2262 = vmatpush1.bf16.msra.mxu0 %v2116
        %2263 = vmatprep.subr.bf16.mxu0 %v2122
        %2264 = vmatpush1.bf16.msra.mxu0 %v2121
        %2265 = vmatprep.subr.bf16.mxu0 0
        %2266 = vmatpush1.bf16.msra.mxu0 0
        %2267 = vmatprep.subr.bf16.mxu0 0
        %2268 = vmatpush1.bf16.msra.mxu0 0
        %2269 = vmatprep.subr.bf16.mxu0 0
        %2270 = vmatpush1.bf16.msra.mxu0 0
        %2271 = vmatprep.subr.bf16.mxu0 0
        %2272 = vmatpush1.bf16.msra.mxu0 0
        %2273 = vmatprep.subr.bf16.mxu0 0
        %2274 = vmatpush1.bf16.msra.mxu0 0
        %2275 = vmatprep.subr.bf16.mxu0 0
        %2276 = vmatpush1.bf16.msra.mxu0 0
        %2277 = vmatprep.subr.bf16.mxu0 0
        %2278 = vmatpush1.bf16.msra.mxu0 0
        %2279 = vmatprep.subr.bf16.mxu0 0
        %2280 = vmatpush1.bf16.msra.mxu0 0
        %2281 = vmatprep.subr.bf16.mxu0 0
        %2282 = vmatpush1.bf16.msra.mxu0 0
        %2283 = vmatprep.subr.bf16.mxu0 0
        %2284 = vmatpush1.bf16.msra.mxu0 0
        %2285 = vmatprep.mubr.bf16.mxu0 0
        %2286 = vmatmul.mubr.bf16.gmra.mrb[0].mxu0 %v2158
        %v2287 = vpop.f32.mrb[0].mxu0
        %v2288 = vadd.f32 0.0, %v2287
        %v2289 = vpop.f32.mrb[0].mxu0
        %v2290 = vadd.f32 0.0, %v2289
        %v2291 = vpop.f32.mrb[0].mxu0
        %v2292 = vadd.f32 0.0, %v2291
        %v2293 = vpop.f32.mrb[0].mxu0
        %v2294 = vadd.f32 0.0, %v2293
        %2295 = vmatprep.mubr.bf16.mxu0 0
        %2296 = vmatmul.mubr.bf16.gmra.mrb[0].mxu0 %v2161
        %v2297 = vpop.f32.mrb[0].mxu0
        %v2298 = vadd.f32 0.0, %v2297
        %v2299 = vpop.f32.mrb[0].mxu0
        %v2300 = vadd.f32 0.0, %v2299
        %v2301 = vpop.f32.mrb[0].mxu0
        %v2302 = vadd.f32 0.0, %v2301
        %v2303 = vpop.f32.mrb[0].mxu0
        %v2304 = vadd.f32 0.0, %v2303
        %2305 = vmatprep.mubr.bf16.mxu0 0
        %2306 = vmatmul.mubr.bf16.gmra.mrb[0].mxu0 %v2164
        %v2307 = vpop.f32.mrb[0].mxu0
        %v2308 = vadd.f32 0.0, %v2307
        %v2309 = vpop.f32.mrb[0].mxu0
        %v2310 = vadd.f32 0.0, %v2309
        %v2311 = vpop.f32.mrb[0].mxu0
        %v2312 = vadd.f32 0.0, %v2311
        %v2313 = vpop.f32.mrb[0].mxu0
        %v2314 = vadd.f32 0.0, %v2313
        %2315 = vmatprep.mubr.bf16.mxu0 0
        %2316 = vmatmul.mubr.bf16.gmra.mrb[0].mxu0 %v2167
        %v2317 = vpop.f32.mrb[0].mxu0
        %v2318 = vadd.f32 0.0, %v2317
        %v2319 = vpop.f32.mrb[0].mxu0
        %v2320 = vadd.f32 0.0, %v2319
        %v2321 = vpop.f32.mrb[0].mxu0
        %v2322 = vadd.f32 0.0, %v2321
        %v2323 = vpop.f32.mrb[0].mxu0
        %v2324 = vadd.f32 0.0, %v2323
        %2325 = vmatprep.mubr.bf16.mxu0 0
        %2326 = vmatmul.mubr.bf16.gmra.mrb[0].mxu0 %v2170
        %v2327 = vpop.f32.mrb[0].mxu0
        %v2328 = vadd.f32 0.0, %v2327
        %v2329 = vpop.f32.mrb[0].mxu0
        %v2330 = vadd.f32 0.0, %v2329
        %v2331 = vpop.f32.mrb[0].mxu0
        %v2332 = vadd.f32 0.0, %v2331
        %v2333 = vpop.f32.mrb[0].mxu0
        %v2334 = vadd.f32 0.0, %v2333
        %2335 = vmatprep.mubr.bf16.mxu0 0
        %2336 = vmatmul.mubr.bf16.gmra.mrb[0].mxu0 %v2173
        %v2337 = vpop.f32.mrb[0].mxu0
        %v2338 = vadd.f32 0.0, %v2337
        %v2339 = vpop.f32.mrb[0].mxu0
        %v2340 = vadd.f32 0.0, %v2339
        %v2341 = vpop.f32.mrb[0].mxu0
        %v2342 = vadd.f32 0.0, %v2341
        %v2343 = vpop.f32.mrb[0].mxu0
        %v2344 = vadd.f32 0.0, %v2343
        %2345 = vmatprep.mubr.bf16.mxu0 0
        %2346 = vmatmul.mubr.bf16.gmra.mrb[0].mxu0 %v2176
        %v2347 = vpop.f32.mrb[0].mxu0
        %v2348 = vadd.f32 0.0, %v2347
        %v2349 = vpop.f32.mrb[0].mxu0
        %v2350 = vadd.f32 0.0, %v2349
        %v2351 = vpop.f32.mrb[0].mxu0
        %v2352 = vadd.f32 0.0, %v2351
        %v2353 = vpop.f32.mrb[0].mxu0
        %v2354 = vadd.f32 0.0, %v2353
        %2355 = vmatprep.mubr.bf16.mxu0 0
        %2356 = vmatmul.mubr.bf16.gmra.mrb[0].mxu0 %v2179
        %v2357 = vpop.f32.mrb[0].mxu0
        %v2358 = vadd.f32 0.0, %v2357
        %v2359 = vpop.f32.mrb[0].mxu0
        %v2360 = vadd.f32 0.0, %v2359
        %v2361 = vpop.f32.mrb[0].mxu0
        %v2362 = vadd.f32 0.0, %v2361
        %v2363 = vpop.f32.mrb[0].mxu0
        %v2364 = vadd.f32 0.0, %v2363
        %2365 = vmatprep.mubr.bf16.mxu0 0
        %2366 = vmatmul.mubr.bf16.gmra.mrb[0].mxu0 %v2182
        %v2367 = vpop.f32.mrb[0].mxu0
        %v2368 = vadd.f32 0.0, %v2367
        %v2369 = vpop.f32.mrb[0].mxu0
        %v2370 = vadd.f32 0.0, %v2369
        %v2371 = vpop.f32.mrb[0].mxu0
        %v2372 = vadd.f32 0.0, %v2371
        %v2373 = vpop.f32.mrb[0].mxu0
        %v2374 = vadd.f32 0.0, %v2373
        %2375 = vmatprep.mubr.bf16.mxu0 0
        %2376 = vmatmul.mubr.bf16.gmra.mrb[0].mxu0 %v2185
        %v2377 = vpop.f32.mrb[0].mxu0
        %v2378 = vadd.f32 0.0, %v2377
        %v2379 = vpop.f32.mrb[0].mxu0
        %v2380 = vadd.f32 0.0, %v2379
        %v2381 = vpop.f32.mrb[0].mxu0
        %v2382 = vadd.f32 0.0, %v2381
        %v2383 = vpop.f32.mrb[0].mxu0
        %v2384 = vadd.f32 0.0, %v2383
        %2385 = vmatprep.mubr.bf16.mxu0 0
        %2386 = vmatmul.mubr.bf16.gmra.mrb[0].mxu0 %v2188
        %v2387 = vpop.f32.mrb[0].mxu0
        %v2388 = vadd.f32 0.0, %v2387
        %v2389 = vpop.f32.mrb[0].mxu0
        %v2390 = vadd.f32 0.0, %v2389
        %v2391 = vpop.f32.mrb[0].mxu0
        %v2392 = vadd.f32 0.0, %v2391
        %v2393 = vpop.f32.mrb[0].mxu0
        %v2394 = vadd.f32 0.0, %v2393
        %2395 = vmatprep.mubr.bf16.mxu0 0
        %2396 = vmatmul.mubr.bf16.gmra.mrb[0].mxu0 %v2191
        %v2397 = vpop.f32.mrb[0].mxu0
        %v2398 = vadd.f32 0.0, %v2397
        %v2399 = vpop.f32.mrb[0].mxu0
        %v2400 = vadd.f32 0.0, %v2399
        %v2401 = vpop.f32.mrb[0].mxu0
        %v2402 = vadd.f32 0.0, %v2401
        %v2403 = vpop.f32.mrb[0].mxu0
        %v2404 = vadd.f32 0.0, %v2403
        %2405 = vmatprep.mubr.bf16.mxu0 0
        %2406 = vmatmul.mubr.bf16.gmra.mrb[0].mxu0 %v2194
        %v2407 = vpop.f32.mrb[0].mxu0
        %v2408 = vadd.f32 0.0, %v2407
        %v2409 = vpop.f32.mrb[0].mxu0
        %v2410 = vadd.f32 0.0, %v2409
        %v2411 = vpop.f32.mrb[0].mxu0
        %v2412 = vadd.f32 0.0, %v2411
        %v2413 = vpop.f32.mrb[0].mxu0
        %v2414 = vadd.f32 0.0, %v2413
        %2415 = vmatprep.mubr.bf16.mxu0 0
        %2416 = vmatmul.mubr.bf16.gmra.mrb[0].mxu0 %v2197
        %v2417 = vpop.f32.mrb[0].mxu0
        %v2418 = vadd.f32 0.0, %v2417
        %v2419 = vpop.f32.mrb[0].mxu0
        %v2420 = vadd.f32 0.0, %v2419
        %v2421 = vpop.f32.mrb[0].mxu0
        %v2422 = vadd.f32 0.0, %v2421
        %v2423 = vpop.f32.mrb[0].mxu0
        %v2424 = vadd.f32 0.0, %v2423
        %2425 = vmatprep.mubr.bf16.mxu0 0
        %2426 = vmatmul.mubr.bf16.gmra.mrb[0].mxu0 %v2200
        %v2427 = vpop.f32.mrb[0].mxu0
        %v2428 = vadd.f32 0.0, %v2427
        %v2429 = vpop.f32.mrb[0].mxu0
        %v2430 = vadd.f32 0.0, %v2429
        %v2431 = vpop.f32.mrb[0].mxu0
        %v2432 = vadd.f32 0.0, %v2431
        %v2433 = vpop.f32.mrb[0].mxu0
        %v2434 = vadd.f32 0.0, %v2433
        %2435 = vmatprep.mubr.bf16.mxu0 0
        %2436 = vmatmul.mubr.bf16.gmra.mrb[0].mxu0 %v2203
        %v2437 = vpop.f32.mrb[0].mxu0
        %v2438 = vadd.f32 0.0, %v2437
        %v2439 = vpop.f32.mrb[0].mxu0
        %v2440 = vadd.f32 0.0, %v2439
        %v2441 = vpop.f32.mrb[0].mxu0
        %v2442 = vadd.f32 0.0, %v2441
        %v2443 = vpop.f32.mrb[0].mxu0
        %v2444 = vadd.f32 0.0, %v2443
        %2445 = vmatprep.mubr.bf16.mxu0 0
        %2446 = vmatmul.mubr.bf16.gmra.mrb[0].mxu0 %v2206
        %v2447 = vpop.f32.mrb[0].mxu0
        %v2448 = vadd.f32 0.0, %v2447
        %v2449 = vpop.f32.mrb[0].mxu0
        %v2450 = vadd.f32 0.0, %v2449
        %v2451 = vpop.f32.mrb[0].mxu0
        %v2452 = vadd.f32 0.0, %v2451
        %v2453 = vpop.f32.mrb[0].mxu0
        %v2454 = vadd.f32 0.0, %v2453
        %2455 = vmatprep.mubr.bf16.mxu0 0
        %2456 = vmatmul.mubr.bf16.gmra.mrb[0].mxu0 %v2209
        %v2457 = vpop.f32.mrb[0].mxu0
        %v2458 = vadd.f32 0.0, %v2457
        %v2459 = vpop.f32.mrb[0].mxu0
        %v2460 = vadd.f32 0.0, %v2459
        %v2461 = vpop.f32.mrb[0].mxu0
        %v2462 = vadd.f32 0.0, %v2461
        %v2463 = vpop.f32.mrb[0].mxu0
        %v2464 = vadd.f32 0.0, %v2463
        %2465 = vmatprep.mubr.bf16.mxu0 0
        %2466 = vmatmul.mubr.bf16.gmra.mrb[0].mxu0 %v2212
        %v2467 = vpop.f32.mrb[0].mxu0
        %v2468 = vadd.f32 0.0, %v2467
        %v2469 = vpop.f32.mrb[0].mxu0
        %v2470 = vadd.f32 0.0, %v2469
        %v2471 = vpop.f32.mrb[0].mxu0
        %v2472 = vadd.f32 0.0, %v2471
        %v2473 = vpop.f32.mrb[0].mxu0
        %v2474 = vadd.f32 0.0, %v2473
        %2475 = vmatprep.mubr.bf16.mxu0 0
        %2476 = vmatmul.mubr.bf16.gmra.mrb[0].mxu0 %v2215
        %v2477 = vpop.f32.mrb[0].mxu0
        %v2478 = vadd.f32 0.0, %v2477
        %v2479 = vpop.f32.mrb[0].mxu0
        %v2480 = vadd.f32 0.0, %v2479
        %v2481 = vpop.f32.mrb[0].mxu0
        %v2482 = vadd.f32 0.0, %v2481
        %v2483 = vpop.f32.mrb[0].mxu0
        %v2484 = vadd.f32 0.0, %v2483
        %2485 = vmatprep.mubr.bf16.mxu0 0
        %2486 = vmatmul.mubr.bf16.gmra.mrb[0].mxu0 %v2218
        %v2487 = vpop.f32.mrb[0].mxu0
        %v2488 = vadd.f32 0.0, %v2487
        %v2489 = vpop.f32.mrb[0].mxu0
        %v2490 = vadd.f32 0.0, %v2489
        %v2491 = vpop.f32.mrb[0].mxu0
        %v2492 = vadd.f32 0.0, %v2491
        %v2493 = vpop.f32.mrb[0].mxu0
        %v2494 = vadd.f32 0.0, %v2493
        %2495 = vmatprep.mubr.bf16.mxu0 0
        %2496 = vmatmul.mubr.bf16.gmra.mrb[0].mxu0 %v2221
        %v2497 = vpop.f32.mrb[0].mxu0
        %v2498 = vadd.f32 0.0, %v2497
        %v2499 = vpop.f32.mrb[0].mxu0
        %v2500 = vadd.f32 0.0, %v2499
        %v2501 = vpop.f32.mrb[0].mxu0
        %v2502 = vadd.f32 0.0, %v2501
        %v2503 = vpop.f32.mrb[0].mxu0
        %v2504 = vadd.f32 0.0, %v2503
        %2505 = vmatprep.mubr.bf16.mxu0 0
        %2506 = vmatmul.mubr.bf16.gmra.mrb[0].mxu0 %v2224
        %v2507 = vpop.f32.mrb[0].mxu0
        %v2508 = vadd.f32 0.0, %v2507
        %v2509 = vpop.f32.mrb[0].mxu0
        %v2510 = vadd.f32 0.0, %v2509
        %v2511 = vpop.f32.mrb[0].mxu0
        %v2512 = vadd.f32 0.0, %v2511
        %v2513 = vpop.f32.mrb[0].mxu0
        %v2514 = vadd.f32 0.0, %v2513
        %2515 = vmatprep.mubr.bf16.mxu0 0
        %2516 = vmatmul.mubr.bf16.gmra.mrb[0].mxu0 %v2227
        %v2517 = vpop.f32.mrb[0].mxu0
        %v2518 = vadd.f32 0.0, %v2517
        %v2519 = vpop.f32.mrb[0].mxu0
        %v2520 = vadd.f32 0.0, %v2519
        %v2521 = vpop.f32.mrb[0].mxu0
        %v2522 = vadd.f32 0.0, %v2521
        %v2523 = vpop.f32.mrb[0].mxu0
        %v2524 = vadd.f32 0.0, %v2523
        %2525 = vmatprep.mubr.bf16.mxu0 0
        %2526 = vmatmul.mubr.bf16.gmra.mrb[0].mxu0 %v2230
        %v2527 = vpop.f32.mrb[0].mxu0
        %v2528 = vadd.f32 0.0, %v2527
        %v2529 = vpop.f32.mrb[0].mxu0
        %v2530 = vadd.f32 0.0, %v2529
        %v2531 = vpop.f32.mrb[0].mxu0
        %v2532 = vadd.f32 0.0, %v2531
        %v2533 = vpop.f32.mrb[0].mxu0
        %v2534 = vadd.f32 0.0, %v2533
        %2535 = vmatprep.mubr.bf16.mxu0 0
        %2536 = vmatmul.mubr.bf16.gmra.mrb[0].mxu0 %v2233
        %v2537 = vpop.f32.mrb[0].mxu0
        %v2538 = vadd.f32 0.0, %v2537
        %v2539 = vpop.f32.mrb[0].mxu0
        %v2540 = vadd.f32 0.0, %v2539
        %v2541 = vpop.f32.mrb[0].mxu0
        %v2542 = vadd.f32 0.0, %v2541
        %v2543 = vpop.f32.mrb[0].mxu0
        %v2544 = vadd.f32 0.0, %v2543
        %2545 = vmatprep.mubr.bf16.mxu0 0
        %2546 = vmatmul.mubr.bf16.gmra.mrb[0].mxu0 %v2236
        %v2547 = vpop.f32.mrb[0].mxu0
        %v2548 = vadd.f32 0.0, %v2547
        %v2549 = vpop.f32.mrb[0].mxu0
        %v2550 = vadd.f32 0.0, %v2549
        %v2551 = vpop.f32.mrb[0].mxu0
        %v2552 = vadd.f32 0.0, %v2551
        %v2553 = vpop.f32.mrb[0].mxu0
        %v2554 = vadd.f32 0.0, %v2553
        %2555 = vmatprep.mubr.bf16.mxu0 0
        %2556 = vmatmul.mubr.bf16.gmra.mrb[0].mxu0 %v2239
        %v2557 = vpop.f32.mrb[0].mxu0
        %v2558 = vadd.f32 0.0, %v2557
        %v2559 = vpop.f32.mrb[0].mxu0
        %v2560 = vadd.f32 0.0, %v2559
        %v2561 = vpop.f32.mrb[0].mxu0
        %v2562 = vadd.f32 0.0, %v2561
        %v2563 = vpop.f32.mrb[0].mxu0
        %v2564 = vadd.f32 0.0, %v2563
        %2565 = vmatprep.mubr.bf16.mxu0 0
        %2566 = vmatmul.mubr.bf16.gmra.mrb[0].mxu0 %v2242
        %v2567 = vpop.f32.mrb[0].mxu0
        %v2568 = vadd.f32 0.0, %v2567
        %v2569 = vpop.f32.mrb[0].mxu0
        %v2570 = vadd.f32 0.0, %v2569
        %v2571 = vpop.f32.mrb[0].mxu0
        %v2572 = vadd.f32 0.0, %v2571
        %v2573 = vpop.f32.mrb[0].mxu0
        %v2574 = vadd.f32 0.0, %v2573
        %2575 = vmatprep.mubr.bf16.mxu0 0
        %2576 = vmatmul.mubr.bf16.gmra.mrb[0].mxu0 %v2245
        %v2577 = vpop.f32.mrb[0].mxu0
        %v2578 = vadd.f32 0.0, %v2577
        %v2579 = vpop.f32.mrb[0].mxu0
        %v2580 = vadd.f32 0.0, %v2579
        %v2581 = vpop.f32.mrb[0].mxu0
        %v2582 = vadd.f32 0.0, %v2581
        %v2583 = vpop.f32.mrb[0].mxu0
        %v2584 = vadd.f32 0.0, %v2583
        %2585 = vmatprep.mubr.bf16.mxu0 0
        %2586 = vmatmul.mubr.bf16.gmra.mrb[0].mxu0 %v2248
        %v2587 = vpop.f32.mrb[0].mxu0
        %v2588 = vadd.f32 0.0, %v2587
        %v2589 = vpop.f32.mrb[0].mxu0
        %v2590 = vadd.f32 0.0, %v2589
        %v2591 = vpop.f32.mrb[0].mxu0
        %v2592 = vadd.f32 0.0, %v2591
        %v2593 = vpop.f32.mrb[0].mxu0
        %v2594 = vadd.f32 0.0, %v2593
        %2595 = vmatprep.mubr.bf16.mxu0 0
        %2596 = vmatmul.mubr.bf16.gmra.mrb[0].mxu0 %v2251
        %v2597 = vpop.f32.mrb[0].mxu0
        %v2598 = vadd.f32 0.0, %v2597
        %v2599 = vpop.f32.mrb[0].mxu0
        %v2600 = vadd.f32 0.0, %v2599
        %v2601 = vpop.f32.mrb[0].mxu0
        %v2602 = vadd.f32 0.0, %v2601
        %v2603 = vpop.f32.mrb[0].mxu0
        %v2604 = vadd.f32 0.0, %v2603
        %2605 = vdwg.mxu0
        %2606 = vmatprep.subr.bf16.mxu0 %v2099
        %2607 = vmatpush1.bf16.msra.mxu0 %v2098
        %2608 = vmatprep.subr.bf16.mxu0 %v2104
        %2609 = vmatpush1.bf16.msra.mxu0 %v2103
        %2610 = vmatprep.subr.bf16.mxu0 %v2109
        %2611 = vmatpush1.bf16.msra.mxu0 %v2108
        %2612 = vmatprep.subr.bf16.mxu0 %v2114
        %2613 = vmatpush1.bf16.msra.mxu0 %v2113
        %2614 = vmatprep.subr.bf16.mxu0 %v2119
        %2615 = vmatpush1.bf16.msra.mxu0 %v2118
        %2616 = vmatprep.subr.bf16.mxu0 %v2124
        %2617 = vmatpush1.bf16.msra.mxu0 %v2123
        %2618 = vmatprep.subr.bf16.mxu0 0
        %2619 = vmatpush1.bf16.msra.mxu0 0
        %2620 = vmatprep.subr.bf16.mxu0 0
        %2621 = vmatpush1.bf16.msra.mxu0 0
        %2622 = vmatprep.subr.bf16.mxu0 0
        %2623 = vmatpush1.bf16.msra.mxu0 0
        %2624 = vmatprep.subr.bf16.mxu0 0
        %2625 = vmatpush1.bf16.msra.mxu0 0
        %2626 = vmatprep.subr.bf16.mxu0 0
        %2627 = vmatpush1.bf16.msra.mxu0 0
        %2628 = vmatprep.subr.bf16.mxu0 0
        %2629 = vmatpush1.bf16.msra.mxu0 0
        %2630 = vmatprep.subr.bf16.mxu0 0
        %2631 = vmatpush1.bf16.msra.mxu0 0
        %2632 = vmatprep.subr.bf16.mxu0 0
        %2633 = vmatpush1.bf16.msra.mxu0 0
        %2634 = vmatprep.subr.bf16.mxu0 0
        %2635 = vmatpush1.bf16.msra.mxu0 0
        %2636 = vmatprep.subr.bf16.mxu0 0
        %2637 = vmatpush1.bf16.msra.mxu0 0
        %2638 = vmatprep.mubr.bf16.mxu0 0
        %2639 = vmatmul.mubr.bf16.gmra.mrb[0].mxu0 %v2158
        %v2640 = vpop.f32.mrb[0].mxu0
        %v2641 = vadd.f32 0.0, %v2640
        %v2642 = vpop.f32.mrb[0].mxu0
        %v2643 = vadd.f32 0.0, %v2642
        %v2644 = vpop.f32.mrb[0].mxu0
        %v2645 = vadd.f32 0.0, %v2644
        %v2646 = vpop.f32.mrb[0].mxu0
        %v2647 = vadd.f32 0.0, %v2646
        %2648 = vmatprep.mubr.bf16.mxu0 0
        %2649 = vmatmul.mubr.bf16.gmra.mrb[0].mxu0 %v2161
        %v2650 = vpop.f32.mrb[0].mxu0
        %v2651 = vadd.f32 0.0, %v2650
        %v2652 = vpop.f32.mrb[0].mxu0
        %v2653 = vadd.f32 0.0, %v2652
        %v2654 = vpop.f32.mrb[0].mxu0
        %v2655 = vadd.f32 0.0, %v2654
        %v2656 = vpop.f32.mrb[0].mxu0
        %v2657 = vadd.f32 0.0, %v2656
        %2658 = vmatprep.mubr.bf16.mxu0 0
        %2659 = vmatmul.mubr.bf16.gmra.mrb[0].mxu0 %v2164
        %v2660 = vpop.f32.mrb[0].mxu0
        %v2661 = vadd.f32 0.0, %v2660
        %v2662 = vpop.f32.mrb[0].mxu0
        %v2663 = vadd.f32 0.0, %v2662
        %v2664 = vpop.f32.mrb[0].mxu0
        %v2665 = vadd.f32 0.0, %v2664
        %v2666 = vpop.f32.mrb[0].mxu0
        %v2667 = vadd.f32 0.0, %v2666
        %2668 = vmatprep.mubr.bf16.mxu0 0
        %2669 = vmatmul.mubr.bf16.gmra.mrb[0].mxu0 %v2167
        %v2670 = vpop.f32.mrb[0].mxu0
        %v2671 = vadd.f32 0.0, %v2670
        %v2672 = vpop.f32.mrb[0].mxu0
        %v2673 = vadd.f32 0.0, %v2672
        %v2674 = vpop.f32.mrb[0].mxu0
        %v2675 = vadd.f32 0.0, %v2674
        %v2676 = vpop.f32.mrb[0].mxu0
        %v2677 = vadd.f32 0.0, %v2676
        %2678 = vmatprep.mubr.bf16.mxu0 0
        %2679 = vmatmul.mubr.bf16.gmra.mrb[0].mxu0 %v2170
        %v2680 = vpop.f32.mrb[0].mxu0
        %v2681 = vadd.f32 0.0, %v2680
        %v2682 = vpop.f32.mrb[0].mxu0
        %v2683 = vadd.f32 0.0, %v2682
        %v2684 = vpop.f32.mrb[0].mxu0
        %v2685 = vadd.f32 0.0, %v2684
        %v2686 = vpop.f32.mrb[0].mxu0
        %v2687 = vadd.f32 0.0, %v2686
        %2688 = vmatprep.mubr.bf16.mxu0 0
        %2689 = vmatmul.mubr.bf16.gmra.mrb[0].mxu0 %v2173
        %v2690 = vpop.f32.mrb[0].mxu0
        %v2691 = vadd.f32 0.0, %v2690
        %v2692 = vpop.f32.mrb[0].mxu0
        %v2693 = vadd.f32 0.0, %v2692
        %v2694 = vpop.f32.mrb[0].mxu0
        %v2695 = vadd.f32 0.0, %v2694
        %v2696 = vpop.f32.mrb[0].mxu0
        %v2697 = vadd.f32 0.0, %v2696
        %2698 = vmatprep.mubr.bf16.mxu0 0
        %2699 = vmatmul.mubr.bf16.gmra.mrb[0].mxu0 %v2176
        %v2700 = vpop.f32.mrb[0].mxu0
        %v2701 = vadd.f32 0.0, %v2700
        %v2702 = vpop.f32.mrb[0].mxu0
        %v2703 = vadd.f32 0.0, %v2702
        %v2704 = vpop.f32.mrb[0].mxu0
        %v2705 = vadd.f32 0.0, %v2704
        %v2706 = vpop.f32.mrb[0].mxu0
        %v2707 = vadd.f32 0.0, %v2706
        %2708 = vmatprep.mubr.bf16.mxu0 0
        %2709 = vmatmul.mubr.bf16.gmra.mrb[0].mxu0 %v2179
        %v2710 = vpop.f32.mrb[0].mxu0
        %v2711 = vadd.f32 0.0, %v2710
        %v2712 = vpop.f32.mrb[0].mxu0
        %v2713 = vadd.f32 0.0, %v2712
        %v2714 = vpop.f32.mrb[0].mxu0
        %v2715 = vadd.f32 0.0, %v2714
        %v2716 = vpop.f32.mrb[0].mxu0
        %v2717 = vadd.f32 0.0, %v2716
        %2718 = vmatprep.mubr.bf16.mxu0 0
        %2719 = vmatmul.mubr.bf16.gmra.mrb[0].mxu0 %v2182
        %v2720 = vpop.f32.mrb[0].mxu0
        %v2721 = vadd.f32 0.0, %v2720
        %v2722 = vpop.f32.mrb[0].mxu0
        %v2723 = vadd.f32 0.0, %v2722
        %v2724 = vpop.f32.mrb[0].mxu0
        %v2725 = vadd.f32 0.0, %v2724
        %v2726 = vpop.f32.mrb[0].mxu0
        %v2727 = vadd.f32 0.0, %v2726
        %2728 = vmatprep.mubr.bf16.mxu0 0
        %2729 = vmatmul.mubr.bf16.gmra.mrb[0].mxu0 %v2185
        %v2730 = vpop.f32.mrb[0].mxu0
        %v2731 = vadd.f32 0.0, %v2730
        %v2732 = vpop.f32.mrb[0].mxu0
        %v2733 = vadd.f32 0.0, %v2732
        %v2734 = vpop.f32.mrb[0].mxu0
        %v2735 = vadd.f32 0.0, %v2734
        %v2736 = vpop.f32.mrb[0].mxu0
        %v2737 = vadd.f32 0.0, %v2736
        %2738 = vmatprep.mubr.bf16.mxu0 0
        %2739 = vmatmul.mubr.bf16.gmra.mrb[0].mxu0 %v2188
        %v2740 = vpop.f32.mrb[0].mxu0
        %v2741 = vadd.f32 0.0, %v2740
        %v2742 = vpop.f32.mrb[0].mxu0
        %v2743 = vadd.f32 0.0, %v2742
        %v2744 = vpop.f32.mrb[0].mxu0
        %v2745 = vadd.f32 0.0, %v2744
        %v2746 = vpop.f32.mrb[0].mxu0
        %v2747 = vadd.f32 0.0, %v2746
        %2748 = vmatprep.mubr.bf16.mxu0 0
        %2749 = vmatmul.mubr.bf16.gmra.mrb[0].mxu0 %v2191
        %v2750 = vpop.f32.mrb[0].mxu0
        %v2751 = vadd.f32 0.0, %v2750
        %v2752 = vpop.f32.mrb[0].mxu0
        %v2753 = vadd.f32 0.0, %v2752
        %v2754 = vpop.f32.mrb[0].mxu0
        %v2755 = vadd.f32 0.0, %v2754
        %v2756 = vpop.f32.mrb[0].mxu0
        %v2757 = vadd.f32 0.0, %v2756
        %2758 = vmatprep.mubr.bf16.mxu0 0
        %2759 = vmatmul.mubr.bf16.gmra.mrb[0].mxu0 %v2194
        %v2760 = vpop.f32.mrb[0].mxu0
        %v2761 = vadd.f32 0.0, %v2760
        %v2762 = vpop.f32.mrb[0].mxu0
        %v2763 = vadd.f32 0.0, %v2762
        %v2764 = vpop.f32.mrb[0].mxu0
        %v2765 = vadd.f32 0.0, %v2764
        %v2766 = vpop.f32.mrb[0].mxu0
        %v2767 = vadd.f32 0.0, %v2766
        %2768 = vmatprep.mubr.bf16.mxu0 0
        %2769 = vmatmul.mubr.bf16.gmra.mrb[0].mxu0 %v2197
        %v2770 = vpop.f32.mrb[0].mxu0
        %v2771 = vadd.f32 0.0, %v2770
        %v2772 = vpop.f32.mrb[0].mxu0
        %v2773 = vadd.f32 0.0, %v2772
        %v2774 = vpop.f32.mrb[0].mxu0
        %v2775 = vadd.f32 0.0, %v2774
        %v2776 = vpop.f32.mrb[0].mxu0
        %v2777 = vadd.f32 0.0, %v2776
        %2778 = vmatprep.mubr.bf16.mxu0 0
        %2779 = vmatmul.mubr.bf16.gmra.mrb[0].mxu0 %v2200
        %v2780 = vpop.f32.mrb[0].mxu0
        %v2781 = vadd.f32 0.0, %v2780
        %v2782 = vpop.f32.mrb[0].mxu0
        %v2783 = vadd.f32 0.0, %v2782
        %v2784 = vpop.f32.mrb[0].mxu0
        %v2785 = vadd.f32 0.0, %v2784
        %v2786 = vpop.f32.mrb[0].mxu0
        %v2787 = vadd.f32 0.0, %v2786
        %2788 = vmatprep.mubr.bf16.mxu0 0
        %2789 = vmatmul.mubr.bf16.gmra.mrb[0].mxu0 %v2203
        %v2790 = vpop.f32.mrb[0].mxu0
        %v2791 = vadd.f32 0.0, %v2790
        %v2792 = vpop.f32.mrb[0].mxu0
        %v2793 = vadd.f32 0.0, %v2792
        %v2794 = vpop.f32.mrb[0].mxu0
        %v2795 = vadd.f32 0.0, %v2794
        %v2796 = vpop.f32.mrb[0].mxu0
        %v2797 = vadd.f32 0.0, %v2796
        %2798 = vmatprep.mubr.bf16.mxu0 0
        %2799 = vmatmul.mubr.bf16.gmra.mrb[0].mxu0 %v2206
        %v2800 = vpop.f32.mrb[0].mxu0
        %v2801 = vadd.f32 0.0, %v2800
        %v2802 = vpop.f32.mrb[0].mxu0
        %v2803 = vadd.f32 0.0, %v2802
        %v2804 = vpop.f32.mrb[0].mxu0
        %v2805 = vadd.f32 0.0, %v2804
        %v2806 = vpop.f32.mrb[0].mxu0
        %v2807 = vadd.f32 0.0, %v2806
        %2808 = vmatprep.mubr.bf16.mxu0 0
        %2809 = vmatmul.mubr.bf16.gmra.mrb[0].mxu0 %v2209
        %v2810 = vpop.f32.mrb[0].mxu0
        %v2811 = vadd.f32 0.0, %v2810
        %v2812 = vpop.f32.mrb[0].mxu0
        %v2813 = vadd.f32 0.0, %v2812
        %v2814 = vpop.f32.mrb[0].mxu0
        %v2815 = vadd.f32 0.0, %v2814
        %v2816 = vpop.f32.mrb[0].mxu0
        %v2817 = vadd.f32 0.0, %v2816
        %2818 = vmatprep.mubr.bf16.mxu0 0
        %2819 = vmatmul.mubr.bf16.gmra.mrb[0].mxu0 %v2212
        %v2820 = vpop.f32.mrb[0].mxu0
        %v2821 = vadd.f32 0.0, %v2820
        %v2822 = vpop.f32.mrb[0].mxu0
        %v2823 = vadd.f32 0.0, %v2822
        %v2824 = vpop.f32.mrb[0].mxu0
        %v2825 = vadd.f32 0.0, %v2824
        %v2826 = vpop.f32.mrb[0].mxu0
        %v2827 = vadd.f32 0.0, %v2826
        %2828 = vmatprep.mubr.bf16.mxu0 0
        %2829 = vmatmul.mubr.bf16.gmra.mrb[0].mxu0 %v2215
        %v2830 = vpop.f32.mrb[0].mxu0
        %v2831 = vadd.f32 0.0, %v2830
        %v2832 = vpop.f32.mrb[0].mxu0
        %v2833 = vadd.f32 0.0, %v2832
        %v2834 = vpop.f32.mrb[0].mxu0
        %v2835 = vadd.f32 0.0, %v2834
        %v2836 = vpop.f32.mrb[0].mxu0
        %v2837 = vadd.f32 0.0, %v2836
        %2838 = vmatprep.mubr.bf16.mxu0 0
        %2839 = vmatmul.mubr.bf16.gmra.mrb[0].mxu0 %v2218
        %v2840 = vpop.f32.mrb[0].mxu0
        %v2841 = vadd.f32 0.0, %v2840
        %v2842 = vpop.f32.mrb[0].mxu0
        %v2843 = vadd.f32 0.0, %v2842
        %v2844 = vpop.f32.mrb[0].mxu0
        %v2845 = vadd.f32 0.0, %v2844
        %v2846 = vpop.f32.mrb[0].mxu0
        %v2847 = vadd.f32 0.0, %v2846
        %2848 = vmatprep.mubr.bf16.mxu0 0
        %2849 = vmatmul.mubr.bf16.gmra.mrb[0].mxu0 %v2221
        %v2850 = vpop.f32.mrb[0].mxu0
        %v2851 = vadd.f32 0.0, %v2850
        %v2852 = vpop.f32.mrb[0].mxu0
        %v2853 = vadd.f32 0.0, %v2852
        %v2854 = vpop.f32.mrb[0].mxu0
        %v2855 = vadd.f32 0.0, %v2854
        %v2856 = vpop.f32.mrb[0].mxu0
        %v2857 = vadd.f32 0.0, %v2856
        %2858 = vmatprep.mubr.bf16.mxu0 0
        %2859 = vmatmul.mubr.bf16.gmra.mrb[0].mxu0 %v2224
        %v2860 = vpop.f32.mrb[0].mxu0
        %v2861 = vadd.f32 0.0, %v2860
        %v2862 = vpop.f32.mrb[0].mxu0
        %v2863 = vadd.f32 0.0, %v2862
        %v2864 = vpop.f32.mrb[0].mxu0
        %v2865 = vadd.f32 0.0, %v2864
        %v2866 = vpop.f32.mrb[0].mxu0
        %v2867 = vadd.f32 0.0, %v2866
        %2868 = vmatprep.mubr.bf16.mxu0 0
        %2869 = vmatmul.mubr.bf16.gmra.mrb[0].mxu0 %v2227
        %v2870 = vpop.f32.mrb[0].mxu0
        %v2871 = vadd.f32 0.0, %v2870
        %v2872 = vpop.f32.mrb[0].mxu0
        %v2873 = vadd.f32 0.0, %v2872
        %v2874 = vpop.f32.mrb[0].mxu0
        %v2875 = vadd.f32 0.0, %v2874
        %v2876 = vpop.f32.mrb[0].mxu0
        %v2877 = vadd.f32 0.0, %v2876
        %2878 = vmatprep.mubr.bf16.mxu0 0
        %2879 = vmatmul.mubr.bf16.gmra.mrb[0].mxu0 %v2230
        %v2880 = vpop.f32.mrb[0].mxu0
        %v2881 = vadd.f32 0.0, %v2880
        %v2882 = vpop.f32.mrb[0].mxu0
        %v2883 = vadd.f32 0.0, %v2882
        %v2884 = vpop.f32.mrb[0].mxu0
        %v2885 = vadd.f32 0.0, %v2884
        %v2886 = vpop.f32.mrb[0].mxu0
        %v2887 = vadd.f32 0.0, %v2886
        %2888 = vmatprep.mubr.bf16.mxu0 0
        %2889 = vmatmul.mubr.bf16.gmra.mrb[0].mxu0 %v2233
        %v2890 = vpop.f32.mrb[0].mxu0
        %v2891 = vadd.f32 0.0, %v2890
        %v2892 = vpop.f32.mrb[0].mxu0
        %v2893 = vadd.f32 0.0, %v2892
        %v2894 = vpop.f32.mrb[0].mxu0
        %v2895 = vadd.f32 0.0, %v2894
        %v2896 = vpop.f32.mrb[0].mxu0
        %v2897 = vadd.f32 0.0, %v2896
        %2898 = vmatprep.mubr.bf16.mxu0 0
        %2899 = vmatmul.mubr.bf16.gmra.mrb[0].mxu0 %v2236
        %v2900 = vpop.f32.mrb[0].mxu0
        %v2901 = vadd.f32 0.0, %v2900
        %v2902 = vpop.f32.mrb[0].mxu0
        %v2903 = vadd.f32 0.0, %v2902
        %v2904 = vpop.f32.mrb[0].mxu0
        %v2905 = vadd.f32 0.0, %v2904
        %v2906 = vpop.f32.mrb[0].mxu0
        %v2907 = vadd.f32 0.0, %v2906
        %2908 = vmatprep.mubr.bf16.mxu0 0
        %2909 = vmatmul.mubr.bf16.gmra.mrb[0].mxu0 %v2239
        %v2910 = vpop.f32.mrb[0].mxu0
        %v2911 = vadd.f32 0.0, %v2910
        %v2912 = vpop.f32.mrb[0].mxu0
        %v2913 = vadd.f32 0.0, %v2912
        %v2914 = vpop.f32.mrb[0].mxu0
        %v2915 = vadd.f32 0.0, %v2914
        %v2916 = vpop.f32.mrb[0].mxu0
        %v2917 = vadd.f32 0.0, %v2916
        %2918 = vmatprep.mubr.bf16.mxu0 0
        %2919 = vmatmul.mubr.bf16.gmra.mrb[0].mxu0 %v2242
        %v2920 = vpop.f32.mrb[0].mxu0
        %v2921 = vadd.f32 0.0, %v2920
        %v2922 = vpop.f32.mrb[0].mxu0
        %v2923 = vadd.f32 0.0, %v2922
        %v2924 = vpop.f32.mrb[0].mxu0
        %v2925 = vadd.f32 0.0, %v2924
        %v2926 = vpop.f32.mrb[0].mxu0
        %v2927 = vadd.f32 0.0, %v2926
        %2928 = vmatprep.mubr.bf16.mxu0 0
        %2929 = vmatmul.mubr.bf16.gmra.mrb[0].mxu0 %v2245
        %v2930 = vpop.f32.mrb[0].mxu0
        %v2931 = vadd.f32 0.0, %v2930
        %v2932 = vpop.f32.mrb[0].mxu0
        %v2933 = vadd.f32 0.0, %v2932
        %v2934 = vpop.f32.mrb[0].mxu0
        %v2935 = vadd.f32 0.0, %v2934
        %v2936 = vpop.f32.mrb[0].mxu0
        %v2937 = vadd.f32 0.0, %v2936
        %2938 = vmatprep.mubr.bf16.mxu0 0
        %2939 = vmatmul.mubr.bf16.gmra.mrb[0].mxu0 %v2248
        %v2940 = vpop.f32.mrb[0].mxu0
        %v2941 = vadd.f32 0.0, %v2940
        %v2942 = vpop.f32.mrb[0].mxu0
        %v2943 = vadd.f32 0.0, %v2942
        %v2944 = vpop.f32.mrb[0].mxu0
        %v2945 = vadd.f32 0.0, %v2944
        %v2946 = vpop.f32.mrb[0].mxu0
        %v2947 = vadd.f32 0.0, %v2946
        %2948 = vmatprep.mubr.bf16.mxu0 0
        %2949 = vmatmul.mubr.bf16.gmra.mrb[0].mxu0 %v2251
        %v2950 = vpop.f32.mrb[0].mxu0
        %v2951 = vadd.f32 0.0, %v2950
        %v2952 = vpop.f32.mrb[0].mxu0
        %v2953 = vadd.f32 0.0, %v2952
        %v2954 = vpop.f32.mrb[0].mxu0
        %v2955 = vadd.f32 0.0, %v2954
        %v2956 = vpop.f32.mrb[0].mxu0
        %v2957 = vadd.f32 0.0, %v2956
        %2958 = vdwg.mxu0
        %2959 = vmatprep.subr.bf16.mxu0 0
        %2960 = vmatpush1.bf16.msra.mxu0 %v2100
        %2961 = vmatprep.subr.bf16.mxu0 0
        %2962 = vmatpush1.bf16.msra.mxu0 %v2105
        %2963 = vmatprep.subr.bf16.mxu0 0
        %2964 = vmatpush1.bf16.msra.mxu0 %v2110
        %2965 = vmatprep.subr.bf16.mxu0 0
        %2966 = vmatpush1.bf16.msra.mxu0 %v2115
        %2967 = vmatprep.subr.bf16.mxu0 0
        %2968 = vmatpush1.bf16.msra.mxu0 %v2120
        %2969 = vmatprep.subr.bf16.mxu0 0
        %2970 = vmatpush1.bf16.msra.mxu0 %v2125
        %2971 = vmatprep.subr.bf16.mxu0 0
        %2972 = vmatpush1.bf16.msra.mxu0 0
        %2973 = vmatprep.subr.bf16.mxu0 0
        %2974 = vmatpush1.bf16.msra.mxu0 0
        %2975 = vmatprep.subr.bf16.mxu0 0
        %2976 = vmatpush1.bf16.msra.mxu0 0
        %2977 = vmatprep.subr.bf16.mxu0 0
        %2978 = vmatpush1.bf16.msra.mxu0 0
        %2979 = vmatprep.subr.bf16.mxu0 0
        %2980 = vmatpush1.bf16.msra.mxu0 0
        %2981 = vmatprep.subr.bf16.mxu0 0
        %2982 = vmatpush1.bf16.msra.mxu0 0
        %2983 = vmatprep.subr.bf16.mxu0 0
        %2984 = vmatpush1.bf16.msra.mxu0 0
        %2985 = vmatprep.subr.bf16.mxu0 0
        %2986 = vmatpush1.bf16.msra.mxu0 0
        %2987 = vmatprep.subr.bf16.mxu0 0
        %2988 = vmatpush1.bf16.msra.mxu0 0
        %2989 = vmatprep.subr.bf16.mxu0 0
        %2990 = vmatpush1.bf16.msra.mxu0 0
        %2991 = vmatprep.mubr.bf16.mxu0 0
        %2992 = vmatmul.mubr.bf16.gmra.mrb[0].mxu0 %v2158
        %v2993 = vpop.f32.mrb[0].mxu0
        %v2994 = vadd.f32 0.0, %v2993
        %v2995 = vpop.f32.mrb[0].mxu0
        %v2996 = vpop.f32.mrb[0].mxu0
        %v2997 = vadd.f32 0.0, %v2996
        %v2998 = vpop.f32.mrb[0].mxu0
        %2999 = vmatprep.mubr.bf16.mxu0 0
        %3000 = vmatmul.mubr.bf16.gmra.mrb[0].mxu0 %v2161
        %v3001 = vpop.f32.mrb[0].mxu0
        %v3002 = vadd.f32 0.0, %v3001
        %v3003 = vpop.f32.mrb[0].mxu0
        %v3004 = vpop.f32.mrb[0].mxu0
        %v3005 = vadd.f32 0.0, %v3004
        %v3006 = vpop.f32.mrb[0].mxu0
        %3007 = vmatprep.mubr.bf16.mxu0 0
        %3008 = vmatmul.mubr.bf16.gmra.mrb[0].mxu0 %v2164
        %v3009 = vpop.f32.mrb[0].mxu0
        %v3010 = vadd.f32 0.0, %v3009
        %v3011 = vpop.f32.mrb[0].mxu0
        %v3012 = vpop.f32.mrb[0].mxu0
        %v3013 = vadd.f32 0.0, %v3012
        %v3014 = vpop.f32.mrb[0].mxu0
        %3015 = vmatprep.mubr.bf16.mxu0 0
        %3016 = vmatmul.mubr.bf16.gmra.mrb[0].mxu0 %v2167
        %v3017 = vpop.f32.mrb[0].mxu0
        %v3018 = vadd.f32 0.0, %v3017
        %v3019 = vpop.f32.mrb[0].mxu0
        %v3020 = vpop.f32.mrb[0].mxu0
        %v3021 = vadd.f32 0.0, %v3020
        %v3022 = vpop.f32.mrb[0].mxu0
        %3023 = vmatprep.mubr.bf16.mxu0 0
        %3024 = vmatmul.mubr.bf16.gmra.mrb[0].mxu0 %v2170
        %v3025 = vpop.f32.mrb[0].mxu0
        %v3026 = vadd.f32 0.0, %v3025
        %v3027 = vpop.f32.mrb[0].mxu0
        %v3028 = vpop.f32.mrb[0].mxu0
        %v3029 = vadd.f32 0.0, %v3028
        %v3030 = vpop.f32.mrb[0].mxu0
        %3031 = vmatprep.mubr.bf16.mxu0 0
        %3032 = vmatmul.mubr.bf16.gmra.mrb[0].mxu0 %v2173
        %v3033 = vpop.f32.mrb[0].mxu0
        %v3034 = vadd.f32 0.0, %v3033
        %v3035 = vpop.f32.mrb[0].mxu0
        %v3036 = vpop.f32.mrb[0].mxu0
        %v3037 = vadd.f32 0.0, %v3036
        %v3038 = vpop.f32.mrb[0].mxu0
        %3039 = vmatprep.mubr.bf16.mxu0 0
        %3040 = vmatmul.mubr.bf16.gmra.mrb[0].mxu0 %v2176
        %v3041 = vpop.f32.mrb[0].mxu0
        %v3042 = vadd.f32 0.0, %v3041
        %v3043 = vpop.f32.mrb[0].mxu0
        %v3044 = vpop.f32.mrb[0].mxu0
        %v3045 = vadd.f32 0.0, %v3044
        %v3046 = vpop.f32.mrb[0].mxu0
        %3047 = vmatprep.mubr.bf16.mxu0 0
        %3048 = vmatmul.mubr.bf16.gmra.mrb[0].mxu0 %v2179
        %v3049 = vpop.f32.mrb[0].mxu0
        %v3050 = vadd.f32 0.0, %v3049
        %v3051 = vpop.f32.mrb[0].mxu0
        %v3052 = vpop.f32.mrb[0].mxu0
        %v3053 = vadd.f32 0.0, %v3052
        %v3054 = vpop.f32.mrb[0].mxu0
        %3055 = vmatprep.mubr.bf16.mxu0 0
        %3056 = vmatmul.mubr.bf16.gmra.mrb[0].mxu0 %v2182
        %v3057 = vpop.f32.mrb[0].mxu0
        %v3058 = vadd.f32 0.0, %v3057
        %v3059 = vpop.f32.mrb[0].mxu0
        %v3060 = vpop.f32.mrb[0].mxu0
        %v3061 = vadd.f32 0.0, %v3060
        %v3062 = vpop.f32.mrb[0].mxu0
        %3063 = vmatprep.mubr.bf16.mxu0 0
        %3064 = vmatmul.mubr.bf16.gmra.mrb[0].mxu0 %v2185
        %v3065 = vpop.f32.mrb[0].mxu0
        %v3066 = vadd.f32 0.0, %v3065
        %v3067 = vpop.f32.mrb[0].mxu0
        %v3068 = vpop.f32.mrb[0].mxu0
        %v3069 = vadd.f32 0.0, %v3068
        %v3070 = vpop.f32.mrb[0].mxu0
        %3071 = vmatprep.mubr.bf16.mxu0 0
        %3072 = vmatmul.mubr.bf16.gmra.mrb[0].mxu0 %v2188
        %v3073 = vpop.f32.mrb[0].mxu0
        %v3074 = vadd.f32 0.0, %v3073
        %v3075 = vpop.f32.mrb[0].mxu0
        %v3076 = vpop.f32.mrb[0].mxu0
        %v3077 = vadd.f32 0.0, %v3076
        %v3078 = vpop.f32.mrb[0].mxu0
        %3079 = vmatprep.mubr.bf16.mxu0 0
        %3080 = vmatmul.mubr.bf16.gmra.mrb[0].mxu0 %v2191
        %v3081 = vpop.f32.mrb[0].mxu0
        %v3082 = vadd.f32 0.0, %v3081
        %v3083 = vpop.f32.mrb[0].mxu0
        %v3084 = vpop.f32.mrb[0].mxu0
        %v3085 = vadd.f32 0.0, %v3084
        %v3086 = vpop.f32.mrb[0].mxu0
        %3087 = vmatprep.mubr.bf16.mxu0 0
        %3088 = vmatmul.mubr.bf16.gmra.mrb[0].mxu0 %v2194
        %v3089 = vpop.f32.mrb[0].mxu0
        %v3090 = vadd.f32 0.0, %v3089
        %v3091 = vpop.f32.mrb[0].mxu0
        %v3092 = vpop.f32.mrb[0].mxu0
        %v3093 = vadd.f32 0.0, %v3092
        %v3094 = vpop.f32.mrb[0].mxu0
        %3095 = vmatprep.mubr.bf16.mxu0 0
        %3096 = vmatmul.mubr.bf16.gmra.mrb[0].mxu0 %v2197
        %v3097 = vpop.f32.mrb[0].mxu0
        %v3098 = vadd.f32 0.0, %v3097
        %v3099 = vpop.f32.mrb[0].mxu0
        %v3100 = vpop.f32.mrb[0].mxu0
        %v3101 = vadd.f32 0.0, %v3100
        %v3102 = vpop.f32.mrb[0].mxu0
        %3103 = vmatprep.mubr.bf16.mxu0 0
        %3104 = vmatmul.mubr.bf16.gmra.mrb[0].mxu0 %v2200
        %v3105 = vpop.f32.mrb[0].mxu0
        %v3106 = vadd.f32 0.0, %v3105
        %v3107 = vpop.f32.mrb[0].mxu0
        %v3108 = vpop.f32.mrb[0].mxu0
        %v3109 = vadd.f32 0.0, %v3108
        %v3110 = vpop.f32.mrb[0].mxu0
        %3111 = vmatprep.mubr.bf16.mxu0 0
        %3112 = vmatmul.mubr.bf16.gmra.mrb[0].mxu0 %v2203
        %v3113 = vpop.f32.mrb[0].mxu0
        %v3114 = vadd.f32 0.0, %v3113
        %v3115 = vpop.f32.mrb[0].mxu0
        %v3116 = vpop.f32.mrb[0].mxu0
        %v3117 = vadd.f32 0.0, %v3116
        %v3118 = vpop.f32.mrb[0].mxu0
        %3119 = vmatprep.mubr.bf16.mxu0 0
        %3120 = vmatmul.mubr.bf16.gmra.mrb[0].mxu0 %v2206
        %v3121 = vpop.f32.mrb[0].mxu0
        %v3122 = vadd.f32 0.0, %v3121
        %v3123 = vpop.f32.mrb[0].mxu0
        %v3124 = vpop.f32.mrb[0].mxu0
        %v3125 = vadd.f32 0.0, %v3124
        %v3126 = vpop.f32.mrb[0].mxu0
        %3127 = vmatprep.mubr.bf16.mxu0 0
        %3128 = vmatmul.mubr.bf16.gmra.mrb[0].mxu0 %v2209
        %v3129 = vpop.f32.mrb[0].mxu0
        %v3130 = vadd.f32 0.0, %v3129
        %v3131 = vpop.f32.mrb[0].mxu0
        %v3132 = vpop.f32.mrb[0].mxu0
        %v3133 = vadd.f32 0.0, %v3132
        %v3134 = vpop.f32.mrb[0].mxu0
        %3135 = vmatprep.mubr.bf16.mxu0 0
        %3136 = vmatmul.mubr.bf16.gmra.mrb[0].mxu0 %v2212
        %v3137 = vpop.f32.mrb[0].mxu0
        %v3138 = vadd.f32 0.0, %v3137
        %v3139 = vpop.f32.mrb[0].mxu0
        %v3140 = vpop.f32.mrb[0].mxu0
        %v3141 = vadd.f32 0.0, %v3140
        %v3142 = vpop.f32.mrb[0].mxu0
        %3143 = vmatprep.mubr.bf16.mxu0 0
        %3144 = vmatmul.mubr.bf16.gmra.mrb[0].mxu0 %v2215
        %v3145 = vpop.f32.mrb[0].mxu0
        %v3146 = vadd.f32 0.0, %v3145
        %v3147 = vpop.f32.mrb[0].mxu0
        %v3148 = vpop.f32.mrb[0].mxu0
        %v3149 = vadd.f32 0.0, %v3148
        %v3150 = vpop.f32.mrb[0].mxu0
        %3151 = vmatprep.mubr.bf16.mxu0 0
        %3152 = vmatmul.mubr.bf16.gmra.mrb[0].mxu0 %v2218
        %v3153 = vpop.f32.mrb[0].mxu0
        %v3154 = vadd.f32 0.0, %v3153
        %v3155 = vpop.f32.mrb[0].mxu0
        %v3156 = vpop.f32.mrb[0].mxu0
        %v3157 = vadd.f32 0.0, %v3156
        %v3158 = vpop.f32.mrb[0].mxu0
        %3159 = vmatprep.mubr.bf16.mxu0 0
        %3160 = vmatmul.mubr.bf16.gmra.mrb[0].mxu0 %v2221
        %v3161 = vpop.f32.mrb[0].mxu0
        %v3162 = vadd.f32 0.0, %v3161
        %v3163 = vpop.f32.mrb[0].mxu0
        %v3164 = vpop.f32.mrb[0].mxu0
        %v3165 = vadd.f32 0.0, %v3164
        %v3166 = vpop.f32.mrb[0].mxu0
        %3167 = vmatprep.mubr.bf16.mxu0 0
        %3168 = vmatmul.mubr.bf16.gmra.mrb[0].mxu0 %v2224
        %v3169 = vpop.f32.mrb[0].mxu0
        %v3170 = vadd.f32 0.0, %v3169
        %v3171 = vpop.f32.mrb[0].mxu0
        %v3172 = vpop.f32.mrb[0].mxu0
        %v3173 = vadd.f32 0.0, %v3172
        %v3174 = vpop.f32.mrb[0].mxu0
        %3175 = vmatprep.mubr.bf16.mxu0 0
        %3176 = vmatmul.mubr.bf16.gmra.mrb[0].mxu0 %v2227
        %v3177 = vpop.f32.mrb[0].mxu0
        %v3178 = vadd.f32 0.0, %v3177
        %v3179 = vpop.f32.mrb[0].mxu0
        %v3180 = vpop.f32.mrb[0].mxu0
        %v3181 = vadd.f32 0.0, %v3180
        %v3182 = vpop.f32.mrb[0].mxu0
        %3183 = vmatprep.mubr.bf16.mxu0 0
        %3184 = vmatmul.mubr.bf16.gmra.mrb[0].mxu0 %v2230
        %v3185 = vpop.f32.mrb[0].mxu0
        %v3186 = vadd.f32 0.0, %v3185
        %v3187 = vpop.f32.mrb[0].mxu0
        %v3188 = vpop.f32.mrb[0].mxu0
        %v3189 = vadd.f32 0.0, %v3188
        %v3190 = vpop.f32.mrb[0].mxu0
        %3191 = vmatprep.mubr.bf16.mxu0 0
        %3192 = vmatmul.mubr.bf16.gmra.mrb[0].mxu0 %v2233
        %v3193 = vpop.f32.mrb[0].mxu0
        %v3194 = vadd.f32 0.0, %v3193
        %v3195 = vpop.f32.mrb[0].mxu0
        %v3196 = vpop.f32.mrb[0].mxu0
        %v3197 = vadd.f32 0.0, %v3196
        %v3198 = vpop.f32.mrb[0].mxu0
        %3199 = vmatprep.mubr.bf16.mxu0 0
        %3200 = vmatmul.mubr.bf16.gmra.mrb[0].mxu0 %v2236
        %v3201 = vpop.f32.mrb[0].mxu0
        %v3202 = vadd.f32 0.0, %v3201
        %v3203 = vpop.f32.mrb[0].mxu0
        %v3204 = vpop.f32.mrb[0].mxu0
        %v3205 = vadd.f32 0.0, %v3204
        %v3206 = vpop.f32.mrb[0].mxu0
        %3207 = vmatprep.mubr.bf16.mxu0 0
        %3208 = vmatmul.mubr.bf16.gmra.mrb[0].mxu0 %v2239
        %v3209 = vpop.f32.mrb[0].mxu0
        %v3210 = vadd.f32 0.0, %v3209
        %v3211 = vpop.f32.mrb[0].mxu0
        %v3212 = vpop.f32.mrb[0].mxu0
        %v3213 = vadd.f32 0.0, %v3212
        %v3214 = vpop.f32.mrb[0].mxu0
        %3215 = vmatprep.mubr.bf16.mxu0 0
        %3216 = vmatmul.mubr.bf16.gmra.mrb[0].mxu0 %v2242
        %v3217 = vpop.f32.mrb[0].mxu0
        %v3218 = vadd.f32 0.0, %v3217
        %v3219 = vpop.f32.mrb[0].mxu0
        %v3220 = vpop.f32.mrb[0].mxu0
        %v3221 = vadd.f32 0.0, %v3220
        %v3222 = vpop.f32.mrb[0].mxu0
        %3223 = vmatprep.mubr.bf16.mxu0 0
        %3224 = vmatmul.mubr.bf16.gmra.mrb[0].mxu0 %v2245
        %v3225 = vpop.f32.mrb[0].mxu0
        %v3226 = vadd.f32 0.0, %v3225
        %v3227 = vpop.f32.mrb[0].mxu0
        %v3228 = vpop.f32.mrb[0].mxu0
        %v3229 = vadd.f32 0.0, %v3228
        %v3230 = vpop.f32.mrb[0].mxu0
        %3231 = vmatprep.mubr.bf16.mxu0 0
        %3232 = vmatmul.mubr.bf16.gmra.mrb[0].mxu0 %v2248
        %v3233 = vpop.f32.mrb[0].mxu0
        %v3234 = vadd.f32 0.0, %v3233
        %v3235 = vpop.f32.mrb[0].mxu0
        %v3236 = vpop.f32.mrb[0].mxu0
        %v3237 = vadd.f32 0.0, %v3236
        %v3238 = vpop.f32.mrb[0].mxu0
        %3239 = vmatprep.mubr.bf16.mxu0 0
        %3240 = vmatmul.mubr.bf16.gmra.mrb[0].mxu0 %v2251
        %v3241 = vpop.f32.mrb[0].mxu0
        %v3242 = vadd.f32 0.0, %v3241
        %v3243 = vpop.f32.mrb[0].mxu0
        %v3244 = vpop.f32.mrb[0].mxu0
        %v3245 = vadd.f32 0.0, %v3244
        %v3246 = vpop.f32.mrb[0].mxu0
        %3247 = vdwg.mxu0
        %v3248 = vadd.f32 %v1740, %v2288
        %v3249 = vadd.f32 %v1741, %v2292
        %v3250 = vadd.f32 %v1742, %v2298
        %v3251 = vadd.f32 %v1743, %v2302
        %v3252 = vadd.f32 %v1744, %v2308
        %v3253 = vadd.f32 %v1745, %v2312
        %v3254 = vadd.f32 %v1746, %v2318
        %v3255 = vadd.f32 %v1747, %v2322
        %v3256 = vadd.f32 %v1748, %v2328
        %v3257 = vadd.f32 %v1749, %v2332
        %v3258 = vadd.f32 %v1750, %v2338
        %v3259 = vadd.f32 %v1751, %v2342
        %v3260 = vadd.f32 %v1752, %v2348
        %v3261 = vadd.f32 %v1753, %v2352
        %v3262 = vadd.f32 %v1754, %v2358
        %v3263 = vadd.f32 %v1755, %v2362
        %v3264 = vadd.f32 %v1756, %v2368
        %v3265 = vadd.f32 %v1757, %v2372
        %v3266 = vadd.f32 %v1758, %v2378
        %v3267 = vadd.f32 %v1759, %v2382
        %v3268 = vadd.f32 %v1760, %v2388
        %v3269 = vadd.f32 %v1761, %v2392
        %v3270 = vadd.f32 %v1762, %v2398
        %v3271 = vadd.f32 %v1763, %v2402
        %v3272 = vadd.f32 %v1764, %v2408
        %v3273 = vadd.f32 %v1765, %v2412
        %v3274 = vadd.f32 %v1766, %v2418
        %v3275 = vadd.f32 %v1767, %v2422
        %v3276 = vadd.f32 %v1768, %v2428
        %v3277 = vadd.f32 %v1769, %v2432
        %v3278 = vadd.f32 %v1770, %v2438
        %v3279 = vadd.f32 %v1771, %v2442
        %v3280 = vadd.f32 %v1772, %v2448
        %v3281 = vadd.f32 %v1773, %v2452
        %v3282 = vadd.f32 %v1774, %v2458
        %v3283 = vadd.f32 %v1775, %v2462
        %v3284 = vadd.f32 %v1776, %v2468
        %v3285 = vadd.f32 %v1777, %v2472
        %v3286 = vadd.f32 %v1778, %v2478
        %v3287 = vadd.f32 %v1779, %v2482
        %v3288 = vadd.f32 %v1780, %v2488
        %v3289 = vadd.f32 %v1781, %v2492
        %v3290 = vadd.f32 %v1782, %v2498
        %v3291 = vadd.f32 %v1783, %v2502
        %v3292 = vadd.f32 %v1784, %v2508
        %v3293 = vadd.f32 %v1785, %v2512
        %v3294 = vadd.f32 %v1786, %v2518
        %v3295 = vadd.f32 %v1787, %v2522
        %v3296 = vadd.f32 %v1788, %v2528
        %v3297 = vadd.f32 %v1789, %v2532
        %v3298 = vadd.f32 %v1790, %v2538
        %v3299 = vadd.f32 %v1791, %v2542
        %v3300 = vadd.f32 %v1792, %v2548
        %v3301 = vadd.f32 %v1793, %v2552
        %v3302 = vadd.f32 %v1794, %v2558
        %v3303 = vadd.f32 %v1795, %v2562
        %v3304 = vadd.f32 %v1796, %v2568
        %v3305 = vadd.f32 %v1797, %v2572
        %v3306 = vadd.f32 %v1798, %v2578
        %v3307 = vadd.f32 %v1799, %v2582
        %v3308 = vadd.f32 %v1800, %v2588
        %v3309 = vadd.f32 %v1801, %v2592
        %v3310 = vadd.f32 %v1802, %v2598
        %v3311 = vadd.f32 %v1803, %v2602
        %v3312 = vld [vmem:[%s5] sm:$0x1]
        %v3313 = vlaneseq
        %v3314 = vshrl.u32 %v3313, 7
        %v3315 = vsub.s32 0, %v3314
        %v3316 = vrot.slane %v3312, %v3315
        %v3317 = vadd.f32 %v3248, %v3316
        %v3318 = vadd.f32 %v3249, %v3316
        %v3319 = vadd.f32 %v3250, %v3316
        %v3320 = vadd.f32 %v3251, %v3316
        %v3321 = vadd.f32 %v3252, %v3316
        %v3322 = vadd.f32 %v3253, %v3316
        %v3323 = vadd.f32 %v3254, %v3316
        %v3324 = vadd.f32 %v3255, %v3316
        %v3325 = vadd.f32 %v3256, %v3316
        %v3326 = vadd.f32 %v3257, %v3316
        %v3327 = vadd.f32 %v3258, %v3316
        %v3328 = vadd.f32 %v3259, %v3316
        %v3329 = vadd.f32 %v3260, %v3316
        %v3330 = vadd.f32 %v3261, %v3316
        %v3331 = vadd.f32 %v3262, %v3316
        %v3332 = vadd.f32 %v3263, %v3316
        %v3333 = vadd.f32 %v3264, %v3316
        %v3334 = vadd.f32 %v3265, %v3316
        %v3335 = vadd.f32 %v3266, %v3316
        %v3336 = vadd.f32 %v3267, %v3316
        %v3337 = vadd.f32 %v3268, %v3316
        %v3338 = vadd.f32 %v3269, %v3316
        %v3339 = vadd.f32 %v3270, %v3316
        %v3340 = vadd.f32 %v3271, %v3316
        %v3341 = vadd.f32 %v3272, %v3316
        %v3342 = vadd.f32 %v3273, %v3316
        %v3343 = vadd.f32 %v3274, %v3316
        %v3344 = vadd.f32 %v3275, %v3316
        %v3345 = vadd.f32 %v3276, %v3316
        %v3346 = vadd.f32 %v3277, %v3316
        %v3347 = vadd.f32 %v3278, %v3316
        %v3348 = vadd.f32 %v3279, %v3316
        %v3349 = vadd.f32 %v3280, %v3316
        %v3350 = vadd.f32 %v3281, %v3316
        %v3351 = vadd.f32 %v3282, %v3316
        %v3352 = vadd.f32 %v3283, %v3316
        %v3353 = vadd.f32 %v3284, %v3316
        %v3354 = vadd.f32 %v3285, %v3316
        %v3355 = vadd.f32 %v3286, %v3316
        %v3356 = vadd.f32 %v3287, %v3316
        %v3357 = vadd.f32 %v3288, %v3316
        %v3358 = vadd.f32 %v3289, %v3316
        %v3359 = vadd.f32 %v3290, %v3316
        %v3360 = vadd.f32 %v3291, %v3316
        %v3361 = vadd.f32 %v3292, %v3316
        %v3362 = vadd.f32 %v3293, %v3316
        %v3363 = vadd.f32 %v3294, %v3316
        %v3364 = vadd.f32 %v3295, %v3316
        %v3365 = vadd.f32 %v3296, %v3316
        %v3366 = vadd.f32 %v3297, %v3316
        %v3367 = vadd.f32 %v3298, %v3316
        %v3368 = vadd.f32 %v3299, %v3316
        %v3369 = vadd.f32 %v3300, %v3316
        %v3370 = vadd.f32 %v3301, %v3316
        %v3371 = vadd.f32 %v3302, %v3316
        %v3372 = vadd.f32 %v3303, %v3316
        %v3373 = vadd.f32 %v3304, %v3316
        %v3374 = vadd.f32 %v3305, %v3316
        %v3375 = vadd.f32 %v3306, %v3316
        %v3376 = vadd.f32 %v3307, %v3316
        %v3377 = vadd.f32 %v3308, %v3316
        %v3378 = vadd.f32 %v3309, %v3316
        %v3379 = vadd.f32 %v3310, %v3316
        %v3380 = vadd.f32 %v3311, %v3316
        %v3381 = vmax.f32 %v3317, 0.0
        %v3382 = vmax.f32 %v3318, 0.0
        %v3383 = vmax.f32 %v3319, 0.0
        %v3384 = vmax.f32 %v3320, 0.0
        %v3385 = vmax.f32 %v3321, 0.0
        %v3386 = vmax.f32 %v3322, 0.0
        %v3387 = vmax.f32 %v3323, 0.0
        %v3388 = vmax.f32 %v3324, 0.0
        %v3389 = vmax.f32 %v3325, 0.0
        %v3390 = vmax.f32 %v3326, 0.0
        %v3391 = vmax.f32 %v3327, 0.0
        %v3392 = vmax.f32 %v3328, 0.0
        %v3393 = vmax.f32 %v3329, 0.0
        %v3394 = vmax.f32 %v3330, 0.0
        %v3395 = vmax.f32 %v3331, 0.0
        %v3396 = vmax.f32 %v3332, 0.0
        %v3397 = vmax.f32 %v3333, 0.0
        %v3398 = vmax.f32 %v3334, 0.0
        %v3399 = vmax.f32 %v3335, 0.0
        %v3400 = vmax.f32 %v3336, 0.0
        %v3401 = vmax.f32 %v3337, 0.0
        %v3402 = vmax.f32 %v3338, 0.0
        %v3403 = vmax.f32 %v3339, 0.0
        %v3404 = vmax.f32 %v3340, 0.0
        %v3405 = vmax.f32 %v3341, 0.0
        %v3406 = vmax.f32 %v3342, 0.0
        %v3407 = vmax.f32 %v3343, 0.0
        %v3408 = vmax.f32 %v3344, 0.0
        %v3409 = vmax.f32 %v3345, 0.0
        %v3410 = vmax.f32 %v3346, 0.0
        %v3411 = vmax.f32 %v3347, 0.0
        %v3412 = vmax.f32 %v3348, 0.0
        %v3413 = vmax.f32 %v3349, 0.0
        %v3414 = vmax.f32 %v3350, 0.0
        %v3415 = vmax.f32 %v3351, 0.0
        %v3416 = vmax.f32 %v3352, 0.0
        %v3417 = vmax.f32 %v3353, 0.0
        %v3418 = vmax.f32 %v3354, 0.0
        %v3419 = vmax.f32 %v3355, 0.0
        %v3420 = vmax.f32 %v3356, 0.0
        %v3421 = vmax.f32 %v3357, 0.0
        %v3422 = vmax.f32 %v3358, 0.0
        %v3423 = vmax.f32 %v3359, 0.0
        %v3424 = vmax.f32 %v3360, 0.0
        %v3425 = vmax.f32 %v3361, 0.0
        %v3426 = vmax.f32 %v3362, 0.0
        %v3427 = vmax.f32 %v3363, 0.0
        %v3428 = vmax.f32 %v3364, 0.0
        %v3429 = vmax.f32 %v3365, 0.0
        %v3430 = vmax.f32 %v3366, 0.0
        %v3431 = vmax.f32 %v3367, 0.0
        %v3432 = vmax.f32 %v3368, 0.0
        %v3433 = vmax.f32 %v3369, 0.0
        %v3434 = vmax.f32 %v3370, 0.0
        %v3435 = vmax.f32 %v3371, 0.0
        %v3436 = vmax.f32 %v3372, 0.0
        %v3437 = vmax.f32 %v3373, 0.0
        %v3438 = vmax.f32 %v3374, 0.0
        %v3439 = vmax.f32 %v3375, 0.0
        %v3440 = vmax.f32 %v3376, 0.0
        %v3441 = vmax.f32 %v3377, 0.0
        %v3442 = vmax.f32 %v3378, 0.0
        %v3443 = vmax.f32 %v3379, 0.0
        %v3444 = vmax.f32 %v3380, 0.0
        %v3445 = vpack.c.bf16 %v3382, %v3381
        %v3446 = vpack.c.bf16 %v3384, %v3383
        %v3447 = vpack.c.bf16 %v3386, %v3385
        %v3448 = vpack.c.bf16 %v3388, %v3387
        %v3449 = vpack.c.bf16 %v3390, %v3389
        %v3450 = vpack.c.bf16 %v3392, %v3391
        %v3451 = vpack.c.bf16 %v3394, %v3393
        %v3452 = vpack.c.bf16 %v3396, %v3395
        %v3453 = vpack.c.bf16 %v3398, %v3397
        %v3454 = vpack.c.bf16 %v3400, %v3399
        %v3455 = vpack.c.bf16 %v3402, %v3401
        %v3456 = vpack.c.bf16 %v3404, %v3403
        %v3457 = vpack.c.bf16 %v3406, %v3405
        %v3458 = vpack.c.bf16 %v3408, %v3407
        %v3459 = vpack.c.bf16 %v3410, %v3409
        %v3460 = vpack.c.bf16 %v3412, %v3411
        %v3461 = vpack.c.bf16 %v3414, %v3413
        %v3462 = vpack.c.bf16 %v3416, %v3415
        %v3463 = vpack.c.bf16 %v3418, %v3417
        %v3464 = vpack.c.bf16 %v3420, %v3419
        %v3465 = vpack.c.bf16 %v3422, %v3421
        %v3466 = vpack.c.bf16 %v3424, %v3423
        %v3467 = vpack.c.bf16 %v3426, %v3425
        %v3468 = vpack.c.bf16 %v3428, %v3427
        %v3469 = vpack.c.bf16 %v3430, %v3429
        %v3470 = vpack.c.bf16 %v3432, %v3431
        %v3471 = vpack.c.bf16 %v3434, %v3433
        %v3472 = vpack.c.bf16 %v3436, %v3435
        %v3473 = vpack.c.bf16 %v3438, %v3437
        %v3474 = vpack.c.bf16 %v3440, %v3439
        %v3475 = vpack.c.bf16 %v3442, %v3441
        %v3476 = vpack.c.bf16 %v3444, %v3443
        %v3477 = vld [vmem:[%s6] sm:$0xf]
        %v3478 = vld [vmem:[%s6 + $0x4] sm:$0xf]
        %v3479 = vld [vmem:[%s6 + $0x8] sm:$0xf]
        %v3480 = vld [vmem:[%s6 + $0xc] sm:$0xf]
        %v3481 = vld [vmem:[%s6 + $0x10] sm:$0xf]
        %v3482 = vld [vmem:[%s6 + $0x14] sm:$0xf]
        %v3483 = vld [vmem:[%s6 + $0x18] sm:$0xf]
        %v3484 = vld [vmem:[%s6 + $0x1c] sm:$0xf]
        %v3485 = vld [vmem:[%s6 + $0x20] sm:$0xf]
        %v3486 = vld [vmem:[%s6 + $0x24] sm:$0xf]
        %v3487 = vld [vmem:[%s6 + $0x28] sm:$0xf]
        %v3488 = vld [vmem:[%s6 + $0x2c] sm:$0xf]
        %v3489 = vld [vmem:[%s6 + $0x30] sm:$0xf]
        %v3490 = vld [vmem:[%s6 + $0x34] sm:$0xf]
        %v3491 = vld [vmem:[%s6 + $0x38] sm:$0xf]
        %v3492 = vld [vmem:[%s6 + $0x3c] sm:$0xf]
        %v3493 = vld [vmem:[%s7] sm:$0x1]
        %v3494 = vlaneseq
        %v3495 = vshrl.u32 %v3494, 7
        %v3496 = vsub.s32 0, %v3495
        %v3497 = vrot.slane %v3493, %v3496
        %v3514 = vunpack.c.l.b16 %v3477
        %v3515 = vunpack.c.l.b16 %v3478
        %v3516 = vunpack.c.l.b16 %v3479
        %v3517 = vunpack.c.l.b16 %v3480
        %v3518 = vunpack.c.l.b16 %v3481
        %v3519 = vunpack.c.l.b16 %v3482
        %v3520 = vunpack.c.l.b16 %v3483
        %v3521 = vunpack.c.l.b16 %v3484
        %v3522 = vunpack.c.l.b16 %v3485
        %v3523 = vunpack.c.l.b16 %v3486
        %v3524 = vunpack.c.l.b16 %v3487
        %v3525 = vunpack.c.l.b16 %v3488
        %v3526 = vunpack.c.l.b16 %v3489
        %v3527 = vunpack.c.l.b16 %v3490
        %v3528 = vunpack.c.l.b16 %v3491
        %v3529 = vunpack.c.l.b16 %v3492
        %v3530 = vpack.c.b16 %v3515, %v3514
        %v3531 = vpack.c.b16 %v3517, %v3516
        %v3532 = vpack.c.b16 %v3519, %v3518
        %v3533 = vpack.c.b16 %v3521, %v3520
        %v3534 = vpack.c.b16 %v3523, %v3522
        %v3535 = vpack.c.b16 %v3525, %v3524
        %v3536 = vpack.c.b16 %v3527, %v3526
        %v3537 = vpack.c.b16 %v3529, %v3528
        %3546 = vmatprep.subr.bf16.mxu0 0
        %3547 = vmatpush1.bf16.msra.mxu0 %v3530
        %3548 = vmatprep.subr.bf16.mxu0 0
        %3549 = vmatpush1.bf16.msra.mxu0 %v3531
        %3550 = vmatprep.subr.bf16.mxu0 0
        %3551 = vmatpush1.bf16.msra.mxu0 %v3532
        %3552 = vmatprep.subr.bf16.mxu0 0
        %3553 = vmatpush1.bf16.msra.mxu0 %v3533
        %3554 = vmatprep.subr.bf16.mxu0 0
        %3555 = vmatpush1.bf16.msra.mxu0 %v3534
        %3556 = vmatprep.subr.bf16.mxu0 0
        %3557 = vmatpush1.bf16.msra.mxu0 %v3535
        %3558 = vmatprep.subr.bf16.mxu0 0
        %3559 = vmatpush1.bf16.msra.mxu0 %v3536
        %3560 = vmatprep.subr.bf16.mxu0 0
        %3561 = vmatpush1.bf16.msra.mxu0 %v3537
        %3562 = vmatprep.subr.bf16.mxu0 0
        %3563 = vmatpush1.bf16.msra.mxu0 0
        %3564 = vmatprep.subr.bf16.mxu0 0
        %3565 = vmatpush1.bf16.msra.mxu0 0
        %3566 = vmatprep.subr.bf16.mxu0 0
        %3567 = vmatpush1.bf16.msra.mxu0 0
        %3568 = vmatprep.subr.bf16.mxu0 0
        %3569 = vmatpush1.bf16.msra.mxu0 0
        %3570 = vmatprep.subr.bf16.mxu0 0
        %3571 = vmatpush1.bf16.msra.mxu0 0
        %3572 = vmatprep.subr.bf16.mxu0 0
        %3573 = vmatpush1.bf16.msra.mxu0 0
        %3574 = vmatprep.subr.bf16.mxu0 0
        %3575 = vmatpush1.bf16.msra.mxu0 0
        %3576 = vmatprep.subr.bf16.mxu0 0
        %3577 = vmatpush1.bf16.msra.mxu0 0
        %3578 = vmatprep.mubr.bf16.mxu0 0
        %3579 = vmatmul.mubr.bf16.gmra.mrb[0].mxu0 %v3445
        %v3580 = vpop.f32.mrb[0].mxu0
        %v3581 = vadd.f32 %v3497, %v3580
        %v3582 = vpop.f32.mrb[0].mxu0
        %v3583 = vpop.f32.mrb[0].mxu0
        %v3584 = vadd.f32 %v3497, %v3583
        %v3585 = vpop.f32.mrb[0].mxu0
        %3586 = vmatprep.mubr.bf16.mxu0 0
        %3587 = vmatmul.mubr.bf16.gmra.mrb[0].mxu0 %v3446
        %v3588 = vpop.f32.mrb[0].mxu0
        %v3589 = vadd.f32 %v3497, %v3588
        %v3590 = vpop.f32.mrb[0].mxu0
        %v3591 = vpop.f32.mrb[0].mxu0
        %v3592 = vadd.f32 %v3497, %v3591
        %v3593 = vpop.f32.mrb[0].mxu0
        %3594 = vmatprep.mubr.bf16.mxu0 0
        %3595 = vmatmul.mubr.bf16.gmra.mrb[0].mxu0 %v3447
        %v3596 = vpop.f32.mrb[0].mxu0
        %v3597 = vadd.f32 %v3497, %v3596
        %v3598 = vpop.f32.mrb[0].mxu0
        %v3599 = vpop.f32.mrb[0].mxu0
        %v3600 = vadd.f32 %v3497, %v3599
        %v3601 = vpop.f32.mrb[0].mxu0
        %3602 = vmatprep.mubr.bf16.mxu0 0
        %3603 = vmatmul.mubr.bf16.gmra.mrb[0].mxu0 %v3448
        %v3604 = vpop.f32.mrb[0].mxu0
        %v3605 = vadd.f32 %v3497, %v3604
        %v3606 = vpop.f32.mrb[0].mxu0
        %v3607 = vpop.f32.mrb[0].mxu0
        %v3608 = vadd.f32 %v3497, %v3607
        %v3609 = vpop.f32.mrb[0].mxu0
        %3610 = vmatprep.mubr.bf16.mxu0 0
        %3611 = vmatmul.mubr.bf16.gmra.mrb[0].mxu0 %v3449
        %v3612 = vpop.f32.mrb[0].mxu0
        %v3613 = vadd.f32 %v3497, %v3612
        %v3614 = vpop.f32.mrb[0].mxu0
        %v3615 = vpop.f32.mrb[0].mxu0
        %v3616 = vadd.f32 %v3497, %v3615
        %v3617 = vpop.f32.mrb[0].mxu0
        %3618 = vmatprep.mubr.bf16.mxu0 0
        %3619 = vmatmul.mubr.bf16.gmra.mrb[0].mxu0 %v3450
        %v3620 = vpop.f32.mrb[0].mxu0
        %v3621 = vadd.f32 %v3497, %v3620
        %v3622 = vpop.f32.mrb[0].mxu0
        %v3623 = vpop.f32.mrb[0].mxu0
        %v3624 = vadd.f32 %v3497, %v3623
        %v3625 = vpop.f32.mrb[0].mxu0
        %3626 = vmatprep.mubr.bf16.mxu0 0
        %3627 = vmatmul.mubr.bf16.gmra.mrb[0].mxu0 %v3451
        %v3628 = vpop.f32.mrb[0].mxu0
        %v3629 = vadd.f32 %v3497, %v3628
        %v3630 = vpop.f32.mrb[0].mxu0
        %v3631 = vpop.f32.mrb[0].mxu0
        %v3632 = vadd.f32 %v3497, %v3631
        %v3633 = vpop.f32.mrb[0].mxu0
        %3634 = vmatprep.mubr.bf16.mxu0 0
        %3635 = vmatmul.mubr.bf16.gmra.mrb[0].mxu0 %v3452
        %v3636 = vpop.f32.mrb[0].mxu0
        %v3637 = vadd.f32 %v3497, %v3636
        %v3638 = vpop.f32.mrb[0].mxu0
        %v3639 = vpop.f32.mrb[0].mxu0
        %v3640 = vadd.f32 %v3497, %v3639
        %v3641 = vpop.f32.mrb[0].mxu0
        %3642 = vmatprep.mubr.bf16.mxu0 0
        %3643 = vmatmul.mubr.bf16.gmra.mrb[0].mxu0 %v3453
        %v3644 = vpop.f32.mrb[0].mxu0
        %v3645 = vadd.f32 %v3497, %v3644
        %v3646 = vpop.f32.mrb[0].mxu0
        %v3647 = vpop.f32.mrb[0].mxu0
        %v3648 = vadd.f32 %v3497, %v3647
        %v3649 = vpop.f32.mrb[0].mxu0
        %3650 = vmatprep.mubr.bf16.mxu0 0
        %3651 = vmatmul.mubr.bf16.gmra.mrb[0].mxu0 %v3454
        %v3652 = vpop.f32.mrb[0].mxu0
        %v3653 = vadd.f32 %v3497, %v3652
        %v3654 = vpop.f32.mrb[0].mxu0
        %v3655 = vpop.f32.mrb[0].mxu0
        %v3656 = vadd.f32 %v3497, %v3655
        %v3657 = vpop.f32.mrb[0].mxu0
        %3658 = vmatprep.mubr.bf16.mxu0 0
        %3659 = vmatmul.mubr.bf16.gmra.mrb[0].mxu0 %v3455
        %v3660 = vpop.f32.mrb[0].mxu0
        %v3661 = vadd.f32 %v3497, %v3660
        %v3662 = vpop.f32.mrb[0].mxu0
        %v3663 = vpop.f32.mrb[0].mxu0
        %v3664 = vadd.f32 %v3497, %v3663
        %v3665 = vpop.f32.mrb[0].mxu0
        %3666 = vmatprep.mubr.bf16.mxu0 0
        %3667 = vmatmul.mubr.bf16.gmra.mrb[0].mxu0 %v3456
        %v3668 = vpop.f32.mrb[0].mxu0
        %v3669 = vadd.f32 %v3497, %v3668
        %v3670 = vpop.f32.mrb[0].mxu0
        %v3671 = vpop.f32.mrb[0].mxu0
        %v3672 = vadd.f32 %v3497, %v3671
        %v3673 = vpop.f32.mrb[0].mxu0
        %3674 = vmatprep.mubr.bf16.mxu0 0
        %3675 = vmatmul.mubr.bf16.gmra.mrb[0].mxu0 %v3457
        %v3676 = vpop.f32.mrb[0].mxu0
        %v3677 = vadd.f32 %v3497, %v3676
        %v3678 = vpop.f32.mrb[0].mxu0
        %v3679 = vpop.f32.mrb[0].mxu0
        %v3680 = vadd.f32 %v3497, %v3679
        %v3681 = vpop.f32.mrb[0].mxu0
        %3682 = vmatprep.mubr.bf16.mxu0 0
        %3683 = vmatmul.mubr.bf16.gmra.mrb[0].mxu0 %v3458
        %v3684 = vpop.f32.mrb[0].mxu0
        %v3685 = vadd.f32 %v3497, %v3684
        %v3686 = vpop.f32.mrb[0].mxu0
        %v3687 = vpop.f32.mrb[0].mxu0
        %v3688 = vadd.f32 %v3497, %v3687
        %v3689 = vpop.f32.mrb[0].mxu0
        %3690 = vmatprep.mubr.bf16.mxu0 0
        %3691 = vmatmul.mubr.bf16.gmra.mrb[0].mxu0 %v3459
        %v3692 = vpop.f32.mrb[0].mxu0
        %v3693 = vadd.f32 %v3497, %v3692
        %v3694 = vpop.f32.mrb[0].mxu0
        %v3695 = vpop.f32.mrb[0].mxu0
        %v3696 = vadd.f32 %v3497, %v3695
        %v3697 = vpop.f32.mrb[0].mxu0
        %3698 = vmatprep.mubr.bf16.mxu0 0
        %3699 = vmatmul.mubr.bf16.gmra.mrb[0].mxu0 %v3460
        %v3700 = vpop.f32.mrb[0].mxu0
        %v3701 = vadd.f32 %v3497, %v3700
        %v3702 = vpop.f32.mrb[0].mxu0
        %v3703 = vpop.f32.mrb[0].mxu0
        %v3704 = vadd.f32 %v3497, %v3703
        %v3705 = vpop.f32.mrb[0].mxu0
        %3706 = vmatprep.mubr.bf16.mxu0 0
        %3707 = vmatmul.mubr.bf16.gmra.mrb[0].mxu0 %v3461
        %v3708 = vpop.f32.mrb[0].mxu0
        %v3709 = vadd.f32 %v3497, %v3708
        %v3710 = vpop.f32.mrb[0].mxu0
        %v3711 = vpop.f32.mrb[0].mxu0
        %v3712 = vadd.f32 %v3497, %v3711
        %v3713 = vpop.f32.mrb[0].mxu0
        %3714 = vmatprep.mubr.bf16.mxu0 0
        %3715 = vmatmul.mubr.bf16.gmra.mrb[0].mxu0 %v3462
        %v3716 = vpop.f32.mrb[0].mxu0
        %v3717 = vadd.f32 %v3497, %v3716
        %v3718 = vpop.f32.mrb[0].mxu0
        %v3719 = vpop.f32.mrb[0].mxu0
        %v3720 = vadd.f32 %v3497, %v3719
        %v3721 = vpop.f32.mrb[0].mxu0
        %3722 = vmatprep.mubr.bf16.mxu0 0
        %3723 = vmatmul.mubr.bf16.gmra.mrb[0].mxu0 %v3463
        %v3724 = vpop.f32.mrb[0].mxu0
        %v3725 = vadd.f32 %v3497, %v3724
        %v3726 = vpop.f32.mrb[0].mxu0
        %v3727 = vpop.f32.mrb[0].mxu0
        %v3728 = vadd.f32 %v3497, %v3727
        %v3729 = vpop.f32.mrb[0].mxu0
        %3730 = vmatprep.mubr.bf16.mxu0 0
        %3731 = vmatmul.mubr.bf16.gmra.mrb[0].mxu0 %v3464
        %v3732 = vpop.f32.mrb[0].mxu0
        %v3733 = vadd.f32 %v3497, %v3732
        %v3734 = vpop.f32.mrb[0].mxu0
        %v3735 = vpop.f32.mrb[0].mxu0
        %v3736 = vadd.f32 %v3497, %v3735
        %v3737 = vpop.f32.mrb[0].mxu0
        %3738 = vmatprep.mubr.bf16.mxu0 0
        %3739 = vmatmul.mubr.bf16.gmra.mrb[0].mxu0 %v3465
        %v3740 = vpop.f32.mrb[0].mxu0
        %v3741 = vadd.f32 %v3497, %v3740
        %v3742 = vpop.f32.mrb[0].mxu0
        %v3743 = vpop.f32.mrb[0].mxu0
        %v3744 = vadd.f32 %v3497, %v3743
        %v3745 = vpop.f32.mrb[0].mxu0
        %3746 = vmatprep.mubr.bf16.mxu0 0
        %3747 = vmatmul.mubr.bf16.gmra.mrb[0].mxu0 %v3466
        %v3748 = vpop.f32.mrb[0].mxu0
        %v3749 = vadd.f32 %v3497, %v3748
        %v3750 = vpop.f32.mrb[0].mxu0
        %v3751 = vpop.f32.mrb[0].mxu0
        %v3752 = vadd.f32 %v3497, %v3751
        %v3753 = vpop.f32.mrb[0].mxu0
        %3754 = vmatprep.mubr.bf16.mxu0 0
        %3755 = vmatmul.mubr.bf16.gmra.mrb[0].mxu0 %v3467
        %v3756 = vpop.f32.mrb[0].mxu0
        %v3757 = vadd.f32 %v3497, %v3756
        %v3758 = vpop.f32.mrb[0].mxu0
        %v3759 = vpop.f32.mrb[0].mxu0
        %v3760 = vadd.f32 %v3497, %v3759
        %v3761 = vpop.f32.mrb[0].mxu0
        %3762 = vmatprep.mubr.bf16.mxu0 0
        %3763 = vmatmul.mubr.bf16.gmra.mrb[0].mxu0 %v3468
        %v3764 = vpop.f32.mrb[0].mxu0
        %v3765 = vadd.f32 %v3497, %v3764
        %v3766 = vpop.f32.mrb[0].mxu0
        %v3767 = vpop.f32.mrb[0].mxu0
        %v3768 = vadd.f32 %v3497, %v3767
        %v3769 = vpop.f32.mrb[0].mxu0
        %3770 = vmatprep.mubr.bf16.mxu0 0
        %3771 = vmatmul.mubr.bf16.gmra.mrb[0].mxu0 %v3469
        %v3772 = vpop.f32.mrb[0].mxu0
        %v3773 = vadd.f32 %v3497, %v3772
        %v3774 = vpop.f32.mrb[0].mxu0
        %v3775 = vpop.f32.mrb[0].mxu0
        %v3776 = vadd.f32 %v3497, %v3775
        %v3777 = vpop.f32.mrb[0].mxu0
        %3778 = vmatprep.mubr.bf16.mxu0 0
        %3779 = vmatmul.mubr.bf16.gmra.mrb[0].mxu0 %v3470
        %v3780 = vpop.f32.mrb[0].mxu0
        %v3781 = vadd.f32 %v3497, %v3780
        %v3782 = vpop.f32.mrb[0].mxu0
        %v3783 = vpop.f32.mrb[0].mxu0
        %v3784 = vadd.f32 %v3497, %v3783
        %v3785 = vpop.f32.mrb[0].mxu0
        %3786 = vmatprep.mubr.bf16.mxu0 0
        %3787 = vmatmul.mubr.bf16.gmra.mrb[0].mxu0 %v3471
        %v3788 = vpop.f32.mrb[0].mxu0
        %v3789 = vadd.f32 %v3497, %v3788
        %v3790 = vpop.f32.mrb[0].mxu0
        %v3791 = vpop.f32.mrb[0].mxu0
        %v3792 = vadd.f32 %v3497, %v3791
        %v3793 = vpop.f32.mrb[0].mxu0
        %3794 = vmatprep.mubr.bf16.mxu0 0
        %3795 = vmatmul.mubr.bf16.gmra.mrb[0].mxu0 %v3472
        %v3796 = vpop.f32.mrb[0].mxu0
        %v3797 = vadd.f32 %v3497, %v3796
        %v3798 = vpop.f32.mrb[0].mxu0
        %v3799 = vpop.f32.mrb[0].mxu0
        %v3800 = vadd.f32 %v3497, %v3799
        %v3801 = vpop.f32.mrb[0].mxu0
        %3802 = vmatprep.mubr.bf16.mxu0 0
        %3803 = vmatmul.mubr.bf16.gmra.mrb[0].mxu0 %v3473
        %v3804 = vpop.f32.mrb[0].mxu0
        %v3805 = vadd.f32 %v3497, %v3804
        %v3806 = vpop.f32.mrb[0].mxu0
        %v3807 = vpop.f32.mrb[0].mxu0
        %v3808 = vadd.f32 %v3497, %v3807
        %v3809 = vpop.f32.mrb[0].mxu0
        %3810 = vmatprep.mubr.bf16.mxu0 0
        %3811 = vmatmul.mubr.bf16.gmra.mrb[0].mxu0 %v3474
        %v3812 = vpop.f32.mrb[0].mxu0
        %v3813 = vadd.f32 %v3497, %v3812
        %v3814 = vpop.f32.mrb[0].mxu0
        %v3815 = vpop.f32.mrb[0].mxu0
        %v3816 = vadd.f32 %v3497, %v3815
        %v3817 = vpop.f32.mrb[0].mxu0
        %3818 = vmatprep.mubr.bf16.mxu0 0
        %3819 = vmatmul.mubr.bf16.gmra.mrb[0].mxu0 %v3475
        %v3820 = vpop.f32.mrb[0].mxu0
        %v3821 = vadd.f32 %v3497, %v3820
        %v3822 = vpop.f32.mrb[0].mxu0
        %v3823 = vpop.f32.mrb[0].mxu0
        %v3824 = vadd.f32 %v3497, %v3823
        %v3825 = vpop.f32.mrb[0].mxu0
        %3826 = vmatprep.mubr.bf16.mxu0 0
        %3827 = vmatmul.mubr.bf16.gmra.mrb[0].mxu0 %v3476
        %v3828 = vpop.f32.mrb[0].mxu0
        %v3829 = vadd.f32 %v3497, %v3828
        %v3830 = vpop.f32.mrb[0].mxu0
        %v3831 = vpop.f32.mrb[0].mxu0
        %v3832 = vadd.f32 %v3497, %v3831
        %v3833 = vpop.f32.mrb[0].mxu0
        %3834 = vdwg.mxu0
        %v3835 = vmax.f32 %v3581, 0.0
        %v3836 = vmax.f32 %v3584, 0.0
        %v3837 = vmax.f32 %v3589, 0.0
        %v3838 = vmax.f32 %v3592, 0.0
        %v3839 = vmax.f32 %v3597, 0.0
        %v3840 = vmax.f32 %v3600, 0.0
        %v3841 = vmax.f32 %v3605, 0.0
        %v3842 = vmax.f32 %v3608, 0.0
        %v3843 = vmax.f32 %v3613, 0.0
        %v3844 = vmax.f32 %v3616, 0.0
        %v3845 = vmax.f32 %v3621, 0.0
        %v3846 = vmax.f32 %v3624, 0.0
        %v3847 = vmax.f32 %v3629, 0.0
        %v3848 = vmax.f32 %v3632, 0.0
        %v3849 = vmax.f32 %v3637, 0.0
        %v3850 = vmax.f32 %v3640, 0.0
        %v3851 = vmax.f32 %v3645, 0.0
        %v3852 = vmax.f32 %v3648, 0.0
        %v3853 = vmax.f32 %v3653, 0.0
        %v3854 = vmax.f32 %v3656, 0.0
        %v3855 = vmax.f32 %v3661, 0.0
        %v3856 = vmax.f32 %v3664, 0.0
        %v3857 = vmax.f32 %v3669, 0.0
        %v3858 = vmax.f32 %v3672, 0.0
        %v3859 = vmax.f32 %v3677, 0.0
        %v3860 = vmax.f32 %v3680, 0.0
        %v3861 = vmax.f32 %v3685, 0.0
        %v3862 = vmax.f32 %v3688, 0.0
        %v3863 = vmax.f32 %v3693, 0.0
        %v3864 = vmax.f32 %v3696, 0.0
        %v3865 = vmax.f32 %v3701, 0.0
        %v3866 = vmax.f32 %v3704, 0.0
        %v3867 = vmax.f32 %v3709, 0.0
        %v3868 = vmax.f32 %v3712, 0.0
        %v3869 = vmax.f32 %v3717, 0.0
        %v3870 = vmax.f32 %v3720, 0.0
        %v3871 = vmax.f32 %v3725, 0.0
        %v3872 = vmax.f32 %v3728, 0.0
        %v3873 = vmax.f32 %v3733, 0.0
        %v3874 = vmax.f32 %v3736, 0.0
        %v3875 = vmax.f32 %v3741, 0.0
        %v3876 = vmax.f32 %v3744, 0.0
        %v3877 = vmax.f32 %v3749, 0.0
        %v3878 = vmax.f32 %v3752, 0.0
        %v3879 = vmax.f32 %v3757, 0.0
        %v3880 = vmax.f32 %v3760, 0.0
        %v3881 = vmax.f32 %v3765, 0.0
        %v3882 = vmax.f32 %v3768, 0.0
        %v3883 = vmax.f32 %v3773, 0.0
        %v3884 = vmax.f32 %v3776, 0.0
        %v3885 = vmax.f32 %v3781, 0.0
        %v3886 = vmax.f32 %v3784, 0.0
        %v3887 = vmax.f32 %v3789, 0.0
        %v3888 = vmax.f32 %v3792, 0.0
        %v3889 = vmax.f32 %v3797, 0.0
        %v3890 = vmax.f32 %v3800, 0.0
        %v3891 = vmax.f32 %v3805, 0.0
        %v3892 = vmax.f32 %v3808, 0.0
        %v3893 = vmax.f32 %v3813, 0.0
        %v3894 = vmax.f32 %v3816, 0.0
        %v3895 = vmax.f32 %v3821, 0.0
        %v3896 = vmax.f32 %v3824, 0.0
        %v3897 = vmax.f32 %v3829, 0.0
        %v3898 = vmax.f32 %v3832, 0.0
        %v3899 = vpack.c.bf16 %v3836, %v3835
        %v3900 = vpack.c.bf16 %v3838, %v3837
        %v3901 = vpack.c.bf16 %v3840, %v3839
        %v3902 = vpack.c.bf16 %v3842, %v3841
        %v3903 = vpack.c.bf16 %v3844, %v3843
        %v3904 = vpack.c.bf16 %v3846, %v3845
        %v3905 = vpack.c.bf16 %v3848, %v3847
        %v3906 = vpack.c.bf16 %v3850, %v3849
        %v3907 = vpack.c.bf16 %v3852, %v3851
        %v3908 = vpack.c.bf16 %v3854, %v3853
        %v3909 = vpack.c.bf16 %v3856, %v3855
        %v3910 = vpack.c.bf16 %v3858, %v3857
        %v3911 = vpack.c.bf16 %v3860, %v3859
        %v3912 = vpack.c.bf16 %v3862, %v3861
        %v3913 = vpack.c.bf16 %v3864, %v3863
        %v3914 = vpack.c.bf16 %v3866, %v3865
        %v3915 = vpack.c.bf16 %v3868, %v3867
        %v3916 = vpack.c.bf16 %v3870, %v3869
        %v3917 = vpack.c.bf16 %v3872, %v3871
        %v3918 = vpack.c.bf16 %v3874, %v3873
        %v3919 = vpack.c.bf16 %v3876, %v3875
        %v3920 = vpack.c.bf16 %v3878, %v3877
        %v3921 = vpack.c.bf16 %v3880, %v3879
        %v3922 = vpack.c.bf16 %v3882, %v3881
        %v3923 = vpack.c.bf16 %v3884, %v3883
        %v3924 = vpack.c.bf16 %v3886, %v3885
        %v3925 = vpack.c.bf16 %v3888, %v3887
        %v3926 = vpack.c.bf16 %v3890, %v3889
        %v3927 = vpack.c.bf16 %v3892, %v3891
        %v3928 = vpack.c.bf16 %v3894, %v3893
        %v3929 = vpack.c.bf16 %v3896, %v3895
        %v3930 = vpack.c.bf16 %v3898, %v3897
        %v3931 = vld [vmem:[%s8] sm:$0xf]
        %v3932 = vld [vmem:[%s8 + $0x4] sm:$0xf]
        %v3933 = vld [vmem:[%s8 + $0x8] sm:$0xf]
        %v3934 = vld [vmem:[%s8 + $0xc] sm:$0xf]
        %v3935 = vld [vmem:[%s8 + $0x10] sm:$0xf]
        %v3936 = vld [vmem:[%s8 + $0x14] sm:$0xf]
        %v3937 = vld [vmem:[%s8 + $0x18] sm:$0xf]
        %v3938 = vld [vmem:[%s8 + $0x1c] sm:$0xf]
        %v3939 = vld [vmem:[%s8 + $0x20] sm:$0xf]
        %v3940 = vld [vmem:[%s8 + $0x24] sm:$0xf]
        %v3941 = vld [vmem:[%s8 + $0x28] sm:$0xf]
        %v3942 = vld [vmem:[%s8 + $0x2c] sm:$0xf]
        %v3943 = vld [vmem:[%s8 + $0x30] sm:$0xf]
        %v3944 = vld [vmem:[%s8 + $0x34] sm:$0xf]
        %v3945 = vld [vmem:[%s8 + $0x38] sm:$0xf]
        %v3946 = vld [vmem:[%s8 + $0x3c] sm:$0xf]
        %v3947 = vld [vmem:[%s9] sm:$0x1]
        %v3948 = vlaneseq
        %v3949 = vshrl.u32 %v3948, 7
        %v3950 = vsub.s32 0, %v3949
        %v3951 = vrot.slane %v3947, %v3950
        %v3968 = vunpack.c.l.b16 %v3931
        %v3969 = vunpack.c.l.b16 %v3932
        %v3970 = vunpack.c.l.b16 %v3933
        %v3971 = vunpack.c.l.b16 %v3934
        %v3972 = vunpack.c.l.b16 %v3935
        %v3973 = vunpack.c.l.b16 %v3936
        %v3974 = vunpack.c.l.b16 %v3937
        %v3975 = vunpack.c.l.b16 %v3938
        %v3976 = vunpack.c.l.b16 %v3939
        %v3977 = vunpack.c.l.b16 %v3940
        %v3978 = vunpack.c.l.b16 %v3941
        %v3979 = vunpack.c.l.b16 %v3942
        %v3980 = vunpack.c.l.b16 %v3943
        %v3981 = vunpack.c.l.b16 %v3944
        %v3982 = vunpack.c.l.b16 %v3945
        %v3983 = vunpack.c.l.b16 %v3946
        %v3984 = vpack.c.b16 %v3969, %v3968
        %v3985 = vpack.c.b16 %v3971, %v3970
        %v3986 = vpack.c.b16 %v3973, %v3972
        %v3987 = vpack.c.b16 %v3975, %v3974
        %v3988 = vpack.c.b16 %v3977, %v3976
        %v3989 = vpack.c.b16 %v3979, %v3978
        %v3990 = vpack.c.b16 %v3981, %v3980
        %v3991 = vpack.c.b16 %v3983, %v3982
        %4000 = vmatprep.subr.bf16.mxu0 0
        %4001 = vmatpush1.bf16.msra.mxu0 %v3984
        %4002 = vmatprep.subr.bf16.mxu0 0
        %4003 = vmatpush1.bf16.msra.mxu0 %v3985
        %4004 = vmatprep.subr.bf16.mxu0 0
        %4005 = vmatpush1.bf16.msra.mxu0 %v3986
        %4006 = vmatprep.subr.bf16.mxu0 0
        %4007 = vmatpush1.bf16.msra.mxu0 %v3987
        %4008 = vmatprep.subr.bf16.mxu0 0
        %4009 = vmatpush1.bf16.msra.mxu0 %v3988
        %4010 = vmatprep.subr.bf16.mxu0 0
        %4011 = vmatpush1.bf16.msra.mxu0 %v3989
        %4012 = vmatprep.subr.bf16.mxu0 0
        %4013 = vmatpush1.bf16.msra.mxu0 %v3990
        %4014 = vmatprep.subr.bf16.mxu0 0
        %4015 = vmatpush1.bf16.msra.mxu0 %v3991
        %4016 = vmatprep.subr.bf16.mxu0 0
        %4017 = vmatpush1.bf16.msra.mxu0 0
        %4018 = vmatprep.subr.bf16.mxu0 0
        %4019 = vmatpush1.bf16.msra.mxu0 0
        %4020 = vmatprep.subr.bf16.mxu0 0
        %4021 = vmatpush1.bf16.msra.mxu0 0
        %4022 = vmatprep.subr.bf16.mxu0 0
        %4023 = vmatpush1.bf16.msra.mxu0 0
        %4024 = vmatprep.subr.bf16.mxu0 0
        %4025 = vmatpush1.bf16.msra.mxu0 0
        %4026 = vmatprep.subr.bf16.mxu0 0
        %4027 = vmatpush1.bf16.msra.mxu0 0
        %4028 = vmatprep.subr.bf16.mxu0 0
        %4029 = vmatpush1.bf16.msra.mxu0 0
        %4030 = vmatprep.subr.bf16.mxu0 0
        %4031 = vmatpush1.bf16.msra.mxu0 0
        %4032 = vmatprep.mubr.bf16.mxu0 0
        %4033 = vmatmul.mubr.bf16.gmra.mrb[0].mxu0 %v3899
        %v4034 = vpop.f32.mrb[0].mxu0
        %v4035 = vadd.f32 %v3951, %v4034
        %v4036 = vpop.f32.mrb[0].mxu0
        %v4037 = vpop.f32.mrb[0].mxu0
        %v4038 = vadd.f32 %v3951, %v4037
        %v4039 = vpop.f32.mrb[0].mxu0
        %4040 = vmatprep.mubr.bf16.mxu0 0
        %4041 = vmatmul.mubr.bf16.gmra.mrb[0].mxu0 %v3900
        %v4042 = vpop.f32.mrb[0].mxu0
        %v4043 = vadd.f32 %v3951, %v4042
        %v4044 = vpop.f32.mrb[0].mxu0
        %v4045 = vpop.f32.mrb[0].mxu0
        %v4046 = vadd.f32 %v3951, %v4045
        %v4047 = vpop.f32.mrb[0].mxu0
        %4048 = vmatprep.mubr.bf16.mxu0 0
        %4049 = vmatmul.mubr.bf16.gmra.mrb[0].mxu0 %v3901
        %v4050 = vpop.f32.mrb[0].mxu0
        %v4051 = vadd.f32 %v3951, %v4050
        %v4052 = vpop.f32.mrb[0].mxu0
        %v4053 = vpop.f32.mrb[0].mxu0
        %v4054 = vadd.f32 %v3951, %v4053
        %v4055 = vpop.f32.mrb[0].mxu0
        %4056 = vmatprep.mubr.bf16.mxu0 0
        %4057 = vmatmul.mubr.bf16.gmra.mrb[0].mxu0 %v3902
        %v4058 = vpop.f32.mrb[0].mxu0
        %v4059 = vadd.f32 %v3951, %v4058
        %v4060 = vpop.f32.mrb[0].mxu0
        %v4061 = vpop.f32.mrb[0].mxu0
        %v4062 = vadd.f32 %v3951, %v4061
        %v4063 = vpop.f32.mrb[0].mxu0
        %4064 = vmatprep.mubr.bf16.mxu0 0
        %4065 = vmatmul.mubr.bf16.gmra.mrb[0].mxu0 %v3903
        %v4066 = vpop.f32.mrb[0].mxu0
        %v4067 = vadd.f32 %v3951, %v4066
        %v4068 = vpop.f32.mrb[0].mxu0
        %v4069 = vpop.f32.mrb[0].mxu0
        %v4070 = vadd.f32 %v3951, %v4069
        %v4071 = vpop.f32.mrb[0].mxu0
        %4072 = vmatprep.mubr.bf16.mxu0 0
        %4073 = vmatmul.mubr.bf16.gmra.mrb[0].mxu0 %v3904
        %v4074 = vpop.f32.mrb[0].mxu0
        %v4075 = vadd.f32 %v3951, %v4074
        %v4076 = vpop.f32.mrb[0].mxu0
        %v4077 = vpop.f32.mrb[0].mxu0
        %v4078 = vadd.f32 %v3951, %v4077
        %v4079 = vpop.f32.mrb[0].mxu0
        %4080 = vmatprep.mubr.bf16.mxu0 0
        %4081 = vmatmul.mubr.bf16.gmra.mrb[0].mxu0 %v3905
        %v4082 = vpop.f32.mrb[0].mxu0
        %v4083 = vadd.f32 %v3951, %v4082
        %v4084 = vpop.f32.mrb[0].mxu0
        %v4085 = vpop.f32.mrb[0].mxu0
        %v4086 = vadd.f32 %v3951, %v4085
        %v4087 = vpop.f32.mrb[0].mxu0
        %4088 = vmatprep.mubr.bf16.mxu0 0
        %4089 = vmatmul.mubr.bf16.gmra.mrb[0].mxu0 %v3906
        %v4090 = vpop.f32.mrb[0].mxu0
        %v4091 = vadd.f32 %v3951, %v4090
        %v4092 = vpop.f32.mrb[0].mxu0
        %v4093 = vpop.f32.mrb[0].mxu0
        %v4094 = vadd.f32 %v3951, %v4093
        %v4095 = vpop.f32.mrb[0].mxu0
        %4096 = vmatprep.mubr.bf16.mxu0 0
        %4097 = vmatmul.mubr.bf16.gmra.mrb[0].mxu0 %v3907
        %v4098 = vpop.f32.mrb[0].mxu0
        %v4099 = vadd.f32 %v3951, %v4098
        %v4100 = vpop.f32.mrb[0].mxu0
        %v4101 = vpop.f32.mrb[0].mxu0
        %v4102 = vadd.f32 %v3951, %v4101
        %v4103 = vpop.f32.mrb[0].mxu0
        %4104 = vmatprep.mubr.bf16.mxu0 0
        %4105 = vmatmul.mubr.bf16.gmra.mrb[0].mxu0 %v3908
        %v4106 = vpop.f32.mrb[0].mxu0
        %v4107 = vadd.f32 %v3951, %v4106
        %v4108 = vpop.f32.mrb[0].mxu0
        %v4109 = vpop.f32.mrb[0].mxu0
        %v4110 = vadd.f32 %v3951, %v4109
        %v4111 = vpop.f32.mrb[0].mxu0
        %4112 = vmatprep.mubr.bf16.mxu0 0
        %4113 = vmatmul.mubr.bf16.gmra.mrb[0].mxu0 %v3909
        %v4114 = vpop.f32.mrb[0].mxu0
        %v4115 = vadd.f32 %v3951, %v4114
        %v4116 = vpop.f32.mrb[0].mxu0
        %v4117 = vpop.f32.mrb[0].mxu0
        %v4118 = vadd.f32 %v3951, %v4117
        %v4119 = vpop.f32.mrb[0].mxu0
        %4120 = vmatprep.mubr.bf16.mxu0 0
        %4121 = vmatmul.mubr.bf16.gmra.mrb[0].mxu0 %v3910
        %v4122 = vpop.f32.mrb[0].mxu0
        %v4123 = vadd.f32 %v3951, %v4122
        %v4124 = vpop.f32.mrb[0].mxu0
        %v4125 = vpop.f32.mrb[0].mxu0
        %v4126 = vadd.f32 %v3951, %v4125
        %v4127 = vpop.f32.mrb[0].mxu0
        %4128 = vmatprep.mubr.bf16.mxu0 0
        %4129 = vmatmul.mubr.bf16.gmra.mrb[0].mxu0 %v3911
        %v4130 = vpop.f32.mrb[0].mxu0
        %v4131 = vadd.f32 %v3951, %v4130
        %v4132 = vpop.f32.mrb[0].mxu0
        %v4133 = vpop.f32.mrb[0].mxu0
        %v4134 = vadd.f32 %v3951, %v4133
        %v4135 = vpop.f32.mrb[0].mxu0
        %4136 = vmatprep.mubr.bf16.mxu0 0
        %4137 = vmatmul.mubr.bf16.gmra.mrb[0].mxu0 %v3912
        %v4138 = vpop.f32.mrb[0].mxu0
        %v4139 = vadd.f32 %v3951, %v4138
        %v4140 = vpop.f32.mrb[0].mxu0
        %v4141 = vpop.f32.mrb[0].mxu0
        %v4142 = vadd.f32 %v3951, %v4141
        %v4143 = vpop.f32.mrb[0].mxu0
        %4144 = vmatprep.mubr.bf16.mxu0 0
        %4145 = vmatmul.mubr.bf16.gmra.mrb[0].mxu0 %v3913
        %v4146 = vpop.f32.mrb[0].mxu0
        %v4147 = vadd.f32 %v3951, %v4146
        %v4148 = vpop.f32.mrb[0].mxu0
        %v4149 = vpop.f32.mrb[0].mxu0
        %v4150 = vadd.f32 %v3951, %v4149
        %v4151 = vpop.f32.mrb[0].mxu0
        %4152 = vmatprep.mubr.bf16.mxu0 0
        %4153 = vmatmul.mubr.bf16.gmra.mrb[0].mxu0 %v3914
        %v4154 = vpop.f32.mrb[0].mxu0
        %v4155 = vadd.f32 %v3951, %v4154
        %v4156 = vpop.f32.mrb[0].mxu0
        %v4157 = vpop.f32.mrb[0].mxu0
        %v4158 = vadd.f32 %v3951, %v4157
        %v4159 = vpop.f32.mrb[0].mxu0
        %4160 = vmatprep.mubr.bf16.mxu0 0
        %4161 = vmatmul.mubr.bf16.gmra.mrb[0].mxu0 %v3915
        %v4162 = vpop.f32.mrb[0].mxu0
        %v4163 = vadd.f32 %v3951, %v4162
        %v4164 = vpop.f32.mrb[0].mxu0
        %v4165 = vpop.f32.mrb[0].mxu0
        %v4166 = vadd.f32 %v3951, %v4165
        %v4167 = vpop.f32.mrb[0].mxu0
        %4168 = vmatprep.mubr.bf16.mxu0 0
        %4169 = vmatmul.mubr.bf16.gmra.mrb[0].mxu0 %v3916
        %v4170 = vpop.f32.mrb[0].mxu0
        %v4171 = vadd.f32 %v3951, %v4170
        %v4172 = vpop.f32.mrb[0].mxu0
        %v4173 = vpop.f32.mrb[0].mxu0
        %v4174 = vadd.f32 %v3951, %v4173
        %v4175 = vpop.f32.mrb[0].mxu0
        %4176 = vmatprep.mubr.bf16.mxu0 0
        %4177 = vmatmul.mubr.bf16.gmra.mrb[0].mxu0 %v3917
        %v4178 = vpop.f32.mrb[0].mxu0
        %v4179 = vadd.f32 %v3951, %v4178
        %v4180 = vpop.f32.mrb[0].mxu0
        %v4181 = vpop.f32.mrb[0].mxu0
        %v4182 = vadd.f32 %v3951, %v4181
        %v4183 = vpop.f32.mrb[0].mxu0
        %4184 = vmatprep.mubr.bf16.mxu0 0
        %4185 = vmatmul.mubr.bf16.gmra.mrb[0].mxu0 %v3918
        %v4186 = vpop.f32.mrb[0].mxu0
        %v4187 = vadd.f32 %v3951, %v4186
        %v4188 = vpop.f32.mrb[0].mxu0
        %v4189 = vpop.f32.mrb[0].mxu0
        %v4190 = vadd.f32 %v3951, %v4189
        %v4191 = vpop.f32.mrb[0].mxu0
        %4192 = vmatprep.mubr.bf16.mxu0 0
        %4193 = vmatmul.mubr.bf16.gmra.mrb[0].mxu0 %v3919
        %v4194 = vpop.f32.mrb[0].mxu0
        %v4195 = vadd.f32 %v3951, %v4194
        %v4196 = vpop.f32.mrb[0].mxu0
        %v4197 = vpop.f32.mrb[0].mxu0
        %v4198 = vadd.f32 %v3951, %v4197
        %v4199 = vpop.f32.mrb[0].mxu0
        %4200 = vmatprep.mubr.bf16.mxu0 0
        %4201 = vmatmul.mubr.bf16.gmra.mrb[0].mxu0 %v3920
        %v4202 = vpop.f32.mrb[0].mxu0
        %v4203 = vadd.f32 %v3951, %v4202
        %v4204 = vpop.f32.mrb[0].mxu0
        %v4205 = vpop.f32.mrb[0].mxu0
        %v4206 = vadd.f32 %v3951, %v4205
        %v4207 = vpop.f32.mrb[0].mxu0
        %4208 = vmatprep.mubr.bf16.mxu0 0
        %4209 = vmatmul.mubr.bf16.gmra.mrb[0].mxu0 %v3921
        %v4210 = vpop.f32.mrb[0].mxu0
        %v4211 = vadd.f32 %v3951, %v4210
        %v4212 = vpop.f32.mrb[0].mxu0
        %v4213 = vpop.f32.mrb[0].mxu0
        %v4214 = vadd.f32 %v3951, %v4213
        %v4215 = vpop.f32.mrb[0].mxu0
        %4216 = vmatprep.mubr.bf16.mxu0 0
        %4217 = vmatmul.mubr.bf16.gmra.mrb[0].mxu0 %v3922
        %v4218 = vpop.f32.mrb[0].mxu0
        %v4219 = vadd.f32 %v3951, %v4218
        %v4220 = vpop.f32.mrb[0].mxu0
        %v4221 = vpop.f32.mrb[0].mxu0
        %v4222 = vadd.f32 %v3951, %v4221
        %v4223 = vpop.f32.mrb[0].mxu0
        %4224 = vmatprep.mubr.bf16.mxu0 0
        %4225 = vmatmul.mubr.bf16.gmra.mrb[0].mxu0 %v3923
        %v4226 = vpop.f32.mrb[0].mxu0
        %v4227 = vadd.f32 %v3951, %v4226
        %v4228 = vpop.f32.mrb[0].mxu0
        %v4229 = vpop.f32.mrb[0].mxu0
        %v4230 = vadd.f32 %v3951, %v4229
        %v4231 = vpop.f32.mrb[0].mxu0
        %4232 = vmatprep.mubr.bf16.mxu0 0
        %4233 = vmatmul.mubr.bf16.gmra.mrb[0].mxu0 %v3924
        %v4234 = vpop.f32.mrb[0].mxu0
        %v4235 = vadd.f32 %v3951, %v4234
        %v4236 = vpop.f32.mrb[0].mxu0
        %v4237 = vpop.f32.mrb[0].mxu0
        %v4238 = vadd.f32 %v3951, %v4237
        %v4239 = vpop.f32.mrb[0].mxu0
        %4240 = vmatprep.mubr.bf16.mxu0 0
        %4241 = vmatmul.mubr.bf16.gmra.mrb[0].mxu0 %v3925
        %v4242 = vpop.f32.mrb[0].mxu0
        %v4243 = vadd.f32 %v3951, %v4242
        %v4244 = vpop.f32.mrb[0].mxu0
        %v4245 = vpop.f32.mrb[0].mxu0
        %v4246 = vadd.f32 %v3951, %v4245
        %v4247 = vpop.f32.mrb[0].mxu0
        %4248 = vmatprep.mubr.bf16.mxu0 0
        %4249 = vmatmul.mubr.bf16.gmra.mrb[0].mxu0 %v3926
        %v4250 = vpop.f32.mrb[0].mxu0
        %v4251 = vadd.f32 %v3951, %v4250
        %v4252 = vpop.f32.mrb[0].mxu0
        %v4253 = vpop.f32.mrb[0].mxu0
        %v4254 = vadd.f32 %v3951, %v4253
        %v4255 = vpop.f32.mrb[0].mxu0
        %4256 = vmatprep.mubr.bf16.mxu0 0
        %4257 = vmatmul.mubr.bf16.gmra.mrb[0].mxu0 %v3927
        %v4258 = vpop.f32.mrb[0].mxu0
        %v4259 = vadd.f32 %v3951, %v4258
        %v4260 = vpop.f32.mrb[0].mxu0
        %v4261 = vpop.f32.mrb[0].mxu0
        %v4262 = vadd.f32 %v3951, %v4261
        %v4263 = vpop.f32.mrb[0].mxu0
        %4264 = vmatprep.mubr.bf16.mxu0 0
        %4265 = vmatmul.mubr.bf16.gmra.mrb[0].mxu0 %v3928
        %v4266 = vpop.f32.mrb[0].mxu0
        %v4267 = vadd.f32 %v3951, %v4266
        %v4268 = vpop.f32.mrb[0].mxu0
        %v4269 = vpop.f32.mrb[0].mxu0
        %v4270 = vadd.f32 %v3951, %v4269
        %v4271 = vpop.f32.mrb[0].mxu0
        %4272 = vmatprep.mubr.bf16.mxu0 0
        %4273 = vmatmul.mubr.bf16.gmra.mrb[0].mxu0 %v3929
        %v4274 = vpop.f32.mrb[0].mxu0
        %v4275 = vadd.f32 %v3951, %v4274
        %v4276 = vpop.f32.mrb[0].mxu0
        %v4277 = vpop.f32.mrb[0].mxu0
        %v4278 = vadd.f32 %v3951, %v4277
        %v4279 = vpop.f32.mrb[0].mxu0
        %4280 = vmatprep.mubr.bf16.mxu0 0
        %4281 = vmatmul.mubr.bf16.gmra.mrb[0].mxu0 %v3930
        %v4282 = vpop.f32.mrb[0].mxu0
        %v4283 = vadd.f32 %v3951, %v4282
        %v4284 = vpop.f32.mrb[0].mxu0
        %v4285 = vpop.f32.mrb[0].mxu0
        %v4286 = vadd.f32 %v3951, %v4285
        %v4287 = vpop.f32.mrb[0].mxu0
        %4288 = vdwg.mxu0
        %v4289 = vadd.f32 %v3317, %v4035
        %v4290 = vadd.f32 %v3318, %v4038
        %v4291 = vadd.f32 %v3319, %v4043
        %v4292 = vadd.f32 %v3320, %v4046
        %v4293 = vadd.f32 %v3321, %v4051
        %v4294 = vadd.f32 %v3322, %v4054
        %v4295 = vadd.f32 %v3323, %v4059
        %v4296 = vadd.f32 %v3324, %v4062
        %v4297 = vadd.f32 %v3325, %v4067
        %v4298 = vadd.f32 %v3326, %v4070
        %v4299 = vadd.f32 %v3327, %v4075
        %v4300 = vadd.f32 %v3328, %v4078
        %v4301 = vadd.f32 %v3329, %v4083
        %v4302 = vadd.f32 %v3330, %v4086
        %v4303 = vadd.f32 %v3331, %v4091
        %v4304 = vadd.f32 %v3332, %v4094
        %v4305 = vadd.f32 %v3333, %v4099
        %v4306 = vadd.f32 %v3334, %v4102
        %v4307 = vadd.f32 %v3335, %v4107
        %v4308 = vadd.f32 %v3336, %v4110
        %v4309 = vadd.f32 %v3337, %v4115
        %v4310 = vadd.f32 %v3338, %v4118
        %v4311 = vadd.f32 %v3339, %v4123
        %v4312 = vadd.f32 %v3340, %v4126
        %v4313 = vadd.f32 %v3341, %v4131
        %v4314 = vadd.f32 %v3342, %v4134
        %v4315 = vadd.f32 %v3343, %v4139
        %v4316 = vadd.f32 %v3344, %v4142
        %v4317 = vadd.f32 %v3345, %v4147
        %v4318 = vadd.f32 %v3346, %v4150
        %v4319 = vadd.f32 %v3347, %v4155
        %v4320 = vadd.f32 %v3348, %v4158
        %v4321 = vadd.f32 %v3349, %v4163
        %v4322 = vadd.f32 %v3350, %v4166
        %v4323 = vadd.f32 %v3351, %v4171
        %v4324 = vadd.f32 %v3352, %v4174
        %v4325 = vadd.f32 %v3353, %v4179
        %v4326 = vadd.f32 %v3354, %v4182
        %v4327 = vadd.f32 %v3355, %v4187
        %v4328 = vadd.f32 %v3356, %v4190
        %v4329 = vadd.f32 %v3357, %v4195
        %v4330 = vadd.f32 %v3358, %v4198
        %v4331 = vadd.f32 %v3359, %v4203
        %v4332 = vadd.f32 %v3360, %v4206
        %v4333 = vadd.f32 %v3361, %v4211
        %v4334 = vadd.f32 %v3362, %v4214
        %v4335 = vadd.f32 %v3363, %v4219
        %v4336 = vadd.f32 %v3364, %v4222
        %v4337 = vadd.f32 %v3365, %v4227
        %v4338 = vadd.f32 %v3366, %v4230
        %v4339 = vadd.f32 %v3367, %v4235
        %v4340 = vadd.f32 %v3368, %v4238
        %v4341 = vadd.f32 %v3369, %v4243
        %v4342 = vadd.f32 %v3370, %v4246
        %v4343 = vadd.f32 %v3371, %v4251
        %v4344 = vadd.f32 %v3372, %v4254
        %v4345 = vadd.f32 %v3373, %v4259
        %v4346 = vadd.f32 %v3374, %v4262
        %v4347 = vadd.f32 %v3375, %v4267
        %v4348 = vadd.f32 %v3376, %v4270
        %v4349 = vadd.f32 %v3377, %v4275
        %v4350 = vadd.f32 %v3378, %v4278
        %v4351 = vadd.f32 %v3379, %v4283
        %v4352 = vadd.f32 %v3380, %v4286
        %v4353 = vadd.f32 %v4289, %v2290
        %v4354 = vadd.f32 %v4290, %v2294
        %v4355 = vadd.f32 %v4291, %v2300
        %v4356 = vadd.f32 %v4292, %v2304
        %v4357 = vadd.f32 %v4293, %v2310
        %v4358 = vadd.f32 %v4294, %v2314
        %v4359 = vadd.f32 %v4295, %v2320
        %v4360 = vadd.f32 %v4296, %v2324
        %v4361 = vadd.f32 %v4297, %v2330
        %v4362 = vadd.f32 %v4298, %v2334
        %v4363 = vadd.f32 %v4299, %v2340
        %v4364 = vadd.f32 %v4300, %v2344
        %v4365 = vadd.f32 %v4301, %v2350
        %v4366 = vadd.f32 %v4302, %v2354
        %v4367 = vadd.f32 %v4303, %v2360
        %v4368 = vadd.f32 %v4304, %v2364
        %v4369 = vadd.f32 %v4305, %v2370
        %v4370 = vadd.f32 %v4306, %v2374
        %v4371 = vadd.f32 %v4307, %v2380
        %v4372 = vadd.f32 %v4308, %v2384
        %v4373 = vadd.f32 %v4309, %v2390
        %v4374 = vadd.f32 %v4310, %v2394
        %v4375 = vadd.f32 %v4311, %v2400
        %v4376 = vadd.f32 %v4312, %v2404
        %v4377 = vadd.f32 %v4313, %v2410
        %v4378 = vadd.f32 %v4314, %v2414
        %v4379 = vadd.f32 %v4315, %v2420
        %v4380 = vadd.f32 %v4316, %v2424
        %v4381 = vadd.f32 %v4317, %v2430
        %v4382 = vadd.f32 %v4318, %v2434
        %v4383 = vadd.f32 %v4319, %v2440
        %v4384 = vadd.f32 %v4320, %v2444
        %v4385 = vadd.f32 %v4321, %v2450
        %v4386 = vadd.f32 %v4322, %v2454
        %v4387 = vadd.f32 %v4323, %v2460
        %v4388 = vadd.f32 %v4324, %v2464
        %v4389 = vadd.f32 %v4325, %v2470
        %v4390 = vadd.f32 %v4326, %v2474
        %v4391 = vadd.f32 %v4327, %v2480
        %v4392 = vadd.f32 %v4328, %v2484
        %v4393 = vadd.f32 %v4329, %v2490
        %v4394 = vadd.f32 %v4330, %v2494
        %v4395 = vadd.f32 %v4331, %v2500
        %v4396 = vadd.f32 %v4332, %v2504
        %v4397 = vadd.f32 %v4333, %v2510
        %v4398 = vadd.f32 %v4334, %v2514
        %v4399 = vadd.f32 %v4335, %v2520
        %v4400 = vadd.f32 %v4336, %v2524
        %v4401 = vadd.f32 %v4337, %v2530
        %v4402 = vadd.f32 %v4338, %v2534
        %v4403 = vadd.f32 %v4339, %v2540
        %v4404 = vadd.f32 %v4340, %v2544
        %v4405 = vadd.f32 %v4341, %v2550
        %v4406 = vadd.f32 %v4342, %v2554
        %v4407 = vadd.f32 %v4343, %v2560
        %v4408 = vadd.f32 %v4344, %v2564
        %v4409 = vadd.f32 %v4345, %v2570
        %v4410 = vadd.f32 %v4346, %v2574
        %v4411 = vadd.f32 %v4347, %v2580
        %v4412 = vadd.f32 %v4348, %v2584
        %v4413 = vadd.f32 %v4349, %v2590
        %v4414 = vadd.f32 %v4350, %v2594
        %v4415 = vadd.f32 %v4351, %v2600
        %v4416 = vadd.f32 %v4352, %v2604
        %v4417 = vld [vmem:[%s5 + $0x1] sm:$0x1]
        %v4418 = vlaneseq
        %v4419 = vshrl.u32 %v4418, 7
        %v4420 = vsub.s32 0, %v4419
        %v4421 = vrot.slane %v4417, %v4420
        %v4422 = vadd.f32 %v4353, %v4421
        %v4423 = vadd.f32 %v4354, %v4421
        %v4424 = vadd.f32 %v4355, %v4421
        %v4425 = vadd.f32 %v4356, %v4421
        %v4426 = vadd.f32 %v4357, %v4421
        %v4427 = vadd.f32 %v4358, %v4421
        %v4428 = vadd.f32 %v4359, %v4421
        %v4429 = vadd.f32 %v4360, %v4421
        %v4430 = vadd.f32 %v4361, %v4421
        %v4431 = vadd.f32 %v4362, %v4421
        %v4432 = vadd.f32 %v4363, %v4421
        %v4433 = vadd.f32 %v4364, %v4421
        %v4434 = vadd.f32 %v4365, %v4421
        %v4435 = vadd.f32 %v4366, %v4421
        %v4436 = vadd.f32 %v4367, %v4421
        %v4437 = vadd.f32 %v4368, %v4421
        %v4438 = vadd.f32 %v4369, %v4421
        %v4439 = vadd.f32 %v4370, %v4421
        %v4440 = vadd.f32 %v4371, %v4421
        %v4441 = vadd.f32 %v4372, %v4421
        %v4442 = vadd.f32 %v4373, %v4421
        %v4443 = vadd.f32 %v4374, %v4421
        %v4444 = vadd.f32 %v4375, %v4421
        %v4445 = vadd.f32 %v4376, %v4421
        %v4446 = vadd.f32 %v4377, %v4421
        %v4447 = vadd.f32 %v4378, %v4421
        %v4448 = vadd.f32 %v4379, %v4421
        %v4449 = vadd.f32 %v4380, %v4421
        %v4450 = vadd.f32 %v4381, %v4421
        %v4451 = vadd.f32 %v4382, %v4421
        %v4452 = vadd.f32 %v4383, %v4421
        %v4453 = vadd.f32 %v4384, %v4421
        %v4454 = vadd.f32 %v4385, %v4421
        %v4455 = vadd.f32 %v4386, %v4421
        %v4456 = vadd.f32 %v4387, %v4421
        %v4457 = vadd.f32 %v4388, %v4421
        %v4458 = vadd.f32 %v4389, %v4421
        %v4459 = vadd.f32 %v4390, %v4421
        %v4460 = vadd.f32 %v4391, %v4421
        %v4461 = vadd.f32 %v4392, %v4421
        %v4462 = vadd.f32 %v4393, %v4421
        %v4463 = vadd.f32 %v4394, %v4421
        %v4464 = vadd.f32 %v4395, %v4421
        %v4465 = vadd.f32 %v4396, %v4421
        %v4466 = vadd.f32 %v4397, %v4421
        %v4467 = vadd.f32 %v4398, %v4421
        %v4468 = vadd.f32 %v4399, %v4421
        %v4469 = vadd.f32 %v4400, %v4421
        %v4470 = vadd.f32 %v4401, %v4421
        %v4471 = vadd.f32 %v4402, %v4421
        %v4472 = vadd.f32 %v4403, %v4421
        %v4473 = vadd.f32 %v4404, %v4421
        %v4474 = vadd.f32 %v4405, %v4421
        %v4475 = vadd.f32 %v4406, %v4421
        %v4476 = vadd.f32 %v4407, %v4421
        %v4477 = vadd.f32 %v4408, %v4421
        %v4478 = vadd.f32 %v4409, %v4421
        %v4479 = vadd.f32 %v4410, %v4421
        %v4480 = vadd.f32 %v4411, %v4421
        %v4481 = vadd.f32 %v4412, %v4421
        %v4482 = vadd.f32 %v4413, %v4421
        %v4483 = vadd.f32 %v4414, %v4421
        %v4484 = vadd.f32 %v4415, %v4421
        %v4485 = vadd.f32 %v4416, %v4421
        %v4486 = vmax.f32 %v4422, 0.0
        %v4487 = vmax.f32 %v4423, 0.0
        %v4488 = vmax.f32 %v4424, 0.0
        %v4489 = vmax.f32 %v4425, 0.0
        %v4490 = vmax.f32 %v4426, 0.0
        %v4491 = vmax.f32 %v4427, 0.0
        %v4492 = vmax.f32 %v4428, 0.0
        %v4493 = vmax.f32 %v4429, 0.0
        %v4494 = vmax.f32 %v4430, 0.0
        %v4495 = vmax.f32 %v4431, 0.0
        %v4496 = vmax.f32 %v4432, 0.0
        %v4497 = vmax.f32 %v4433, 0.0
        %v4498 = vmax.f32 %v4434, 0.0
        %v4499 = vmax.f32 %v4435, 0.0
        %v4500 = vmax.f32 %v4436, 0.0
        %v4501 = vmax.f32 %v4437, 0.0
        %v4502 = vmax.f32 %v4438, 0.0
        %v4503 = vmax.f32 %v4439, 0.0
        %v4504 = vmax.f32 %v4440, 0.0
        %v4505 = vmax.f32 %v4441, 0.0
        %v4506 = vmax.f32 %v4442, 0.0
        %v4507 = vmax.f32 %v4443, 0.0
        %v4508 = vmax.f32 %v4444, 0.0
        %v4509 = vmax.f32 %v4445, 0.0
        %v4510 = vmax.f32 %v4446, 0.0
        %v4511 = vmax.f32 %v4447, 0.0
        %v4512 = vmax.f32 %v4448, 0.0
        %v4513 = vmax.f32 %v4449, 0.0
        %v4514 = vmax.f32 %v4450, 0.0
        %v4515 = vmax.f32 %v4451, 0.0
        %v4516 = vmax.f32 %v4452, 0.0
        %v4517 = vmax.f32 %v4453, 0.0
        %v4518 = vmax.f32 %v4454, 0.0
        %v4519 = vmax.f32 %v4455, 0.0
        %v4520 = vmax.f32 %v4456, 0.0
        %v4521 = vmax.f32 %v4457, 0.0
        %v4522 = vmax.f32 %v4458, 0.0
        %v4523 = vmax.f32 %v4459, 0.0
        %v4524 = vmax.f32 %v4460, 0.0
        %v4525 = vmax.f32 %v4461, 0.0
        %v4526 = vmax.f32 %v4462, 0.0
        %v4527 = vmax.f32 %v4463, 0.0
        %v4528 = vmax.f32 %v4464, 0.0
        %v4529 = vmax.f32 %v4465, 0.0
        %v4530 = vmax.f32 %v4466, 0.0
        %v4531 = vmax.f32 %v4467, 0.0
        %v4532 = vmax.f32 %v4468, 0.0
        %v4533 = vmax.f32 %v4469, 0.0
        %v4534 = vmax.f32 %v4470, 0.0
        %v4535 = vmax.f32 %v4471, 0.0
        %v4536 = vmax.f32 %v4472, 0.0
        %v4537 = vmax.f32 %v4473, 0.0
        %v4538 = vmax.f32 %v4474, 0.0
        %v4539 = vmax.f32 %v4475, 0.0
        %v4540 = vmax.f32 %v4476, 0.0
        %v4541 = vmax.f32 %v4477, 0.0
        %v4542 = vmax.f32 %v4478, 0.0
        %v4543 = vmax.f32 %v4479, 0.0
        %v4544 = vmax.f32 %v4480, 0.0
        %v4545 = vmax.f32 %v4481, 0.0
        %v4546 = vmax.f32 %v4482, 0.0
        %v4547 = vmax.f32 %v4483, 0.0
        %v4548 = vmax.f32 %v4484, 0.0
        %v4549 = vmax.f32 %v4485, 0.0
        %v4550 = vpack.c.bf16 %v4487, %v4486
        %v4551 = vpack.c.bf16 %v4489, %v4488
        %v4552 = vpack.c.bf16 %v4491, %v4490
        %v4553 = vpack.c.bf16 %v4493, %v4492
        %v4554 = vpack.c.bf16 %v4495, %v4494
        %v4555 = vpack.c.bf16 %v4497, %v4496
        %v4556 = vpack.c.bf16 %v4499, %v4498
        %v4557 = vpack.c.bf16 %v4501, %v4500
        %v4558 = vpack.c.bf16 %v4503, %v4502
        %v4559 = vpack.c.bf16 %v4505, %v4504
        %v4560 = vpack.c.bf16 %v4507, %v4506
        %v4561 = vpack.c.bf16 %v4509, %v4508
        %v4562 = vpack.c.bf16 %v4511, %v4510
        %v4563 = vpack.c.bf16 %v4513, %v4512
        %v4564 = vpack.c.bf16 %v4515, %v4514
        %v4565 = vpack.c.bf16 %v4517, %v4516
        %v4566 = vpack.c.bf16 %v4519, %v4518
        %v4567 = vpack.c.bf16 %v4521, %v4520
        %v4568 = vpack.c.bf16 %v4523, %v4522
        %v4569 = vpack.c.bf16 %v4525, %v4524
        %v4570 = vpack.c.bf16 %v4527, %v4526
        %v4571 = vpack.c.bf16 %v4529, %v4528
        %v4572 = vpack.c.bf16 %v4531, %v4530
        %v4573 = vpack.c.bf16 %v4533, %v4532
        %v4574 = vpack.c.bf16 %v4535, %v4534
        %v4575 = vpack.c.bf16 %v4537, %v4536
        %v4576 = vpack.c.bf16 %v4539, %v4538
        %v4577 = vpack.c.bf16 %v4541, %v4540
        %v4578 = vpack.c.bf16 %v4543, %v4542
        %v4579 = vpack.c.bf16 %v4545, %v4544
        %v4580 = vpack.c.bf16 %v4547, %v4546
        %v4581 = vpack.c.bf16 %v4549, %v4548
        %s4582 = scalar_lea.vmem %s6, 64
        %v4583 = vld [vmem:[%s4582] sm:$0xf]
        %v4584 = vld [vmem:[%s4582 + $0x4] sm:$0xf]
        %v4585 = vld [vmem:[%s4582 + $0x8] sm:$0xf]
        %v4586 = vld [vmem:[%s4582 + $0xc] sm:$0xf]
        %v4587 = vld [vmem:[%s4582 + $0x10] sm:$0xf]
        %v4588 = vld [vmem:[%s4582 + $0x14] sm:$0xf]
        %v4589 = vld [vmem:[%s4582 + $0x18] sm:$0xf]
        %v4590 = vld [vmem:[%s4582 + $0x1c] sm:$0xf]
        %v4591 = vld [vmem:[%s4582 + $0x20] sm:$0xf]
        %v4592 = vld [vmem:[%s4582 + $0x24] sm:$0xf]
        %v4593 = vld [vmem:[%s4582 + $0x28] sm:$0xf]
        %v4594 = vld [vmem:[%s4582 + $0x2c] sm:$0xf]
        %v4595 = vld [vmem:[%s4582 + $0x30] sm:$0xf]
        %v4596 = vld [vmem:[%s4582 + $0x34] sm:$0xf]
        %v4597 = vld [vmem:[%s4582 + $0x38] sm:$0xf]
        %v4598 = vld [vmem:[%s4582 + $0x3c] sm:$0xf]
        %v4599 = vld [vmem:[%s7 + $0x1] sm:$0x1]
        %v4600 = vlaneseq
        %v4601 = vshrl.u32 %v4600, 7
        %v4602 = vsub.s32 0, %v4601
        %v4603 = vrot.slane %v4599, %v4602
        %v4620 = vunpack.c.l.b16 %v4583
        %v4621 = vunpack.c.l.b16 %v4584
        %v4622 = vunpack.c.l.b16 %v4585
        %v4623 = vunpack.c.l.b16 %v4586
        %v4624 = vunpack.c.l.b16 %v4587
        %v4625 = vunpack.c.l.b16 %v4588
        %v4626 = vunpack.c.l.b16 %v4589
        %v4627 = vunpack.c.l.b16 %v4590
        %v4628 = vunpack.c.l.b16 %v4591
        %v4629 = vunpack.c.l.b16 %v4592
        %v4630 = vunpack.c.l.b16 %v4593
        %v4631 = vunpack.c.l.b16 %v4594
        %v4632 = vunpack.c.l.b16 %v4595
        %v4633 = vunpack.c.l.b16 %v4596
        %v4634 = vunpack.c.l.b16 %v4597
        %v4635 = vunpack.c.l.b16 %v4598
        %v4636 = vpack.c.b16 %v4621, %v4620
        %v4637 = vpack.c.b16 %v4623, %v4622
        %v4638 = vpack.c.b16 %v4625, %v4624
        %v4639 = vpack.c.b16 %v4627, %v4626
        %v4640 = vpack.c.b16 %v4629, %v4628
        %v4641 = vpack.c.b16 %v4631, %v4630
        %v4642 = vpack.c.b16 %v4633, %v4632
        %v4643 = vpack.c.b16 %v4635, %v4634
        %4652 = vmatprep.subr.bf16.mxu0 0
        %4653 = vmatpush1.bf16.msra.mxu0 %v4636
        %4654 = vmatprep.subr.bf16.mxu0 0
        %4655 = vmatpush1.bf16.msra.mxu0 %v4637
        %4656 = vmatprep.subr.bf16.mxu0 0
        %4657 = vmatpush1.bf16.msra.mxu0 %v4638
        %4658 = vmatprep.subr.bf16.mxu0 0
        %4659 = vmatpush1.bf16.msra.mxu0 %v4639
        %4660 = vmatprep.subr.bf16.mxu0 0
        %4661 = vmatpush1.bf16.msra.mxu0 %v4640
        %4662 = vmatprep.subr.bf16.mxu0 0
        %4663 = vmatpush1.bf16.msra.mxu0 %v4641
        %4664 = vmatprep.subr.bf16.mxu0 0
        %4665 = vmatpush1.bf16.msra.mxu0 %v4642
        %4666 = vmatprep.subr.bf16.mxu0 0
        %4667 = vmatpush1.bf16.msra.mxu0 %v4643
        %4668 = vmatprep.subr.bf16.mxu0 0
        %4669 = vmatpush1.bf16.msra.mxu0 0
        %4670 = vmatprep.subr.bf16.mxu0 0
        %4671 = vmatpush1.bf16.msra.mxu0 0
        %4672 = vmatprep.subr.bf16.mxu0 0
        %4673 = vmatpush1.bf16.msra.mxu0 0
        %4674 = vmatprep.subr.bf16.mxu0 0
        %4675 = vmatpush1.bf16.msra.mxu0 0
        %4676 = vmatprep.subr.bf16.mxu0 0
        %4677 = vmatpush1.bf16.msra.mxu0 0
        %4678 = vmatprep.subr.bf16.mxu0 0
        %4679 = vmatpush1.bf16.msra.mxu0 0
        %4680 = vmatprep.subr.bf16.mxu0 0
        %4681 = vmatpush1.bf16.msra.mxu0 0
        %4682 = vmatprep.subr.bf16.mxu0 0
        %4683 = vmatpush1.bf16.msra.mxu0 0
        %4684 = vmatprep.mubr.bf16.mxu0 0
        %4685 = vmatmul.mubr.bf16.gmra.mrb[0].mxu0 %v4550
        %v4686 = vpop.f32.mrb[0].mxu0
        %v4687 = vadd.f32 %v4603, %v4686
        %v4688 = vpop.f32.mrb[0].mxu0
        %v4689 = vpop.f32.mrb[0].mxu0
        %v4690 = vadd.f32 %v4603, %v4689
        %v4691 = vpop.f32.mrb[0].mxu0
        %4692 = vmatprep.mubr.bf16.mxu0 0
        %4693 = vmatmul.mubr.bf16.gmra.mrb[0].mxu0 %v4551
        %v4694 = vpop.f32.mrb[0].mxu0
        %v4695 = vadd.f32 %v4603, %v4694
        %v4696 = vpop.f32.mrb[0].mxu0
        %v4697 = vpop.f32.mrb[0].mxu0
        %v4698 = vadd.f32 %v4603, %v4697
        %v4699 = vpop.f32.mrb[0].mxu0
        %4700 = vmatprep.mubr.bf16.mxu0 0
        %4701 = vmatmul.mubr.bf16.gmra.mrb[0].mxu0 %v4552
        %v4702 = vpop.f32.mrb[0].mxu0
        %v4703 = vadd.f32 %v4603, %v4702
        %v4704 = vpop.f32.mrb[0].mxu0
        %v4705 = vpop.f32.mrb[0].mxu0
        %v4706 = vadd.f32 %v4603, %v4705
        %v4707 = vpop.f32.mrb[0].mxu0
        %4708 = vmatprep.mubr.bf16.mxu0 0
        %4709 = vmatmul.mubr.bf16.gmra.mrb[0].mxu0 %v4553
        %v4710 = vpop.f32.mrb[0].mxu0
        %v4711 = vadd.f32 %v4603, %v4710
        %v4712 = vpop.f32.mrb[0].mxu0
        %v4713 = vpop.f32.mrb[0].mxu0
        %v4714 = vadd.f32 %v4603, %v4713
        %v4715 = vpop.f32.mrb[0].mxu0
        %4716 = vmatprep.mubr.bf16.mxu0 0
        %4717 = vmatmul.mubr.bf16.gmra.mrb[0].mxu0 %v4554
        %v4718 = vpop.f32.mrb[0].mxu0
        %v4719 = vadd.f32 %v4603, %v4718
        %v4720 = vpop.f32.mrb[0].mxu0
        %v4721 = vpop.f32.mrb[0].mxu0
        %v4722 = vadd.f32 %v4603, %v4721
        %v4723 = vpop.f32.mrb[0].mxu0
        %4724 = vmatprep.mubr.bf16.mxu0 0
        %4725 = vmatmul.mubr.bf16.gmra.mrb[0].mxu0 %v4555
        %v4726 = vpop.f32.mrb[0].mxu0
        %v4727 = vadd.f32 %v4603, %v4726
        %v4728 = vpop.f32.mrb[0].mxu0
        %v4729 = vpop.f32.mrb[0].mxu0
        %v4730 = vadd.f32 %v4603, %v4729
        %v4731 = vpop.f32.mrb[0].mxu0
        %4732 = vmatprep.mubr.bf16.mxu0 0
        %4733 = vmatmul.mubr.bf16.gmra.mrb[0].mxu0 %v4556
        %v4734 = vpop.f32.mrb[0].mxu0
        %v4735 = vadd.f32 %v4603, %v4734
        %v4736 = vpop.f32.mrb[0].mxu0
        %v4737 = vpop.f32.mrb[0].mxu0
        %v4738 = vadd.f32 %v4603, %v4737
        %v4739 = vpop.f32.mrb[0].mxu0
        %4740 = vmatprep.mubr.bf16.mxu0 0
        %4741 = vmatmul.mubr.bf16.gmra.mrb[0].mxu0 %v4557
        %v4742 = vpop.f32.mrb[0].mxu0
        %v4743 = vadd.f32 %v4603, %v4742
        %v4744 = vpop.f32.mrb[0].mxu0
        %v4745 = vpop.f32.mrb[0].mxu0
        %v4746 = vadd.f32 %v4603, %v4745
        %v4747 = vpop.f32.mrb[0].mxu0
        %4748 = vmatprep.mubr.bf16.mxu0 0
        %4749 = vmatmul.mubr.bf16.gmra.mrb[0].mxu0 %v4558
        %v4750 = vpop.f32.mrb[0].mxu0
        %v4751 = vadd.f32 %v4603, %v4750
        %v4752 = vpop.f32.mrb[0].mxu0
        %v4753 = vpop.f32.mrb[0].mxu0
        %v4754 = vadd.f32 %v4603, %v4753
        %v4755 = vpop.f32.mrb[0].mxu0
        %4756 = vmatprep.mubr.bf16.mxu0 0
        %4757 = vmatmul.mubr.bf16.gmra.mrb[0].mxu0 %v4559
        %v4758 = vpop.f32.mrb[0].mxu0
        %v4759 = vadd.f32 %v4603, %v4758
        %v4760 = vpop.f32.mrb[0].mxu0
        %v4761 = vpop.f32.mrb[0].mxu0
        %v4762 = vadd.f32 %v4603, %v4761
        %v4763 = vpop.f32.mrb[0].mxu0
        %4764 = vmatprep.mubr.bf16.mxu0 0
        %4765 = vmatmul.mubr.bf16.gmra.mrb[0].mxu0 %v4560
        %v4766 = vpop.f32.mrb[0].mxu0
        %v4767 = vadd.f32 %v4603, %v4766
        %v4768 = vpop.f32.mrb[0].mxu0
        %v4769 = vpop.f32.mrb[0].mxu0
        %v4770 = vadd.f32 %v4603, %v4769
        %v4771 = vpop.f32.mrb[0].mxu0
        %4772 = vmatprep.mubr.bf16.mxu0 0
        %4773 = vmatmul.mubr.bf16.gmra.mrb[0].mxu0 %v4561
        %v4774 = vpop.f32.mrb[0].mxu0
        %v4775 = vadd.f32 %v4603, %v4774
        %v4776 = vpop.f32.mrb[0].mxu0
        %v4777 = vpop.f32.mrb[0].mxu0
        %v4778 = vadd.f32 %v4603, %v4777
        %v4779 = vpop.f32.mrb[0].mxu0
        %4780 = vmatprep.mubr.bf16.mxu0 0
        %4781 = vmatmul.mubr.bf16.gmra.mrb[0].mxu0 %v4562
        %v4782 = vpop.f32.mrb[0].mxu0
        %v4783 = vadd.f32 %v4603, %v4782
        %v4784 = vpop.f32.mrb[0].mxu0
        %v4785 = vpop.f32.mrb[0].mxu0
        %v4786 = vadd.f32 %v4603, %v4785
        %v4787 = vpop.f32.mrb[0].mxu0
        %4788 = vmatprep.mubr.bf16.mxu0 0
        %4789 = vmatmul.mubr.bf16.gmra.mrb[0].mxu0 %v4563
        %v4790 = vpop.f32.mrb[0].mxu0
        %v4791 = vadd.f32 %v4603, %v4790
        %v4792 = vpop.f32.mrb[0].mxu0
        %v4793 = vpop.f32.mrb[0].mxu0
        %v4794 = vadd.f32 %v4603, %v4793
        %v4795 = vpop.f32.mrb[0].mxu0
        %4796 = vmatprep.mubr.bf16.mxu0 0
        %4797 = vmatmul.mubr.bf16.gmra.mrb[0].mxu0 %v4564
        %v4798 = vpop.f32.mrb[0].mxu0
        %v4799 = vadd.f32 %v4603, %v4798
        %v4800 = vpop.f32.mrb[0].mxu0
        %v4801 = vpop.f32.mrb[0].mxu0
        %v4802 = vadd.f32 %v4603, %v4801
        %v4803 = vpop.f32.mrb[0].mxu0
        %4804 = vmatprep.mubr.bf16.mxu0 0
        %4805 = vmatmul.mubr.bf16.gmra.mrb[0].mxu0 %v4565
        %v4806 = vpop.f32.mrb[0].mxu0
        %v4807 = vadd.f32 %v4603, %v4806
        %v4808 = vpop.f32.mrb[0].mxu0
        %v4809 = vpop.f32.mrb[0].mxu0
        %v4810 = vadd.f32 %v4603, %v4809
        %v4811 = vpop.f32.mrb[0].mxu0
        %4812 = vmatprep.mubr.bf16.mxu0 0
        %4813 = vmatmul.mubr.bf16.gmra.mrb[0].mxu0 %v4566
        %v4814 = vpop.f32.mrb[0].mxu0
        %v4815 = vadd.f32 %v4603, %v4814
        %v4816 = vpop.f32.mrb[0].mxu0
        %v4817 = vpop.f32.mrb[0].mxu0
        %v4818 = vadd.f32 %v4603, %v4817
        %v4819 = vpop.f32.mrb[0].mxu0
        %4820 = vmatprep.mubr.bf16.mxu0 0
        %4821 = vmatmul.mubr.bf16.gmra.mrb[0].mxu0 %v4567
        %v4822 = vpop.f32.mrb[0].mxu0
        %v4823 = vadd.f32 %v4603, %v4822
        %v4824 = vpop.f32.mrb[0].mxu0
        %v4825 = vpop.f32.mrb[0].mxu0
        %v4826 = vadd.f32 %v4603, %v4825
        %v4827 = vpop.f32.mrb[0].mxu0
        %4828 = vmatprep.mubr.bf16.mxu0 0
        %4829 = vmatmul.mubr.bf16.gmra.mrb[0].mxu0 %v4568
        %v4830 = vpop.f32.mrb[0].mxu0
        %v4831 = vadd.f32 %v4603, %v4830
        %v4832 = vpop.f32.mrb[0].mxu0
        %v4833 = vpop.f32.mrb[0].mxu0
        %v4834 = vadd.f32 %v4603, %v4833
        %v4835 = vpop.f32.mrb[0].mxu0
        %4836 = vmatprep.mubr.bf16.mxu0 0
        %4837 = vmatmul.mubr.bf16.gmra.mrb[0].mxu0 %v4569
        %v4838 = vpop.f32.mrb[0].mxu0
        %v4839 = vadd.f32 %v4603, %v4838
        %v4840 = vpop.f32.mrb[0].mxu0
        %v4841 = vpop.f32.mrb[0].mxu0
        %v4842 = vadd.f32 %v4603, %v4841
        %v4843 = vpop.f32.mrb[0].mxu0
        %4844 = vmatprep.mubr.bf16.mxu0 0
        %4845 = vmatmul.mubr.bf16.gmra.mrb[0].mxu0 %v4570
        %v4846 = vpop.f32.mrb[0].mxu0
        %v4847 = vadd.f32 %v4603, %v4846
        %v4848 = vpop.f32.mrb[0].mxu0
        %v4849 = vpop.f32.mrb[0].mxu0
        %v4850 = vadd.f32 %v4603, %v4849
        %v4851 = vpop.f32.mrb[0].mxu0
        %4852 = vmatprep.mubr.bf16.mxu0 0
        %4853 = vmatmul.mubr.bf16.gmra.mrb[0].mxu0 %v4571
        %v4854 = vpop.f32.mrb[0].mxu0
        %v4855 = vadd.f32 %v4603, %v4854
        %v4856 = vpop.f32.mrb[0].mxu0
        %v4857 = vpop.f32.mrb[0].mxu0
        %v4858 = vadd.f32 %v4603, %v4857
        %v4859 = vpop.f32.mrb[0].mxu0
        %4860 = vmatprep.mubr.bf16.mxu0 0
        %4861 = vmatmul.mubr.bf16.gmra.mrb[0].mxu0 %v4572
        %v4862 = vpop.f32.mrb[0].mxu0
        %v4863 = vadd.f32 %v4603, %v4862
        %v4864 = vpop.f32.mrb[0].mxu0
        %v4865 = vpop.f32.mrb[0].mxu0
        %v4866 = vadd.f32 %v4603, %v4865
        %v4867 = vpop.f32.mrb[0].mxu0
        %4868 = vmatprep.mubr.bf16.mxu0 0
        %4869 = vmatmul.mubr.bf16.gmra.mrb[0].mxu0 %v4573
        %v4870 = vpop.f32.mrb[0].mxu0
        %v4871 = vadd.f32 %v4603, %v4870
        %v4872 = vpop.f32.mrb[0].mxu0
        %v4873 = vpop.f32.mrb[0].mxu0
        %v4874 = vadd.f32 %v4603, %v4873
        %v4875 = vpop.f32.mrb[0].mxu0
        %4876 = vmatprep.mubr.bf16.mxu0 0
        %4877 = vmatmul.mubr.bf16.gmra.mrb[0].mxu0 %v4574
        %v4878 = vpop.f32.mrb[0].mxu0
        %v4879 = vadd.f32 %v4603, %v4878
        %v4880 = vpop.f32.mrb[0].mxu0
        %v4881 = vpop.f32.mrb[0].mxu0
        %v4882 = vadd.f32 %v4603, %v4881
        %v4883 = vpop.f32.mrb[0].mxu0
        %4884 = vmatprep.mubr.bf16.mxu0 0
        %4885 = vmatmul.mubr.bf16.gmra.mrb[0].mxu0 %v4575
        %v4886 = vpop.f32.mrb[0].mxu0
        %v4887 = vadd.f32 %v4603, %v4886
        %v4888 = vpop.f32.mrb[0].mxu0
        %v4889 = vpop.f32.mrb[0].mxu0
        %v4890 = vadd.f32 %v4603, %v4889
        %v4891 = vpop.f32.mrb[0].mxu0
        %4892 = vmatprep.mubr.bf16.mxu0 0
        %4893 = vmatmul.mubr.bf16.gmra.mrb[0].mxu0 %v4576
        %v4894 = vpop.f32.mrb[0].mxu0
        %v4895 = vadd.f32 %v4603, %v4894
        %v4896 = vpop.f32.mrb[0].mxu0
        %v4897 = vpop.f32.mrb[0].mxu0
        %v4898 = vadd.f32 %v4603, %v4897
        %v4899 = vpop.f32.mrb[0].mxu0
        %4900 = vmatprep.mubr.bf16.mxu0 0
        %4901 = vmatmul.mubr.bf16.gmra.mrb[0].mxu0 %v4577
        %v4902 = vpop.f32.mrb[0].mxu0
        %v4903 = vadd.f32 %v4603, %v4902
        %v4904 = vpop.f32.mrb[0].mxu0
        %v4905 = vpop.f32.mrb[0].mxu0
        %v4906 = vadd.f32 %v4603, %v4905
        %v4907 = vpop.f32.mrb[0].mxu0
        %4908 = vmatprep.mubr.bf16.mxu0 0
        %4909 = vmatmul.mubr.bf16.gmra.mrb[0].mxu0 %v4578
        %v4910 = vpop.f32.mrb[0].mxu0
        %v4911 = vadd.f32 %v4603, %v4910
        %v4912 = vpop.f32.mrb[0].mxu0
        %v4913 = vpop.f32.mrb[0].mxu0
        %v4914 = vadd.f32 %v4603, %v4913
        %v4915 = vpop.f32.mrb[0].mxu0
        %4916 = vmatprep.mubr.bf16.mxu0 0
        %4917 = vmatmul.mubr.bf16.gmra.mrb[0].mxu0 %v4579
        %v4918 = vpop.f32.mrb[0].mxu0
        %v4919 = vadd.f32 %v4603, %v4918
        %v4920 = vpop.f32.mrb[0].mxu0
        %v4921 = vpop.f32.mrb[0].mxu0
        %v4922 = vadd.f32 %v4603, %v4921
        %v4923 = vpop.f32.mrb[0].mxu0
        %4924 = vmatprep.mubr.bf16.mxu0 0
        %4925 = vmatmul.mubr.bf16.gmra.mrb[0].mxu0 %v4580
        %v4926 = vpop.f32.mrb[0].mxu0
        %v4927 = vadd.f32 %v4603, %v4926
        %v4928 = vpop.f32.mrb[0].mxu0
        %v4929 = vpop.f32.mrb[0].mxu0
        %v4930 = vadd.f32 %v4603, %v4929
        %v4931 = vpop.f32.mrb[0].mxu0
        %4932 = vmatprep.mubr.bf16.mxu0 0
        %4933 = vmatmul.mubr.bf16.gmra.mrb[0].mxu0 %v4581
        %v4934 = vpop.f32.mrb[0].mxu0
        %v4935 = vadd.f32 %v4603, %v4934
        %v4936 = vpop.f32.mrb[0].mxu0
        %v4937 = vpop.f32.mrb[0].mxu0
        %v4938 = vadd.f32 %v4603, %v4937
        %v4939 = vpop.f32.mrb[0].mxu0
        %4940 = vdwg.mxu0
        %v4941 = vmax.f32 %v4687, 0.0
        %v4942 = vmax.f32 %v4690, 0.0
        %v4943 = vmax.f32 %v4695, 0.0
        %v4944 = vmax.f32 %v4698, 0.0
        %v4945 = vmax.f32 %v4703, 0.0
        %v4946 = vmax.f32 %v4706, 0.0
        %v4947 = vmax.f32 %v4711, 0.0
        %v4948 = vmax.f32 %v4714, 0.0
        %v4949 = vmax.f32 %v4719, 0.0
        %v4950 = vmax.f32 %v4722, 0.0
        %v4951 = vmax.f32 %v4727, 0.0
        %v4952 = vmax.f32 %v4730, 0.0
        %v4953 = vmax.f32 %v4735, 0.0
        %v4954 = vmax.f32 %v4738, 0.0
        %v4955 = vmax.f32 %v4743, 0.0
        %v4956 = vmax.f32 %v4746, 0.0
        %v4957 = vmax.f32 %v4751, 0.0
        %v4958 = vmax.f32 %v4754, 0.0
        %v4959 = vmax.f32 %v4759, 0.0
        %v4960 = vmax.f32 %v4762, 0.0
        %v4961 = vmax.f32 %v4767, 0.0
        %v4962 = vmax.f32 %v4770, 0.0
        %v4963 = vmax.f32 %v4775, 0.0
        %v4964 = vmax.f32 %v4778, 0.0
        %v4965 = vmax.f32 %v4783, 0.0
        %v4966 = vmax.f32 %v4786, 0.0
        %v4967 = vmax.f32 %v4791, 0.0
        %v4968 = vmax.f32 %v4794, 0.0
        %v4969 = vmax.f32 %v4799, 0.0
        %v4970 = vmax.f32 %v4802, 0.0
        %v4971 = vmax.f32 %v4807, 0.0
        %v4972 = vmax.f32 %v4810, 0.0
        %v4973 = vmax.f32 %v4815, 0.0
        %v4974 = vmax.f32 %v4818, 0.0
        %v4975 = vmax.f32 %v4823, 0.0
        %v4976 = vmax.f32 %v4826, 0.0
        %v4977 = vmax.f32 %v4831, 0.0
        %v4978 = vmax.f32 %v4834, 0.0
        %v4979 = vmax.f32 %v4839, 0.0
        %v4980 = vmax.f32 %v4842, 0.0
        %v4981 = vmax.f32 %v4847, 0.0
        %v4982 = vmax.f32 %v4850, 0.0
        %v4983 = vmax.f32 %v4855, 0.0
        %v4984 = vmax.f32 %v4858, 0.0
        %v4985 = vmax.f32 %v4863, 0.0
        %v4986 = vmax.f32 %v4866, 0.0
        %v4987 = vmax.f32 %v4871, 0.0
        %v4988 = vmax.f32 %v4874, 0.0
        %v4989 = vmax.f32 %v4879, 0.0
        %v4990 = vmax.f32 %v4882, 0.0
        %v4991 = vmax.f32 %v4887, 0.0
        %v4992 = vmax.f32 %v4890, 0.0
        %v4993 = vmax.f32 %v4895, 0.0
        %v4994 = vmax.f32 %v4898, 0.0
        %v4995 = vmax.f32 %v4903, 0.0
        %v4996 = vmax.f32 %v4906, 0.0
        %v4997 = vmax.f32 %v4911, 0.0
        %v4998 = vmax.f32 %v4914, 0.0
        %v4999 = vmax.f32 %v4919, 0.0
        %v5000 = vmax.f32 %v4922, 0.0
        %v5001 = vmax.f32 %v4927, 0.0
        %v5002 = vmax.f32 %v4930, 0.0
        %v5003 = vmax.f32 %v4935, 0.0
        %v5004 = vmax.f32 %v4938, 0.0
        %v5005 = vpack.c.bf16 %v4942, %v4941
        %v5006 = vpack.c.bf16 %v4944, %v4943
        %v5007 = vpack.c.bf16 %v4946, %v4945
        %v5008 = vpack.c.bf16 %v4948, %v4947
        %v5009 = vpack.c.bf16 %v4950, %v4949
        %v5010 = vpack.c.bf16 %v4952, %v4951
        %v5011 = vpack.c.bf16 %v4954, %v4953
        %v5012 = vpack.c.bf16 %v4956, %v4955
        %v5013 = vpack.c.bf16 %v4958, %v4957
        %v5014 = vpack.c.bf16 %v4960, %v4959
        %v5015 = vpack.c.bf16 %v4962, %v4961
        %v5016 = vpack.c.bf16 %v4964, %v4963
        %v5017 = vpack.c.bf16 %v4966, %v4965
        %v5018 = vpack.c.bf16 %v4968, %v4967
        %v5019 = vpack.c.bf16 %v4970, %v4969
        %v5020 = vpack.c.bf16 %v4972, %v4971
        %v5021 = vpack.c.bf16 %v4974, %v4973
        %v5022 = vpack.c.bf16 %v4976, %v4975
        %v5023 = vpack.c.bf16 %v4978, %v4977
        %v5024 = vpack.c.bf16 %v4980, %v4979
        %v5025 = vpack.c.bf16 %v4982, %v4981
        %v5026 = vpack.c.bf16 %v4984, %v4983
        %v5027 = vpack.c.bf16 %v4986, %v4985
        %v5028 = vpack.c.bf16 %v4988, %v4987
        %v5029 = vpack.c.bf16 %v4990, %v4989
        %v5030 = vpack.c.bf16 %v4992, %v4991
        %v5031 = vpack.c.bf16 %v4994, %v4993
        %v5032 = vpack.c.bf16 %v4996, %v4995
        %v5033 = vpack.c.bf16 %v4998, %v4997
        %v5034 = vpack.c.bf16 %v5000, %v4999
        %v5035 = vpack.c.bf16 %v5002, %v5001
        %v5036 = vpack.c.bf16 %v5004, %v5003
        %s5037 = scalar_lea.vmem %s8, 64
        %v5038 = vld [vmem:[%s5037] sm:$0xf]
        %v5039 = vld [vmem:[%s5037 + $0x4] sm:$0xf]
        %v5040 = vld [vmem:[%s5037 + $0x8] sm:$0xf]
        %v5041 = vld [vmem:[%s5037 + $0xc] sm:$0xf]
        %v5042 = vld [vmem:[%s5037 + $0x10] sm:$0xf]
        %v5043 = vld [vmem:[%s5037 + $0x14] sm:$0xf]
        %v5044 = vld [vmem:[%s5037 + $0x18] sm:$0xf]
        %v5045 = vld [vmem:[%s5037 + $0x1c] sm:$0xf]
        %v5046 = vld [vmem:[%s5037 + $0x20] sm:$0xf]
        %v5047 = vld [vmem:[%s5037 + $0x24] sm:$0xf]
        %v5048 = vld [vmem:[%s5037 + $0x28] sm:$0xf]
        %v5049 = vld [vmem:[%s5037 + $0x2c] sm:$0xf]
        %v5050 = vld [vmem:[%s5037 + $0x30] sm:$0xf]
        %v5051 = vld [vmem:[%s5037 + $0x34] sm:$0xf]
        %v5052 = vld [vmem:[%s5037 + $0x38] sm:$0xf]
        %v5053 = vld [vmem:[%s5037 + $0x3c] sm:$0xf]
        %v5054 = vld [vmem:[%s9 + $0x1] sm:$0x1]
        %v5055 = vlaneseq
        %v5056 = vshrl.u32 %v5055, 7
        %v5057 = vsub.s32 0, %v5056
        %v5058 = vrot.slane %v5054, %v5057
        %v5075 = vunpack.c.l.b16 %v5038
        %v5076 = vunpack.c.l.b16 %v5039
        %v5077 = vunpack.c.l.b16 %v5040
        %v5078 = vunpack.c.l.b16 %v5041
        %v5079 = vunpack.c.l.b16 %v5042
        %v5080 = vunpack.c.l.b16 %v5043
        %v5081 = vunpack.c.l.b16 %v5044
        %v5082 = vunpack.c.l.b16 %v5045
        %v5083 = vunpack.c.l.b16 %v5046
        %v5084 = vunpack.c.l.b16 %v5047
        %v5085 = vunpack.c.l.b16 %v5048
        %v5086 = vunpack.c.l.b16 %v5049
        %v5087 = vunpack.c.l.b16 %v5050
        %v5088 = vunpack.c.l.b16 %v5051
        %v5089 = vunpack.c.l.b16 %v5052
        %v5090 = vunpack.c.l.b16 %v5053
        %v5091 = vpack.c.b16 %v5076, %v5075
        %v5092 = vpack.c.b16 %v5078, %v5077
        %v5093 = vpack.c.b16 %v5080, %v5079
        %v5094 = vpack.c.b16 %v5082, %v5081
        %v5095 = vpack.c.b16 %v5084, %v5083
        %v5096 = vpack.c.b16 %v5086, %v5085
        %v5097 = vpack.c.b16 %v5088, %v5087
        %v5098 = vpack.c.b16 %v5090, %v5089
        %5107 = vmatprep.subr.bf16.mxu0 0
        %5108 = vmatpush1.bf16.msra.mxu0 %v5091
        %5109 = vmatprep.subr.bf16.mxu0 0
        %5110 = vmatpush1.bf16.msra.mxu0 %v5092
        %5111 = vmatprep.subr.bf16.mxu0 0
        %5112 = vmatpush1.bf16.msra.mxu0 %v5093
        %5113 = vmatprep.subr.bf16.mxu0 0
        %5114 = vmatpush1.bf16.msra.mxu0 %v5094
        %5115 = vmatprep.subr.bf16.mxu0 0
        %5116 = vmatpush1.bf16.msra.mxu0 %v5095
        %5117 = vmatprep.subr.bf16.mxu0 0
        %5118 = vmatpush1.bf16.msra.mxu0 %v5096
        %5119 = vmatprep.subr.bf16.mxu0 0
        %5120 = vmatpush1.bf16.msra.mxu0 %v5097
        %5121 = vmatprep.subr.bf16.mxu0 0
        %5122 = vmatpush1.bf16.msra.mxu0 %v5098
        %5123 = vmatprep.subr.bf16.mxu0 0
        %5124 = vmatpush1.bf16.msra.mxu0 0
        %5125 = vmatprep.subr.bf16.mxu0 0
        %5126 = vmatpush1.bf16.msra.mxu0 0
        %5127 = vmatprep.subr.bf16.mxu0 0
        %5128 = vmatpush1.bf16.msra.mxu0 0
        %5129 = vmatprep.subr.bf16.mxu0 0
        %5130 = vmatpush1.bf16.msra.mxu0 0
        %5131 = vmatprep.subr.bf16.mxu0 0
        %5132 = vmatpush1.bf16.msra.mxu0 0
        %5133 = vmatprep.subr.bf16.mxu0 0
        %5134 = vmatpush1.bf16.msra.mxu0 0
        %5135 = vmatprep.subr.bf16.mxu0 0
        %5136 = vmatpush1.bf16.msra.mxu0 0
        %5137 = vmatprep.subr.bf16.mxu0 0
        %5138 = vmatpush1.bf16.msra.mxu0 0
        %5139 = vmatprep.mubr.bf16.mxu0 0
        %5140 = vmatmul.mubr.bf16.gmra.mrb[0].mxu0 %v5005
        %v5141 = vpop.f32.mrb[0].mxu0
        %v5142 = vadd.f32 %v5058, %v5141
        %v5143 = vpop.f32.mrb[0].mxu0
        %v5144 = vpop.f32.mrb[0].mxu0
        %v5145 = vadd.f32 %v5058, %v5144
        %v5146 = vpop.f32.mrb[0].mxu0
        %5147 = vmatprep.mubr.bf16.mxu0 0
        %5148 = vmatmul.mubr.bf16.gmra.mrb[0].mxu0 %v5006
        %v5149 = vpop.f32.mrb[0].mxu0
        %v5150 = vadd.f32 %v5058, %v5149
        %v5151 = vpop.f32.mrb[0].mxu0
        %v5152 = vpop.f32.mrb[0].mxu0
        %v5153 = vadd.f32 %v5058, %v5152
        %v5154 = vpop.f32.mrb[0].mxu0
        %5155 = vmatprep.mubr.bf16.mxu0 0
        %5156 = vmatmul.mubr.bf16.gmra.mrb[0].mxu0 %v5007
        %v5157 = vpop.f32.mrb[0].mxu0
        %v5158 = vadd.f32 %v5058, %v5157
        %v5159 = vpop.f32.mrb[0].mxu0
        %v5160 = vpop.f32.mrb[0].mxu0
        %v5161 = vadd.f32 %v5058, %v5160
        %v5162 = vpop.f32.mrb[0].mxu0
        %5163 = vmatprep.mubr.bf16.mxu0 0
        %5164 = vmatmul.mubr.bf16.gmra.mrb[0].mxu0 %v5008
        %v5165 = vpop.f32.mrb[0].mxu0
        %v5166 = vadd.f32 %v5058, %v5165
        %v5167 = vpop.f32.mrb[0].mxu0
        %v5168 = vpop.f32.mrb[0].mxu0
        %v5169 = vadd.f32 %v5058, %v5168
        %v5170 = vpop.f32.mrb[0].mxu0
        %5171 = vmatprep.mubr.bf16.mxu0 0
        %5172 = vmatmul.mubr.bf16.gmra.mrb[0].mxu0 %v5009
        %v5173 = vpop.f32.mrb[0].mxu0
        %v5174 = vadd.f32 %v5058, %v5173
        %v5175 = vpop.f32.mrb[0].mxu0
        %v5176 = vpop.f32.mrb[0].mxu0
        %v5177 = vadd.f32 %v5058, %v5176
        %v5178 = vpop.f32.mrb[0].mxu0
        %5179 = vmatprep.mubr.bf16.mxu0 0
        %5180 = vmatmul.mubr.bf16.gmra.mrb[0].mxu0 %v5010
        %v5181 = vpop.f32.mrb[0].mxu0
        %v5182 = vadd.f32 %v5058, %v5181
        %v5183 = vpop.f32.mrb[0].mxu0
        %v5184 = vpop.f32.mrb[0].mxu0
        %v5185 = vadd.f32 %v5058, %v5184
        %v5186 = vpop.f32.mrb[0].mxu0
        %5187 = vmatprep.mubr.bf16.mxu0 0
        %5188 = vmatmul.mubr.bf16.gmra.mrb[0].mxu0 %v5011
        %v5189 = vpop.f32.mrb[0].mxu0
        %v5190 = vadd.f32 %v5058, %v5189
        %v5191 = vpop.f32.mrb[0].mxu0
        %v5192 = vpop.f32.mrb[0].mxu0
        %v5193 = vadd.f32 %v5058, %v5192
        %v5194 = vpop.f32.mrb[0].mxu0
        %5195 = vmatprep.mubr.bf16.mxu0 0
        %5196 = vmatmul.mubr.bf16.gmra.mrb[0].mxu0 %v5012
        %v5197 = vpop.f32.mrb[0].mxu0
        %v5198 = vadd.f32 %v5058, %v5197
        %v5199 = vpop.f32.mrb[0].mxu0
        %v5200 = vpop.f32.mrb[0].mxu0
        %v5201 = vadd.f32 %v5058, %v5200
        %v5202 = vpop.f32.mrb[0].mxu0
        %5203 = vmatprep.mubr.bf16.mxu0 0
        %5204 = vmatmul.mubr.bf16.gmra.mrb[0].mxu0 %v5013
        %v5205 = vpop.f32.mrb[0].mxu0
        %v5206 = vadd.f32 %v5058, %v5205
        %v5207 = vpop.f32.mrb[0].mxu0
        %v5208 = vpop.f32.mrb[0].mxu0
        %v5209 = vadd.f32 %v5058, %v5208
        %v5210 = vpop.f32.mrb[0].mxu0
        %5211 = vmatprep.mubr.bf16.mxu0 0
        %5212 = vmatmul.mubr.bf16.gmra.mrb[0].mxu0 %v5014
        %v5213 = vpop.f32.mrb[0].mxu0
        %v5214 = vadd.f32 %v5058, %v5213
        %v5215 = vpop.f32.mrb[0].mxu0
        %v5216 = vpop.f32.mrb[0].mxu0
        %v5217 = vadd.f32 %v5058, %v5216
        %v5218 = vpop.f32.mrb[0].mxu0
        %5219 = vmatprep.mubr.bf16.mxu0 0
        %5220 = vmatmul.mubr.bf16.gmra.mrb[0].mxu0 %v5015
        %v5221 = vpop.f32.mrb[0].mxu0
        %v5222 = vadd.f32 %v5058, %v5221
        %v5223 = vpop.f32.mrb[0].mxu0
        %v5224 = vpop.f32.mrb[0].mxu0
        %v5225 = vadd.f32 %v5058, %v5224
        %v5226 = vpop.f32.mrb[0].mxu0
        %5227 = vmatprep.mubr.bf16.mxu0 0
        %5228 = vmatmul.mubr.bf16.gmra.mrb[0].mxu0 %v5016
        %v5229 = vpop.f32.mrb[0].mxu0
        %v5230 = vadd.f32 %v5058, %v5229
        %v5231 = vpop.f32.mrb[0].mxu0
        %v5232 = vpop.f32.mrb[0].mxu0
        %v5233 = vadd.f32 %v5058, %v5232
        %v5234 = vpop.f32.mrb[0].mxu0
        %5235 = vmatprep.mubr.bf16.mxu0 0
        %5236 = vmatmul.mubr.bf16.gmra.mrb[0].mxu0 %v5017
        %v5237 = vpop.f32.mrb[0].mxu0
        %v5238 = vadd.f32 %v5058, %v5237
        %v5239 = vpop.f32.mrb[0].mxu0
        %v5240 = vpop.f32.mrb[0].mxu0
        %v5241 = vadd.f32 %v5058, %v5240
        %v5242 = vpop.f32.mrb[0].mxu0
        %5243 = vmatprep.mubr.bf16.mxu0 0
        %5244 = vmatmul.mubr.bf16.gmra.mrb[0].mxu0 %v5018
        %v5245 = vpop.f32.mrb[0].mxu0
        %v5246 = vadd.f32 %v5058, %v5245
        %v5247 = vpop.f32.mrb[0].mxu0
        %v5248 = vpop.f32.mrb[0].mxu0
        %v5249 = vadd.f32 %v5058, %v5248
        %v5250 = vpop.f32.mrb[0].mxu0
        %5251 = vmatprep.mubr.bf16.mxu0 0
        %5252 = vmatmul.mubr.bf16.gmra.mrb[0].mxu0 %v5019
        %v5253 = vpop.f32.mrb[0].mxu0
        %v5254 = vadd.f32 %v5058, %v5253
        %v5255 = vpop.f32.mrb[0].mxu0
        %v5256 = vpop.f32.mrb[0].mxu0
        %v5257 = vadd.f32 %v5058, %v5256
        %v5258 = vpop.f32.mrb[0].mxu0
        %5259 = vmatprep.mubr.bf16.mxu0 0
        %5260 = vmatmul.mubr.bf16.gmra.mrb[0].mxu0 %v5020
        %v5261 = vpop.f32.mrb[0].mxu0
        %v5262 = vadd.f32 %v5058, %v5261
        %v5263 = vpop.f32.mrb[0].mxu0
        %v5264 = vpop.f32.mrb[0].mxu0
        %v5265 = vadd.f32 %v5058, %v5264
        %v5266 = vpop.f32.mrb[0].mxu0
        %5267 = vmatprep.mubr.bf16.mxu0 0
        %5268 = vmatmul.mubr.bf16.gmra.mrb[0].mxu0 %v5021
        %v5269 = vpop.f32.mrb[0].mxu0
        %v5270 = vadd.f32 %v5058, %v5269
        %v5271 = vpop.f32.mrb[0].mxu0
        %v5272 = vpop.f32.mrb[0].mxu0
        %v5273 = vadd.f32 %v5058, %v5272
        %v5274 = vpop.f32.mrb[0].mxu0
        %5275 = vmatprep.mubr.bf16.mxu0 0
        %5276 = vmatmul.mubr.bf16.gmra.mrb[0].mxu0 %v5022
        %v5277 = vpop.f32.mrb[0].mxu0
        %v5278 = vadd.f32 %v5058, %v5277
        %v5279 = vpop.f32.mrb[0].mxu0
        %v5280 = vpop.f32.mrb[0].mxu0
        %v5281 = vadd.f32 %v5058, %v5280
        %v5282 = vpop.f32.mrb[0].mxu0
        %5283 = vmatprep.mubr.bf16.mxu0 0
        %5284 = vmatmul.mubr.bf16.gmra.mrb[0].mxu0 %v5023
        %v5285 = vpop.f32.mrb[0].mxu0
        %v5286 = vadd.f32 %v5058, %v5285
        %v5287 = vpop.f32.mrb[0].mxu0
        %v5288 = vpop.f32.mrb[0].mxu0
        %v5289 = vadd.f32 %v5058, %v5288
        %v5290 = vpop.f32.mrb[0].mxu0
        %5291 = vmatprep.mubr.bf16.mxu0 0
        %5292 = vmatmul.mubr.bf16.gmra.mrb[0].mxu0 %v5024
        %v5293 = vpop.f32.mrb[0].mxu0
        %v5294 = vadd.f32 %v5058, %v5293
        %v5295 = vpop.f32.mrb[0].mxu0
        %v5296 = vpop.f32.mrb[0].mxu0
        %v5297 = vadd.f32 %v5058, %v5296
        %v5298 = vpop.f32.mrb[0].mxu0
        %5299 = vmatprep.mubr.bf16.mxu0 0
        %5300 = vmatmul.mubr.bf16.gmra.mrb[0].mxu0 %v5025
        %v5301 = vpop.f32.mrb[0].mxu0
        %v5302 = vadd.f32 %v5058, %v5301
        %v5303 = vpop.f32.mrb[0].mxu0
        %v5304 = vpop.f32.mrb[0].mxu0
        %v5305 = vadd.f32 %v5058, %v5304
        %v5306 = vpop.f32.mrb[0].mxu0
        %5307 = vmatprep.mubr.bf16.mxu0 0
        %5308 = vmatmul.mubr.bf16.gmra.mrb[0].mxu0 %v5026
        %v5309 = vpop.f32.mrb[0].mxu0
        %v5310 = vadd.f32 %v5058, %v5309
        %v5311 = vpop.f32.mrb[0].mxu0
        %v5312 = vpop.f32.mrb[0].mxu0
        %v5313 = vadd.f32 %v5058, %v5312
        %v5314 = vpop.f32.mrb[0].mxu0
        %5315 = vmatprep.mubr.bf16.mxu0 0
        %5316 = vmatmul.mubr.bf16.gmra.mrb[0].mxu0 %v5027
        %v5317 = vpop.f32.mrb[0].mxu0
        %v5318 = vadd.f32 %v5058, %v5317
        %v5319 = vpop.f32.mrb[0].mxu0
        %v5320 = vpop.f32.mrb[0].mxu0
        %v5321 = vadd.f32 %v5058, %v5320
        %v5322 = vpop.f32.mrb[0].mxu0
        %5323 = vmatprep.mubr.bf16.mxu0 0
        %5324 = vmatmul.mubr.bf16.gmra.mrb[0].mxu0 %v5028
        %v5325 = vpop.f32.mrb[0].mxu0
        %v5326 = vadd.f32 %v5058, %v5325
        %v5327 = vpop.f32.mrb[0].mxu0
        %v5328 = vpop.f32.mrb[0].mxu0
        %v5329 = vadd.f32 %v5058, %v5328
        %v5330 = vpop.f32.mrb[0].mxu0
        %5331 = vmatprep.mubr.bf16.mxu0 0
        %5332 = vmatmul.mubr.bf16.gmra.mrb[0].mxu0 %v5029
        %v5333 = vpop.f32.mrb[0].mxu0
        %v5334 = vadd.f32 %v5058, %v5333
        %v5335 = vpop.f32.mrb[0].mxu0
        %v5336 = vpop.f32.mrb[0].mxu0
        %v5337 = vadd.f32 %v5058, %v5336
        %v5338 = vpop.f32.mrb[0].mxu0
        %5339 = vmatprep.mubr.bf16.mxu0 0
        %5340 = vmatmul.mubr.bf16.gmra.mrb[0].mxu0 %v5030
        %v5341 = vpop.f32.mrb[0].mxu0
        %v5342 = vadd.f32 %v5058, %v5341
        %v5343 = vpop.f32.mrb[0].mxu0
        %v5344 = vpop.f32.mrb[0].mxu0
        %v5345 = vadd.f32 %v5058, %v5344
        %v5346 = vpop.f32.mrb[0].mxu0
        %5347 = vmatprep.mubr.bf16.mxu0 0
        %5348 = vmatmul.mubr.bf16.gmra.mrb[0].mxu0 %v5031
        %v5349 = vpop.f32.mrb[0].mxu0
        %v5350 = vadd.f32 %v5058, %v5349
        %v5351 = vpop.f32.mrb[0].mxu0
        %v5352 = vpop.f32.mrb[0].mxu0
        %v5353 = vadd.f32 %v5058, %v5352
        %v5354 = vpop.f32.mrb[0].mxu0
        %5355 = vmatprep.mubr.bf16.mxu0 0
        %5356 = vmatmul.mubr.bf16.gmra.mrb[0].mxu0 %v5032
        %v5357 = vpop.f32.mrb[0].mxu0
        %v5358 = vadd.f32 %v5058, %v5357
        %v5359 = vpop.f32.mrb[0].mxu0
        %v5360 = vpop.f32.mrb[0].mxu0
        %v5361 = vadd.f32 %v5058, %v5360
        %v5362 = vpop.f32.mrb[0].mxu0
        %5363 = vmatprep.mubr.bf16.mxu0 0
        %5364 = vmatmul.mubr.bf16.gmra.mrb[0].mxu0 %v5033
        %v5365 = vpop.f32.mrb[0].mxu0
        %v5366 = vadd.f32 %v5058, %v5365
        %v5367 = vpop.f32.mrb[0].mxu0
        %v5368 = vpop.f32.mrb[0].mxu0
        %v5369 = vadd.f32 %v5058, %v5368
        %v5370 = vpop.f32.mrb[0].mxu0
        %5371 = vmatprep.mubr.bf16.mxu0 0
        %5372 = vmatmul.mubr.bf16.gmra.mrb[0].mxu0 %v5034
        %v5373 = vpop.f32.mrb[0].mxu0
        %v5374 = vadd.f32 %v5058, %v5373
        %v5375 = vpop.f32.mrb[0].mxu0
        %v5376 = vpop.f32.mrb[0].mxu0
        %v5377 = vadd.f32 %v5058, %v5376
        %v5378 = vpop.f32.mrb[0].mxu0
        %5379 = vmatprep.mubr.bf16.mxu0 0
        %5380 = vmatmul.mubr.bf16.gmra.mrb[0].mxu0 %v5035
        %v5381 = vpop.f32.mrb[0].mxu0
        %v5382 = vadd.f32 %v5058, %v5381
        %v5383 = vpop.f32.mrb[0].mxu0
        %v5384 = vpop.f32.mrb[0].mxu0
        %v5385 = vadd.f32 %v5058, %v5384
        %v5386 = vpop.f32.mrb[0].mxu0
        %5387 = vmatprep.mubr.bf16.mxu0 0
        %5388 = vmatmul.mubr.bf16.gmra.mrb[0].mxu0 %v5036
        %v5389 = vpop.f32.mrb[0].mxu0
        %v5390 = vadd.f32 %v5058, %v5389
        %v5391 = vpop.f32.mrb[0].mxu0
        %v5392 = vpop.f32.mrb[0].mxu0
        %v5393 = vadd.f32 %v5058, %v5392
        %v5394 = vpop.f32.mrb[0].mxu0
        %5395 = vdwg.mxu0
        %v5396 = vadd.f32 %v4422, %v5142
        %v5397 = vadd.f32 %v4423, %v5145
        %v5398 = vadd.f32 %v4424, %v5150
        %v5399 = vadd.f32 %v4425, %v5153
        %v5400 = vadd.f32 %v4426, %v5158
        %v5401 = vadd.f32 %v4427, %v5161
        %v5402 = vadd.f32 %v4428, %v5166
        %v5403 = vadd.f32 %v4429, %v5169
        %v5404 = vadd.f32 %v4430, %v5174
        %v5405 = vadd.f32 %v4431, %v5177
        %v5406 = vadd.f32 %v4432, %v5182
        %v5407 = vadd.f32 %v4433, %v5185
        %v5408 = vadd.f32 %v4434, %v5190
        %v5409 = vadd.f32 %v4435, %v5193
        %v5410 = vadd.f32 %v4436, %v5198
        %v5411 = vadd.f32 %v4437, %v5201
        %v5412 = vadd.f32 %v4438, %v5206
        %v5413 = vadd.f32 %v4439, %v5209
        %v5414 = vadd.f32 %v4440, %v5214
        %v5415 = vadd.f32 %v4441, %v5217
        %v5416 = vadd.f32 %v4442, %v5222
        %v5417 = vadd.f32 %v4443, %v5225
        %v5418 = vadd.f32 %v4444, %v5230
        %v5419 = vadd.f32 %v4445, %v5233
        %v5420 = vadd.f32 %v4446, %v5238
        %v5421 = vadd.f32 %v4447, %v5241
        %v5422 = vadd.f32 %v4448, %v5246
        %v5423 = vadd.f32 %v4449, %v5249
        %v5424 = vadd.f32 %v4450, %v5254
        %v5425 = vadd.f32 %v4451, %v5257
        %v5426 = vadd.f32 %v4452, %v5262
        %v5427 = vadd.f32 %v4453, %v5265
        %v5428 = vadd.f32 %v4454, %v5270
        %v5429 = vadd.f32 %v4455, %v5273
        %v5430 = vadd.f32 %v4456, %v5278
        %v5431 = vadd.f32 %v4457, %v5281
        %v5432 = vadd.f32 %v4458, %v5286
        %v5433 = vadd.f32 %v4459, %v5289
        %v5434 = vadd.f32 %v4460, %v5294
        %v5435 = vadd.f32 %v4461, %v5297
        %v5436 = vadd.f32 %v4462, %v5302
        %v5437 = vadd.f32 %v4463, %v5305
        %v5438 = vadd.f32 %v4464, %v5310
        %v5439 = vadd.f32 %v4465, %v5313
        %v5440 = vadd.f32 %v4466, %v5318
        %v5441 = vadd.f32 %v4467, %v5321
        %v5442 = vadd.f32 %v4468, %v5326
        %v5443 = vadd.f32 %v4469, %v5329
        %v5444 = vadd.f32 %v4470, %v5334
        %v5445 = vadd.f32 %v4471, %v5337
        %v5446 = vadd.f32 %v4472, %v5342
        %v5447 = vadd.f32 %v4473, %v5345
        %v5448 = vadd.f32 %v4474, %v5350
        %v5449 = vadd.f32 %v4475, %v5353
        %v5450 = vadd.f32 %v4476, %v5358
        %v5451 = vadd.f32 %v4477, %v5361
        %v5452 = vadd.f32 %v4478, %v5366
        %v5453 = vadd.f32 %v4479, %v5369
        %v5454 = vadd.f32 %v4480, %v5374
        %v5455 = vadd.f32 %v4481, %v5377
        %v5456 = vadd.f32 %v4482, %v5382
        %v5457 = vadd.f32 %v4483, %v5385
        %v5458 = vadd.f32 %v4484, %v5390
        %v5459 = vadd.f32 %v4485, %v5393
        %v5460 = vadd.f32 %v5396, %v2641
        %v5461 = vadd.f32 %v5397, %v2645
        %v5462 = vadd.f32 %v5398, %v2651
        %v5463 = vadd.f32 %v5399, %v2655
        %v5464 = vadd.f32 %v5400, %v2661
        %v5465 = vadd.f32 %v5401, %v2665
        %v5466 = vadd.f32 %v5402, %v2671
        %v5467 = vadd.f32 %v5403, %v2675
        %v5468 = vadd.f32 %v5404, %v2681
        %v5469 = vadd.f32 %v5405, %v2685
        %v5470 = vadd.f32 %v5406, %v2691
        %v5471 = vadd.f32 %v5407, %v2695
        %v5472 = vadd.f32 %v5408, %v2701
        %v5473 = vadd.f32 %v5409, %v2705
        %v5474 = vadd.f32 %v5410, %v2711
        %v5475 = vadd.f32 %v5411, %v2715
        %v5476 = vadd.f32 %v5412, %v2721
        %v5477 = vadd.f32 %v5413, %v2725
        %v5478 = vadd.f32 %v5414, %v2731
        %v5479 = vadd.f32 %v5415, %v2735
        %v5480 = vadd.f32 %v5416, %v2741
        %v5481 = vadd.f32 %v5417, %v2745
        %v5482 = vadd.f32 %v5418, %v2751
        %v5483 = vadd.f32 %v5419, %v2755
        %v5484 = vadd.f32 %v5420, %v2761
        %v5485 = vadd.f32 %v5421, %v2765
        %v5486 = vadd.f32 %v5422, %v2771
        %v5487 = vadd.f32 %v5423, %v2775
        %v5488 = vadd.f32 %v5424, %v2781
        %v5489 = vadd.f32 %v5425, %v2785
        %v5490 = vadd.f32 %v5426, %v2791
        %v5491 = vadd.f32 %v5427, %v2795
        %v5492 = vadd.f32 %v5428, %v2801
        %v5493 = vadd.f32 %v5429, %v2805
        %v5494 = vadd.f32 %v5430, %v2811
        %v5495 = vadd.f32 %v5431, %v2815
        %v5496 = vadd.f32 %v5432, %v2821
        %v5497 = vadd.f32 %v5433, %v2825
        %v5498 = vadd.f32 %v5434, %v2831
        %v5499 = vadd.f32 %v5435, %v2835
        %v5500 = vadd.f32 %v5436, %v2841
        %v5501 = vadd.f32 %v5437, %v2845
        %v5502 = vadd.f32 %v5438, %v2851
        %v5503 = vadd.f32 %v5439, %v2855
        %v5504 = vadd.f32 %v5440, %v2861
        %v5505 = vadd.f32 %v5441, %v2865
        %v5506 = vadd.f32 %v5442, %v2871
        %v5507 = vadd.f32 %v5443, %v2875
        %v5508 = vadd.f32 %v5444, %v2881
        %v5509 = vadd.f32 %v5445, %v2885
        %v5510 = vadd.f32 %v5446, %v2891
        %v5511 = vadd.f32 %v5447, %v2895
        %v5512 = vadd.f32 %v5448, %v2901
        %v5513 = vadd.f32 %v5449, %v2905
        %v5514 = vadd.f32 %v5450, %v2911
        %v5515 = vadd.f32 %v5451, %v2915
        %v5516 = vadd.f32 %v5452, %v2921
        %v5517 = vadd.f32 %v5453, %v2925
        %v5518 = vadd.f32 %v5454, %v2931
        %v5519 = vadd.f32 %v5455, %v2935
        %v5520 = vadd.f32 %v5456, %v2941
        %v5521 = vadd.f32 %v5457, %v2945
        %v5522 = vadd.f32 %v5458, %v2951
        %v5523 = vadd.f32 %v5459, %v2955
        %v5524 = vld [vmem:[%s5 + $0x2] sm:$0x1]
        %v5525 = vlaneseq
        %v5526 = vshrl.u32 %v5525, 7
        %v5527 = vsub.s32 0, %v5526
        %v5528 = vrot.slane %v5524, %v5527
        %v5529 = vadd.f32 %v5460, %v5528
        %v5530 = vadd.f32 %v5461, %v5528
        %v5531 = vadd.f32 %v5462, %v5528
        %v5532 = vadd.f32 %v5463, %v5528
        %v5533 = vadd.f32 %v5464, %v5528
        %v5534 = vadd.f32 %v5465, %v5528
        %v5535 = vadd.f32 %v5466, %v5528
        %v5536 = vadd.f32 %v5467, %v5528
        %v5537 = vadd.f32 %v5468, %v5528
        %v5538 = vadd.f32 %v5469, %v5528
        %v5539 = vadd.f32 %v5470, %v5528
        %v5540 = vadd.f32 %v5471, %v5528
        %v5541 = vadd.f32 %v5472, %v5528
        %v5542 = vadd.f32 %v5473, %v5528
        %v5543 = vadd.f32 %v5474, %v5528
        %v5544 = vadd.f32 %v5475, %v5528
        %v5545 = vadd.f32 %v5476, %v5528
        %v5546 = vadd.f32 %v5477, %v5528
        %v5547 = vadd.f32 %v5478, %v5528
        %v5548 = vadd.f32 %v5479, %v5528
        %v5549 = vadd.f32 %v5480, %v5528
        %v5550 = vadd.f32 %v5481, %v5528
        %v5551 = vadd.f32 %v5482, %v5528
        %v5552 = vadd.f32 %v5483, %v5528
        %v5553 = vadd.f32 %v5484, %v5528
        %v5554 = vadd.f32 %v5485, %v5528
        %v5555 = vadd.f32 %v5486, %v5528
        %v5556 = vadd.f32 %v5487, %v5528
        %v5557 = vadd.f32 %v5488, %v5528
        %v5558 = vadd.f32 %v5489, %v5528
        %v5559 = vadd.f32 %v5490, %v5528
        %v5560 = vadd.f32 %v5491, %v5528
        %v5561 = vadd.f32 %v5492, %v5528
        %v5562 = vadd.f32 %v5493, %v5528
        %v5563 = vadd.f32 %v5494, %v5528
        %v5564 = vadd.f32 %v5495, %v5528
        %v5565 = vadd.f32 %v5496, %v5528
        %v5566 = vadd.f32 %v5497, %v5528
        %v5567 = vadd.f32 %v5498, %v5528
        %v5568 = vadd.f32 %v5499, %v5528
        %v5569 = vadd.f32 %v5500, %v5528
        %v5570 = vadd.f32 %v5501, %v5528
        %v5571 = vadd.f32 %v5502, %v5528
        %v5572 = vadd.f32 %v5503, %v5528
        %v5573 = vadd.f32 %v5504, %v5528
        %v5574 = vadd.f32 %v5505, %v5528
        %v5575 = vadd.f32 %v5506, %v5528
        %v5576 = vadd.f32 %v5507, %v5528
        %v5577 = vadd.f32 %v5508, %v5528
        %v5578 = vadd.f32 %v5509, %v5528
        %v5579 = vadd.f32 %v5510, %v5528
        %v5580 = vadd.f32 %v5511, %v5528
        %v5581 = vadd.f32 %v5512, %v5528
        %v5582 = vadd.f32 %v5513, %v5528
        %v5583 = vadd.f32 %v5514, %v5528
        %v5584 = vadd.f32 %v5515, %v5528
        %v5585 = vadd.f32 %v5516, %v5528
        %v5586 = vadd.f32 %v5517, %v5528
        %v5587 = vadd.f32 %v5518, %v5528
        %v5588 = vadd.f32 %v5519, %v5528
        %v5589 = vadd.f32 %v5520, %v5528
        %v5590 = vadd.f32 %v5521, %v5528
        %v5591 = vadd.f32 %v5522, %v5528
        %v5592 = vadd.f32 %v5523, %v5528
        %v5593 = vmax.f32 %v5529, 0.0
        %v5594 = vmax.f32 %v5530, 0.0
        %v5595 = vmax.f32 %v5531, 0.0
        %v5596 = vmax.f32 %v5532, 0.0
        %v5597 = vmax.f32 %v5533, 0.0
        %v5598 = vmax.f32 %v5534, 0.0
        %v5599 = vmax.f32 %v5535, 0.0
        %v5600 = vmax.f32 %v5536, 0.0
        %v5601 = vmax.f32 %v5537, 0.0
        %v5602 = vmax.f32 %v5538, 0.0
        %v5603 = vmax.f32 %v5539, 0.0
        %v5604 = vmax.f32 %v5540, 0.0
        %v5605 = vmax.f32 %v5541, 0.0
        %v5606 = vmax.f32 %v5542, 0.0
        %v5607 = vmax.f32 %v5543, 0.0
        %v5608 = vmax.f32 %v5544, 0.0
        %v5609 = vmax.f32 %v5545, 0.0
        %v5610 = vmax.f32 %v5546, 0.0
        %v5611 = vmax.f32 %v5547, 0.0
        %v5612 = vmax.f32 %v5548, 0.0
        %v5613 = vmax.f32 %v5549, 0.0
        %v5614 = vmax.f32 %v5550, 0.0
        %v5615 = vmax.f32 %v5551, 0.0
        %v5616 = vmax.f32 %v5552, 0.0
        %v5617 = vmax.f32 %v5553, 0.0
        %v5618 = vmax.f32 %v5554, 0.0
        %v5619 = vmax.f32 %v5555, 0.0
        %v5620 = vmax.f32 %v5556, 0.0
        %v5621 = vmax.f32 %v5557, 0.0
        %v5622 = vmax.f32 %v5558, 0.0
        %v5623 = vmax.f32 %v5559, 0.0
        %v5624 = vmax.f32 %v5560, 0.0
        %v5625 = vmax.f32 %v5561, 0.0
        %v5626 = vmax.f32 %v5562, 0.0
        %v5627 = vmax.f32 %v5563, 0.0
        %v5628 = vmax.f32 %v5564, 0.0
        %v5629 = vmax.f32 %v5565, 0.0
        %v5630 = vmax.f32 %v5566, 0.0
        %v5631 = vmax.f32 %v5567, 0.0
        %v5632 = vmax.f32 %v5568, 0.0
        %v5633 = vmax.f32 %v5569, 0.0
        %v5634 = vmax.f32 %v5570, 0.0
        %v5635 = vmax.f32 %v5571, 0.0
        %v5636 = vmax.f32 %v5572, 0.0
        %v5637 = vmax.f32 %v5573, 0.0
        %v5638 = vmax.f32 %v5574, 0.0
        %v5639 = vmax.f32 %v5575, 0.0
        %v5640 = vmax.f32 %v5576, 0.0
        %v5641 = vmax.f32 %v5577, 0.0
        %v5642 = vmax.f32 %v5578, 0.0
        %v5643 = vmax.f32 %v5579, 0.0
        %v5644 = vmax.f32 %v5580, 0.0
        %v5645 = vmax.f32 %v5581, 0.0
        %v5646 = vmax.f32 %v5582, 0.0
        %v5647 = vmax.f32 %v5583, 0.0
        %v5648 = vmax.f32 %v5584, 0.0
        %v5649 = vmax.f32 %v5585, 0.0
        %v5650 = vmax.f32 %v5586, 0.0
        %v5651 = vmax.f32 %v5587, 0.0
        %v5652 = vmax.f32 %v5588, 0.0
        %v5653 = vmax.f32 %v5589, 0.0
        %v5654 = vmax.f32 %v5590, 0.0
        %v5655 = vmax.f32 %v5591, 0.0
        %v5656 = vmax.f32 %v5592, 0.0
        %v5657 = vpack.c.bf16 %v5594, %v5593
        %v5658 = vpack.c.bf16 %v5596, %v5595
        %v5659 = vpack.c.bf16 %v5598, %v5597
        %v5660 = vpack.c.bf16 %v5600, %v5599
        %v5661 = vpack.c.bf16 %v5602, %v5601
        %v5662 = vpack.c.bf16 %v5604, %v5603
        %v5663 = vpack.c.bf16 %v5606, %v5605
        %v5664 = vpack.c.bf16 %v5608, %v5607
        %v5665 = vpack.c.bf16 %v5610, %v5609
        %v5666 = vpack.c.bf16 %v5612, %v5611
        %v5667 = vpack.c.bf16 %v5614, %v5613
        %v5668 = vpack.c.bf16 %v5616, %v5615
        %v5669 = vpack.c.bf16 %v5618, %v5617
        %v5670 = vpack.c.bf16 %v5620, %v5619
        %v5671 = vpack.c.bf16 %v5622, %v5621
        %v5672 = vpack.c.bf16 %v5624, %v5623
        %v5673 = vpack.c.bf16 %v5626, %v5625
        %v5674 = vpack.c.bf16 %v5628, %v5627
        %v5675 = vpack.c.bf16 %v5630, %v5629
        %v5676 = vpack.c.bf16 %v5632, %v5631
        %v5677 = vpack.c.bf16 %v5634, %v5633
        %v5678 = vpack.c.bf16 %v5636, %v5635
        %v5679 = vpack.c.bf16 %v5638, %v5637
        %v5680 = vpack.c.bf16 %v5640, %v5639
        %v5681 = vpack.c.bf16 %v5642, %v5641
        %v5682 = vpack.c.bf16 %v5644, %v5643
        %v5683 = vpack.c.bf16 %v5646, %v5645
        %v5684 = vpack.c.bf16 %v5648, %v5647
        %v5685 = vpack.c.bf16 %v5650, %v5649
        %v5686 = vpack.c.bf16 %v5652, %v5651
        %v5687 = vpack.c.bf16 %v5654, %v5653
        %v5688 = vpack.c.bf16 %v5656, %v5655
        %s5689 = scalar_lea.vmem %s6, 128
        %v5690 = vld [vmem:[%s5689] sm:$0xf]
        %v5691 = vld [vmem:[%s5689 + $0x4] sm:$0xf]
        %v5692 = vld [vmem:[%s5689 + $0x8] sm:$0xf]
        %v5693 = vld [vmem:[%s5689 + $0xc] sm:$0xf]
        %v5694 = vld [vmem:[%s5689 + $0x10] sm:$0xf]
        %v5695 = vld [vmem:[%s5689 + $0x14] sm:$0xf]
        %v5696 = vld [vmem:[%s5689 + $0x18] sm:$0xf]
        %v5697 = vld [vmem:[%s5689 + $0x1c] sm:$0xf]
        %v5698 = vld [vmem:[%s5689 + $0x20] sm:$0xf]
        %v5699 = vld [vmem:[%s5689 + $0x24] sm:$0xf]
        %v5700 = vld [vmem:[%s5689 + $0x28] sm:$0xf]
        %v5701 = vld [vmem:[%s5689 + $0x2c] sm:$0xf]
        %v5702 = vld [vmem:[%s5689 + $0x30] sm:$0xf]
        %v5703 = vld [vmem:[%s5689 + $0x34] sm:$0xf]
        %v5704 = vld [vmem:[%s5689 + $0x38] sm:$0xf]
        %v5705 = vld [vmem:[%s5689 + $0x3c] sm:$0xf]
        %v5706 = vld [vmem:[%s7 + $0x2] sm:$0x1]
        %v5707 = vlaneseq
        %v5708 = vshrl.u32 %v5707, 7
        %v5709 = vsub.s32 0, %v5708
        %v5710 = vrot.slane %v5706, %v5709
        %v5727 = vunpack.c.l.b16 %v5690
        %v5728 = vunpack.c.l.b16 %v5691
        %v5729 = vunpack.c.l.b16 %v5692
        %v5730 = vunpack.c.l.b16 %v5693
        %v5731 = vunpack.c.l.b16 %v5694
        %v5732 = vunpack.c.l.b16 %v5695
        %v5733 = vunpack.c.l.b16 %v5696
        %v5734 = vunpack.c.l.b16 %v5697
        %v5735 = vunpack.c.l.b16 %v5698
        %v5736 = vunpack.c.l.b16 %v5699
        %v5737 = vunpack.c.l.b16 %v5700
        %v5738 = vunpack.c.l.b16 %v5701
        %v5739 = vunpack.c.l.b16 %v5702
        %v5740 = vunpack.c.l.b16 %v5703
        %v5741 = vunpack.c.l.b16 %v5704
        %v5742 = vunpack.c.l.b16 %v5705
        %v5743 = vpack.c.b16 %v5728, %v5727
        %v5744 = vpack.c.b16 %v5730, %v5729
        %v5745 = vpack.c.b16 %v5732, %v5731
        %v5746 = vpack.c.b16 %v5734, %v5733
        %v5747 = vpack.c.b16 %v5736, %v5735
        %v5748 = vpack.c.b16 %v5738, %v5737
        %v5749 = vpack.c.b16 %v5740, %v5739
        %v5750 = vpack.c.b16 %v5742, %v5741
        %5759 = vmatprep.subr.bf16.mxu0 0
        %5760 = vmatpush1.bf16.msra.mxu0 %v5743
        %5761 = vmatprep.subr.bf16.mxu0 0
        %5762 = vmatpush1.bf16.msra.mxu0 %v5744
        %5763 = vmatprep.subr.bf16.mxu0 0
        %5764 = vmatpush1.bf16.msra.mxu0 %v5745
        %5765 = vmatprep.subr.bf16.mxu0 0
        %5766 = vmatpush1.bf16.msra.mxu0 %v5746
        %5767 = vmatprep.subr.bf16.mxu0 0
        %5768 = vmatpush1.bf16.msra.mxu0 %v5747
        %5769 = vmatprep.subr.bf16.mxu0 0
        %5770 = vmatpush1.bf16.msra.mxu0 %v5748
        %5771 = vmatprep.subr.bf16.mxu0 0
        %5772 = vmatpush1.bf16.msra.mxu0 %v5749
        %5773 = vmatprep.subr.bf16.mxu0 0
        %5774 = vmatpush1.bf16.msra.mxu0 %v5750
        %5775 = vmatprep.subr.bf16.mxu0 0
        %5776 = vmatpush1.bf16.msra.mxu0 0
        %5777 = vmatprep.subr.bf16.mxu0 0
        %5778 = vmatpush1.bf16.msra.mxu0 0
        %5779 = vmatprep.subr.bf16.mxu0 0
        %5780 = vmatpush1.bf16.msra.mxu0 0
        %5781 = vmatprep.subr.bf16.mxu0 0
        %5782 = vmatpush1.bf16.msra.mxu0 0
        %5783 = vmatprep.subr.bf16.mxu0 0
        %5784 = vmatpush1.bf16.msra.mxu0 0
        %5785 = vmatprep.subr.bf16.mxu0 0
        %5786 = vmatpush1.bf16.msra.mxu0 0
        %5787 = vmatprep.subr.bf16.mxu0 0
        %5788 = vmatpush1.bf16.msra.mxu0 0
        %5789 = vmatprep.subr.bf16.mxu0 0
        %5790 = vmatpush1.bf16.msra.mxu0 0
        %5791 = vmatprep.mubr.bf16.mxu0 0
        %5792 = vmatmul.mubr.bf16.gmra.mrb[0].mxu0 %v5657
        %v5793 = vpop.f32.mrb[0].mxu0
        %v5794 = vadd.f32 %v5710, %v5793
        %v5795 = vpop.f32.mrb[0].mxu0
        %v5796 = vpop.f32.mrb[0].mxu0
        %v5797 = vadd.f32 %v5710, %v5796
        %v5798 = vpop.f32.mrb[0].mxu0
        %5799 = vmatprep.mubr.bf16.mxu0 0
        %5800 = vmatmul.mubr.bf16.gmra.mrb[0].mxu0 %v5658
        %v5801 = vpop.f32.mrb[0].mxu0
        %v5802 = vadd.f32 %v5710, %v5801
        %v5803 = vpop.f32.mrb[0].mxu0
        %v5804 = vpop.f32.mrb[0].mxu0
        %v5805 = vadd.f32 %v5710, %v5804
        %v5806 = vpop.f32.mrb[0].mxu0
        %5807 = vmatprep.mubr.bf16.mxu0 0
        %5808 = vmatmul.mubr.bf16.gmra.mrb[0].mxu0 %v5659
        %v5809 = vpop.f32.mrb[0].mxu0
        %v5810 = vadd.f32 %v5710, %v5809
        %v5811 = vpop.f32.mrb[0].mxu0
        %v5812 = vpop.f32.mrb[0].mxu0
        %v5813 = vadd.f32 %v5710, %v5812
        %v5814 = vpop.f32.mrb[0].mxu0
        %5815 = vmatprep.mubr.bf16.mxu0 0
        %5816 = vmatmul.mubr.bf16.gmra.mrb[0].mxu0 %v5660
        %v5817 = vpop.f32.mrb[0].mxu0
        %v5818 = vadd.f32 %v5710, %v5817
        %v5819 = vpop.f32.mrb[0].mxu0
        %v5820 = vpop.f32.mrb[0].mxu0
        %v5821 = vadd.f32 %v5710, %v5820
        %v5822 = vpop.f32.mrb[0].mxu0
        %5823 = vmatprep.mubr.bf16.mxu0 0
        %5824 = vmatmul.mubr.bf16.gmra.mrb[0].mxu0 %v5661
        %v5825 = vpop.f32.mrb[0].mxu0
        %v5826 = vadd.f32 %v5710, %v5825
        %v5827 = vpop.f32.mrb[0].mxu0
        %v5828 = vpop.f32.mrb[0].mxu0
        %v5829 = vadd.f32 %v5710, %v5828
        %v5830 = vpop.f32.mrb[0].mxu0
        %5831 = vmatprep.mubr.bf16.mxu0 0
        %5832 = vmatmul.mubr.bf16.gmra.mrb[0].mxu0 %v5662
        %v5833 = vpop.f32.mrb[0].mxu0
        %v5834 = vadd.f32 %v5710, %v5833
        %v5835 = vpop.f32.mrb[0].mxu0
        %v5836 = vpop.f32.mrb[0].mxu0
        %v5837 = vadd.f32 %v5710, %v5836
        %v5838 = vpop.f32.mrb[0].mxu0
        %5839 = vmatprep.mubr.bf16.mxu0 0
        %5840 = vmatmul.mubr.bf16.gmra.mrb[0].mxu0 %v5663
        %v5841 = vpop.f32.mrb[0].mxu0
        %v5842 = vadd.f32 %v5710, %v5841
        %v5843 = vpop.f32.mrb[0].mxu0
        %v5844 = vpop.f32.mrb[0].mxu0
        %v5845 = vadd.f32 %v5710, %v5844
        %v5846 = vpop.f32.mrb[0].mxu0
        %5847 = vmatprep.mubr.bf16.mxu0 0
        %5848 = vmatmul.mubr.bf16.gmra.mrb[0].mxu0 %v5664
        %v5849 = vpop.f32.mrb[0].mxu0
        %v5850 = vadd.f32 %v5710, %v5849
        %v5851 = vpop.f32.mrb[0].mxu0
        %v5852 = vpop.f32.mrb[0].mxu0
        %v5853 = vadd.f32 %v5710, %v5852
        %v5854 = vpop.f32.mrb[0].mxu0
        %5855 = vmatprep.mubr.bf16.mxu0 0
        %5856 = vmatmul.mubr.bf16.gmra.mrb[0].mxu0 %v5665
        %v5857 = vpop.f32.mrb[0].mxu0
        %v5858 = vadd.f32 %v5710, %v5857
        %v5859 = vpop.f32.mrb[0].mxu0
        %v5860 = vpop.f32.mrb[0].mxu0
        %v5861 = vadd.f32 %v5710, %v5860
        %v5862 = vpop.f32.mrb[0].mxu0
        %5863 = vmatprep.mubr.bf16.mxu0 0
        %5864 = vmatmul.mubr.bf16.gmra.mrb[0].mxu0 %v5666
        %v5865 = vpop.f32.mrb[0].mxu0
        %v5866 = vadd.f32 %v5710, %v5865
        %v5867 = vpop.f32.mrb[0].mxu0
        %v5868 = vpop.f32.mrb[0].mxu0
        %v5869 = vadd.f32 %v5710, %v5868
        %v5870 = vpop.f32.mrb[0].mxu0
        %5871 = vmatprep.mubr.bf16.mxu0 0
        %5872 = vmatmul.mubr.bf16.gmra.mrb[0].mxu0 %v5667
        %v5873 = vpop.f32.mrb[0].mxu0
        %v5874 = vadd.f32 %v5710, %v5873
        %v5875 = vpop.f32.mrb[0].mxu0
        %v5876 = vpop.f32.mrb[0].mxu0
        %v5877 = vadd.f32 %v5710, %v5876
        %v5878 = vpop.f32.mrb[0].mxu0
        %5879 = vmatprep.mubr.bf16.mxu0 0
        %5880 = vmatmul.mubr.bf16.gmra.mrb[0].mxu0 %v5668
        %v5881 = vpop.f32.mrb[0].mxu0
        %v5882 = vadd.f32 %v5710, %v5881
        %v5883 = vpop.f32.mrb[0].mxu0
        %v5884 = vpop.f32.mrb[0].mxu0
        %v5885 = vadd.f32 %v5710, %v5884
        %v5886 = vpop.f32.mrb[0].mxu0
        %5887 = vmatprep.mubr.bf16.mxu0 0
        %5888 = vmatmul.mubr.bf16.gmra.mrb[0].mxu0 %v5669
        %v5889 = vpop.f32.mrb[0].mxu0
        %v5890 = vadd.f32 %v5710, %v5889
        %v5891 = vpop.f32.mrb[0].mxu0
        %v5892 = vpop.f32.mrb[0].mxu0
        %v5893 = vadd.f32 %v5710, %v5892
        %v5894 = vpop.f32.mrb[0].mxu0
        %5895 = vmatprep.mubr.bf16.mxu0 0
        %5896 = vmatmul.mubr.bf16.gmra.mrb[0].mxu0 %v5670
        %v5897 = vpop.f32.mrb[0].mxu0
        %v5898 = vadd.f32 %v5710, %v5897
        %v5899 = vpop.f32.mrb[0].mxu0
        %v5900 = vpop.f32.mrb[0].mxu0
        %v5901 = vadd.f32 %v5710, %v5900
        %v5902 = vpop.f32.mrb[0].mxu0
        %5903 = vmatprep.mubr.bf16.mxu0 0
        %5904 = vmatmul.mubr.bf16.gmra.mrb[0].mxu0 %v5671
        %v5905 = vpop.f32.mrb[0].mxu0
        %v5906 = vadd.f32 %v5710, %v5905
        %v5907 = vpop.f32.mrb[0].mxu0
        %v5908 = vpop.f32.mrb[0].mxu0
        %v5909 = vadd.f32 %v5710, %v5908
        %v5910 = vpop.f32.mrb[0].mxu0
        %5911 = vmatprep.mubr.bf16.mxu0 0
        %5912 = vmatmul.mubr.bf16.gmra.mrb[0].mxu0 %v5672
        %v5913 = vpop.f32.mrb[0].mxu0
        %v5914 = vadd.f32 %v5710, %v5913
        %v5915 = vpop.f32.mrb[0].mxu0
        %v5916 = vpop.f32.mrb[0].mxu0
        %v5917 = vadd.f32 %v5710, %v5916
        %v5918 = vpop.f32.mrb[0].mxu0
        %5919 = vmatprep.mubr.bf16.mxu0 0
        %5920 = vmatmul.mubr.bf16.gmra.mrb[0].mxu0 %v5673
        %v5921 = vpop.f32.mrb[0].mxu0
        %v5922 = vadd.f32 %v5710, %v5921
        %v5923 = vpop.f32.mrb[0].mxu0
        %v5924 = vpop.f32.mrb[0].mxu0
        %v5925 = vadd.f32 %v5710, %v5924
        %v5926 = vpop.f32.mrb[0].mxu0
        %5927 = vmatprep.mubr.bf16.mxu0 0
        %5928 = vmatmul.mubr.bf16.gmra.mrb[0].mxu0 %v5674
        %v5929 = vpop.f32.mrb[0].mxu0
        %v5930 = vadd.f32 %v5710, %v5929
        %v5931 = vpop.f32.mrb[0].mxu0
        %v5932 = vpop.f32.mrb[0].mxu0
        %v5933 = vadd.f32 %v5710, %v5932
        %v5934 = vpop.f32.mrb[0].mxu0
        %5935 = vmatprep.mubr.bf16.mxu0 0
        %5936 = vmatmul.mubr.bf16.gmra.mrb[0].mxu0 %v5675
        %v5937 = vpop.f32.mrb[0].mxu0
        %v5938 = vadd.f32 %v5710, %v5937
        %v5939 = vpop.f32.mrb[0].mxu0
        %v5940 = vpop.f32.mrb[0].mxu0
        %v5941 = vadd.f32 %v5710, %v5940
        %v5942 = vpop.f32.mrb[0].mxu0
        %5943 = vmatprep.mubr.bf16.mxu0 0
        %5944 = vmatmul.mubr.bf16.gmra.mrb[0].mxu0 %v5676
        %v5945 = vpop.f32.mrb[0].mxu0
        %v5946 = vadd.f32 %v5710, %v5945
        %v5947 = vpop.f32.mrb[0].mxu0
        %v5948 = vpop.f32.mrb[0].mxu0
        %v5949 = vadd.f32 %v5710, %v5948
        %v5950 = vpop.f32.mrb[0].mxu0
        %5951 = vmatprep.mubr.bf16.mxu0 0
        %5952 = vmatmul.mubr.bf16.gmra.mrb[0].mxu0 %v5677
        %v5953 = vpop.f32.mrb[0].mxu0
        %v5954 = vadd.f32 %v5710, %v5953
        %v5955 = vpop.f32.mrb[0].mxu0
        %v5956 = vpop.f32.mrb[0].mxu0
        %v5957 = vadd.f32 %v5710, %v5956
        %v5958 = vpop.f32.mrb[0].mxu0
        %5959 = vmatprep.mubr.bf16.mxu0 0
        %5960 = vmatmul.mubr.bf16.gmra.mrb[0].mxu0 %v5678
        %v5961 = vpop.f32.mrb[0].mxu0
        %v5962 = vadd.f32 %v5710, %v5961
        %v5963 = vpop.f32.mrb[0].mxu0
        %v5964 = vpop.f32.mrb[0].mxu0
        %v5965 = vadd.f32 %v5710, %v5964
        %v5966 = vpop.f32.mrb[0].mxu0
        %5967 = vmatprep.mubr.bf16.mxu0 0
        %5968 = vmatmul.mubr.bf16.gmra.mrb[0].mxu0 %v5679
        %v5969 = vpop.f32.mrb[0].mxu0
        %v5970 = vadd.f32 %v5710, %v5969
        %v5971 = vpop.f32.mrb[0].mxu0
        %v5972 = vpop.f32.mrb[0].mxu0
        %v5973 = vadd.f32 %v5710, %v5972
        %v5974 = vpop.f32.mrb[0].mxu0
        %5975 = vmatprep.mubr.bf16.mxu0 0
        %5976 = vmatmul.mubr.bf16.gmra.mrb[0].mxu0 %v5680
        %v5977 = vpop.f32.mrb[0].mxu0
        %v5978 = vadd.f32 %v5710, %v5977
        %v5979 = vpop.f32.mrb[0].mxu0
        %v5980 = vpop.f32.mrb[0].mxu0
        %v5981 = vadd.f32 %v5710, %v5980
        %v5982 = vpop.f32.mrb[0].mxu0
        %5983 = vmatprep.mubr.bf16.mxu0 0
        %5984 = vmatmul.mubr.bf16.gmra.mrb[0].mxu0 %v5681
        %v5985 = vpop.f32.mrb[0].mxu0
        %v5986 = vadd.f32 %v5710, %v5985
        %v5987 = vpop.f32.mrb[0].mxu0
        %v5988 = vpop.f32.mrb[0].mxu0
        %v5989 = vadd.f32 %v5710, %v5988
        %v5990 = vpop.f32.mrb[0].mxu0
        %5991 = vmatprep.mubr.bf16.mxu0 0
        %5992 = vmatmul.mubr.bf16.gmra.mrb[0].mxu0 %v5682
        %v5993 = vpop.f32.mrb[0].mxu0
        %v5994 = vadd.f32 %v5710, %v5993
        %v5995 = vpop.f32.mrb[0].mxu0
        %v5996 = vpop.f32.mrb[0].mxu0
        %v5997 = vadd.f32 %v5710, %v5996
        %v5998 = vpop.f32.mrb[0].mxu0
        %5999 = vmatprep.mubr.bf16.mxu0 0
        %6000 = vmatmul.mubr.bf16.gmra.mrb[0].mxu0 %v5683
        %v6001 = vpop.f32.mrb[0].mxu0
        %v6002 = vadd.f32 %v5710, %v6001
        %v6003 = vpop.f32.mrb[0].mxu0
        %v6004 = vpop.f32.mrb[0].mxu0
        %v6005 = vadd.f32 %v5710, %v6004
        %v6006 = vpop.f32.mrb[0].mxu0
        %6007 = vmatprep.mubr.bf16.mxu0 0
        %6008 = vmatmul.mubr.bf16.gmra.mrb[0].mxu0 %v5684
        %v6009 = vpop.f32.mrb[0].mxu0
        %v6010 = vadd.f32 %v5710, %v6009
        %v6011 = vpop.f32.mrb[0].mxu0
        %v6012 = vpop.f32.mrb[0].mxu0
        %v6013 = vadd.f32 %v5710, %v6012
        %v6014 = vpop.f32.mrb[0].mxu0
        %6015 = vmatprep.mubr.bf16.mxu0 0
        %6016 = vmatmul.mubr.bf16.gmra.mrb[0].mxu0 %v5685
        %v6017 = vpop.f32.mrb[0].mxu0
        %v6018 = vadd.f32 %v5710, %v6017
        %v6019 = vpop.f32.mrb[0].mxu0
        %v6020 = vpop.f32.mrb[0].mxu0
        %v6021 = vadd.f32 %v5710, %v6020
        %v6022 = vpop.f32.mrb[0].mxu0
        %6023 = vmatprep.mubr.bf16.mxu0 0
        %6024 = vmatmul.mubr.bf16.gmra.mrb[0].mxu0 %v5686
        %v6025 = vpop.f32.mrb[0].mxu0
        %v6026 = vadd.f32 %v5710, %v6025
        %v6027 = vpop.f32.mrb[0].mxu0
        %v6028 = vpop.f32.mrb[0].mxu0
        %v6029 = vadd.f32 %v5710, %v6028
        %v6030 = vpop.f32.mrb[0].mxu0
        %6031 = vmatprep.mubr.bf16.mxu0 0
        %6032 = vmatmul.mubr.bf16.gmra.mrb[0].mxu0 %v5687
        %v6033 = vpop.f32.mrb[0].mxu0
        %v6034 = vadd.f32 %v5710, %v6033
        %v6035 = vpop.f32.mrb[0].mxu0
        %v6036 = vpop.f32.mrb[0].mxu0
        %v6037 = vadd.f32 %v5710, %v6036
        %v6038 = vpop.f32.mrb[0].mxu0
        %6039 = vmatprep.mubr.bf16.mxu0 0
        %6040 = vmatmul.mubr.bf16.gmra.mrb[0].mxu0 %v5688
        %v6041 = vpop.f32.mrb[0].mxu0
        %v6042 = vadd.f32 %v5710, %v6041
        %v6043 = vpop.f32.mrb[0].mxu0
        %v6044 = vpop.f32.mrb[0].mxu0
        %v6045 = vadd.f32 %v5710, %v6044
        %v6046 = vpop.f32.mrb[0].mxu0
        %6047 = vdwg.mxu0
        %v6048 = vmax.f32 %v5794, 0.0
        %v6049 = vmax.f32 %v5797, 0.0
        %v6050 = vmax.f32 %v5802, 0.0
        %v6051 = vmax.f32 %v5805, 0.0
        %v6052 = vmax.f32 %v5810, 0.0
        %v6053 = vmax.f32 %v5813, 0.0
        %v6054 = vmax.f32 %v5818, 0.0
        %v6055 = vmax.f32 %v5821, 0.0
        %v6056 = vmax.f32 %v5826, 0.0
        %v6057 = vmax.f32 %v5829, 0.0
        %v6058 = vmax.f32 %v5834, 0.0
        %v6059 = vmax.f32 %v5837, 0.0
        %v6060 = vmax.f32 %v5842, 0.0
        %v6061 = vmax.f32 %v5845, 0.0
        %v6062 = vmax.f32 %v5850, 0.0
        %v6063 = vmax.f32 %v5853, 0.0
        %v6064 = vmax.f32 %v5858, 0.0
        %v6065 = vmax.f32 %v5861, 0.0
        %v6066 = vmax.f32 %v5866, 0.0
        %v6067 = vmax.f32 %v5869, 0.0
        %v6068 = vmax.f32 %v5874, 0.0
        %v6069 = vmax.f32 %v5877, 0.0
        %v6070 = vmax.f32 %v5882, 0.0
        %v6071 = vmax.f32 %v5885, 0.0
        %v6072 = vmax.f32 %v5890, 0.0
        %v6073 = vmax.f32 %v5893, 0.0
        %v6074 = vmax.f32 %v5898, 0.0
        %v6075 = vmax.f32 %v5901, 0.0
        %v6076 = vmax.f32 %v5906, 0.0
        %v6077 = vmax.f32 %v5909, 0.0
        %v6078 = vmax.f32 %v5914, 0.0
        %v6079 = vmax.f32 %v5917, 0.0
        %v6080 = vmax.f32 %v5922, 0.0
        %v6081 = vmax.f32 %v5925, 0.0
        %v6082 = vmax.f32 %v5930, 0.0
        %v6083 = vmax.f32 %v5933, 0.0
        %v6084 = vmax.f32 %v5938, 0.0
        %v6085 = vmax.f32 %v5941, 0.0
        %v6086 = vmax.f32 %v5946, 0.0
        %v6087 = vmax.f32 %v5949, 0.0
        %v6088 = vmax.f32 %v5954, 0.0
        %v6089 = vmax.f32 %v5957, 0.0
        %v6090 = vmax.f32 %v5962, 0.0
        %v6091 = vmax.f32 %v5965, 0.0
        %v6092 = vmax.f32 %v5970, 0.0
        %v6093 = vmax.f32 %v5973, 0.0
        %v6094 = vmax.f32 %v5978, 0.0
        %v6095 = vmax.f32 %v5981, 0.0
        %v6096 = vmax.f32 %v5986, 0.0
        %v6097 = vmax.f32 %v5989, 0.0
        %v6098 = vmax.f32 %v5994, 0.0
        %v6099 = vmax.f32 %v5997, 0.0
        %v6100 = vmax.f32 %v6002, 0.0
        %v6101 = vmax.f32 %v6005, 0.0
        %v6102 = vmax.f32 %v6010, 0.0
        %v6103 = vmax.f32 %v6013, 0.0
        %v6104 = vmax.f32 %v6018, 0.0
        %v6105 = vmax.f32 %v6021, 0.0
        %v6106 = vmax.f32 %v6026, 0.0
        %v6107 = vmax.f32 %v6029, 0.0
        %v6108 = vmax.f32 %v6034, 0.0
        %v6109 = vmax.f32 %v6037, 0.0
        %v6110 = vmax.f32 %v6042, 0.0
        %v6111 = vmax.f32 %v6045, 0.0
        %v6112 = vpack.c.bf16 %v6049, %v6048
        %v6113 = vpack.c.bf16 %v6051, %v6050
        %v6114 = vpack.c.bf16 %v6053, %v6052
        %v6115 = vpack.c.bf16 %v6055, %v6054
        %v6116 = vpack.c.bf16 %v6057, %v6056
        %v6117 = vpack.c.bf16 %v6059, %v6058
        %v6118 = vpack.c.bf16 %v6061, %v6060
        %v6119 = vpack.c.bf16 %v6063, %v6062
        %v6120 = vpack.c.bf16 %v6065, %v6064
        %v6121 = vpack.c.bf16 %v6067, %v6066
        %v6122 = vpack.c.bf16 %v6069, %v6068
        %v6123 = vpack.c.bf16 %v6071, %v6070
        %v6124 = vpack.c.bf16 %v6073, %v6072
        %v6125 = vpack.c.bf16 %v6075, %v6074
        %v6126 = vpack.c.bf16 %v6077, %v6076
        %v6127 = vpack.c.bf16 %v6079, %v6078
        %v6128 = vpack.c.bf16 %v6081, %v6080
        %v6129 = vpack.c.bf16 %v6083, %v6082
        %v6130 = vpack.c.bf16 %v6085, %v6084
        %v6131 = vpack.c.bf16 %v6087, %v6086
        %v6132 = vpack.c.bf16 %v6089, %v6088
        %v6133 = vpack.c.bf16 %v6091, %v6090
        %v6134 = vpack.c.bf16 %v6093, %v6092
        %v6135 = vpack.c.bf16 %v6095, %v6094
        %v6136 = vpack.c.bf16 %v6097, %v6096
        %v6137 = vpack.c.bf16 %v6099, %v6098
        %v6138 = vpack.c.bf16 %v6101, %v6100
        %v6139 = vpack.c.bf16 %v6103, %v6102
        %v6140 = vpack.c.bf16 %v6105, %v6104
        %v6141 = vpack.c.bf16 %v6107, %v6106
        %v6142 = vpack.c.bf16 %v6109, %v6108
        %v6143 = vpack.c.bf16 %v6111, %v6110
        %s6144 = scalar_lea.vmem %s8, 128
        %v6145 = vld [vmem:[%s6144] sm:$0xf]
        %v6146 = vld [vmem:[%s6144 + $0x4] sm:$0xf]
        %v6147 = vld [vmem:[%s6144 + $0x8] sm:$0xf]
        %v6148 = vld [vmem:[%s6144 + $0xc] sm:$0xf]
        %v6149 = vld [vmem:[%s6144 + $0x10] sm:$0xf]
        %v6150 = vld [vmem:[%s6144 + $0x14] sm:$0xf]
        %v6151 = vld [vmem:[%s6144 + $0x18] sm:$0xf]
        %v6152 = vld [vmem:[%s6144 + $0x1c] sm:$0xf]
        %v6153 = vld [vmem:[%s6144 + $0x20] sm:$0xf]
        %v6154 = vld [vmem:[%s6144 + $0x24] sm:$0xf]
        %v6155 = vld [vmem:[%s6144 + $0x28] sm:$0xf]
        %v6156 = vld [vmem:[%s6144 + $0x2c] sm:$0xf]
        %v6157 = vld [vmem:[%s6144 + $0x30] sm:$0xf]
        %v6158 = vld [vmem:[%s6144 + $0x34] sm:$0xf]
        %v6159 = vld [vmem:[%s6144 + $0x38] sm:$0xf]
        %v6160 = vld [vmem:[%s6144 + $0x3c] sm:$0xf]
        %v6161 = vld [vmem:[%s9 + $0x2] sm:$0x1]
        %v6162 = vlaneseq
        %v6163 = vshrl.u32 %v6162, 7
        %v6164 = vsub.s32 0, %v6163
        %v6165 = vrot.slane %v6161, %v6164
        %v6182 = vunpack.c.l.b16 %v6145
        %v6183 = vunpack.c.l.b16 %v6146
        %v6184 = vunpack.c.l.b16 %v6147
        %v6185 = vunpack.c.l.b16 %v6148
        %v6186 = vunpack.c.l.b16 %v6149
        %v6187 = vunpack.c.l.b16 %v6150
        %v6188 = vunpack.c.l.b16 %v6151
        %v6189 = vunpack.c.l.b16 %v6152
        %v6190 = vunpack.c.l.b16 %v6153
        %v6191 = vunpack.c.l.b16 %v6154
        %v6192 = vunpack.c.l.b16 %v6155
        %v6193 = vunpack.c.l.b16 %v6156
        %v6194 = vunpack.c.l.b16 %v6157
        %v6195 = vunpack.c.l.b16 %v6158
        %v6196 = vunpack.c.l.b16 %v6159
        %v6197 = vunpack.c.l.b16 %v6160
        %v6198 = vpack.c.b16 %v6183, %v6182
        %v6199 = vpack.c.b16 %v6185, %v6184
        %v6200 = vpack.c.b16 %v6187, %v6186
        %v6201 = vpack.c.b16 %v6189, %v6188
        %v6202 = vpack.c.b16 %v6191, %v6190
        %v6203 = vpack.c.b16 %v6193, %v6192
        %v6204 = vpack.c.b16 %v6195, %v6194
        %v6205 = vpack.c.b16 %v6197, %v6196
        %6214 = vmatprep.subr.bf16.mxu0 0
        %6215 = vmatpush1.bf16.msra.mxu0 %v6198
        %6216 = vmatprep.subr.bf16.mxu0 0
        %6217 = vmatpush1.bf16.msra.mxu0 %v6199
        %6218 = vmatprep.subr.bf16.mxu0 0
        %6219 = vmatpush1.bf16.msra.mxu0 %v6200
        %6220 = vmatprep.subr.bf16.mxu0 0
        %6221 = vmatpush1.bf16.msra.mxu0 %v6201
        %6222 = vmatprep.subr.bf16.mxu0 0
        %6223 = vmatpush1.bf16.msra.mxu0 %v6202
        %6224 = vmatprep.subr.bf16.mxu0 0
        %6225 = vmatpush1.bf16.msra.mxu0 %v6203
        %6226 = vmatprep.subr.bf16.mxu0 0
        %6227 = vmatpush1.bf16.msra.mxu0 %v6204
        %6228 = vmatprep.subr.bf16.mxu0 0
        %6229 = vmatpush1.bf16.msra.mxu0 %v6205
        %6230 = vmatprep.subr.bf16.mxu0 0
        %6231 = vmatpush1.bf16.msra.mxu0 0
        %6232 = vmatprep.subr.bf16.mxu0 0
        %6233 = vmatpush1.bf16.msra.mxu0 0
        %6234 = vmatprep.subr.bf16.mxu0 0
        %6235 = vmatpush1.bf16.msra.mxu0 0
        %6236 = vmatprep.subr.bf16.mxu0 0
        %6237 = vmatpush1.bf16.msra.mxu0 0
        %6238 = vmatprep.subr.bf16.mxu0 0
        %6239 = vmatpush1.bf16.msra.mxu0 0
        %6240 = vmatprep.subr.bf16.mxu0 0
        %6241 = vmatpush1.bf16.msra.mxu0 0
        %6242 = vmatprep.subr.bf16.mxu0 0
        %6243 = vmatpush1.bf16.msra.mxu0 0
        %6244 = vmatprep.subr.bf16.mxu0 0
        %6245 = vmatpush1.bf16.msra.mxu0 0
        %6246 = vmatprep.mubr.bf16.mxu0 0
        %6247 = vmatmul.mubr.bf16.gmra.mrb[0].mxu0 %v6112
        %v6248 = vpop.f32.mrb[0].mxu0
        %v6249 = vadd.f32 %v6165, %v6248
        %v6250 = vpop.f32.mrb[0].mxu0
        %v6251 = vpop.f32.mrb[0].mxu0
        %v6252 = vadd.f32 %v6165, %v6251
        %v6253 = vpop.f32.mrb[0].mxu0
        %6254 = vmatprep.mubr.bf16.mxu0 0
        %6255 = vmatmul.mubr.bf16.gmra.mrb[0].mxu0 %v6113
        %v6256 = vpop.f32.mrb[0].mxu0
        %v6257 = vadd.f32 %v6165, %v6256
        %v6258 = vpop.f32.mrb[0].mxu0
        %v6259 = vpop.f32.mrb[0].mxu0
        %v6260 = vadd.f32 %v6165, %v6259
        %v6261 = vpop.f32.mrb[0].mxu0
        %6262 = vmatprep.mubr.bf16.mxu0 0
        %6263 = vmatmul.mubr.bf16.gmra.mrb[0].mxu0 %v6114
        %v6264 = vpop.f32.mrb[0].mxu0
        %v6265 = vadd.f32 %v6165, %v6264
        %v6266 = vpop.f32.mrb[0].mxu0
        %v6267 = vpop.f32.mrb[0].mxu0
        %v6268 = vadd.f32 %v6165, %v6267
        %v6269 = vpop.f32.mrb[0].mxu0
        %6270 = vmatprep.mubr.bf16.mxu0 0
        %6271 = vmatmul.mubr.bf16.gmra.mrb[0].mxu0 %v6115
        %v6272 = vpop.f32.mrb[0].mxu0
        %v6273 = vadd.f32 %v6165, %v6272
        %v6274 = vpop.f32.mrb[0].mxu0
        %v6275 = vpop.f32.mrb[0].mxu0
        %v6276 = vadd.f32 %v6165, %v6275
        %v6277 = vpop.f32.mrb[0].mxu0
        %6278 = vmatprep.mubr.bf16.mxu0 0
        %6279 = vmatmul.mubr.bf16.gmra.mrb[0].mxu0 %v6116
        %v6280 = vpop.f32.mrb[0].mxu0
        %v6281 = vadd.f32 %v6165, %v6280
        %v6282 = vpop.f32.mrb[0].mxu0
        %v6283 = vpop.f32.mrb[0].mxu0
        %v6284 = vadd.f32 %v6165, %v6283
        %v6285 = vpop.f32.mrb[0].mxu0
        %6286 = vmatprep.mubr.bf16.mxu0 0
        %6287 = vmatmul.mubr.bf16.gmra.mrb[0].mxu0 %v6117
        %v6288 = vpop.f32.mrb[0].mxu0
        %v6289 = vadd.f32 %v6165, %v6288
        %v6290 = vpop.f32.mrb[0].mxu0
        %v6291 = vpop.f32.mrb[0].mxu0
        %v6292 = vadd.f32 %v6165, %v6291
        %v6293 = vpop.f32.mrb[0].mxu0
        %6294 = vmatprep.mubr.bf16.mxu0 0
        %6295 = vmatmul.mubr.bf16.gmra.mrb[0].mxu0 %v6118
        %v6296 = vpop.f32.mrb[0].mxu0
        %v6297 = vadd.f32 %v6165, %v6296
        %v6298 = vpop.f32.mrb[0].mxu0
        %v6299 = vpop.f32.mrb[0].mxu0
        %v6300 = vadd.f32 %v6165, %v6299
        %v6301 = vpop.f32.mrb[0].mxu0
        %6302 = vmatprep.mubr.bf16.mxu0 0
        %6303 = vmatmul.mubr.bf16.gmra.mrb[0].mxu0 %v6119
        %v6304 = vpop.f32.mrb[0].mxu0
        %v6305 = vadd.f32 %v6165, %v6304
        %v6306 = vpop.f32.mrb[0].mxu0
        %v6307 = vpop.f32.mrb[0].mxu0
        %v6308 = vadd.f32 %v6165, %v6307
        %v6309 = vpop.f32.mrb[0].mxu0
        %6310 = vmatprep.mubr.bf16.mxu0 0
        %6311 = vmatmul.mubr.bf16.gmra.mrb[0].mxu0 %v6120
        %v6312 = vpop.f32.mrb[0].mxu0
        %v6313 = vadd.f32 %v6165, %v6312
        %v6314 = vpop.f32.mrb[0].mxu0
        %v6315 = vpop.f32.mrb[0].mxu0
        %v6316 = vadd.f32 %v6165, %v6315
        %v6317 = vpop.f32.mrb[0].mxu0
        %6318 = vmatprep.mubr.bf16.mxu0 0
        %6319 = vmatmul.mubr.bf16.gmra.mrb[0].mxu0 %v6121
        %v6320 = vpop.f32.mrb[0].mxu0
        %v6321 = vadd.f32 %v6165, %v6320
        %v6322 = vpop.f32.mrb[0].mxu0
        %v6323 = vpop.f32.mrb[0].mxu0
        %v6324 = vadd.f32 %v6165, %v6323
        %v6325 = vpop.f32.mrb[0].mxu0
        %6326 = vmatprep.mubr.bf16.mxu0 0
        %6327 = vmatmul.mubr.bf16.gmra.mrb[0].mxu0 %v6122
        %v6328 = vpop.f32.mrb[0].mxu0
        %v6329 = vadd.f32 %v6165, %v6328
        %v6330 = vpop.f32.mrb[0].mxu0
        %v6331 = vpop.f32.mrb[0].mxu0
        %v6332 = vadd.f32 %v6165, %v6331
        %v6333 = vpop.f32.mrb[0].mxu0
        %6334 = vmatprep.mubr.bf16.mxu0 0
        %6335 = vmatmul.mubr.bf16.gmra.mrb[0].mxu0 %v6123
        %v6336 = vpop.f32.mrb[0].mxu0
        %v6337 = vadd.f32 %v6165, %v6336
        %v6338 = vpop.f32.mrb[0].mxu0
        %v6339 = vpop.f32.mrb[0].mxu0
        %v6340 = vadd.f32 %v6165, %v6339
        %v6341 = vpop.f32.mrb[0].mxu0
        %6342 = vmatprep.mubr.bf16.mxu0 0
        %6343 = vmatmul.mubr.bf16.gmra.mrb[0].mxu0 %v6124
        %v6344 = vpop.f32.mrb[0].mxu0
        %v6345 = vadd.f32 %v6165, %v6344
        %v6346 = vpop.f32.mrb[0].mxu0
        %v6347 = vpop.f32.mrb[0].mxu0
        %v6348 = vadd.f32 %v6165, %v6347
        %v6349 = vpop.f32.mrb[0].mxu0
        %6350 = vmatprep.mubr.bf16.mxu0 0
        %6351 = vmatmul.mubr.bf16.gmra.mrb[0].mxu0 %v6125
        %v6352 = vpop.f32.mrb[0].mxu0
        %v6353 = vadd.f32 %v6165, %v6352
        %v6354 = vpop.f32.mrb[0].mxu0
        %v6355 = vpop.f32.mrb[0].mxu0
        %v6356 = vadd.f32 %v6165, %v6355
        %v6357 = vpop.f32.mrb[0].mxu0
        %6358 = vmatprep.mubr.bf16.mxu0 0
        %6359 = vmatmul.mubr.bf16.gmra.mrb[0].mxu0 %v6126
        %v6360 = vpop.f32.mrb[0].mxu0
        %v6361 = vadd.f32 %v6165, %v6360
        %v6362 = vpop.f32.mrb[0].mxu0
        %v6363 = vpop.f32.mrb[0].mxu0
        %v6364 = vadd.f32 %v6165, %v6363
        %v6365 = vpop.f32.mrb[0].mxu0
        %6366 = vmatprep.mubr.bf16.mxu0 0
        %6367 = vmatmul.mubr.bf16.gmra.mrb[0].mxu0 %v6127
        %v6368 = vpop.f32.mrb[0].mxu0
        %v6369 = vadd.f32 %v6165, %v6368
        %v6370 = vpop.f32.mrb[0].mxu0
        %v6371 = vpop.f32.mrb[0].mxu0
        %v6372 = vadd.f32 %v6165, %v6371
        %v6373 = vpop.f32.mrb[0].mxu0
        %6374 = vmatprep.mubr.bf16.mxu0 0
        %6375 = vmatmul.mubr.bf16.gmra.mrb[0].mxu0 %v6128
        %v6376 = vpop.f32.mrb[0].mxu0
        %v6377 = vadd.f32 %v6165, %v6376
        %v6378 = vpop.f32.mrb[0].mxu0
        %v6379 = vpop.f32.mrb[0].mxu0
        %v6380 = vadd.f32 %v6165, %v6379
        %v6381 = vpop.f32.mrb[0].mxu0
        %6382 = vmatprep.mubr.bf16.mxu0 0
        %6383 = vmatmul.mubr.bf16.gmra.mrb[0].mxu0 %v6129
        %v6384 = vpop.f32.mrb[0].mxu0
        %v6385 = vadd.f32 %v6165, %v6384
        %v6386 = vpop.f32.mrb[0].mxu0
        %v6387 = vpop.f32.mrb[0].mxu0
        %v6388 = vadd.f32 %v6165, %v6387
        %v6389 = vpop.f32.mrb[0].mxu0
        %6390 = vmatprep.mubr.bf16.mxu0 0
        %6391 = vmatmul.mubr.bf16.gmra.mrb[0].mxu0 %v6130
        %v6392 = vpop.f32.mrb[0].mxu0
        %v6393 = vadd.f32 %v6165, %v6392
        %v6394 = vpop.f32.mrb[0].mxu0
        %v6395 = vpop.f32.mrb[0].mxu0
        %v6396 = vadd.f32 %v6165, %v6395
        %v6397 = vpop.f32.mrb[0].mxu0
        %6398 = vmatprep.mubr.bf16.mxu0 0
        %6399 = vmatmul.mubr.bf16.gmra.mrb[0].mxu0 %v6131
        %v6400 = vpop.f32.mrb[0].mxu0
        %v6401 = vadd.f32 %v6165, %v6400
        %v6402 = vpop.f32.mrb[0].mxu0
        %v6403 = vpop.f32.mrb[0].mxu0
        %v6404 = vadd.f32 %v6165, %v6403
        %v6405 = vpop.f32.mrb[0].mxu0
        %6406 = vmatprep.mubr.bf16.mxu0 0
        %6407 = vmatmul.mubr.bf16.gmra.mrb[0].mxu0 %v6132
        %v6408 = vpop.f32.mrb[0].mxu0
        %v6409 = vadd.f32 %v6165, %v6408
        %v6410 = vpop.f32.mrb[0].mxu0
        %v6411 = vpop.f32.mrb[0].mxu0
        %v6412 = vadd.f32 %v6165, %v6411
        %v6413 = vpop.f32.mrb[0].mxu0
        %6414 = vmatprep.mubr.bf16.mxu0 0
        %6415 = vmatmul.mubr.bf16.gmra.mrb[0].mxu0 %v6133
        %v6416 = vpop.f32.mrb[0].mxu0
        %v6417 = vadd.f32 %v6165, %v6416
        %v6418 = vpop.f32.mrb[0].mxu0
        %v6419 = vpop.f32.mrb[0].mxu0
        %v6420 = vadd.f32 %v6165, %v6419
        %v6421 = vpop.f32.mrb[0].mxu0
        %6422 = vmatprep.mubr.bf16.mxu0 0
        %6423 = vmatmul.mubr.bf16.gmra.mrb[0].mxu0 %v6134
        %v6424 = vpop.f32.mrb[0].mxu0
        %v6425 = vadd.f32 %v6165, %v6424
        %v6426 = vpop.f32.mrb[0].mxu0
        %v6427 = vpop.f32.mrb[0].mxu0
        %v6428 = vadd.f32 %v6165, %v6427
        %v6429 = vpop.f32.mrb[0].mxu0
        %6430 = vmatprep.mubr.bf16.mxu0 0
        %6431 = vmatmul.mubr.bf16.gmra.mrb[0].mxu0 %v6135
        %v6432 = vpop.f32.mrb[0].mxu0
        %v6433 = vadd.f32 %v6165, %v6432
        %v6434 = vpop.f32.mrb[0].mxu0
        %v6435 = vpop.f32.mrb[0].mxu0
        %v6436 = vadd.f32 %v6165, %v6435
        %v6437 = vpop.f32.mrb[0].mxu0
        %6438 = vmatprep.mubr.bf16.mxu0 0
        %6439 = vmatmul.mubr.bf16.gmra.mrb[0].mxu0 %v6136
        %v6440 = vpop.f32.mrb[0].mxu0
        %v6441 = vadd.f32 %v6165, %v6440
        %v6442 = vpop.f32.mrb[0].mxu0
        %v6443 = vpop.f32.mrb[0].mxu0
        %v6444 = vadd.f32 %v6165, %v6443
        %v6445 = vpop.f32.mrb[0].mxu0
        %6446 = vmatprep.mubr.bf16.mxu0 0
        %6447 = vmatmul.mubr.bf16.gmra.mrb[0].mxu0 %v6137
        %v6448 = vpop.f32.mrb[0].mxu0
        %v6449 = vadd.f32 %v6165, %v6448
        %v6450 = vpop.f32.mrb[0].mxu0
        %v6451 = vpop.f32.mrb[0].mxu0
        %v6452 = vadd.f32 %v6165, %v6451
        %v6453 = vpop.f32.mrb[0].mxu0
        %6454 = vmatprep.mubr.bf16.mxu0 0
        %6455 = vmatmul.mubr.bf16.gmra.mrb[0].mxu0 %v6138
        %v6456 = vpop.f32.mrb[0].mxu0
        %v6457 = vadd.f32 %v6165, %v6456
        %v6458 = vpop.f32.mrb[0].mxu0
        %v6459 = vpop.f32.mrb[0].mxu0
        %v6460 = vadd.f32 %v6165, %v6459
        %v6461 = vpop.f32.mrb[0].mxu0
        %6462 = vmatprep.mubr.bf16.mxu0 0
        %6463 = vmatmul.mubr.bf16.gmra.mrb[0].mxu0 %v6139
        %v6464 = vpop.f32.mrb[0].mxu0
        %v6465 = vadd.f32 %v6165, %v6464
        %v6466 = vpop.f32.mrb[0].mxu0
        %v6467 = vpop.f32.mrb[0].mxu0
        %v6468 = vadd.f32 %v6165, %v6467
        %v6469 = vpop.f32.mrb[0].mxu0
        %6470 = vmatprep.mubr.bf16.mxu0 0
        %6471 = vmatmul.mubr.bf16.gmra.mrb[0].mxu0 %v6140
        %v6472 = vpop.f32.mrb[0].mxu0
        %v6473 = vadd.f32 %v6165, %v6472
        %v6474 = vpop.f32.mrb[0].mxu0
        %v6475 = vpop.f32.mrb[0].mxu0
        %v6476 = vadd.f32 %v6165, %v6475
        %v6477 = vpop.f32.mrb[0].mxu0
        %6478 = vmatprep.mubr.bf16.mxu0 0
        %6479 = vmatmul.mubr.bf16.gmra.mrb[0].mxu0 %v6141
        %v6480 = vpop.f32.mrb[0].mxu0
        %v6481 = vadd.f32 %v6165, %v6480
        %v6482 = vpop.f32.mrb[0].mxu0
        %v6483 = vpop.f32.mrb[0].mxu0
        %v6484 = vadd.f32 %v6165, %v6483
        %v6485 = vpop.f32.mrb[0].mxu0
        %6486 = vmatprep.mubr.bf16.mxu0 0
        %6487 = vmatmul.mubr.bf16.gmra.mrb[0].mxu0 %v6142
        %v6488 = vpop.f32.mrb[0].mxu0
        %v6489 = vadd.f32 %v6165, %v6488
        %v6490 = vpop.f32.mrb[0].mxu0
        %v6491 = vpop.f32.mrb[0].mxu0
        %v6492 = vadd.f32 %v6165, %v6491
        %v6493 = vpop.f32.mrb[0].mxu0
        %6494 = vmatprep.mubr.bf16.mxu0 0
        %6495 = vmatmul.mubr.bf16.gmra.mrb[0].mxu0 %v6143
        %v6496 = vpop.f32.mrb[0].mxu0
        %v6497 = vadd.f32 %v6165, %v6496
        %v6498 = vpop.f32.mrb[0].mxu0
        %v6499 = vpop.f32.mrb[0].mxu0
        %v6500 = vadd.f32 %v6165, %v6499
        %v6501 = vpop.f32.mrb[0].mxu0
        %6502 = vdwg.mxu0
        %v6503 = vadd.f32 %v5529, %v6249
        %v6504 = vadd.f32 %v5530, %v6252
        %v6505 = vadd.f32 %v5531, %v6257
        %v6506 = vadd.f32 %v5532, %v6260
        %v6507 = vadd.f32 %v5533, %v6265
        %v6508 = vadd.f32 %v5534, %v6268
        %v6509 = vadd.f32 %v5535, %v6273
        %v6510 = vadd.f32 %v5536, %v6276
        %v6511 = vadd.f32 %v5537, %v6281
        %v6512 = vadd.f32 %v5538, %v6284
        %v6513 = vadd.f32 %v5539, %v6289
        %v6514 = vadd.f32 %v5540, %v6292
        %v6515 = vadd.f32 %v5541, %v6297
        %v6516 = vadd.f32 %v5542, %v6300
        %v6517 = vadd.f32 %v5543, %v6305
        %v6518 = vadd.f32 %v5544, %v6308
        %v6519 = vadd.f32 %v5545, %v6313
        %v6520 = vadd.f32 %v5546, %v6316
        %v6521 = vadd.f32 %v5547, %v6321
        %v6522 = vadd.f32 %v5548, %v6324
        %v6523 = vadd.f32 %v5549, %v6329
        %v6524 = vadd.f32 %v5550, %v6332
        %v6525 = vadd.f32 %v5551, %v6337
        %v6526 = vadd.f32 %v5552, %v6340
        %v6527 = vadd.f32 %v5553, %v6345
        %v6528 = vadd.f32 %v5554, %v6348
        %v6529 = vadd.f32 %v5555, %v6353
        %v6530 = vadd.f32 %v5556, %v6356
        %v6531 = vadd.f32 %v5557, %v6361
        %v6532 = vadd.f32 %v5558, %v6364
        %v6533 = vadd.f32 %v5559, %v6369
        %v6534 = vadd.f32 %v5560, %v6372
        %v6535 = vadd.f32 %v5561, %v6377
        %v6536 = vadd.f32 %v5562, %v6380
        %v6537 = vadd.f32 %v5563, %v6385
        %v6538 = vadd.f32 %v5564, %v6388
        %v6539 = vadd.f32 %v5565, %v6393
        %v6540 = vadd.f32 %v5566, %v6396
        %v6541 = vadd.f32 %v5567, %v6401
        %v6542 = vadd.f32 %v5568, %v6404
        %v6543 = vadd.f32 %v5569, %v6409
        %v6544 = vadd.f32 %v5570, %v6412
        %v6545 = vadd.f32 %v5571, %v6417
        %v6546 = vadd.f32 %v5572, %v6420
        %v6547 = vadd.f32 %v5573, %v6425
        %v6548 = vadd.f32 %v5574, %v6428
        %v6549 = vadd.f32 %v5575, %v6433
        %v6550 = vadd.f32 %v5576, %v6436
        %v6551 = vadd.f32 %v5577, %v6441
        %v6552 = vadd.f32 %v5578, %v6444
        %v6553 = vadd.f32 %v5579, %v6449
        %v6554 = vadd.f32 %v5580, %v6452
        %v6555 = vadd.f32 %v5581, %v6457
        %v6556 = vadd.f32 %v5582, %v6460
        %v6557 = vadd.f32 %v5583, %v6465
        %v6558 = vadd.f32 %v5584, %v6468
        %v6559 = vadd.f32 %v5585, %v6473
        %v6560 = vadd.f32 %v5586, %v6476
        %v6561 = vadd.f32 %v5587, %v6481
        %v6562 = vadd.f32 %v5588, %v6484
        %v6563 = vadd.f32 %v5589, %v6489
        %v6564 = vadd.f32 %v5590, %v6492
        %v6565 = vadd.f32 %v5591, %v6497
        %v6566 = vadd.f32 %v5592, %v6500
        %v6567 = vadd.f32 %v6503, %v2643
        %v6568 = vadd.f32 %v6504, %v2647
        %v6569 = vadd.f32 %v6505, %v2653
        %v6570 = vadd.f32 %v6506, %v2657
        %v6571 = vadd.f32 %v6507, %v2663
        %v6572 = vadd.f32 %v6508, %v2667
        %v6573 = vadd.f32 %v6509, %v2673
        %v6574 = vadd.f32 %v6510, %v2677
        %v6575 = vadd.f32 %v6511, %v2683
        %v6576 = vadd.f32 %v6512, %v2687
        %v6577 = vadd.f32 %v6513, %v2693
        %v6578 = vadd.f32 %v6514, %v2697
        %v6579 = vadd.f32 %v6515, %v2703
        %v6580 = vadd.f32 %v6516, %v2707
        %v6581 = vadd.f32 %v6517, %v2713
        %v6582 = vadd.f32 %v6518, %v2717
        %v6583 = vadd.f32 %v6519, %v2723
        %v6584 = vadd.f32 %v6520, %v2727
        %v6585 = vadd.f32 %v6521, %v2733
        %v6586 = vadd.f32 %v6522, %v2737
        %v6587 = vadd.f32 %v6523, %v2743
        %v6588 = vadd.f32 %v6524, %v2747
        %v6589 = vadd.f32 %v6525, %v2753
        %v6590 = vadd.f32 %v6526, %v2757
        %v6591 = vadd.f32 %v6527, %v2763
        %v6592 = vadd.f32 %v6528, %v2767
        %v6593 = vadd.f32 %v6529, %v2773
        %v6594 = vadd.f32 %v6530, %v2777
        %v6595 = vadd.f32 %v6531, %v2783
        %v6596 = vadd.f32 %v6532, %v2787
        %v6597 = vadd.f32 %v6533, %v2793
        %v6598 = vadd.f32 %v6534, %v2797
        %v6599 = vadd.f32 %v6535, %v2803
        %v6600 = vadd.f32 %v6536, %v2807
        %v6601 = vadd.f32 %v6537, %v2813
        %v6602 = vadd.f32 %v6538, %v2817
        %v6603 = vadd.f32 %v6539, %v2823
        %v6604 = vadd.f32 %v6540, %v2827
        %v6605 = vadd.f32 %v6541, %v2833
        %v6606 = vadd.f32 %v6542, %v2837
        %v6607 = vadd.f32 %v6543, %v2843
        %v6608 = vadd.f32 %v6544, %v2847
        %v6609 = vadd.f32 %v6545, %v2853
        %v6610 = vadd.f32 %v6546, %v2857
        %v6611 = vadd.f32 %v6547, %v2863
        %v6612 = vadd.f32 %v6548, %v2867
        %v6613 = vadd.f32 %v6549, %v2873
        %v6614 = vadd.f32 %v6550, %v2877
        %v6615 = vadd.f32 %v6551, %v2883
        %v6616 = vadd.f32 %v6552, %v2887
        %v6617 = vadd.f32 %v6553, %v2893
        %v6618 = vadd.f32 %v6554, %v2897
        %v6619 = vadd.f32 %v6555, %v2903
        %v6620 = vadd.f32 %v6556, %v2907
        %v6621 = vadd.f32 %v6557, %v2913
        %v6622 = vadd.f32 %v6558, %v2917
        %v6623 = vadd.f32 %v6559, %v2923
        %v6624 = vadd.f32 %v6560, %v2927
        %v6625 = vadd.f32 %v6561, %v2933
        %v6626 = vadd.f32 %v6562, %v2937
        %v6627 = vadd.f32 %v6563, %v2943
        %v6628 = vadd.f32 %v6564, %v2947
        %v6629 = vadd.f32 %v6565, %v2953
        %v6630 = vadd.f32 %v6566, %v2957
        %v6631 = vld [vmem:[%s5 + $0x3] sm:$0x1]
        %v6632 = vlaneseq
        %v6633 = vshrl.u32 %v6632, 7
        %v6634 = vsub.s32 0, %v6633
        %v6635 = vrot.slane %v6631, %v6634
        %v6636 = vadd.f32 %v6567, %v6635
        %v6637 = vadd.f32 %v6568, %v6635
        %v6638 = vadd.f32 %v6569, %v6635
        %v6639 = vadd.f32 %v6570, %v6635
        %v6640 = vadd.f32 %v6571, %v6635
        %v6641 = vadd.f32 %v6572, %v6635
        %v6642 = vadd.f32 %v6573, %v6635
        %v6643 = vadd.f32 %v6574, %v6635
        %v6644 = vadd.f32 %v6575, %v6635
        %v6645 = vadd.f32 %v6576, %v6635
        %v6646 = vadd.f32 %v6577, %v6635
        %v6647 = vadd.f32 %v6578, %v6635
        %v6648 = vadd.f32 %v6579, %v6635
        %v6649 = vadd.f32 %v6580, %v6635
        %v6650 = vadd.f32 %v6581, %v6635
        %v6651 = vadd.f32 %v6582, %v6635
        %v6652 = vadd.f32 %v6583, %v6635
        %v6653 = vadd.f32 %v6584, %v6635
        %v6654 = vadd.f32 %v6585, %v6635
        %v6655 = vadd.f32 %v6586, %v6635
        %v6656 = vadd.f32 %v6587, %v6635
        %v6657 = vadd.f32 %v6588, %v6635
        %v6658 = vadd.f32 %v6589, %v6635
        %v6659 = vadd.f32 %v6590, %v6635
        %v6660 = vadd.f32 %v6591, %v6635
        %v6661 = vadd.f32 %v6592, %v6635
        %v6662 = vadd.f32 %v6593, %v6635
        %v6663 = vadd.f32 %v6594, %v6635
        %v6664 = vadd.f32 %v6595, %v6635
        %v6665 = vadd.f32 %v6596, %v6635
        %v6666 = vadd.f32 %v6597, %v6635
        %v6667 = vadd.f32 %v6598, %v6635
        %v6668 = vadd.f32 %v6599, %v6635
        %v6669 = vadd.f32 %v6600, %v6635
        %v6670 = vadd.f32 %v6601, %v6635
        %v6671 = vadd.f32 %v6602, %v6635
        %v6672 = vadd.f32 %v6603, %v6635
        %v6673 = vadd.f32 %v6604, %v6635
        %v6674 = vadd.f32 %v6605, %v6635
        %v6675 = vadd.f32 %v6606, %v6635
        %v6676 = vadd.f32 %v6607, %v6635
        %v6677 = vadd.f32 %v6608, %v6635
        %v6678 = vadd.f32 %v6609, %v6635
        %v6679 = vadd.f32 %v6610, %v6635
        %v6680 = vadd.f32 %v6611, %v6635
        %v6681 = vadd.f32 %v6612, %v6635
        %v6682 = vadd.f32 %v6613, %v6635
        %v6683 = vadd.f32 %v6614, %v6635
        %v6684 = vadd.f32 %v6615, %v6635
        %v6685 = vadd.f32 %v6616, %v6635
        %v6686 = vadd.f32 %v6617, %v6635
        %v6687 = vadd.f32 %v6618, %v6635
        %v6688 = vadd.f32 %v6619, %v6635
        %v6689 = vadd.f32 %v6620, %v6635
        %v6690 = vadd.f32 %v6621, %v6635
        %v6691 = vadd.f32 %v6622, %v6635
        %v6692 = vadd.f32 %v6623, %v6635
        %v6693 = vadd.f32 %v6624, %v6635
        %v6694 = vadd.f32 %v6625, %v6635
        %v6695 = vadd.f32 %v6626, %v6635
        %v6696 = vadd.f32 %v6627, %v6635
        %v6697 = vadd.f32 %v6628, %v6635
        %v6698 = vadd.f32 %v6629, %v6635
        %v6699 = vadd.f32 %v6630, %v6635
        %v6700 = vmax.f32 %v6636, 0.0
        %v6701 = vmax.f32 %v6637, 0.0
        %v6702 = vmax.f32 %v6638, 0.0
        %v6703 = vmax.f32 %v6639, 0.0
        %v6704 = vmax.f32 %v6640, 0.0
        %v6705 = vmax.f32 %v6641, 0.0
        %v6706 = vmax.f32 %v6642, 0.0
        %v6707 = vmax.f32 %v6643, 0.0
        %v6708 = vmax.f32 %v6644, 0.0
        %v6709 = vmax.f32 %v6645, 0.0
        %v6710 = vmax.f32 %v6646, 0.0
        %v6711 = vmax.f32 %v6647, 0.0
        %v6712 = vmax.f32 %v6648, 0.0
        %v6713 = vmax.f32 %v6649, 0.0
        %v6714 = vmax.f32 %v6650, 0.0
        %v6715 = vmax.f32 %v6651, 0.0
        %v6716 = vmax.f32 %v6652, 0.0
        %v6717 = vmax.f32 %v6653, 0.0
        %v6718 = vmax.f32 %v6654, 0.0
        %v6719 = vmax.f32 %v6655, 0.0
        %v6720 = vmax.f32 %v6656, 0.0
        %v6721 = vmax.f32 %v6657, 0.0
        %v6722 = vmax.f32 %v6658, 0.0
        %v6723 = vmax.f32 %v6659, 0.0
        %v6724 = vmax.f32 %v6660, 0.0
        %v6725 = vmax.f32 %v6661, 0.0
        %v6726 = vmax.f32 %v6662, 0.0
        %v6727 = vmax.f32 %v6663, 0.0
        %v6728 = vmax.f32 %v6664, 0.0
        %v6729 = vmax.f32 %v6665, 0.0
        %v6730 = vmax.f32 %v6666, 0.0
        %v6731 = vmax.f32 %v6667, 0.0
        %v6732 = vmax.f32 %v6668, 0.0
        %v6733 = vmax.f32 %v6669, 0.0
        %v6734 = vmax.f32 %v6670, 0.0
        %v6735 = vmax.f32 %v6671, 0.0
        %v6736 = vmax.f32 %v6672, 0.0
        %v6737 = vmax.f32 %v6673, 0.0
        %v6738 = vmax.f32 %v6674, 0.0
        %v6739 = vmax.f32 %v6675, 0.0
        %v6740 = vmax.f32 %v6676, 0.0
        %v6741 = vmax.f32 %v6677, 0.0
        %v6742 = vmax.f32 %v6678, 0.0
        %v6743 = vmax.f32 %v6679, 0.0
        %v6744 = vmax.f32 %v6680, 0.0
        %v6745 = vmax.f32 %v6681, 0.0
        %v6746 = vmax.f32 %v6682, 0.0
        %v6747 = vmax.f32 %v6683, 0.0
        %v6748 = vmax.f32 %v6684, 0.0
        %v6749 = vmax.f32 %v6685, 0.0
        %v6750 = vmax.f32 %v6686, 0.0
        %v6751 = vmax.f32 %v6687, 0.0
        %v6752 = vmax.f32 %v6688, 0.0
        %v6753 = vmax.f32 %v6689, 0.0
        %v6754 = vmax.f32 %v6690, 0.0
        %v6755 = vmax.f32 %v6691, 0.0
        %v6756 = vmax.f32 %v6692, 0.0
        %v6757 = vmax.f32 %v6693, 0.0
        %v6758 = vmax.f32 %v6694, 0.0
        %v6759 = vmax.f32 %v6695, 0.0
        %v6760 = vmax.f32 %v6696, 0.0
        %v6761 = vmax.f32 %v6697, 0.0
        %v6762 = vmax.f32 %v6698, 0.0
        %v6763 = vmax.f32 %v6699, 0.0
        %v6764 = vpack.c.bf16 %v6701, %v6700
        %v6765 = vpack.c.bf16 %v6703, %v6702
        %v6766 = vpack.c.bf16 %v6705, %v6704
        %v6767 = vpack.c.bf16 %v6707, %v6706
        %v6768 = vpack.c.bf16 %v6709, %v6708
        %v6769 = vpack.c.bf16 %v6711, %v6710
        %v6770 = vpack.c.bf16 %v6713, %v6712
        %v6771 = vpack.c.bf16 %v6715, %v6714
        %v6772 = vpack.c.bf16 %v6717, %v6716
        %v6773 = vpack.c.bf16 %v6719, %v6718
        %v6774 = vpack.c.bf16 %v6721, %v6720
        %v6775 = vpack.c.bf16 %v6723, %v6722
        %v6776 = vpack.c.bf16 %v6725, %v6724
        %v6777 = vpack.c.bf16 %v6727, %v6726
        %v6778 = vpack.c.bf16 %v6729, %v6728
        %v6779 = vpack.c.bf16 %v6731, %v6730
        %v6780 = vpack.c.bf16 %v6733, %v6732
        %v6781 = vpack.c.bf16 %v6735, %v6734
        %v6782 = vpack.c.bf16 %v6737, %v6736
        %v6783 = vpack.c.bf16 %v6739, %v6738
        %v6784 = vpack.c.bf16 %v6741, %v6740
        %v6785 = vpack.c.bf16 %v6743, %v6742
        %v6786 = vpack.c.bf16 %v6745, %v6744
        %v6787 = vpack.c.bf16 %v6747, %v6746
        %v6788 = vpack.c.bf16 %v6749, %v6748
        %v6789 = vpack.c.bf16 %v6751, %v6750
        %v6790 = vpack.c.bf16 %v6753, %v6752
        %v6791 = vpack.c.bf16 %v6755, %v6754
        %v6792 = vpack.c.bf16 %v6757, %v6756
        %v6793 = vpack.c.bf16 %v6759, %v6758
        %v6794 = vpack.c.bf16 %v6761, %v6760
        %v6795 = vpack.c.bf16 %v6763, %v6762
        %s6796 = scalar_lea.vmem %s6, 192
        %v6797 = vld [vmem:[%s6796] sm:$0xf]
        %v6798 = vld [vmem:[%s6796 + $0x4] sm:$0xf]
        %v6799 = vld [vmem:[%s6796 + $0x8] sm:$0xf]
        %v6800 = vld [vmem:[%s6796 + $0xc] sm:$0xf]
        %v6801 = vld [vmem:[%s6796 + $0x10] sm:$0xf]
        %v6802 = vld [vmem:[%s6796 + $0x14] sm:$0xf]
        %v6803 = vld [vmem:[%s6796 + $0x18] sm:$0xf]
        %v6804 = vld [vmem:[%s6796 + $0x1c] sm:$0xf]
        %v6805 = vld [vmem:[%s6796 + $0x20] sm:$0xf]
        %v6806 = vld [vmem:[%s6796 + $0x24] sm:$0xf]
        %v6807 = vld [vmem:[%s6796 + $0x28] sm:$0xf]
        %v6808 = vld [vmem:[%s6796 + $0x2c] sm:$0xf]
        %v6809 = vld [vmem:[%s6796 + $0x30] sm:$0xf]
        %v6810 = vld [vmem:[%s6796 + $0x34] sm:$0xf]
        %v6811 = vld [vmem:[%s6796 + $0x38] sm:$0xf]
        %v6812 = vld [vmem:[%s6796 + $0x3c] sm:$0xf]
        %v6813 = vld [vmem:[%s7 + $0x3] sm:$0x1]
        %v6814 = vlaneseq
        %v6815 = vshrl.u32 %v6814, 7
        %v6816 = vsub.s32 0, %v6815
        %v6817 = vrot.slane %v6813, %v6816
        %v6834 = vunpack.c.l.b16 %v6797
        %v6835 = vunpack.c.l.b16 %v6798
        %v6836 = vunpack.c.l.b16 %v6799
        %v6837 = vunpack.c.l.b16 %v6800
        %v6838 = vunpack.c.l.b16 %v6801
        %v6839 = vunpack.c.l.b16 %v6802
        %v6840 = vunpack.c.l.b16 %v6803
        %v6841 = vunpack.c.l.b16 %v6804
        %v6842 = vunpack.c.l.b16 %v6805
        %v6843 = vunpack.c.l.b16 %v6806
        %v6844 = vunpack.c.l.b16 %v6807
        %v6845 = vunpack.c.l.b16 %v6808
        %v6846 = vunpack.c.l.b16 %v6809
        %v6847 = vunpack.c.l.b16 %v6810
        %v6848 = vunpack.c.l.b16 %v6811
        %v6849 = vunpack.c.l.b16 %v6812
        %v6850 = vpack.c.b16 %v6835, %v6834
        %v6851 = vpack.c.b16 %v6837, %v6836
        %v6852 = vpack.c.b16 %v6839, %v6838
        %v6853 = vpack.c.b16 %v6841, %v6840
        %v6854 = vpack.c.b16 %v6843, %v6842
        %v6855 = vpack.c.b16 %v6845, %v6844
        %v6856 = vpack.c.b16 %v6847, %v6846
        %v6857 = vpack.c.b16 %v6849, %v6848
        %6866 = vmatprep.subr.bf16.mxu0 0
        %6867 = vmatpush1.bf16.msra.mxu0 %v6850
        %6868 = vmatprep.subr.bf16.mxu0 0
        %6869 = vmatpush1.bf16.msra.mxu0 %v6851
        %6870 = vmatprep.subr.bf16.mxu0 0
        %6871 = vmatpush1.bf16.msra.mxu0 %v6852
        %6872 = vmatprep.subr.bf16.mxu0 0
        %6873 = vmatpush1.bf16.msra.mxu0 %v6853
        %6874 = vmatprep.subr.bf16.mxu0 0
        %6875 = vmatpush1.bf16.msra.mxu0 %v6854
        %6876 = vmatprep.subr.bf16.mxu0 0
        %6877 = vmatpush1.bf16.msra.mxu0 %v6855
        %6878 = vmatprep.subr.bf16.mxu0 0
        %6879 = vmatpush1.bf16.msra.mxu0 %v6856
        %6880 = vmatprep.subr.bf16.mxu0 0
        %6881 = vmatpush1.bf16.msra.mxu0 %v6857
        %6882 = vmatprep.subr.bf16.mxu0 0
        %6883 = vmatpush1.bf16.msra.mxu0 0
        %6884 = vmatprep.subr.bf16.mxu0 0
        %6885 = vmatpush1.bf16.msra.mxu0 0
        %6886 = vmatprep.subr.bf16.mxu0 0
        %6887 = vmatpush1.bf16.msra.mxu0 0
        %6888 = vmatprep.subr.bf16.mxu0 0
        %6889 = vmatpush1.bf16.msra.mxu0 0
        %6890 = vmatprep.subr.bf16.mxu0 0
        %6891 = vmatpush1.bf16.msra.mxu0 0
        %6892 = vmatprep.subr.bf16.mxu0 0
        %6893 = vmatpush1.bf16.msra.mxu0 0
        %6894 = vmatprep.subr.bf16.mxu0 0
        %6895 = vmatpush1.bf16.msra.mxu0 0
        %6896 = vmatprep.subr.bf16.mxu0 0
        %6897 = vmatpush1.bf16.msra.mxu0 0
        %6898 = vmatprep.mubr.bf16.mxu0 0
        %6899 = vmatmul.mubr.bf16.gmra.mrb[0].mxu0 %v6764
        %v6900 = vpop.f32.mrb[0].mxu0
        %v6901 = vadd.f32 %v6817, %v6900
        %v6902 = vpop.f32.mrb[0].mxu0
        %v6903 = vpop.f32.mrb[0].mxu0
        %v6904 = vadd.f32 %v6817, %v6903
        %v6905 = vpop.f32.mrb[0].mxu0
        %6906 = vmatprep.mubr.bf16.mxu0 0
        %6907 = vmatmul.mubr.bf16.gmra.mrb[0].mxu0 %v6765
        %v6908 = vpop.f32.mrb[0].mxu0
        %v6909 = vadd.f32 %v6817, %v6908
        %v6910 = vpop.f32.mrb[0].mxu0
        %v6911 = vpop.f32.mrb[0].mxu0
        %v6912 = vadd.f32 %v6817, %v6911
        %v6913 = vpop.f32.mrb[0].mxu0
        %6914 = vmatprep.mubr.bf16.mxu0 0
        %6915 = vmatmul.mubr.bf16.gmra.mrb[0].mxu0 %v6766
        %v6916 = vpop.f32.mrb[0].mxu0
        %v6917 = vadd.f32 %v6817, %v6916
        %v6918 = vpop.f32.mrb[0].mxu0
        %v6919 = vpop.f32.mrb[0].mxu0
        %v6920 = vadd.f32 %v6817, %v6919
        %v6921 = vpop.f32.mrb[0].mxu0
        %6922 = vmatprep.mubr.bf16.mxu0 0
        %6923 = vmatmul.mubr.bf16.gmra.mrb[0].mxu0 %v6767
        %v6924 = vpop.f32.mrb[0].mxu0
        %v6925 = vadd.f32 %v6817, %v6924
        %v6926 = vpop.f32.mrb[0].mxu0
        %v6927 = vpop.f32.mrb[0].mxu0
        %v6928 = vadd.f32 %v6817, %v6927
        %v6929 = vpop.f32.mrb[0].mxu0
        %6930 = vmatprep.mubr.bf16.mxu0 0
        %6931 = vmatmul.mubr.bf16.gmra.mrb[0].mxu0 %v6768
        %v6932 = vpop.f32.mrb[0].mxu0
        %v6933 = vadd.f32 %v6817, %v6932
        %v6934 = vpop.f32.mrb[0].mxu0
        %v6935 = vpop.f32.mrb[0].mxu0
        %v6936 = vadd.f32 %v6817, %v6935
        %v6937 = vpop.f32.mrb[0].mxu0
        %6938 = vmatprep.mubr.bf16.mxu0 0
        %6939 = vmatmul.mubr.bf16.gmra.mrb[0].mxu0 %v6769
        %v6940 = vpop.f32.mrb[0].mxu0
        %v6941 = vadd.f32 %v6817, %v6940
        %v6942 = vpop.f32.mrb[0].mxu0
        %v6943 = vpop.f32.mrb[0].mxu0
        %v6944 = vadd.f32 %v6817, %v6943
        %v6945 = vpop.f32.mrb[0].mxu0
        %6946 = vmatprep.mubr.bf16.mxu0 0
        %6947 = vmatmul.mubr.bf16.gmra.mrb[0].mxu0 %v6770
        %v6948 = vpop.f32.mrb[0].mxu0
        %v6949 = vadd.f32 %v6817, %v6948
        %v6950 = vpop.f32.mrb[0].mxu0
        %v6951 = vpop.f32.mrb[0].mxu0
        %v6952 = vadd.f32 %v6817, %v6951
        %v6953 = vpop.f32.mrb[0].mxu0
        %6954 = vmatprep.mubr.bf16.mxu0 0
        %6955 = vmatmul.mubr.bf16.gmra.mrb[0].mxu0 %v6771
        %v6956 = vpop.f32.mrb[0].mxu0
        %v6957 = vadd.f32 %v6817, %v6956
        %v6958 = vpop.f32.mrb[0].mxu0
        %v6959 = vpop.f32.mrb[0].mxu0
        %v6960 = vadd.f32 %v6817, %v6959
        %v6961 = vpop.f32.mrb[0].mxu0
        %6962 = vmatprep.mubr.bf16.mxu0 0
        %6963 = vmatmul.mubr.bf16.gmra.mrb[0].mxu0 %v6772
        %v6964 = vpop.f32.mrb[0].mxu0
        %v6965 = vadd.f32 %v6817, %v6964
        %v6966 = vpop.f32.mrb[0].mxu0
        %v6967 = vpop.f32.mrb[0].mxu0
        %v6968 = vadd.f32 %v6817, %v6967
        %v6969 = vpop.f32.mrb[0].mxu0
        %6970 = vmatprep.mubr.bf16.mxu0 0
        %6971 = vmatmul.mubr.bf16.gmra.mrb[0].mxu0 %v6773
        %v6972 = vpop.f32.mrb[0].mxu0
        %v6973 = vadd.f32 %v6817, %v6972
        %v6974 = vpop.f32.mrb[0].mxu0
        %v6975 = vpop.f32.mrb[0].mxu0
        %v6976 = vadd.f32 %v6817, %v6975
        %v6977 = vpop.f32.mrb[0].mxu0
        %6978 = vmatprep.mubr.bf16.mxu0 0
        %6979 = vmatmul.mubr.bf16.gmra.mrb[0].mxu0 %v6774
        %v6980 = vpop.f32.mrb[0].mxu0
        %v6981 = vadd.f32 %v6817, %v6980
        %v6982 = vpop.f32.mrb[0].mxu0
        %v6983 = vpop.f32.mrb[0].mxu0
        %v6984 = vadd.f32 %v6817, %v6983
        %v6985 = vpop.f32.mrb[0].mxu0
        %6986 = vmatprep.mubr.bf16.mxu0 0
        %6987 = vmatmul.mubr.bf16.gmra.mrb[0].mxu0 %v6775
        %v6988 = vpop.f32.mrb[0].mxu0
        %v6989 = vadd.f32 %v6817, %v6988
        %v6990 = vpop.f32.mrb[0].mxu0
        %v6991 = vpop.f32.mrb[0].mxu0
        %v6992 = vadd.f32 %v6817, %v6991
        %v6993 = vpop.f32.mrb[0].mxu0
        %6994 = vmatprep.mubr.bf16.mxu0 0
        %6995 = vmatmul.mubr.bf16.gmra.mrb[0].mxu0 %v6776
        %v6996 = vpop.f32.mrb[0].mxu0
        %v6997 = vadd.f32 %v6817, %v6996
        %v6998 = vpop.f32.mrb[0].mxu0
        %v6999 = vpop.f32.mrb[0].mxu0
        %v7000 = vadd.f32 %v6817, %v6999
        %v7001 = vpop.f32.mrb[0].mxu0
        %7002 = vmatprep.mubr.bf16.mxu0 0
        %7003 = vmatmul.mubr.bf16.gmra.mrb[0].mxu0 %v6777
        %v7004 = vpop.f32.mrb[0].mxu0
        %v7005 = vadd.f32 %v6817, %v7004
        %v7006 = vpop.f32.mrb[0].mxu0
        %v7007 = vpop.f32.mrb[0].mxu0
        %v7008 = vadd.f32 %v6817, %v7007
        %v7009 = vpop.f32.mrb[0].mxu0
        %7010 = vmatprep.mubr.bf16.mxu0 0
        %7011 = vmatmul.mubr.bf16.gmra.mrb[0].mxu0 %v6778
        %v7012 = vpop.f32.mrb[0].mxu0
        %v7013 = vadd.f32 %v6817, %v7012
        %v7014 = vpop.f32.mrb[0].mxu0
        %v7015 = vpop.f32.mrb[0].mxu0
        %v7016 = vadd.f32 %v6817, %v7015
        %v7017 = vpop.f32.mrb[0].mxu0
        %7018 = vmatprep.mubr.bf16.mxu0 0
        %7019 = vmatmul.mubr.bf16.gmra.mrb[0].mxu0 %v6779
        %v7020 = vpop.f32.mrb[0].mxu0
        %v7021 = vadd.f32 %v6817, %v7020
        %v7022 = vpop.f32.mrb[0].mxu0
        %v7023 = vpop.f32.mrb[0].mxu0
        %v7024 = vadd.f32 %v6817, %v7023
        %v7025 = vpop.f32.mrb[0].mxu0
        %7026 = vmatprep.mubr.bf16.mxu0 0
        %7027 = vmatmul.mubr.bf16.gmra.mrb[0].mxu0 %v6780
        %v7028 = vpop.f32.mrb[0].mxu0
        %v7029 = vadd.f32 %v6817, %v7028
        %v7030 = vpop.f32.mrb[0].mxu0
        %v7031 = vpop.f32.mrb[0].mxu0
        %v7032 = vadd.f32 %v6817, %v7031
        %v7033 = vpop.f32.mrb[0].mxu0
        %7034 = vmatprep.mubr.bf16.mxu0 0
        %7035 = vmatmul.mubr.bf16.gmra.mrb[0].mxu0 %v6781
        %v7036 = vpop.f32.mrb[0].mxu0
        %v7037 = vadd.f32 %v6817, %v7036
        %v7038 = vpop.f32.mrb[0].mxu0
        %v7039 = vpop.f32.mrb[0].mxu0
        %v7040 = vadd.f32 %v6817, %v7039
        %v7041 = vpop.f32.mrb[0].mxu0
        %7042 = vmatprep.mubr.bf16.mxu0 0
        %7043 = vmatmul.mubr.bf16.gmra.mrb[0].mxu0 %v6782
        %v7044 = vpop.f32.mrb[0].mxu0
        %v7045 = vadd.f32 %v6817, %v7044
        %v7046 = vpop.f32.mrb[0].mxu0
        %v7047 = vpop.f32.mrb[0].mxu0
        %v7048 = vadd.f32 %v6817, %v7047
        %v7049 = vpop.f32.mrb[0].mxu0
        %7050 = vmatprep.mubr.bf16.mxu0 0
        %7051 = vmatmul.mubr.bf16.gmra.mrb[0].mxu0 %v6783
        %v7052 = vpop.f32.mrb[0].mxu0
        %v7053 = vadd.f32 %v6817, %v7052
        %v7054 = vpop.f32.mrb[0].mxu0
        %v7055 = vpop.f32.mrb[0].mxu0
        %v7056 = vadd.f32 %v6817, %v7055
        %v7057 = vpop.f32.mrb[0].mxu0
        %7058 = vmatprep.mubr.bf16.mxu0 0
        %7059 = vmatmul.mubr.bf16.gmra.mrb[0].mxu0 %v6784
        %v7060 = vpop.f32.mrb[0].mxu0
        %v7061 = vadd.f32 %v6817, %v7060
        %v7062 = vpop.f32.mrb[0].mxu0
        %v7063 = vpop.f32.mrb[0].mxu0
        %v7064 = vadd.f32 %v6817, %v7063
        %v7065 = vpop.f32.mrb[0].mxu0
        %7066 = vmatprep.mubr.bf16.mxu0 0
        %7067 = vmatmul.mubr.bf16.gmra.mrb[0].mxu0 %v6785
        %v7068 = vpop.f32.mrb[0].mxu0
        %v7069 = vadd.f32 %v6817, %v7068
        %v7070 = vpop.f32.mrb[0].mxu0
        %v7071 = vpop.f32.mrb[0].mxu0
        %v7072 = vadd.f32 %v6817, %v7071
        %v7073 = vpop.f32.mrb[0].mxu0
        %7074 = vmatprep.mubr.bf16.mxu0 0
        %7075 = vmatmul.mubr.bf16.gmra.mrb[0].mxu0 %v6786
        %v7076 = vpop.f32.mrb[0].mxu0
        %v7077 = vadd.f32 %v6817, %v7076
        %v7078 = vpop.f32.mrb[0].mxu0
        %v7079 = vpop.f32.mrb[0].mxu0
        %v7080 = vadd.f32 %v6817, %v7079
        %v7081 = vpop.f32.mrb[0].mxu0
        %7082 = vmatprep.mubr.bf16.mxu0 0
        %7083 = vmatmul.mubr.bf16.gmra.mrb[0].mxu0 %v6787
        %v7084 = vpop.f32.mrb[0].mxu0
        %v7085 = vadd.f32 %v6817, %v7084
        %v7086 = vpop.f32.mrb[0].mxu0
        %v7087 = vpop.f32.mrb[0].mxu0
        %v7088 = vadd.f32 %v6817, %v7087
        %v7089 = vpop.f32.mrb[0].mxu0
        %7090 = vmatprep.mubr.bf16.mxu0 0
        %7091 = vmatmul.mubr.bf16.gmra.mrb[0].mxu0 %v6788
        %v7092 = vpop.f32.mrb[0].mxu0
        %v7093 = vadd.f32 %v6817, %v7092
        %v7094 = vpop.f32.mrb[0].mxu0
        %v7095 = vpop.f32.mrb[0].mxu0
        %v7096 = vadd.f32 %v6817, %v7095
        %v7097 = vpop.f32.mrb[0].mxu0
        %7098 = vmatprep.mubr.bf16.mxu0 0
        %7099 = vmatmul.mubr.bf16.gmra.mrb[0].mxu0 %v6789
        %v7100 = vpop.f32.mrb[0].mxu0
        %v7101 = vadd.f32 %v6817, %v7100
        %v7102 = vpop.f32.mrb[0].mxu0
        %v7103 = vpop.f32.mrb[0].mxu0
        %v7104 = vadd.f32 %v6817, %v7103
        %v7105 = vpop.f32.mrb[0].mxu0
        %7106 = vmatprep.mubr.bf16.mxu0 0
        %7107 = vmatmul.mubr.bf16.gmra.mrb[0].mxu0 %v6790
        %v7108 = vpop.f32.mrb[0].mxu0
        %v7109 = vadd.f32 %v6817, %v7108
        %v7110 = vpop.f32.mrb[0].mxu0
        %v7111 = vpop.f32.mrb[0].mxu0
        %v7112 = vadd.f32 %v6817, %v7111
        %v7113 = vpop.f32.mrb[0].mxu0
        %7114 = vmatprep.mubr.bf16.mxu0 0
        %7115 = vmatmul.mubr.bf16.gmra.mrb[0].mxu0 %v6791
        %v7116 = vpop.f32.mrb[0].mxu0
        %v7117 = vadd.f32 %v6817, %v7116
        %v7118 = vpop.f32.mrb[0].mxu0
        %v7119 = vpop.f32.mrb[0].mxu0
        %v7120 = vadd.f32 %v6817, %v7119
        %v7121 = vpop.f32.mrb[0].mxu0
        %7122 = vmatprep.mubr.bf16.mxu0 0
        %7123 = vmatmul.mubr.bf16.gmra.mrb[0].mxu0 %v6792
        %v7124 = vpop.f32.mrb[0].mxu0
        %v7125 = vadd.f32 %v6817, %v7124
        %v7126 = vpop.f32.mrb[0].mxu0
        %v7127 = vpop.f32.mrb[0].mxu0
        %v7128 = vadd.f32 %v6817, %v7127
        %v7129 = vpop.f32.mrb[0].mxu0
        %7130 = vmatprep.mubr.bf16.mxu0 0
        %7131 = vmatmul.mubr.bf16.gmra.mrb[0].mxu0 %v6793
        %v7132 = vpop.f32.mrb[0].mxu0
        %v7133 = vadd.f32 %v6817, %v7132
        %v7134 = vpop.f32.mrb[0].mxu0
        %v7135 = vpop.f32.mrb[0].mxu0
        %v7136 = vadd.f32 %v6817, %v7135
        %v7137 = vpop.f32.mrb[0].mxu0
        %7138 = vmatprep.mubr.bf16.mxu0 0
        %7139 = vmatmul.mubr.bf16.gmra.mrb[0].mxu0 %v6794
        %v7140 = vpop.f32.mrb[0].mxu0
        %v7141 = vadd.f32 %v6817, %v7140
        %v7142 = vpop.f32.mrb[0].mxu0
        %v7143 = vpop.f32.mrb[0].mxu0
        %v7144 = vadd.f32 %v6817, %v7143
        %v7145 = vpop.f32.mrb[0].mxu0
        %7146 = vmatprep.mubr.bf16.mxu0 0
        %7147 = vmatmul.mubr.bf16.gmra.mrb[0].mxu0 %v6795
        %v7148 = vpop.f32.mrb[0].mxu0
        %v7149 = vadd.f32 %v6817, %v7148
        %v7150 = vpop.f32.mrb[0].mxu0
        %v7151 = vpop.f32.mrb[0].mxu0
        %v7152 = vadd.f32 %v6817, %v7151
        %v7153 = vpop.f32.mrb[0].mxu0
        %7154 = vdwg.mxu0
        %v7155 = vmax.f32 %v6901, 0.0
        %v7156 = vmax.f32 %v6904, 0.0
        %v7157 = vmax.f32 %v6909, 0.0
        %v7158 = vmax.f32 %v6912, 0.0
        %v7159 = vmax.f32 %v6917, 0.0
        %v7160 = vmax.f32 %v6920, 0.0
        %v7161 = vmax.f32 %v6925, 0.0
        %v7162 = vmax.f32 %v6928, 0.0
        %v7163 = vmax.f32 %v6933, 0.0
        %v7164 = vmax.f32 %v6936, 0.0
        %v7165 = vmax.f32 %v6941, 0.0
        %v7166 = vmax.f32 %v6944, 0.0
        %v7167 = vmax.f32 %v6949, 0.0
        %v7168 = vmax.f32 %v6952, 0.0
        %v7169 = vmax.f32 %v6957, 0.0
        %v7170 = vmax.f32 %v6960, 0.0
        %v7171 = vmax.f32 %v6965, 0.0
        %v7172 = vmax.f32 %v6968, 0.0
        %v7173 = vmax.f32 %v6973, 0.0
        %v7174 = vmax.f32 %v6976, 0.0
        %v7175 = vmax.f32 %v6981, 0.0
        %v7176 = vmax.f32 %v6984, 0.0
        %v7177 = vmax.f32 %v6989, 0.0
        %v7178 = vmax.f32 %v6992, 0.0
        %v7179 = vmax.f32 %v6997, 0.0
        %v7180 = vmax.f32 %v7000, 0.0
        %v7181 = vmax.f32 %v7005, 0.0
        %v7182 = vmax.f32 %v7008, 0.0
        %v7183 = vmax.f32 %v7013, 0.0
        %v7184 = vmax.f32 %v7016, 0.0
        %v7185 = vmax.f32 %v7021, 0.0
        %v7186 = vmax.f32 %v7024, 0.0
        %v7187 = vmax.f32 %v7029, 0.0
        %v7188 = vmax.f32 %v7032, 0.0
        %v7189 = vmax.f32 %v7037, 0.0
        %v7190 = vmax.f32 %v7040, 0.0
        %v7191 = vmax.f32 %v7045, 0.0
        %v7192 = vmax.f32 %v7048, 0.0
        %v7193 = vmax.f32 %v7053, 0.0
        %v7194 = vmax.f32 %v7056, 0.0
        %v7195 = vmax.f32 %v7061, 0.0
        %v7196 = vmax.f32 %v7064, 0.0
        %v7197 = vmax.f32 %v7069, 0.0
        %v7198 = vmax.f32 %v7072, 0.0
        %v7199 = vmax.f32 %v7077, 0.0
        %v7200 = vmax.f32 %v7080, 0.0
        %v7201 = vmax.f32 %v7085, 0.0
        %v7202 = vmax.f32 %v7088, 0.0
        %v7203 = vmax.f32 %v7093, 0.0
        %v7204 = vmax.f32 %v7096, 0.0
        %v7205 = vmax.f32 %v7101, 0.0
        %v7206 = vmax.f32 %v7104, 0.0
        %v7207 = vmax.f32 %v7109, 0.0
        %v7208 = vmax.f32 %v7112, 0.0
        %v7209 = vmax.f32 %v7117, 0.0
        %v7210 = vmax.f32 %v7120, 0.0
        %v7211 = vmax.f32 %v7125, 0.0
        %v7212 = vmax.f32 %v7128, 0.0
        %v7213 = vmax.f32 %v7133, 0.0
        %v7214 = vmax.f32 %v7136, 0.0
        %v7215 = vmax.f32 %v7141, 0.0
        %v7216 = vmax.f32 %v7144, 0.0
        %v7217 = vmax.f32 %v7149, 0.0
        %v7218 = vmax.f32 %v7152, 0.0
        %v7219 = vpack.c.bf16 %v7156, %v7155
        %v7220 = vpack.c.bf16 %v7158, %v7157
        %v7221 = vpack.c.bf16 %v7160, %v7159
        %v7222 = vpack.c.bf16 %v7162, %v7161
        %v7223 = vpack.c.bf16 %v7164, %v7163
        %v7224 = vpack.c.bf16 %v7166, %v7165
        %v7225 = vpack.c.bf16 %v7168, %v7167
        %v7226 = vpack.c.bf16 %v7170, %v7169
        %v7227 = vpack.c.bf16 %v7172, %v7171
        %v7228 = vpack.c.bf16 %v7174, %v7173
        %v7229 = vpack.c.bf16 %v7176, %v7175
        %v7230 = vpack.c.bf16 %v7178, %v7177
        %v7231 = vpack.c.bf16 %v7180, %v7179
        %v7232 = vpack.c.bf16 %v7182, %v7181
        %v7233 = vpack.c.bf16 %v7184, %v7183
        %v7234 = vpack.c.bf16 %v7186, %v7185
        %v7235 = vpack.c.bf16 %v7188, %v7187
        %v7236 = vpack.c.bf16 %v7190, %v7189
        %v7237 = vpack.c.bf16 %v7192, %v7191
        %v7238 = vpack.c.bf16 %v7194, %v7193
        %v7239 = vpack.c.bf16 %v7196, %v7195
        %v7240 = vpack.c.bf16 %v7198, %v7197
        %v7241 = vpack.c.bf16 %v7200, %v7199
        %v7242 = vpack.c.bf16 %v7202, %v7201
        %v7243 = vpack.c.bf16 %v7204, %v7203
        %v7244 = vpack.c.bf16 %v7206, %v7205
        %v7245 = vpack.c.bf16 %v7208, %v7207
        %v7246 = vpack.c.bf16 %v7210, %v7209
        %v7247 = vpack.c.bf16 %v7212, %v7211
        %v7248 = vpack.c.bf16 %v7214, %v7213
        %v7249 = vpack.c.bf16 %v7216, %v7215
        %v7250 = vpack.c.bf16 %v7218, %v7217
        %s7251 = scalar_lea.vmem %s8, 192
        %v7252 = vld [vmem:[%s7251] sm:$0xf]
        %v7253 = vld [vmem:[%s7251 + $0x4] sm:$0xf]
        %v7254 = vld [vmem:[%s7251 + $0x8] sm:$0xf]
        %v7255 = vld [vmem:[%s7251 + $0xc] sm:$0xf]
        %v7256 = vld [vmem:[%s7251 + $0x10] sm:$0xf]
        %v7257 = vld [vmem:[%s7251 + $0x14] sm:$0xf]
        %v7258 = vld [vmem:[%s7251 + $0x18] sm:$0xf]
        %v7259 = vld [vmem:[%s7251 + $0x1c] sm:$0xf]
        %v7260 = vld [vmem:[%s7251 + $0x20] sm:$0xf]
        %v7261 = vld [vmem:[%s7251 + $0x24] sm:$0xf]
        %v7262 = vld [vmem:[%s7251 + $0x28] sm:$0xf]
        %v7263 = vld [vmem:[%s7251 + $0x2c] sm:$0xf]
        %v7264 = vld [vmem:[%s7251 + $0x30] sm:$0xf]
        %v7265 = vld [vmem:[%s7251 + $0x34] sm:$0xf]
        %v7266 = vld [vmem:[%s7251 + $0x38] sm:$0xf]
        %v7267 = vld [vmem:[%s7251 + $0x3c] sm:$0xf]
        %v7268 = vld [vmem:[%s9 + $0x3] sm:$0x1]
        %v7269 = vlaneseq
        %v7270 = vshrl.u32 %v7269, 7
        %v7271 = vsub.s32 0, %v7270
        %v7272 = vrot.slane %v7268, %v7271
        %v7289 = vunpack.c.l.b16 %v7252
        %v7290 = vunpack.c.l.b16 %v7253
        %v7291 = vunpack.c.l.b16 %v7254
        %v7292 = vunpack.c.l.b16 %v7255
        %v7293 = vunpack.c.l.b16 %v7256
        %v7294 = vunpack.c.l.b16 %v7257
        %v7295 = vunpack.c.l.b16 %v7258
        %v7296 = vunpack.c.l.b16 %v7259
        %v7297 = vunpack.c.l.b16 %v7260
        %v7298 = vunpack.c.l.b16 %v7261
        %v7299 = vunpack.c.l.b16 %v7262
        %v7300 = vunpack.c.l.b16 %v7263
        %v7301 = vunpack.c.l.b16 %v7264
        %v7302 = vunpack.c.l.b16 %v7265
        %v7303 = vunpack.c.l.b16 %v7266
        %v7304 = vunpack.c.l.b16 %v7267
        %v7305 = vpack.c.b16 %v7290, %v7289
        %v7306 = vpack.c.b16 %v7292, %v7291
        %v7307 = vpack.c.b16 %v7294, %v7293
        %v7308 = vpack.c.b16 %v7296, %v7295
        %v7309 = vpack.c.b16 %v7298, %v7297
        %v7310 = vpack.c.b16 %v7300, %v7299
        %v7311 = vpack.c.b16 %v7302, %v7301
        %v7312 = vpack.c.b16 %v7304, %v7303
        %7321 = vmatprep.subr.bf16.mxu0 0
        %7322 = vmatpush1.bf16.msra.mxu0 %v7305
        %7323 = vmatprep.subr.bf16.mxu0 0
        %7324 = vmatpush1.bf16.msra.mxu0 %v7306
        %7325 = vmatprep.subr.bf16.mxu0 0
        %7326 = vmatpush1.bf16.msra.mxu0 %v7307
        %7327 = vmatprep.subr.bf16.mxu0 0
        %7328 = vmatpush1.bf16.msra.mxu0 %v7308
        %7329 = vmatprep.subr.bf16.mxu0 0
        %7330 = vmatpush1.bf16.msra.mxu0 %v7309
        %7331 = vmatprep.subr.bf16.mxu0 0
        %7332 = vmatpush1.bf16.msra.mxu0 %v7310
        %7333 = vmatprep.subr.bf16.mxu0 0
        %7334 = vmatpush1.bf16.msra.mxu0 %v7311
        %7335 = vmatprep.subr.bf16.mxu0 0
        %7336 = vmatpush1.bf16.msra.mxu0 %v7312
        %7337 = vmatprep.subr.bf16.mxu0 0
        %7338 = vmatpush1.bf16.msra.mxu0 0
        %7339 = vmatprep.subr.bf16.mxu0 0
        %7340 = vmatpush1.bf16.msra.mxu0 0
        %7341 = vmatprep.subr.bf16.mxu0 0
        %7342 = vmatpush1.bf16.msra.mxu0 0
        %7343 = vmatprep.subr.bf16.mxu0 0
        %7344 = vmatpush1.bf16.msra.mxu0 0
        %7345 = vmatprep.subr.bf16.mxu0 0
        %7346 = vmatpush1.bf16.msra.mxu0 0
        %7347 = vmatprep.subr.bf16.mxu0 0
        %7348 = vmatpush1.bf16.msra.mxu0 0
        %7349 = vmatprep.subr.bf16.mxu0 0
        %7350 = vmatpush1.bf16.msra.mxu0 0
        %7351 = vmatprep.subr.bf16.mxu0 0
        %7352 = vmatpush1.bf16.msra.mxu0 0
        %7353 = vmatprep.mubr.bf16.mxu0 0
        %7354 = vmatmul.mubr.bf16.gmra.mrb[0].mxu0 %v7219
        %v7355 = vpop.f32.mrb[0].mxu0
        %v7356 = vadd.f32 %v7272, %v7355
        %v7357 = vpop.f32.mrb[0].mxu0
        %v7358 = vpop.f32.mrb[0].mxu0
        %v7359 = vadd.f32 %v7272, %v7358
        %v7360 = vpop.f32.mrb[0].mxu0
        %7361 = vmatprep.mubr.bf16.mxu0 0
        %7362 = vmatmul.mubr.bf16.gmra.mrb[0].mxu0 %v7220
        %v7363 = vpop.f32.mrb[0].mxu0
        %v7364 = vadd.f32 %v7272, %v7363
        %v7365 = vpop.f32.mrb[0].mxu0
        %v7366 = vpop.f32.mrb[0].mxu0
        %v7367 = vadd.f32 %v7272, %v7366
        %v7368 = vpop.f32.mrb[0].mxu0
        %7369 = vmatprep.mubr.bf16.mxu0 0
        %7370 = vmatmul.mubr.bf16.gmra.mrb[0].mxu0 %v7221
        %v7371 = vpop.f32.mrb[0].mxu0
        %v7372 = vadd.f32 %v7272, %v7371
        %v7373 = vpop.f32.mrb[0].mxu0
        %v7374 = vpop.f32.mrb[0].mxu0
        %v7375 = vadd.f32 %v7272, %v7374
        %v7376 = vpop.f32.mrb[0].mxu0
        %7377 = vmatprep.mubr.bf16.mxu0 0
        %7378 = vmatmul.mubr.bf16.gmra.mrb[0].mxu0 %v7222
        %v7379 = vpop.f32.mrb[0].mxu0
        %v7380 = vadd.f32 %v7272, %v7379
        %v7381 = vpop.f32.mrb[0].mxu0
        %v7382 = vpop.f32.mrb[0].mxu0
        %v7383 = vadd.f32 %v7272, %v7382
        %v7384 = vpop.f32.mrb[0].mxu0
        %7385 = vmatprep.mubr.bf16.mxu0 0
        %7386 = vmatmul.mubr.bf16.gmra.mrb[0].mxu0 %v7223
        %v7387 = vpop.f32.mrb[0].mxu0
        %v7388 = vadd.f32 %v7272, %v7387
        %v7389 = vpop.f32.mrb[0].mxu0
        %v7390 = vpop.f32.mrb[0].mxu0
        %v7391 = vadd.f32 %v7272, %v7390
        %v7392 = vpop.f32.mrb[0].mxu0
        %7393 = vmatprep.mubr.bf16.mxu0 0
        %7394 = vmatmul.mubr.bf16.gmra.mrb[0].mxu0 %v7224
        %v7395 = vpop.f32.mrb[0].mxu0
        %v7396 = vadd.f32 %v7272, %v7395
        %v7397 = vpop.f32.mrb[0].mxu0
        %v7398 = vpop.f32.mrb[0].mxu0
        %v7399 = vadd.f32 %v7272, %v7398
        %v7400 = vpop.f32.mrb[0].mxu0
        %7401 = vmatprep.mubr.bf16.mxu0 0
        %7402 = vmatmul.mubr.bf16.gmra.mrb[0].mxu0 %v7225
        %v7403 = vpop.f32.mrb[0].mxu0
        %v7404 = vadd.f32 %v7272, %v7403
        %v7405 = vpop.f32.mrb[0].mxu0
        %v7406 = vpop.f32.mrb[0].mxu0
        %v7407 = vadd.f32 %v7272, %v7406
        %v7408 = vpop.f32.mrb[0].mxu0
        %7409 = vmatprep.mubr.bf16.mxu0 0
        %7410 = vmatmul.mubr.bf16.gmra.mrb[0].mxu0 %v7226
        %v7411 = vpop.f32.mrb[0].mxu0
        %v7412 = vadd.f32 %v7272, %v7411
        %v7413 = vpop.f32.mrb[0].mxu0
        %v7414 = vpop.f32.mrb[0].mxu0
        %v7415 = vadd.f32 %v7272, %v7414
        %v7416 = vpop.f32.mrb[0].mxu0
        %7417 = vmatprep.mubr.bf16.mxu0 0
        %7418 = vmatmul.mubr.bf16.gmra.mrb[0].mxu0 %v7227
        %v7419 = vpop.f32.mrb[0].mxu0
        %v7420 = vadd.f32 %v7272, %v7419
        %v7421 = vpop.f32.mrb[0].mxu0
        %v7422 = vpop.f32.mrb[0].mxu0
        %v7423 = vadd.f32 %v7272, %v7422
        %v7424 = vpop.f32.mrb[0].mxu0
        %7425 = vmatprep.mubr.bf16.mxu0 0
        %7426 = vmatmul.mubr.bf16.gmra.mrb[0].mxu0 %v7228
        %v7427 = vpop.f32.mrb[0].mxu0
        %v7428 = vadd.f32 %v7272, %v7427
        %v7429 = vpop.f32.mrb[0].mxu0
        %v7430 = vpop.f32.mrb[0].mxu0
        %v7431 = vadd.f32 %v7272, %v7430
        %v7432 = vpop.f32.mrb[0].mxu0
        %7433 = vmatprep.mubr.bf16.mxu0 0
        %7434 = vmatmul.mubr.bf16.gmra.mrb[0].mxu0 %v7229
        %v7435 = vpop.f32.mrb[0].mxu0
        %v7436 = vadd.f32 %v7272, %v7435
        %v7437 = vpop.f32.mrb[0].mxu0
        %v7438 = vpop.f32.mrb[0].mxu0
        %v7439 = vadd.f32 %v7272, %v7438
        %v7440 = vpop.f32.mrb[0].mxu0
        %7441 = vmatprep.mubr.bf16.mxu0 0
        %7442 = vmatmul.mubr.bf16.gmra.mrb[0].mxu0 %v7230
        %v7443 = vpop.f32.mrb[0].mxu0
        %v7444 = vadd.f32 %v7272, %v7443
        %v7445 = vpop.f32.mrb[0].mxu0
        %v7446 = vpop.f32.mrb[0].mxu0
        %v7447 = vadd.f32 %v7272, %v7446
        %v7448 = vpop.f32.mrb[0].mxu0
        %7449 = vmatprep.mubr.bf16.mxu0 0
        %7450 = vmatmul.mubr.bf16.gmra.mrb[0].mxu0 %v7231
        %v7451 = vpop.f32.mrb[0].mxu0
        %v7452 = vadd.f32 %v7272, %v7451
        %v7453 = vpop.f32.mrb[0].mxu0
        %v7454 = vpop.f32.mrb[0].mxu0
        %v7455 = vadd.f32 %v7272, %v7454
        %v7456 = vpop.f32.mrb[0].mxu0
        %7457 = vmatprep.mubr.bf16.mxu0 0
        %7458 = vmatmul.mubr.bf16.gmra.mrb[0].mxu0 %v7232
        %v7459 = vpop.f32.mrb[0].mxu0
        %v7460 = vadd.f32 %v7272, %v7459
        %v7461 = vpop.f32.mrb[0].mxu0
        %v7462 = vpop.f32.mrb[0].mxu0
        %v7463 = vadd.f32 %v7272, %v7462
        %v7464 = vpop.f32.mrb[0].mxu0
        %7465 = vmatprep.mubr.bf16.mxu0 0
        %7466 = vmatmul.mubr.bf16.gmra.mrb[0].mxu0 %v7233
        %v7467 = vpop.f32.mrb[0].mxu0
        %v7468 = vadd.f32 %v7272, %v7467
        %v7469 = vpop.f32.mrb[0].mxu0
        %v7470 = vpop.f32.mrb[0].mxu0
        %v7471 = vadd.f32 %v7272, %v7470
        %v7472 = vpop.f32.mrb[0].mxu0
        %7473 = vmatprep.mubr.bf16.mxu0 0
        %7474 = vmatmul.mubr.bf16.gmra.mrb[0].mxu0 %v7234
        %v7475 = vpop.f32.mrb[0].mxu0
        %v7476 = vadd.f32 %v7272, %v7475
        %v7477 = vpop.f32.mrb[0].mxu0
        %v7478 = vpop.f32.mrb[0].mxu0
        %v7479 = vadd.f32 %v7272, %v7478
        %v7480 = vpop.f32.mrb[0].mxu0
        %7481 = vmatprep.mubr.bf16.mxu0 0
        %7482 = vmatmul.mubr.bf16.gmra.mrb[0].mxu0 %v7235
        %v7483 = vpop.f32.mrb[0].mxu0
        %v7484 = vadd.f32 %v7272, %v7483
        %v7485 = vpop.f32.mrb[0].mxu0
        %v7486 = vpop.f32.mrb[0].mxu0
        %v7487 = vadd.f32 %v7272, %v7486
        %v7488 = vpop.f32.mrb[0].mxu0
        %7489 = vmatprep.mubr.bf16.mxu0 0
        %7490 = vmatmul.mubr.bf16.gmra.mrb[0].mxu0 %v7236
        %v7491 = vpop.f32.mrb[0].mxu0
        %v7492 = vadd.f32 %v7272, %v7491
        %v7493 = vpop.f32.mrb[0].mxu0
        %v7494 = vpop.f32.mrb[0].mxu0
        %v7495 = vadd.f32 %v7272, %v7494
        %v7496 = vpop.f32.mrb[0].mxu0
        %7497 = vmatprep.mubr.bf16.mxu0 0
        %7498 = vmatmul.mubr.bf16.gmra.mrb[0].mxu0 %v7237
        %v7499 = vpop.f32.mrb[0].mxu0
        %v7500 = vadd.f32 %v7272, %v7499
        %v7501 = vpop.f32.mrb[0].mxu0
        %v7502 = vpop.f32.mrb[0].mxu0
        %v7503 = vadd.f32 %v7272, %v7502
        %v7504 = vpop.f32.mrb[0].mxu0
        %7505 = vmatprep.mubr.bf16.mxu0 0
        %7506 = vmatmul.mubr.bf16.gmra.mrb[0].mxu0 %v7238
        %v7507 = vpop.f32.mrb[0].mxu0
        %v7508 = vadd.f32 %v7272, %v7507
        %v7509 = vpop.f32.mrb[0].mxu0
        %v7510 = vpop.f32.mrb[0].mxu0
        %v7511 = vadd.f32 %v7272, %v7510
        %v7512 = vpop.f32.mrb[0].mxu0
        %7513 = vmatprep.mubr.bf16.mxu0 0
        %7514 = vmatmul.mubr.bf16.gmra.mrb[0].mxu0 %v7239
        %v7515 = vpop.f32.mrb[0].mxu0
        %v7516 = vadd.f32 %v7272, %v7515
        %v7517 = vpop.f32.mrb[0].mxu0
        %v7518 = vpop.f32.mrb[0].mxu0
        %v7519 = vadd.f32 %v7272, %v7518
        %v7520 = vpop.f32.mrb[0].mxu0
        %7521 = vmatprep.mubr.bf16.mxu0 0
        %7522 = vmatmul.mubr.bf16.gmra.mrb[0].mxu0 %v7240
        %v7523 = vpop.f32.mrb[0].mxu0
        %v7524 = vadd.f32 %v7272, %v7523
        %v7525 = vpop.f32.mrb[0].mxu0
        %v7526 = vpop.f32.mrb[0].mxu0
        %v7527 = vadd.f32 %v7272, %v7526
        %v7528 = vpop.f32.mrb[0].mxu0
        %7529 = vmatprep.mubr.bf16.mxu0 0
        %7530 = vmatmul.mubr.bf16.gmra.mrb[0].mxu0 %v7241
        %v7531 = vpop.f32.mrb[0].mxu0
        %v7532 = vadd.f32 %v7272, %v7531
        %v7533 = vpop.f32.mrb[0].mxu0
        %v7534 = vpop.f32.mrb[0].mxu0
        %v7535 = vadd.f32 %v7272, %v7534
        %v7536 = vpop.f32.mrb[0].mxu0
        %7537 = vmatprep.mubr.bf16.mxu0 0
        %7538 = vmatmul.mubr.bf16.gmra.mrb[0].mxu0 %v7242
        %v7539 = vpop.f32.mrb[0].mxu0
        %v7540 = vadd.f32 %v7272, %v7539
        %v7541 = vpop.f32.mrb[0].mxu0
        %v7542 = vpop.f32.mrb[0].mxu0
        %v7543 = vadd.f32 %v7272, %v7542
        %v7544 = vpop.f32.mrb[0].mxu0
        %7545 = vmatprep.mubr.bf16.mxu0 0
        %7546 = vmatmul.mubr.bf16.gmra.mrb[0].mxu0 %v7243
        %v7547 = vpop.f32.mrb[0].mxu0
        %v7548 = vadd.f32 %v7272, %v7547
        %v7549 = vpop.f32.mrb[0].mxu0
        %v7550 = vpop.f32.mrb[0].mxu0
        %v7551 = vadd.f32 %v7272, %v7550
        %v7552 = vpop.f32.mrb[0].mxu0
        %7553 = vmatprep.mubr.bf16.mxu0 0
        %7554 = vmatmul.mubr.bf16.gmra.mrb[0].mxu0 %v7244
        %v7555 = vpop.f32.mrb[0].mxu0
        %v7556 = vadd.f32 %v7272, %v7555
        %v7557 = vpop.f32.mrb[0].mxu0
        %v7558 = vpop.f32.mrb[0].mxu0
        %v7559 = vadd.f32 %v7272, %v7558
        %v7560 = vpop.f32.mrb[0].mxu0
        %7561 = vmatprep.mubr.bf16.mxu0 0
        %7562 = vmatmul.mubr.bf16.gmra.mrb[0].mxu0 %v7245
        %v7563 = vpop.f32.mrb[0].mxu0
        %v7564 = vadd.f32 %v7272, %v7563
        %v7565 = vpop.f32.mrb[0].mxu0
        %v7566 = vpop.f32.mrb[0].mxu0
        %v7567 = vadd.f32 %v7272, %v7566
        %v7568 = vpop.f32.mrb[0].mxu0
        %7569 = vmatprep.mubr.bf16.mxu0 0
        %7570 = vmatmul.mubr.bf16.gmra.mrb[0].mxu0 %v7246
        %v7571 = vpop.f32.mrb[0].mxu0
        %v7572 = vadd.f32 %v7272, %v7571
        %v7573 = vpop.f32.mrb[0].mxu0
        %v7574 = vpop.f32.mrb[0].mxu0
        %v7575 = vadd.f32 %v7272, %v7574
        %v7576 = vpop.f32.mrb[0].mxu0
        %7577 = vmatprep.mubr.bf16.mxu0 0
        %7578 = vmatmul.mubr.bf16.gmra.mrb[0].mxu0 %v7247
        %v7579 = vpop.f32.mrb[0].mxu0
        %v7580 = vadd.f32 %v7272, %v7579
        %v7581 = vpop.f32.mrb[0].mxu0
        %v7582 = vpop.f32.mrb[0].mxu0
        %v7583 = vadd.f32 %v7272, %v7582
        %v7584 = vpop.f32.mrb[0].mxu0
        %7585 = vmatprep.mubr.bf16.mxu0 0
        %7586 = vmatmul.mubr.bf16.gmra.mrb[0].mxu0 %v7248
        %v7587 = vpop.f32.mrb[0].mxu0
        %v7588 = vadd.f32 %v7272, %v7587
        %v7589 = vpop.f32.mrb[0].mxu0
        %v7590 = vpop.f32.mrb[0].mxu0
        %v7591 = vadd.f32 %v7272, %v7590
        %v7592 = vpop.f32.mrb[0].mxu0
        %7593 = vmatprep.mubr.bf16.mxu0 0
        %7594 = vmatmul.mubr.bf16.gmra.mrb[0].mxu0 %v7249
        %v7595 = vpop.f32.mrb[0].mxu0
        %v7596 = vadd.f32 %v7272, %v7595
        %v7597 = vpop.f32.mrb[0].mxu0
        %v7598 = vpop.f32.mrb[0].mxu0
        %v7599 = vadd.f32 %v7272, %v7598
        %v7600 = vpop.f32.mrb[0].mxu0
        %7601 = vmatprep.mubr.bf16.mxu0 0
        %7602 = vmatmul.mubr.bf16.gmra.mrb[0].mxu0 %v7250
        %v7603 = vpop.f32.mrb[0].mxu0
        %v7604 = vadd.f32 %v7272, %v7603
        %v7605 = vpop.f32.mrb[0].mxu0
        %v7606 = vpop.f32.mrb[0].mxu0
        %v7607 = vadd.f32 %v7272, %v7606
        %v7608 = vpop.f32.mrb[0].mxu0
        %7609 = vdwg.mxu0
        %v7610 = vadd.f32 %v6636, %v7356
        %v7611 = vadd.f32 %v6637, %v7359
        %v7612 = vadd.f32 %v6638, %v7364
        %v7613 = vadd.f32 %v6639, %v7367
        %v7614 = vadd.f32 %v6640, %v7372
        %v7615 = vadd.f32 %v6641, %v7375
        %v7616 = vadd.f32 %v6642, %v7380
        %v7617 = vadd.f32 %v6643, %v7383
        %v7618 = vadd.f32 %v6644, %v7388
        %v7619 = vadd.f32 %v6645, %v7391
        %v7620 = vadd.f32 %v6646, %v7396
        %v7621 = vadd.f32 %v6647, %v7399
        %v7622 = vadd.f32 %v6648, %v7404
        %v7623 = vadd.f32 %v6649, %v7407
        %v7624 = vadd.f32 %v6650, %v7412
        %v7625 = vadd.f32 %v6651, %v7415
        %v7626 = vadd.f32 %v6652, %v7420
        %v7627 = vadd.f32 %v6653, %v7423
        %v7628 = vadd.f32 %v6654, %v7428
        %v7629 = vadd.f32 %v6655, %v7431
        %v7630 = vadd.f32 %v6656, %v7436
        %v7631 = vadd.f32 %v6657, %v7439
        %v7632 = vadd.f32 %v6658, %v7444
        %v7633 = vadd.f32 %v6659, %v7447
        %v7634 = vadd.f32 %v6660, %v7452
        %v7635 = vadd.f32 %v6661, %v7455
        %v7636 = vadd.f32 %v6662, %v7460
        %v7637 = vadd.f32 %v6663, %v7463
        %v7638 = vadd.f32 %v6664, %v7468
        %v7639 = vadd.f32 %v6665, %v7471
        %v7640 = vadd.f32 %v6666, %v7476
        %v7641 = vadd.f32 %v6667, %v7479
        %v7642 = vadd.f32 %v6668, %v7484
        %v7643 = vadd.f32 %v6669, %v7487
        %v7644 = vadd.f32 %v6670, %v7492
        %v7645 = vadd.f32 %v6671, %v7495
        %v7646 = vadd.f32 %v6672, %v7500
        %v7647 = vadd.f32 %v6673, %v7503
        %v7648 = vadd.f32 %v6674, %v7508
        %v7649 = vadd.f32 %v6675, %v7511
        %v7650 = vadd.f32 %v6676, %v7516
        %v7651 = vadd.f32 %v6677, %v7519
        %v7652 = vadd.f32 %v6678, %v7524
        %v7653 = vadd.f32 %v6679, %v7527
        %v7654 = vadd.f32 %v6680, %v7532
        %v7655 = vadd.f32 %v6681, %v7535
        %v7656 = vadd.f32 %v6682, %v7540
        %v7657 = vadd.f32 %v6683, %v7543
        %v7658 = vadd.f32 %v6684, %v7548
        %v7659 = vadd.f32 %v6685, %v7551
        %v7660 = vadd.f32 %v6686, %v7556
        %v7661 = vadd.f32 %v6687, %v7559
        %v7662 = vadd.f32 %v6688, %v7564
        %v7663 = vadd.f32 %v6689, %v7567
        %v7664 = vadd.f32 %v6690, %v7572
        %v7665 = vadd.f32 %v6691, %v7575
        %v7666 = vadd.f32 %v6692, %v7580
        %v7667 = vadd.f32 %v6693, %v7583
        %v7668 = vadd.f32 %v6694, %v7588
        %v7669 = vadd.f32 %v6695, %v7591
        %v7670 = vadd.f32 %v6696, %v7596
        %v7671 = vadd.f32 %v6697, %v7599
        %v7672 = vadd.f32 %v6698, %v7604
        %v7673 = vadd.f32 %v6699, %v7607
        %v7674 = vadd.f32 %v7610, %v2994
        %v7675 = vadd.f32 %v7611, %v2997
        %v7676 = vadd.f32 %v7612, %v3002
        %v7677 = vadd.f32 %v7613, %v3005
        %v7678 = vadd.f32 %v7614, %v3010
        %v7679 = vadd.f32 %v7615, %v3013
        %v7680 = vadd.f32 %v7616, %v3018
        %v7681 = vadd.f32 %v7617, %v3021
        %v7682 = vadd.f32 %v7618, %v3026
        %v7683 = vadd.f32 %v7619, %v3029
        %v7684 = vadd.f32 %v7620, %v3034
        %v7685 = vadd.f32 %v7621, %v3037
        %v7686 = vadd.f32 %v7622, %v3042
        %v7687 = vadd.f32 %v7623, %v3045
        %v7688 = vadd.f32 %v7624, %v3050
        %v7689 = vadd.f32 %v7625, %v3053
        %v7690 = vadd.f32 %v7626, %v3058
        %v7691 = vadd.f32 %v7627, %v3061
        %v7692 = vadd.f32 %v7628, %v3066
        %v7693 = vadd.f32 %v7629, %v3069
        %v7694 = vadd.f32 %v7630, %v3074
        %v7695 = vadd.f32 %v7631, %v3077
        %v7696 = vadd.f32 %v7632, %v3082
        %v7697 = vadd.f32 %v7633, %v3085
        %v7698 = vadd.f32 %v7634, %v3090
        %v7699 = vadd.f32 %v7635, %v3093
        %v7700 = vadd.f32 %v7636, %v3098
        %v7701 = vadd.f32 %v7637, %v3101
        %v7702 = vadd.f32 %v7638, %v3106
        %v7703 = vadd.f32 %v7639, %v3109
        %v7704 = vadd.f32 %v7640, %v3114
        %v7705 = vadd.f32 %v7641, %v3117
        %v7706 = vadd.f32 %v7642, %v3122
        %v7707 = vadd.f32 %v7643, %v3125
        %v7708 = vadd.f32 %v7644, %v3130
        %v7709 = vadd.f32 %v7645, %v3133
        %v7710 = vadd.f32 %v7646, %v3138
        %v7711 = vadd.f32 %v7647, %v3141
        %v7712 = vadd.f32 %v7648, %v3146
        %v7713 = vadd.f32 %v7649, %v3149
        %v7714 = vadd.f32 %v7650, %v3154
        %v7715 = vadd.f32 %v7651, %v3157
        %v7716 = vadd.f32 %v7652, %v3162
        %v7717 = vadd.f32 %v7653, %v3165
        %v7718 = vadd.f32 %v7654, %v3170
        %v7719 = vadd.f32 %v7655, %v3173
        %v7720 = vadd.f32 %v7656, %v3178
        %v7721 = vadd.f32 %v7657, %v3181
        %v7722 = vadd.f32 %v7658, %v3186
        %v7723 = vadd.f32 %v7659, %v3189
        %v7724 = vadd.f32 %v7660, %v3194
        %v7725 = vadd.f32 %v7661, %v3197
        %v7726 = vadd.f32 %v7662, %v3202
        %v7727 = vadd.f32 %v7663, %v3205
        %v7728 = vadd.f32 %v7664, %v3210
        %v7729 = vadd.f32 %v7665, %v3213
        %v7730 = vadd.f32 %v7666, %v3218
        %v7731 = vadd.f32 %v7667, %v3221
        %v7732 = vadd.f32 %v7668, %v3226
        %v7733 = vadd.f32 %v7669, %v3229
        %v7734 = vadd.f32 %v7670, %v3234
        %v7735 = vadd.f32 %v7671, %v3237
        %v7736 = vadd.f32 %v7672, %v3242
        %v7737 = vadd.f32 %v7673, %v3245
        %v7738 = vld [vmem:[%s5 + $0x4] sm:$0x1]
        %v7739 = vlaneseq
        %v7740 = vshrl.u32 %v7739, 7
        %v7741 = vsub.s32 0, %v7740
        %v7742 = vrot.slane %v7738, %v7741
        %v7743 = vadd.f32 %v7674, %v7742
        %v7744 = vadd.f32 %v7675, %v7742
        %v7745 = vadd.f32 %v7676, %v7742
        %v7746 = vadd.f32 %v7677, %v7742
        %v7747 = vadd.f32 %v7678, %v7742
        %v7748 = vadd.f32 %v7679, %v7742
        %v7749 = vadd.f32 %v7680, %v7742
        %v7750 = vadd.f32 %v7681, %v7742
        %v7751 = vadd.f32 %v7682, %v7742
        %v7752 = vadd.f32 %v7683, %v7742
        %v7753 = vadd.f32 %v7684, %v7742
        %v7754 = vadd.f32 %v7685, %v7742
        %v7755 = vadd.f32 %v7686, %v7742
        %v7756 = vadd.f32 %v7687, %v7742
        %v7757 = vadd.f32 %v7688, %v7742
        %v7758 = vadd.f32 %v7689, %v7742
        %v7759 = vadd.f32 %v7690, %v7742
        %v7760 = vadd.f32 %v7691, %v7742
        %v7761 = vadd.f32 %v7692, %v7742
        %v7762 = vadd.f32 %v7693, %v7742
        %v7763 = vadd.f32 %v7694, %v7742
        %v7764 = vadd.f32 %v7695, %v7742
        %v7765 = vadd.f32 %v7696, %v7742
        %v7766 = vadd.f32 %v7697, %v7742
        %v7767 = vadd.f32 %v7698, %v7742
        %v7768 = vadd.f32 %v7699, %v7742
        %v7769 = vadd.f32 %v7700, %v7742
        %v7770 = vadd.f32 %v7701, %v7742
        %v7771 = vadd.f32 %v7702, %v7742
        %v7772 = vadd.f32 %v7703, %v7742
        %v7773 = vadd.f32 %v7704, %v7742
        %v7774 = vadd.f32 %v7705, %v7742
        %v7775 = vadd.f32 %v7706, %v7742
        %v7776 = vadd.f32 %v7707, %v7742
        %v7777 = vadd.f32 %v7708, %v7742
        %v7778 = vadd.f32 %v7709, %v7742
        %v7779 = vadd.f32 %v7710, %v7742
        %v7780 = vadd.f32 %v7711, %v7742
        %v7781 = vadd.f32 %v7712, %v7742
        %v7782 = vadd.f32 %v7713, %v7742
        %v7783 = vadd.f32 %v7714, %v7742
        %v7784 = vadd.f32 %v7715, %v7742
        %v7785 = vadd.f32 %v7716, %v7742
        %v7786 = vadd.f32 %v7717, %v7742
        %v7787 = vadd.f32 %v7718, %v7742
        %v7788 = vadd.f32 %v7719, %v7742
        %v7789 = vadd.f32 %v7720, %v7742
        %v7790 = vadd.f32 %v7721, %v7742
        %v7791 = vadd.f32 %v7722, %v7742
        %v7792 = vadd.f32 %v7723, %v7742
        %v7793 = vadd.f32 %v7724, %v7742
        %v7794 = vadd.f32 %v7725, %v7742
        %v7795 = vadd.f32 %v7726, %v7742
        %v7796 = vadd.f32 %v7727, %v7742
        %v7797 = vadd.f32 %v7728, %v7742
        %v7798 = vadd.f32 %v7729, %v7742
        %v7799 = vadd.f32 %v7730, %v7742
        %v7800 = vadd.f32 %v7731, %v7742
        %v7801 = vadd.f32 %v7732, %v7742
        %v7802 = vadd.f32 %v7733, %v7742
        %v7803 = vadd.f32 %v7734, %v7742
        %v7804 = vadd.f32 %v7735, %v7742
        %v7805 = vadd.f32 %v7736, %v7742
        %v7806 = vadd.f32 %v7737, %v7742
        %v7807 = vmax.f32 %v7743, 0.0
        %v7808 = vmax.f32 %v7744, 0.0
        %v7809 = vmax.f32 %v7745, 0.0
        %v7810 = vmax.f32 %v7746, 0.0
        %v7811 = vmax.f32 %v7747, 0.0
        %v7812 = vmax.f32 %v7748, 0.0
        %v7813 = vmax.f32 %v7749, 0.0
        %v7814 = vmax.f32 %v7750, 0.0
        %v7815 = vmax.f32 %v7751, 0.0
        %v7816 = vmax.f32 %v7752, 0.0
        %v7817 = vmax.f32 %v7753, 0.0
        %v7818 = vmax.f32 %v7754, 0.0
        %v7819 = vmax.f32 %v7755, 0.0
        %v7820 = vmax.f32 %v7756, 0.0
        %v7821 = vmax.f32 %v7757, 0.0
        %v7822 = vmax.f32 %v7758, 0.0
        %v7823 = vmax.f32 %v7759, 0.0
        %v7824 = vmax.f32 %v7760, 0.0
        %v7825 = vmax.f32 %v7761, 0.0
        %v7826 = vmax.f32 %v7762, 0.0
        %v7827 = vmax.f32 %v7763, 0.0
        %v7828 = vmax.f32 %v7764, 0.0
        %v7829 = vmax.f32 %v7765, 0.0
        %v7830 = vmax.f32 %v7766, 0.0
        %v7831 = vmax.f32 %v7767, 0.0
        %v7832 = vmax.f32 %v7768, 0.0
        %v7833 = vmax.f32 %v7769, 0.0
        %v7834 = vmax.f32 %v7770, 0.0
        %v7835 = vmax.f32 %v7771, 0.0
        %v7836 = vmax.f32 %v7772, 0.0
        %v7837 = vmax.f32 %v7773, 0.0
        %v7838 = vmax.f32 %v7774, 0.0
        %v7839 = vmax.f32 %v7775, 0.0
        %v7840 = vmax.f32 %v7776, 0.0
        %v7841 = vmax.f32 %v7777, 0.0
        %v7842 = vmax.f32 %v7778, 0.0
        %v7843 = vmax.f32 %v7779, 0.0
        %v7844 = vmax.f32 %v7780, 0.0
        %v7845 = vmax.f32 %v7781, 0.0
        %v7846 = vmax.f32 %v7782, 0.0
        %v7847 = vmax.f32 %v7783, 0.0
        %v7848 = vmax.f32 %v7784, 0.0
        %v7849 = vmax.f32 %v7785, 0.0
        %v7850 = vmax.f32 %v7786, 0.0
        %v7851 = vmax.f32 %v7787, 0.0
        %v7852 = vmax.f32 %v7788, 0.0
        %v7853 = vmax.f32 %v7789, 0.0
        %v7854 = vmax.f32 %v7790, 0.0
        %v7855 = vmax.f32 %v7791, 0.0
        %v7856 = vmax.f32 %v7792, 0.0
        %v7857 = vmax.f32 %v7793, 0.0
        %v7858 = vmax.f32 %v7794, 0.0
        %v7859 = vmax.f32 %v7795, 0.0
        %v7860 = vmax.f32 %v7796, 0.0
        %v7861 = vmax.f32 %v7797, 0.0
        %v7862 = vmax.f32 %v7798, 0.0
        %v7863 = vmax.f32 %v7799, 0.0
        %v7864 = vmax.f32 %v7800, 0.0
        %v7865 = vmax.f32 %v7801, 0.0
        %v7866 = vmax.f32 %v7802, 0.0
        %v7867 = vmax.f32 %v7803, 0.0
        %v7868 = vmax.f32 %v7804, 0.0
        %v7869 = vmax.f32 %v7805, 0.0
        %v7870 = vmax.f32 %v7806, 0.0
        %v7871 = vpack.c.bf16 %v7808, %v7807
        %v7872 = vpack.c.bf16 %v7810, %v7809
        %v7873 = vpack.c.bf16 %v7812, %v7811
        %v7874 = vpack.c.bf16 %v7814, %v7813
        %v7875 = vpack.c.bf16 %v7816, %v7815
        %v7876 = vpack.c.bf16 %v7818, %v7817
        %v7877 = vpack.c.bf16 %v7820, %v7819
        %v7878 = vpack.c.bf16 %v7822, %v7821
        %v7879 = vpack.c.bf16 %v7824, %v7823
        %v7880 = vpack.c.bf16 %v7826, %v7825
        %v7881 = vpack.c.bf16 %v7828, %v7827
        %v7882 = vpack.c.bf16 %v7830, %v7829
        %v7883 = vpack.c.bf16 %v7832, %v7831
        %v7884 = vpack.c.bf16 %v7834, %v7833
        %v7885 = vpack.c.bf16 %v7836, %v7835
        %v7886 = vpack.c.bf16 %v7838, %v7837
        %v7887 = vpack.c.bf16 %v7840, %v7839
        %v7888 = vpack.c.bf16 %v7842, %v7841
        %v7889 = vpack.c.bf16 %v7844, %v7843
        %v7890 = vpack.c.bf16 %v7846, %v7845
        %v7891 = vpack.c.bf16 %v7848, %v7847
        %v7892 = vpack.c.bf16 %v7850, %v7849
        %v7893 = vpack.c.bf16 %v7852, %v7851
        %v7894 = vpack.c.bf16 %v7854, %v7853
        %v7895 = vpack.c.bf16 %v7856, %v7855
        %v7896 = vpack.c.bf16 %v7858, %v7857
        %v7897 = vpack.c.bf16 %v7860, %v7859
        %v7898 = vpack.c.bf16 %v7862, %v7861
        %v7899 = vpack.c.bf16 %v7864, %v7863
        %v7900 = vpack.c.bf16 %v7866, %v7865
        %v7901 = vpack.c.bf16 %v7868, %v7867
        %v7902 = vpack.c.bf16 %v7870, %v7869
        %s7903 = scalar_lea.vmem %s6, 256
        %v7904 = vld [vmem:[%s7903] sm:$0xf]
        %v7905 = vld [vmem:[%s7903 + $0x4] sm:$0xf]
        %v7906 = vld [vmem:[%s7903 + $0x8] sm:$0xf]
        %v7907 = vld [vmem:[%s7903 + $0xc] sm:$0xf]
        %v7908 = vld [vmem:[%s7903 + $0x10] sm:$0xf]
        %v7909 = vld [vmem:[%s7903 + $0x14] sm:$0xf]
        %v7910 = vld [vmem:[%s7903 + $0x18] sm:$0xf]
        %v7911 = vld [vmem:[%s7903 + $0x1c] sm:$0xf]
        %v7912 = vld [vmem:[%s7903 + $0x20] sm:$0xf]
        %v7913 = vld [vmem:[%s7903 + $0x24] sm:$0xf]
        %v7914 = vld [vmem:[%s7903 + $0x28] sm:$0xf]
        %v7915 = vld [vmem:[%s7903 + $0x2c] sm:$0xf]
        %v7916 = vld [vmem:[%s7903 + $0x30] sm:$0xf]
        %v7917 = vld [vmem:[%s7903 + $0x34] sm:$0xf]
        %v7918 = vld [vmem:[%s7903 + $0x38] sm:$0xf]
        %v7919 = vld [vmem:[%s7903 + $0x3c] sm:$0xf]
        %v7920 = vld [vmem:[%s7 + $0x4] sm:$0x1]
        %v7921 = vlaneseq
        %v7922 = vshrl.u32 %v7921, 7
        %v7923 = vsub.s32 0, %v7922
        %v7924 = vrot.slane %v7920, %v7923
        %v7941 = vunpack.c.l.b16 %v7904
        %v7942 = vunpack.c.l.b16 %v7905
        %v7943 = vunpack.c.l.b16 %v7906
        %v7944 = vunpack.c.l.b16 %v7907
        %v7945 = vunpack.c.l.b16 %v7908
        %v7946 = vunpack.c.l.b16 %v7909
        %v7947 = vunpack.c.l.b16 %v7910
        %v7948 = vunpack.c.l.b16 %v7911
        %v7949 = vunpack.c.l.b16 %v7912
        %v7950 = vunpack.c.l.b16 %v7913
        %v7951 = vunpack.c.l.b16 %v7914
        %v7952 = vunpack.c.l.b16 %v7915
        %v7953 = vunpack.c.l.b16 %v7916
        %v7954 = vunpack.c.l.b16 %v7917
        %v7955 = vunpack.c.l.b16 %v7918
        %v7956 = vunpack.c.l.b16 %v7919
        %v7957 = vpack.c.b16 %v7942, %v7941
        %v7958 = vpack.c.b16 %v7944, %v7943
        %v7959 = vpack.c.b16 %v7946, %v7945
        %v7960 = vpack.c.b16 %v7948, %v7947
        %v7961 = vpack.c.b16 %v7950, %v7949
        %v7962 = vpack.c.b16 %v7952, %v7951
        %v7963 = vpack.c.b16 %v7954, %v7953
        %v7964 = vpack.c.b16 %v7956, %v7955
        %7973 = vmatprep.subr.bf16.mxu0 0
        %7974 = vmatpush1.bf16.msra.mxu0 %v7957
        %7975 = vmatprep.subr.bf16.mxu0 0
        %7976 = vmatpush1.bf16.msra.mxu0 %v7958
        %7977 = vmatprep.subr.bf16.mxu0 0
        %7978 = vmatpush1.bf16.msra.mxu0 %v7959
        %7979 = vmatprep.subr.bf16.mxu0 0
        %7980 = vmatpush1.bf16.msra.mxu0 %v7960
        %7981 = vmatprep.subr.bf16.mxu0 0
        %7982 = vmatpush1.bf16.msra.mxu0 %v7961
        %7983 = vmatprep.subr.bf16.mxu0 0
        %7984 = vmatpush1.bf16.msra.mxu0 %v7962
        %7985 = vmatprep.subr.bf16.mxu0 0
        %7986 = vmatpush1.bf16.msra.mxu0 %v7963
        %7987 = vmatprep.subr.bf16.mxu0 0
        %7988 = vmatpush1.bf16.msra.mxu0 %v7964
        %7989 = vmatprep.subr.bf16.mxu0 0
        %7990 = vmatpush1.bf16.msra.mxu0 0
        %7991 = vmatprep.subr.bf16.mxu0 0
        %7992 = vmatpush1.bf16.msra.mxu0 0
        %7993 = vmatprep.subr.bf16.mxu0 0
        %7994 = vmatpush1.bf16.msra.mxu0 0
        %7995 = vmatprep.subr.bf16.mxu0 0
        %7996 = vmatpush1.bf16.msra.mxu0 0
        %7997 = vmatprep.subr.bf16.mxu0 0
        %7998 = vmatpush1.bf16.msra.mxu0 0
        %7999 = vmatprep.subr.bf16.mxu0 0
        %8000 = vmatpush1.bf16.msra.mxu0 0
        %8001 = vmatprep.subr.bf16.mxu0 0
        %8002 = vmatpush1.bf16.msra.mxu0 0
        %8003 = vmatprep.subr.bf16.mxu0 0
        %8004 = vmatpush1.bf16.msra.mxu0 0
        %8005 = vmatprep.mubr.bf16.mxu0 0
        %8006 = vmatmul.mubr.bf16.gmra.mrb[0].mxu0 %v7871
        %v8007 = vpop.f32.mrb[0].mxu0
        %v8008 = vadd.f32 %v7924, %v8007
        %v8009 = vpop.f32.mrb[0].mxu0
        %v8010 = vpop.f32.mrb[0].mxu0
        %v8011 = vadd.f32 %v7924, %v8010
        %v8012 = vpop.f32.mrb[0].mxu0
        %8013 = vmatprep.mubr.bf16.mxu0 0
        %8014 = vmatmul.mubr.bf16.gmra.mrb[0].mxu0 %v7872
        %v8015 = vpop.f32.mrb[0].mxu0
        %v8016 = vadd.f32 %v7924, %v8015
        %v8017 = vpop.f32.mrb[0].mxu0
        %v8018 = vpop.f32.mrb[0].mxu0
        %v8019 = vadd.f32 %v7924, %v8018
        %v8020 = vpop.f32.mrb[0].mxu0
        %8021 = vmatprep.mubr.bf16.mxu0 0
        %8022 = vmatmul.mubr.bf16.gmra.mrb[0].mxu0 %v7873
        %v8023 = vpop.f32.mrb[0].mxu0
        %v8024 = vadd.f32 %v7924, %v8023
        %v8025 = vpop.f32.mrb[0].mxu0
        %v8026 = vpop.f32.mrb[0].mxu0
        %v8027 = vadd.f32 %v7924, %v8026
        %v8028 = vpop.f32.mrb[0].mxu0
        %8029 = vmatprep.mubr.bf16.mxu0 0
        %8030 = vmatmul.mubr.bf16.gmra.mrb[0].mxu0 %v7874
        %v8031 = vpop.f32.mrb[0].mxu0
        %v8032 = vadd.f32 %v7924, %v8031
        %v8033 = vpop.f32.mrb[0].mxu0
        %v8034 = vpop.f32.mrb[0].mxu0
        %v8035 = vadd.f32 %v7924, %v8034
        %v8036 = vpop.f32.mrb[0].mxu0
        %8037 = vmatprep.mubr.bf16.mxu0 0
        %8038 = vmatmul.mubr.bf16.gmra.mrb[0].mxu0 %v7875
        %v8039 = vpop.f32.mrb[0].mxu0
        %v8040 = vadd.f32 %v7924, %v8039
        %v8041 = vpop.f32.mrb[0].mxu0
        %v8042 = vpop.f32.mrb[0].mxu0
        %v8043 = vadd.f32 %v7924, %v8042
        %v8044 = vpop.f32.mrb[0].mxu0
        %8045 = vmatprep.mubr.bf16.mxu0 0
        %8046 = vmatmul.mubr.bf16.gmra.mrb[0].mxu0 %v7876
        %v8047 = vpop.f32.mrb[0].mxu0
        %v8048 = vadd.f32 %v7924, %v8047
        %v8049 = vpop.f32.mrb[0].mxu0
        %v8050 = vpop.f32.mrb[0].mxu0
        %v8051 = vadd.f32 %v7924, %v8050
        %v8052 = vpop.f32.mrb[0].mxu0
        %8053 = vmatprep.mubr.bf16.mxu0 0
        %8054 = vmatmul.mubr.bf16.gmra.mrb[0].mxu0 %v7877
        %v8055 = vpop.f32.mrb[0].mxu0
        %v8056 = vadd.f32 %v7924, %v8055
        %v8057 = vpop.f32.mrb[0].mxu0
        %v8058 = vpop.f32.mrb[0].mxu0
        %v8059 = vadd.f32 %v7924, %v8058
        %v8060 = vpop.f32.mrb[0].mxu0
        %8061 = vmatprep.mubr.bf16.mxu0 0
        %8062 = vmatmul.mubr.bf16.gmra.mrb[0].mxu0 %v7878
        %v8063 = vpop.f32.mrb[0].mxu0
        %v8064 = vadd.f32 %v7924, %v8063
        %v8065 = vpop.f32.mrb[0].mxu0
        %v8066 = vpop.f32.mrb[0].mxu0
        %v8067 = vadd.f32 %v7924, %v8066
        %v8068 = vpop.f32.mrb[0].mxu0
        %8069 = vmatprep.mubr.bf16.mxu0 0
        %8070 = vmatmul.mubr.bf16.gmra.mrb[0].mxu0 %v7879
        %v8071 = vpop.f32.mrb[0].mxu0
        %v8072 = vadd.f32 %v7924, %v8071
        %v8073 = vpop.f32.mrb[0].mxu0
        %v8074 = vpop.f32.mrb[0].mxu0
        %v8075 = vadd.f32 %v7924, %v8074
        %v8076 = vpop.f32.mrb[0].mxu0
        %8077 = vmatprep.mubr.bf16.mxu0 0
        %8078 = vmatmul.mubr.bf16.gmra.mrb[0].mxu0 %v7880
        %v8079 = vpop.f32.mrb[0].mxu0
        %v8080 = vadd.f32 %v7924, %v8079
        %v8081 = vpop.f32.mrb[0].mxu0
        %v8082 = vpop.f32.mrb[0].mxu0
        %v8083 = vadd.f32 %v7924, %v8082
        %v8084 = vpop.f32.mrb[0].mxu0
        %8085 = vmatprep.mubr.bf16.mxu0 0
        %8086 = vmatmul.mubr.bf16.gmra.mrb[0].mxu0 %v7881
        %v8087 = vpop.f32.mrb[0].mxu0
        %v8088 = vadd.f32 %v7924, %v8087
        %v8089 = vpop.f32.mrb[0].mxu0
        %v8090 = vpop.f32.mrb[0].mxu0
        %v8091 = vadd.f32 %v7924, %v8090
        %v8092 = vpop.f32.mrb[0].mxu0
        %8093 = vmatprep.mubr.bf16.mxu0 0
        %8094 = vmatmul.mubr.bf16.gmra.mrb[0].mxu0 %v7882
        %v8095 = vpop.f32.mrb[0].mxu0
        %v8096 = vadd.f32 %v7924, %v8095
        %v8097 = vpop.f32.mrb[0].mxu0
        %v8098 = vpop.f32.mrb[0].mxu0
        %v8099 = vadd.f32 %v7924, %v8098
        %v8100 = vpop.f32.mrb[0].mxu0
        %8101 = vmatprep.mubr.bf16.mxu0 0
        %8102 = vmatmul.mubr.bf16.gmra.mrb[0].mxu0 %v7883
        %v8103 = vpop.f32.mrb[0].mxu0
        %v8104 = vadd.f32 %v7924, %v8103
        %v8105 = vpop.f32.mrb[0].mxu0
        %v8106 = vpop.f32.mrb[0].mxu0
        %v8107 = vadd.f32 %v7924, %v8106
        %v8108 = vpop.f32.mrb[0].mxu0
        %8109 = vmatprep.mubr.bf16.mxu0 0
        %8110 = vmatmul.mubr.bf16.gmra.mrb[0].mxu0 %v7884
        %v8111 = vpop.f32.mrb[0].mxu0
        %v8112 = vadd.f32 %v7924, %v8111
        %v8113 = vpop.f32.mrb[0].mxu0
        %v8114 = vpop.f32.mrb[0].mxu0
        %v8115 = vadd.f32 %v7924, %v8114
        %v8116 = vpop.f32.mrb[0].mxu0
        %8117 = vmatprep.mubr.bf16.mxu0 0
        %8118 = vmatmul.mubr.bf16.gmra.mrb[0].mxu0 %v7885
        %v8119 = vpop.f32.mrb[0].mxu0
        %v8120 = vadd.f32 %v7924, %v8119
        %v8121 = vpop.f32.mrb[0].mxu0
        %v8122 = vpop.f32.mrb[0].mxu0
        %v8123 = vadd.f32 %v7924, %v8122
        %v8124 = vpop.f32.mrb[0].mxu0
        %8125 = vmatprep.mubr.bf16.mxu0 0
        %8126 = vmatmul.mubr.bf16.gmra.mrb[0].mxu0 %v7886
        %v8127 = vpop.f32.mrb[0].mxu0
        %v8128 = vadd.f32 %v7924, %v8127
        %v8129 = vpop.f32.mrb[0].mxu0
        %v8130 = vpop.f32.mrb[0].mxu0
        %v8131 = vadd.f32 %v7924, %v8130
        %v8132 = vpop.f32.mrb[0].mxu0
        %8133 = vmatprep.mubr.bf16.mxu0 0
        %8134 = vmatmul.mubr.bf16.gmra.mrb[0].mxu0 %v7887
        %v8135 = vpop.f32.mrb[0].mxu0
        %v8136 = vadd.f32 %v7924, %v8135
        %v8137 = vpop.f32.mrb[0].mxu0
        %v8138 = vpop.f32.mrb[0].mxu0
        %v8139 = vadd.f32 %v7924, %v8138
        %v8140 = vpop.f32.mrb[0].mxu0
        %8141 = vmatprep.mubr.bf16.mxu0 0
        %8142 = vmatmul.mubr.bf16.gmra.mrb[0].mxu0 %v7888
        %v8143 = vpop.f32.mrb[0].mxu0
        %v8144 = vadd.f32 %v7924, %v8143
        %v8145 = vpop.f32.mrb[0].mxu0
        %v8146 = vpop.f32.mrb[0].mxu0
        %v8147 = vadd.f32 %v7924, %v8146
        %v8148 = vpop.f32.mrb[0].mxu0
        %8149 = vmatprep.mubr.bf16.mxu0 0
        %8150 = vmatmul.mubr.bf16.gmra.mrb[0].mxu0 %v7889
        %v8151 = vpop.f32.mrb[0].mxu0
        %v8152 = vadd.f32 %v7924, %v8151
        %v8153 = vpop.f32.mrb[0].mxu0
        %v8154 = vpop.f32.mrb[0].mxu0
        %v8155 = vadd.f32 %v7924, %v8154
        %v8156 = vpop.f32.mrb[0].mxu0
        %8157 = vmatprep.mubr.bf16.mxu0 0
        %8158 = vmatmul.mubr.bf16.gmra.mrb[0].mxu0 %v7890
        %v8159 = vpop.f32.mrb[0].mxu0
        %v8160 = vadd.f32 %v7924, %v8159
        %v8161 = vpop.f32.mrb[0].mxu0
        %v8162 = vpop.f32.mrb[0].mxu0
        %v8163 = vadd.f32 %v7924, %v8162
        %v8164 = vpop.f32.mrb[0].mxu0
        %8165 = vmatprep.mubr.bf16.mxu0 0
        %8166 = vmatmul.mubr.bf16.gmra.mrb[0].mxu0 %v7891
        %v8167 = vpop.f32.mrb[0].mxu0
        %v8168 = vadd.f32 %v7924, %v8167
        %v8169 = vpop.f32.mrb[0].mxu0
        %v8170 = vpop.f32.mrb[0].mxu0
        %v8171 = vadd.f32 %v7924, %v8170
        %v8172 = vpop.f32.mrb[0].mxu0
        %8173 = vmatprep.mubr.bf16.mxu0 0
        %8174 = vmatmul.mubr.bf16.gmra.mrb[0].mxu0 %v7892
        %v8175 = vpop.f32.mrb[0].mxu0
        %v8176 = vadd.f32 %v7924, %v8175
        %v8177 = vpop.f32.mrb[0].mxu0
        %v8178 = vpop.f32.mrb[0].mxu0
        %v8179 = vadd.f32 %v7924, %v8178
        %v8180 = vpop.f32.mrb[0].mxu0
        %8181 = vmatprep.mubr.bf16.mxu0 0
        %8182 = vmatmul.mubr.bf16.gmra.mrb[0].mxu0 %v7893
        %v8183 = vpop.f32.mrb[0].mxu0
        %v8184 = vadd.f32 %v7924, %v8183
        %v8185 = vpop.f32.mrb[0].mxu0
        %v8186 = vpop.f32.mrb[0].mxu0
        %v8187 = vadd.f32 %v7924, %v8186
        %v8188 = vpop.f32.mrb[0].mxu0
        %8189 = vmatprep.mubr.bf16.mxu0 0
        %8190 = vmatmul.mubr.bf16.gmra.mrb[0].mxu0 %v7894
        %v8191 = vpop.f32.mrb[0].mxu0
        %v8192 = vadd.f32 %v7924, %v8191
        %v8193 = vpop.f32.mrb[0].mxu0
        %v8194 = vpop.f32.mrb[0].mxu0
        %v8195 = vadd.f32 %v7924, %v8194
        %v8196 = vpop.f32.mrb[0].mxu0
        %8197 = vmatprep.mubr.bf16.mxu0 0
        %8198 = vmatmul.mubr.bf16.gmra.mrb[0].mxu0 %v7895
        %v8199 = vpop.f32.mrb[0].mxu0
        %v8200 = vadd.f32 %v7924, %v8199
        %v8201 = vpop.f32.mrb[0].mxu0
        %v8202 = vpop.f32.mrb[0].mxu0
        %v8203 = vadd.f32 %v7924, %v8202
        %v8204 = vpop.f32.mrb[0].mxu0
        %8205 = vmatprep.mubr.bf16.mxu0 0
        %8206 = vmatmul.mubr.bf16.gmra.mrb[0].mxu0 %v7896
        %v8207 = vpop.f32.mrb[0].mxu0
        %v8208 = vadd.f32 %v7924, %v8207
        %v8209 = vpop.f32.mrb[0].mxu0
        %v8210 = vpop.f32.mrb[0].mxu0
        %v8211 = vadd.f32 %v7924, %v8210
        %v8212 = vpop.f32.mrb[0].mxu0
        %8213 = vmatprep.mubr.bf16.mxu0 0
        %8214 = vmatmul.mubr.bf16.gmra.mrb[0].mxu0 %v7897
        %v8215 = vpop.f32.mrb[0].mxu0
        %v8216 = vadd.f32 %v7924, %v8215
        %v8217 = vpop.f32.mrb[0].mxu0
        %v8218 = vpop.f32.mrb[0].mxu0
        %v8219 = vadd.f32 %v7924, %v8218
        %v8220 = vpop.f32.mrb[0].mxu0
        %8221 = vmatprep.mubr.bf16.mxu0 0
        %8222 = vmatmul.mubr.bf16.gmra.mrb[0].mxu0 %v7898
        %v8223 = vpop.f32.mrb[0].mxu0
        %v8224 = vadd.f32 %v7924, %v8223
        %v8225 = vpop.f32.mrb[0].mxu0
        %v8226 = vpop.f32.mrb[0].mxu0
        %v8227 = vadd.f32 %v7924, %v8226
        %v8228 = vpop.f32.mrb[0].mxu0
        %8229 = vmatprep.mubr.bf16.mxu0 0
        %8230 = vmatmul.mubr.bf16.gmra.mrb[0].mxu0 %v7899
        %v8231 = vpop.f32.mrb[0].mxu0
        %v8232 = vadd.f32 %v7924, %v8231
        %v8233 = vpop.f32.mrb[0].mxu0
        %v8234 = vpop.f32.mrb[0].mxu0
        %v8235 = vadd.f32 %v7924, %v8234
        %v8236 = vpop.f32.mrb[0].mxu0
        %8237 = vmatprep.mubr.bf16.mxu0 0
        %8238 = vmatmul.mubr.bf16.gmra.mrb[0].mxu0 %v7900
        %v8239 = vpop.f32.mrb[0].mxu0
        %v8240 = vadd.f32 %v7924, %v8239
        %v8241 = vpop.f32.mrb[0].mxu0
        %v8242 = vpop.f32.mrb[0].mxu0
        %v8243 = vadd.f32 %v7924, %v8242
        %v8244 = vpop.f32.mrb[0].mxu0
        %8245 = vmatprep.mubr.bf16.mxu0 0
        %8246 = vmatmul.mubr.bf16.gmra.mrb[0].mxu0 %v7901
        %v8247 = vpop.f32.mrb[0].mxu0
        %v8248 = vadd.f32 %v7924, %v8247
        %v8249 = vpop.f32.mrb[0].mxu0
        %v8250 = vpop.f32.mrb[0].mxu0
        %v8251 = vadd.f32 %v7924, %v8250
        %v8252 = vpop.f32.mrb[0].mxu0
        %8253 = vmatprep.mubr.bf16.mxu0 0
        %8254 = vmatmul.mubr.bf16.gmra.mrb[0].mxu0 %v7902
        %v8255 = vpop.f32.mrb[0].mxu0
        %v8256 = vadd.f32 %v7924, %v8255
        %v8257 = vpop.f32.mrb[0].mxu0
        %v8258 = vpop.f32.mrb[0].mxu0
        %v8259 = vadd.f32 %v7924, %v8258
        %v8260 = vpop.f32.mrb[0].mxu0
        %8261 = vdwg.mxu0
        %v8262 = vmax.f32 %v8008, 0.0
        %v8263 = vmax.f32 %v8011, 0.0
        %v8264 = vmax.f32 %v8016, 0.0
        %v8265 = vmax.f32 %v8019, 0.0
        %v8266 = vmax.f32 %v8024, 0.0
        %v8267 = vmax.f32 %v8027, 0.0
        %v8268 = vmax.f32 %v8032, 0.0
        %v8269 = vmax.f32 %v8035, 0.0
        %v8270 = vmax.f32 %v8040, 0.0
        %v8271 = vmax.f32 %v8043, 0.0
        %v8272 = vmax.f32 %v8048, 0.0
        %v8273 = vmax.f32 %v8051, 0.0
        %v8274 = vmax.f32 %v8056, 0.0
        %v8275 = vmax.f32 %v8059, 0.0
        %v8276 = vmax.f32 %v8064, 0.0
        %v8277 = vmax.f32 %v8067, 0.0
        %v8278 = vmax.f32 %v8072, 0.0
        %v8279 = vmax.f32 %v8075, 0.0
        %v8280 = vmax.f32 %v8080, 0.0
        %v8281 = vmax.f32 %v8083, 0.0
        %v8282 = vmax.f32 %v8088, 0.0
        %v8283 = vmax.f32 %v8091, 0.0
        %v8284 = vmax.f32 %v8096, 0.0
        %v8285 = vmax.f32 %v8099, 0.0
        %v8286 = vmax.f32 %v8104, 0.0
        %v8287 = vmax.f32 %v8107, 0.0
        %v8288 = vmax.f32 %v8112, 0.0
        %v8289 = vmax.f32 %v8115, 0.0
        %v8290 = vmax.f32 %v8120, 0.0
        %v8291 = vmax.f32 %v8123, 0.0
        %v8292 = vmax.f32 %v8128, 0.0
        %v8293 = vmax.f32 %v8131, 0.0
        %v8294 = vmax.f32 %v8136, 0.0
        %v8295 = vmax.f32 %v8139, 0.0
        %v8296 = vmax.f32 %v8144, 0.0
        %v8297 = vmax.f32 %v8147, 0.0
        %v8298 = vmax.f32 %v8152, 0.0
        %v8299 = vmax.f32 %v8155, 0.0
        %v8300 = vmax.f32 %v8160, 0.0
        %v8301 = vmax.f32 %v8163, 0.0
        %v8302 = vmax.f32 %v8168, 0.0
        %v8303 = vmax.f32 %v8171, 0.0
        %v8304 = vmax.f32 %v8176, 0.0
        %v8305 = vmax.f32 %v8179, 0.0
        %v8306 = vmax.f32 %v8184, 0.0
        %v8307 = vmax.f32 %v8187, 0.0
        %v8308 = vmax.f32 %v8192, 0.0
        %v8309 = vmax.f32 %v8195, 0.0
        %v8310 = vmax.f32 %v8200, 0.0
        %v8311 = vmax.f32 %v8203, 0.0
        %v8312 = vmax.f32 %v8208, 0.0
        %v8313 = vmax.f32 %v8211, 0.0
        %v8314 = vmax.f32 %v8216, 0.0
        %v8315 = vmax.f32 %v8219, 0.0
        %v8316 = vmax.f32 %v8224, 0.0
        %v8317 = vmax.f32 %v8227, 0.0
        %v8318 = vmax.f32 %v8232, 0.0
        %v8319 = vmax.f32 %v8235, 0.0
        %v8320 = vmax.f32 %v8240, 0.0
        %v8321 = vmax.f32 %v8243, 0.0
        %v8322 = vmax.f32 %v8248, 0.0
        %v8323 = vmax.f32 %v8251, 0.0
        %v8324 = vmax.f32 %v8256, 0.0
        %v8325 = vmax.f32 %v8259, 0.0
        %v8326 = vpack.c.bf16 %v8263, %v8262
        %v8327 = vpack.c.bf16 %v8265, %v8264
        %v8328 = vpack.c.bf16 %v8267, %v8266
        %v8329 = vpack.c.bf16 %v8269, %v8268
        %v8330 = vpack.c.bf16 %v8271, %v8270
        %v8331 = vpack.c.bf16 %v8273, %v8272
        %v8332 = vpack.c.bf16 %v8275, %v8274
        %v8333 = vpack.c.bf16 %v8277, %v8276
        %v8334 = vpack.c.bf16 %v8279, %v8278
        %v8335 = vpack.c.bf16 %v8281, %v8280
        %v8336 = vpack.c.bf16 %v8283, %v8282
        %v8337 = vpack.c.bf16 %v8285, %v8284
        %v8338 = vpack.c.bf16 %v8287, %v8286
        %v8339 = vpack.c.bf16 %v8289, %v8288
        %v8340 = vpack.c.bf16 %v8291, %v8290
        %v8341 = vpack.c.bf16 %v8293, %v8292
        %v8342 = vpack.c.bf16 %v8295, %v8294
        %v8343 = vpack.c.bf16 %v8297, %v8296
        %v8344 = vpack.c.bf16 %v8299, %v8298
        %v8345 = vpack.c.bf16 %v8301, %v8300
        %v8346 = vpack.c.bf16 %v8303, %v8302
        %v8347 = vpack.c.bf16 %v8305, %v8304
        %v8348 = vpack.c.bf16 %v8307, %v8306
        %v8349 = vpack.c.bf16 %v8309, %v8308
        %v8350 = vpack.c.bf16 %v8311, %v8310
        %v8351 = vpack.c.bf16 %v8313, %v8312
        %v8352 = vpack.c.bf16 %v8315, %v8314
        %v8353 = vpack.c.bf16 %v8317, %v8316
        %v8354 = vpack.c.bf16 %v8319, %v8318
        %v8355 = vpack.c.bf16 %v8321, %v8320
        %v8356 = vpack.c.bf16 %v8323, %v8322
        %v8357 = vpack.c.bf16 %v8325, %v8324
        %s8358 = scalar_lea.vmem %s8, 256
        %v8359 = vld [vmem:[%s8358] sm:$0xf]
        %v8360 = vld [vmem:[%s8358 + $0x4] sm:$0xf]
        %v8361 = vld [vmem:[%s8358 + $0x8] sm:$0xf]
        %v8362 = vld [vmem:[%s8358 + $0xc] sm:$0xf]
        %v8363 = vld [vmem:[%s8358 + $0x10] sm:$0xf]
        %v8364 = vld [vmem:[%s8358 + $0x14] sm:$0xf]
        %v8365 = vld [vmem:[%s8358 + $0x18] sm:$0xf]
        %v8366 = vld [vmem:[%s8358 + $0x1c] sm:$0xf]
        %v8367 = vld [vmem:[%s8358 + $0x20] sm:$0xf]
        %v8368 = vld [vmem:[%s8358 + $0x24] sm:$0xf]
        %v8369 = vld [vmem:[%s8358 + $0x28] sm:$0xf]
        %v8370 = vld [vmem:[%s8358 + $0x2c] sm:$0xf]
        %v8371 = vld [vmem:[%s8358 + $0x30] sm:$0xf]
        %v8372 = vld [vmem:[%s8358 + $0x34] sm:$0xf]
        %v8373 = vld [vmem:[%s8358 + $0x38] sm:$0xf]
        %v8374 = vld [vmem:[%s8358 + $0x3c] sm:$0xf]
        %v8375 = vld [vmem:[%s9 + $0x4] sm:$0x1]
        %v8376 = vlaneseq
        %v8377 = vshrl.u32 %v8376, 7
        %v8378 = vsub.s32 0, %v8377
        %v8379 = vrot.slane %v8375, %v8378
        %v8396 = vunpack.c.l.b16 %v8359
        %v8397 = vunpack.c.l.b16 %v8360
        %v8398 = vunpack.c.l.b16 %v8361
        %v8399 = vunpack.c.l.b16 %v8362
        %v8400 = vunpack.c.l.b16 %v8363
        %v8401 = vunpack.c.l.b16 %v8364
        %v8402 = vunpack.c.l.b16 %v8365
        %v8403 = vunpack.c.l.b16 %v8366
        %v8404 = vunpack.c.l.b16 %v8367
        %v8405 = vunpack.c.l.b16 %v8368
        %v8406 = vunpack.c.l.b16 %v8369
        %v8407 = vunpack.c.l.b16 %v8370
        %v8408 = vunpack.c.l.b16 %v8371
        %v8409 = vunpack.c.l.b16 %v8372
        %v8410 = vunpack.c.l.b16 %v8373
        %v8411 = vunpack.c.l.b16 %v8374
        %v8412 = vpack.c.b16 %v8397, %v8396
        %v8413 = vpack.c.b16 %v8399, %v8398
        %v8414 = vpack.c.b16 %v8401, %v8400
        %v8415 = vpack.c.b16 %v8403, %v8402
        %v8416 = vpack.c.b16 %v8405, %v8404
        %v8417 = vpack.c.b16 %v8407, %v8406
        %v8418 = vpack.c.b16 %v8409, %v8408
        %v8419 = vpack.c.b16 %v8411, %v8410
        %8428 = vmatprep.subr.bf16.mxu0 0
        %8429 = vmatpush1.bf16.msra.mxu0 %v8412
        %8430 = vmatprep.subr.bf16.mxu0 0
        %8431 = vmatpush1.bf16.msra.mxu0 %v8413
        %8432 = vmatprep.subr.bf16.mxu0 0
        %8433 = vmatpush1.bf16.msra.mxu0 %v8414
        %8434 = vmatprep.subr.bf16.mxu0 0
        %8435 = vmatpush1.bf16.msra.mxu0 %v8415
        %8436 = vmatprep.subr.bf16.mxu0 0
        %8437 = vmatpush1.bf16.msra.mxu0 %v8416
        %8438 = vmatprep.subr.bf16.mxu0 0
        %8439 = vmatpush1.bf16.msra.mxu0 %v8417
        %8440 = vmatprep.subr.bf16.mxu0 0
        %8441 = vmatpush1.bf16.msra.mxu0 %v8418
        %8442 = vmatprep.subr.bf16.mxu0 0
        %8443 = vmatpush1.bf16.msra.mxu0 %v8419
        %8444 = vmatprep.subr.bf16.mxu0 0
        %8445 = vmatpush1.bf16.msra.mxu0 0
        %8446 = vmatprep.subr.bf16.mxu0 0
        %8447 = vmatpush1.bf16.msra.mxu0 0
        %8448 = vmatprep.subr.bf16.mxu0 0
        %8449 = vmatpush1.bf16.msra.mxu0 0
        %8450 = vmatprep.subr.bf16.mxu0 0
        %8451 = vmatpush1.bf16.msra.mxu0 0
        %8452 = vmatprep.subr.bf16.mxu0 0
        %8453 = vmatpush1.bf16.msra.mxu0 0
        %8454 = vmatprep.subr.bf16.mxu0 0
        %8455 = vmatpush1.bf16.msra.mxu0 0
        %8456 = vmatprep.subr.bf16.mxu0 0
        %8457 = vmatpush1.bf16.msra.mxu0 0
        %8458 = vmatprep.subr.bf16.mxu0 0
        %8459 = vmatpush1.bf16.msra.mxu0 0
        %8460 = vmatprep.mubr.bf16.mxu0 0
        %8461 = vmatmul.mubr.bf16.gmra.mrb[0].mxu0 %v8326
        %v8462 = vpop.f32.mrb[0].mxu0
        %v8463 = vadd.f32 %v8379, %v8462
        %v8464 = vpop.f32.mrb[0].mxu0
        %v8465 = vpop.f32.mrb[0].mxu0
        %v8466 = vadd.f32 %v8379, %v8465
        %v8467 = vpop.f32.mrb[0].mxu0
        %8468 = vmatprep.mubr.bf16.mxu0 0
        %8469 = vmatmul.mubr.bf16.gmra.mrb[0].mxu0 %v8327
        %v8470 = vpop.f32.mrb[0].mxu0
        %v8471 = vadd.f32 %v8379, %v8470
        %v8472 = vpop.f32.mrb[0].mxu0
        %v8473 = vpop.f32.mrb[0].mxu0
        %v8474 = vadd.f32 %v8379, %v8473
        %v8475 = vpop.f32.mrb[0].mxu0
        %8476 = vmatprep.mubr.bf16.mxu0 0
        %8477 = vmatmul.mubr.bf16.gmra.mrb[0].mxu0 %v8328
        %v8478 = vpop.f32.mrb[0].mxu0
        %v8479 = vadd.f32 %v8379, %v8478
        %v8480 = vpop.f32.mrb[0].mxu0
        %v8481 = vpop.f32.mrb[0].mxu0
        %v8482 = vadd.f32 %v8379, %v8481
        %v8483 = vpop.f32.mrb[0].mxu0
        %8484 = vmatprep.mubr.bf16.mxu0 0
        %8485 = vmatmul.mubr.bf16.gmra.mrb[0].mxu0 %v8329
        %v8486 = vpop.f32.mrb[0].mxu0
        %v8487 = vadd.f32 %v8379, %v8486
        %v8488 = vpop.f32.mrb[0].mxu0
        %v8489 = vpop.f32.mrb[0].mxu0
        %v8490 = vadd.f32 %v8379, %v8489
        %v8491 = vpop.f32.mrb[0].mxu0
        %8492 = vmatprep.mubr.bf16.mxu0 0
        %8493 = vmatmul.mubr.bf16.gmra.mrb[0].mxu0 %v8330
        %v8494 = vpop.f32.mrb[0].mxu0
        %v8495 = vadd.f32 %v8379, %v8494
        %v8496 = vpop.f32.mrb[0].mxu0
        %v8497 = vpop.f32.mrb[0].mxu0
        %v8498 = vadd.f32 %v8379, %v8497
        %v8499 = vpop.f32.mrb[0].mxu0
        %8500 = vmatprep.mubr.bf16.mxu0 0
        %8501 = vmatmul.mubr.bf16.gmra.mrb[0].mxu0 %v8331
        %v8502 = vpop.f32.mrb[0].mxu0
        %v8503 = vadd.f32 %v8379, %v8502
        %v8504 = vpop.f32.mrb[0].mxu0
        %v8505 = vpop.f32.mrb[0].mxu0
        %v8506 = vadd.f32 %v8379, %v8505
        %v8507 = vpop.f32.mrb[0].mxu0
        %8508 = vmatprep.mubr.bf16.mxu0 0
        %8509 = vmatmul.mubr.bf16.gmra.mrb[0].mxu0 %v8332
        %v8510 = vpop.f32.mrb[0].mxu0
        %v8511 = vadd.f32 %v8379, %v8510
        %v8512 = vpop.f32.mrb[0].mxu0
        %v8513 = vpop.f32.mrb[0].mxu0
        %v8514 = vadd.f32 %v8379, %v8513
        %v8515 = vpop.f32.mrb[0].mxu0
        %8516 = vmatprep.mubr.bf16.mxu0 0
        %8517 = vmatmul.mubr.bf16.gmra.mrb[0].mxu0 %v8333
        %v8518 = vpop.f32.mrb[0].mxu0
        %v8519 = vadd.f32 %v8379, %v8518
        %v8520 = vpop.f32.mrb[0].mxu0
        %v8521 = vpop.f32.mrb[0].mxu0
        %v8522 = vadd.f32 %v8379, %v8521
        %v8523 = vpop.f32.mrb[0].mxu0
        %8524 = vmatprep.mubr.bf16.mxu0 0
        %8525 = vmatmul.mubr.bf16.gmra.mrb[0].mxu0 %v8334
        %v8526 = vpop.f32.mrb[0].mxu0
        %v8527 = vadd.f32 %v8379, %v8526
        %v8528 = vpop.f32.mrb[0].mxu0
        %v8529 = vpop.f32.mrb[0].mxu0
        %v8530 = vadd.f32 %v8379, %v8529
        %v8531 = vpop.f32.mrb[0].mxu0
        %8532 = vmatprep.mubr.bf16.mxu0 0
        %8533 = vmatmul.mubr.bf16.gmra.mrb[0].mxu0 %v8335
        %v8534 = vpop.f32.mrb[0].mxu0
        %v8535 = vadd.f32 %v8379, %v8534
        %v8536 = vpop.f32.mrb[0].mxu0
        %v8537 = vpop.f32.mrb[0].mxu0
        %v8538 = vadd.f32 %v8379, %v8537
        %v8539 = vpop.f32.mrb[0].mxu0
        %8540 = vmatprep.mubr.bf16.mxu0 0
        %8541 = vmatmul.mubr.bf16.gmra.mrb[0].mxu0 %v8336
        %v8542 = vpop.f32.mrb[0].mxu0
        %v8543 = vadd.f32 %v8379, %v8542
        %v8544 = vpop.f32.mrb[0].mxu0
        %v8545 = vpop.f32.mrb[0].mxu0
        %v8546 = vadd.f32 %v8379, %v8545
        %v8547 = vpop.f32.mrb[0].mxu0
        %8548 = vmatprep.mubr.bf16.mxu0 0
        %8549 = vmatmul.mubr.bf16.gmra.mrb[0].mxu0 %v8337
        %v8550 = vpop.f32.mrb[0].mxu0
        %v8551 = vadd.f32 %v8379, %v8550
        %v8552 = vpop.f32.mrb[0].mxu0
        %v8553 = vpop.f32.mrb[0].mxu0
        %v8554 = vadd.f32 %v8379, %v8553
        %v8555 = vpop.f32.mrb[0].mxu0
        %8556 = vmatprep.mubr.bf16.mxu0 0
        %8557 = vmatmul.mubr.bf16.gmra.mrb[0].mxu0 %v8338
        %v8558 = vpop.f32.mrb[0].mxu0
        %v8559 = vadd.f32 %v8379, %v8558
        %v8560 = vpop.f32.mrb[0].mxu0
        %v8561 = vpop.f32.mrb[0].mxu0
        %v8562 = vadd.f32 %v8379, %v8561
        %v8563 = vpop.f32.mrb[0].mxu0
        %8564 = vmatprep.mubr.bf16.mxu0 0
        %8565 = vmatmul.mubr.bf16.gmra.mrb[0].mxu0 %v8339
        %v8566 = vpop.f32.mrb[0].mxu0
        %v8567 = vadd.f32 %v8379, %v8566
        %v8568 = vpop.f32.mrb[0].mxu0
        %v8569 = vpop.f32.mrb[0].mxu0
        %v8570 = vadd.f32 %v8379, %v8569
        %v8571 = vpop.f32.mrb[0].mxu0
        %8572 = vmatprep.mubr.bf16.mxu0 0
        %8573 = vmatmul.mubr.bf16.gmra.mrb[0].mxu0 %v8340
        %v8574 = vpop.f32.mrb[0].mxu0
        %v8575 = vadd.f32 %v8379, %v8574
        %v8576 = vpop.f32.mrb[0].mxu0
        %v8577 = vpop.f32.mrb[0].mxu0
        %v8578 = vadd.f32 %v8379, %v8577
        %v8579 = vpop.f32.mrb[0].mxu0
        %8580 = vmatprep.mubr.bf16.mxu0 0
        %8581 = vmatmul.mubr.bf16.gmra.mrb[0].mxu0 %v8341
        %v8582 = vpop.f32.mrb[0].mxu0
        %v8583 = vadd.f32 %v8379, %v8582
        %v8584 = vpop.f32.mrb[0].mxu0
        %v8585 = vpop.f32.mrb[0].mxu0
        %v8586 = vadd.f32 %v8379, %v8585
        %v8587 = vpop.f32.mrb[0].mxu0
        %8588 = vmatprep.mubr.bf16.mxu0 0
        %8589 = vmatmul.mubr.bf16.gmra.mrb[0].mxu0 %v8342
        %v8590 = vpop.f32.mrb[0].mxu0
        %v8591 = vadd.f32 %v8379, %v8590
        %v8592 = vpop.f32.mrb[0].mxu0
        %v8593 = vpop.f32.mrb[0].mxu0
        %v8594 = vadd.f32 %v8379, %v8593
        %v8595 = vpop.f32.mrb[0].mxu0
        %8596 = vmatprep.mubr.bf16.mxu0 0
        %8597 = vmatmul.mubr.bf16.gmra.mrb[0].mxu0 %v8343
        %v8598 = vpop.f32.mrb[0].mxu0
        %v8599 = vadd.f32 %v8379, %v8598
        %v8600 = vpop.f32.mrb[0].mxu0
        %v8601 = vpop.f32.mrb[0].mxu0
        %v8602 = vadd.f32 %v8379, %v8601
        %v8603 = vpop.f32.mrb[0].mxu0
        %8604 = vmatprep.mubr.bf16.mxu0 0
        %8605 = vmatmul.mubr.bf16.gmra.mrb[0].mxu0 %v8344
        %v8606 = vpop.f32.mrb[0].mxu0
        %v8607 = vadd.f32 %v8379, %v8606
        %v8608 = vpop.f32.mrb[0].mxu0
        %v8609 = vpop.f32.mrb[0].mxu0
        %v8610 = vadd.f32 %v8379, %v8609
        %v8611 = vpop.f32.mrb[0].mxu0
        %8612 = vmatprep.mubr.bf16.mxu0 0
        %8613 = vmatmul.mubr.bf16.gmra.mrb[0].mxu0 %v8345
        %v8614 = vpop.f32.mrb[0].mxu0
        %v8615 = vadd.f32 %v8379, %v8614
        %v8616 = vpop.f32.mrb[0].mxu0
        %v8617 = vpop.f32.mrb[0].mxu0
        %v8618 = vadd.f32 %v8379, %v8617
        %v8619 = vpop.f32.mrb[0].mxu0
        %8620 = vmatprep.mubr.bf16.mxu0 0
        %8621 = vmatmul.mubr.bf16.gmra.mrb[0].mxu0 %v8346
        %v8622 = vpop.f32.mrb[0].mxu0
        %v8623 = vadd.f32 %v8379, %v8622
        %v8624 = vpop.f32.mrb[0].mxu0
        %v8625 = vpop.f32.mrb[0].mxu0
        %v8626 = vadd.f32 %v8379, %v8625
        %v8627 = vpop.f32.mrb[0].mxu0
        %8628 = vmatprep.mubr.bf16.mxu0 0
        %8629 = vmatmul.mubr.bf16.gmra.mrb[0].mxu0 %v8347
        %v8630 = vpop.f32.mrb[0].mxu0
        %v8631 = vadd.f32 %v8379, %v8630
        %v8632 = vpop.f32.mrb[0].mxu0
        %v8633 = vpop.f32.mrb[0].mxu0
        %v8634 = vadd.f32 %v8379, %v8633
        %v8635 = vpop.f32.mrb[0].mxu0
        %8636 = vmatprep.mubr.bf16.mxu0 0
        %8637 = vmatmul.mubr.bf16.gmra.mrb[0].mxu0 %v8348
        %v8638 = vpop.f32.mrb[0].mxu0
        %v8639 = vadd.f32 %v8379, %v8638
        %v8640 = vpop.f32.mrb[0].mxu0
        %v8641 = vpop.f32.mrb[0].mxu0
        %v8642 = vadd.f32 %v8379, %v8641
        %v8643 = vpop.f32.mrb[0].mxu0
        %8644 = vmatprep.mubr.bf16.mxu0 0
        %8645 = vmatmul.mubr.bf16.gmra.mrb[0].mxu0 %v8349
        %v8646 = vpop.f32.mrb[0].mxu0
        %v8647 = vadd.f32 %v8379, %v8646
        %v8648 = vpop.f32.mrb[0].mxu0
        %v8649 = vpop.f32.mrb[0].mxu0
        %v8650 = vadd.f32 %v8379, %v8649
        %v8651 = vpop.f32.mrb[0].mxu0
        %8652 = vmatprep.mubr.bf16.mxu0 0
        %8653 = vmatmul.mubr.bf16.gmra.mrb[0].mxu0 %v8350
        %v8654 = vpop.f32.mrb[0].mxu0
        %v8655 = vadd.f32 %v8379, %v8654
        %v8656 = vpop.f32.mrb[0].mxu0
        %v8657 = vpop.f32.mrb[0].mxu0
        %v8658 = vadd.f32 %v8379, %v8657
        %v8659 = vpop.f32.mrb[0].mxu0
        %8660 = vmatprep.mubr.bf16.mxu0 0
        %8661 = vmatmul.mubr.bf16.gmra.mrb[0].mxu0 %v8351
        %v8662 = vpop.f32.mrb[0].mxu0
        %v8663 = vadd.f32 %v8379, %v8662
        %v8664 = vpop.f32.mrb[0].mxu0
        %v8665 = vpop.f32.mrb[0].mxu0
        %v8666 = vadd.f32 %v8379, %v8665
        %v8667 = vpop.f32.mrb[0].mxu0
        %8668 = vmatprep.mubr.bf16.mxu0 0
        %8669 = vmatmul.mubr.bf16.gmra.mrb[0].mxu0 %v8352
        %v8670 = vpop.f32.mrb[0].mxu0
        %v8671 = vadd.f32 %v8379, %v8670
        %v8672 = vpop.f32.mrb[0].mxu0
        %v8673 = vpop.f32.mrb[0].mxu0
        %v8674 = vadd.f32 %v8379, %v8673
        %v8675 = vpop.f32.mrb[0].mxu0
        %8676 = vmatprep.mubr.bf16.mxu0 0
        %8677 = vmatmul.mubr.bf16.gmra.mrb[0].mxu0 %v8353
        %v8678 = vpop.f32.mrb[0].mxu0
        %v8679 = vadd.f32 %v8379, %v8678
        %v8680 = vpop.f32.mrb[0].mxu0
        %v8681 = vpop.f32.mrb[0].mxu0
        %v8682 = vadd.f32 %v8379, %v8681
        %v8683 = vpop.f32.mrb[0].mxu0
        %8684 = vmatprep.mubr.bf16.mxu0 0
        %8685 = vmatmul.mubr.bf16.gmra.mrb[0].mxu0 %v8354
        %v8686 = vpop.f32.mrb[0].mxu0
        %v8687 = vadd.f32 %v8379, %v8686
        %v8688 = vpop.f32.mrb[0].mxu0
        %v8689 = vpop.f32.mrb[0].mxu0
        %v8690 = vadd.f32 %v8379, %v8689
        %v8691 = vpop.f32.mrb[0].mxu0
        %8692 = vmatprep.mubr.bf16.mxu0 0
        %8693 = vmatmul.mubr.bf16.gmra.mrb[0].mxu0 %v8355
        %v8694 = vpop.f32.mrb[0].mxu0
        %v8695 = vadd.f32 %v8379, %v8694
        %v8696 = vpop.f32.mrb[0].mxu0
        %v8697 = vpop.f32.mrb[0].mxu0
        %v8698 = vadd.f32 %v8379, %v8697
        %v8699 = vpop.f32.mrb[0].mxu0
        %8700 = vmatprep.mubr.bf16.mxu0 0
        %8701 = vmatmul.mubr.bf16.gmra.mrb[0].mxu0 %v8356
        %v8702 = vpop.f32.mrb[0].mxu0
        %v8703 = vadd.f32 %v8379, %v8702
        %v8704 = vpop.f32.mrb[0].mxu0
        %v8705 = vpop.f32.mrb[0].mxu0
        %v8706 = vadd.f32 %v8379, %v8705
        %v8707 = vpop.f32.mrb[0].mxu0
        %8708 = vmatprep.mubr.bf16.mxu0 0
        %8709 = vmatmul.mubr.bf16.gmra.mrb[0].mxu0 %v8357
        %v8710 = vpop.f32.mrb[0].mxu0
        %v8711 = vadd.f32 %v8379, %v8710
        %v8712 = vpop.f32.mrb[0].mxu0
        %v8713 = vpop.f32.mrb[0].mxu0
        %v8714 = vadd.f32 %v8379, %v8713
        %v8715 = vpop.f32.mrb[0].mxu0
        %8716 = vdwg.mxu0
        %v8717 = vadd.f32 %v7743, %v8463
        %v8718 = vadd.f32 %v7744, %v8466
        %v8719 = vadd.f32 %v7745, %v8471
        %v8720 = vadd.f32 %v7746, %v8474
        %v8721 = vadd.f32 %v7747, %v8479
        %v8722 = vadd.f32 %v7748, %v8482
        %v8723 = vadd.f32 %v7749, %v8487
        %v8724 = vadd.f32 %v7750, %v8490
        %v8725 = vadd.f32 %v7751, %v8495
        %v8726 = vadd.f32 %v7752, %v8498
        %v8727 = vadd.f32 %v7753, %v8503
        %v8728 = vadd.f32 %v7754, %v8506
        %v8729 = vadd.f32 %v7755, %v8511
        %v8730 = vadd.f32 %v7756, %v8514
        %v8731 = vadd.f32 %v7757, %v8519
        %v8732 = vadd.f32 %v7758, %v8522
        %v8733 = vadd.f32 %v7759, %v8527
        %v8734 = vadd.f32 %v7760, %v8530
        %v8735 = vadd.f32 %v7761, %v8535
        %v8736 = vadd.f32 %v7762, %v8538
        %v8737 = vadd.f32 %v7763, %v8543
        %v8738 = vadd.f32 %v7764, %v8546
        %v8739 = vadd.f32 %v7765, %v8551
        %v8740 = vadd.f32 %v7766, %v8554
        %v8741 = vadd.f32 %v7767, %v8559
        %v8742 = vadd.f32 %v7768, %v8562
        %v8743 = vadd.f32 %v7769, %v8567
        %v8744 = vadd.f32 %v7770, %v8570
        %v8745 = vadd.f32 %v7771, %v8575
        %v8746 = vadd.f32 %v7772, %v8578
        %v8747 = vadd.f32 %v7773, %v8583
        %v8748 = vadd.f32 %v7774, %v8586
        %v8749 = vadd.f32 %v7775, %v8591
        %v8750 = vadd.f32 %v7776, %v8594
        %v8751 = vadd.f32 %v7777, %v8599
        %v8752 = vadd.f32 %v7778, %v8602
        %v8753 = vadd.f32 %v7779, %v8607
        %v8754 = vadd.f32 %v7780, %v8610
        %v8755 = vadd.f32 %v7781, %v8615
        %v8756 = vadd.f32 %v7782, %v8618
        %v8757 = vadd.f32 %v7783, %v8623
        %v8758 = vadd.f32 %v7784, %v8626
        %v8759 = vadd.f32 %v7785, %v8631
        %v8760 = vadd.f32 %v7786, %v8634
        %v8761 = vadd.f32 %v7787, %v8639
        %v8762 = vadd.f32 %v7788, %v8642
        %v8763 = vadd.f32 %v7789, %v8647
        %v8764 = vadd.f32 %v7790, %v8650
        %v8765 = vadd.f32 %v7791, %v8655
        %v8766 = vadd.f32 %v7792, %v8658
        %v8767 = vadd.f32 %v7793, %v8663
        %v8768 = vadd.f32 %v7794, %v8666
        %v8769 = vadd.f32 %v7795, %v8671
        %v8770 = vadd.f32 %v7796, %v8674
        %v8771 = vadd.f32 %v7797, %v8679
        %v8772 = vadd.f32 %v7798, %v8682
        %v8773 = vadd.f32 %v7799, %v8687
        %v8774 = vadd.f32 %v7800, %v8690
        %v8775 = vadd.f32 %v7801, %v8695
        %v8776 = vadd.f32 %v7802, %v8698
        %v8777 = vadd.f32 %v7803, %v8703
        %v8778 = vadd.f32 %v7804, %v8706
        %v8779 = vadd.f32 %v7805, %v8711
        %v8780 = vadd.f32 %v7806, %v8714
        %v8781 = vld [vmem:[%s10] sm:$0x1]
        %v8782 = vmax.f32 %v8717, 0.0
        %v8783 = vmax.f32 %v8718, 0.0
        %v8784 = vmax.f32 %v8719, 0.0
        %v8785 = vmax.f32 %v8720, 0.0
        %v8786 = vmax.f32 %v8721, 0.0
        %v8787 = vmax.f32 %v8722, 0.0
        %v8788 = vmax.f32 %v8723, 0.0
        %v8789 = vmax.f32 %v8724, 0.0
        %v8790 = vmax.f32 %v8725, 0.0
        %v8791 = vmax.f32 %v8726, 0.0
        %v8792 = vmax.f32 %v8727, 0.0
        %v8793 = vmax.f32 %v8728, 0.0
        %v8794 = vmax.f32 %v8729, 0.0
        %v8795 = vmax.f32 %v8730, 0.0
        %v8796 = vmax.f32 %v8731, 0.0
        %v8797 = vmax.f32 %v8732, 0.0
        %v8798 = vmax.f32 %v8733, 0.0
        %v8799 = vmax.f32 %v8734, 0.0
        %v8800 = vmax.f32 %v8735, 0.0
        %v8801 = vmax.f32 %v8736, 0.0
        %v8802 = vmax.f32 %v8737, 0.0
        %v8803 = vmax.f32 %v8738, 0.0
        %v8804 = vmax.f32 %v8739, 0.0
        %v8805 = vmax.f32 %v8740, 0.0
        %v8806 = vmax.f32 %v8741, 0.0
        %v8807 = vmax.f32 %v8742, 0.0
        %v8808 = vmax.f32 %v8743, 0.0
        %v8809 = vmax.f32 %v8744, 0.0
        %v8810 = vmax.f32 %v8745, 0.0
        %v8811 = vmax.f32 %v8746, 0.0
        %v8812 = vmax.f32 %v8747, 0.0
        %v8813 = vmax.f32 %v8748, 0.0
        %v8814 = vmax.f32 %v8749, 0.0
        %v8815 = vmax.f32 %v8750, 0.0
        %v8816 = vmax.f32 %v8751, 0.0
        %v8817 = vmax.f32 %v8752, 0.0
        %v8818 = vmax.f32 %v8753, 0.0
        %v8819 = vmax.f32 %v8754, 0.0
        %v8820 = vmax.f32 %v8755, 0.0
        %v8821 = vmax.f32 %v8756, 0.0
        %v8822 = vmax.f32 %v8757, 0.0
        %v8823 = vmax.f32 %v8758, 0.0
        %v8824 = vmax.f32 %v8759, 0.0
        %v8825 = vmax.f32 %v8760, 0.0
        %v8826 = vmax.f32 %v8761, 0.0
        %v8827 = vmax.f32 %v8762, 0.0
        %v8828 = vmax.f32 %v8763, 0.0
        %v8829 = vmax.f32 %v8764, 0.0
        %v8830 = vmax.f32 %v8765, 0.0
        %v8831 = vmax.f32 %v8766, 0.0
        %v8832 = vmax.f32 %v8767, 0.0
        %v8833 = vmax.f32 %v8768, 0.0
        %v8834 = vmax.f32 %v8769, 0.0
        %v8835 = vmax.f32 %v8770, 0.0
        %v8836 = vmax.f32 %v8771, 0.0
        %v8837 = vmax.f32 %v8772, 0.0
        %v8838 = vmax.f32 %v8773, 0.0
        %v8839 = vmax.f32 %v8774, 0.0
        %v8840 = vmax.f32 %v8775, 0.0
        %v8841 = vmax.f32 %v8776, 0.0
        %v8842 = vmax.f32 %v8777, 0.0
        %v8843 = vmax.f32 %v8778, 0.0
        %v8844 = vmax.f32 %v8779, 0.0
        %v8845 = vmax.f32 %v8780, 0.0
        %v8846 = vld [vmem:[#allocation2] sm:$0x1]
        %8848 = vset.pattern.permute.xlu0 0
        %8849 = vperm.xlu0 %8848, %v8846
        %v8850 = vpop.permute.xlu0 %8849
        %v8852 = vlaneseq
        %v8853 = vshrl.u32 %v8852, 7
        %v8854 = vsub.s32 0, %v8853
        %v8855 = vrot.slane %v8850, %v8854
        %8856 = vmatprep.subr.mxu0 0.0
        %8857 = vmatpush1.xpose.msra.mxu0 %v8782
        %8858 = vmatprep.subr.mxu0 0.0
        %8859 = vmatpush1.xpose.msra.mxu0 %v8783
        %8860 = vmatprep.subr.mxu0 0.0
        %8861 = vmatpush1.xpose.msra.mxu0 %v8784
        %8862 = vmatprep.subr.mxu0 0.0
        %8863 = vmatpush1.xpose.msra.mxu0 %v8785
        %8864 = vmatprep.subr.mxu0 0.0
        %8865 = vmatpush1.xpose.msra.mxu0 %v8786
        %8866 = vmatprep.subr.mxu0 0.0
        %8867 = vmatpush1.xpose.msra.mxu0 %v8787
        %8868 = vmatprep.subr.mxu0 0.0
        %8869 = vmatpush1.xpose.msra.mxu0 %v8788
        %8870 = vmatprep.subr.mxu0 0.0
        %8871 = vmatpush1.xpose.msra.mxu0 %v8789
        %8872 = vmatprep.subr.mxu0 0.0
        %8873 = vmatpush1.xpose.msra.mxu0 %v8790
        %8874 = vmatprep.subr.mxu0 0.0
        %8875 = vmatpush1.xpose.msra.mxu0 %v8791
        %8876 = vmatprep.subr.mxu0 0.0
        %8877 = vmatpush1.xpose.msra.mxu0 %v8792
        %8878 = vmatprep.subr.mxu0 0.0
        %8879 = vmatpush1.xpose.msra.mxu0 %v8793
        %8880 = vmatprep.subr.mxu0 0.0
        %8881 = vmatpush1.xpose.msra.mxu0 %v8794
        %8882 = vmatprep.subr.mxu0 0.0
        %8883 = vmatpush1.xpose.msra.mxu0 %v8795
        %8884 = vmatprep.subr.mxu0 0.0
        %8885 = vmatpush1.xpose.msra.mxu0 %v8796
        %8886 = vmatprep.subr.mxu0 0.0
        %8887 = vmatpush1.xpose.msra.mxu0 %v8797
        %8888 = vmatprep.subr.mxu0 0.0
        %8889 = vmatpush1.xpose.msra.mxu0 %v8798
        %8890 = vmatprep.subr.mxu0 0.0
        %8891 = vmatpush1.xpose.msra.mxu0 %v8799
        %8892 = vmatprep.subr.mxu0 0.0
        %8893 = vmatpush1.xpose.msra.mxu0 %v8800
        %8894 = vmatprep.subr.mxu0 0.0
        %8895 = vmatpush1.xpose.msra.mxu0 %v8801
        %8896 = vmatprep.subr.mxu0 0.0
        %8897 = vmatpush1.xpose.msra.mxu0 %v8802
        %8898 = vmatprep.subr.mxu0 0.0
        %8899 = vmatpush1.xpose.msra.mxu0 %v8803
        %8900 = vmatprep.subr.mxu0 0.0
        %8901 = vmatpush1.xpose.msra.mxu0 %v8804
        %8902 = vmatprep.subr.mxu0 0.0
        %8903 = vmatpush1.xpose.msra.mxu0 %v8805
        %8904 = vmatprep.subr.mxu0 0.0
        %8905 = vmatpush1.xpose.msra.mxu0 %v8806
        %8906 = vmatprep.subr.mxu0 0.0
        %8907 = vmatpush1.xpose.msra.mxu0 %v8807
        %8908 = vmatprep.subr.mxu0 0.0
        %8909 = vmatpush1.xpose.msra.mxu0 %v8808
        %8910 = vmatprep.subr.mxu0 0.0
        %8911 = vmatpush1.xpose.msra.mxu0 %v8809
        %8912 = vmatprep.subr.mxu0 0.0
        %8913 = vmatpush1.xpose.msra.mxu0 %v8810
        %8914 = vmatprep.subr.mxu0 0.0
        %8915 = vmatpush1.xpose.msra.mxu0 %v8811
        %8916 = vmatprep.subr.mxu0 0.0
        %8917 = vmatpush1.xpose.msra.mxu0 %v8812
        %8918 = vmatprep.subr.mxu0 0.0
        %8919 = vmatpush1.xpose.msra.mxu0 %v8813
        %8920 = vmatprep.mubr.f32.mxu0 0.0
        %8921 = vmatmul.mubr.f32.gmra.mrb[0].mxu0 %v8781
        %v8922 = vpop.f32.mrb[0].mxu0
        %v8923 = vadd.f32 %v8855, %v8922
        %v8924 = vpop.f32.mrb[0].mxu0
        %v8925 = vadd.f32 %v8855, %v8924
        %8926 = vdwg.mxu0
        %8927 = vmatprep.subr.mxu0 0.0
        %8928 = vmatpush1.xpose.msra.mxu0 %v8814
        %8929 = vmatprep.subr.mxu0 0.0
        %8930 = vmatpush1.xpose.msra.mxu0 %v8815
        %8931 = vmatprep.subr.mxu0 0.0
        %8932 = vmatpush1.xpose.msra.mxu0 %v8816
        %8933 = vmatprep.subr.mxu0 0.0
        %8934 = vmatpush1.xpose.msra.mxu0 %v8817
        %8935 = vmatprep.subr.mxu0 0.0
        %8936 = vmatpush1.xpose.msra.mxu0 %v8818
        %8937 = vmatprep.subr.mxu0 0.0
        %8938 = vmatpush1.xpose.msra.mxu0 %v8819
        %8939 = vmatprep.subr.mxu0 0.0
        %8940 = vmatpush1.xpose.msra.mxu0 %v8820
        %8941 = vmatprep.subr.mxu0 0.0
        %8942 = vmatpush1.xpose.msra.mxu0 %v8821
        %8943 = vmatprep.subr.mxu0 0.0
        %8944 = vmatpush1.xpose.msra.mxu0 %v8822
        %8945 = vmatprep.subr.mxu0 0.0
        %8946 = vmatpush1.xpose.msra.mxu0 %v8823
        %8947 = vmatprep.subr.mxu0 0.0
        %8948 = vmatpush1.xpose.msra.mxu0 %v8824
        %8949 = vmatprep.subr.mxu0 0.0
        %8950 = vmatpush1.xpose.msra.mxu0 %v8825
        %8951 = vmatprep.subr.mxu0 0.0
        %8952 = vmatpush1.xpose.msra.mxu0 %v8826
        %8953 = vmatprep.subr.mxu0 0.0
        %8954 = vmatpush1.xpose.msra.mxu0 %v8827
        %8955 = vmatprep.subr.mxu0 0.0
        %8956 = vmatpush1.xpose.msra.mxu0 %v8828
        %8957 = vmatprep.subr.mxu0 0.0
        %8958 = vmatpush1.xpose.msra.mxu0 %v8829
        %8959 = vmatprep.subr.mxu0 0.0
        %8960 = vmatpush1.xpose.msra.mxu0 %v8830
        %8961 = vmatprep.subr.mxu0 0.0
        %8962 = vmatpush1.xpose.msra.mxu0 %v8831
        %8963 = vmatprep.subr.mxu0 0.0
        %8964 = vmatpush1.xpose.msra.mxu0 %v8832
        %8965 = vmatprep.subr.mxu0 0.0
        %8966 = vmatpush1.xpose.msra.mxu0 %v8833
        %8967 = vmatprep.subr.mxu0 0.0
        %8968 = vmatpush1.xpose.msra.mxu0 %v8834
        %8969 = vmatprep.subr.mxu0 0.0
        %8970 = vmatpush1.xpose.msra.mxu0 %v8835
        %8971 = vmatprep.subr.mxu0 0.0
        %8972 = vmatpush1.xpose.msra.mxu0 %v8836
        %8973 = vmatprep.subr.mxu0 0.0
        %8974 = vmatpush1.xpose.msra.mxu0 %v8837
        %8975 = vmatprep.subr.mxu0 0.0
        %8976 = vmatpush1.xpose.msra.mxu0 %v8838
        %8977 = vmatprep.subr.mxu0 0.0
        %8978 = vmatpush1.xpose.msra.mxu0 %v8839
        %8979 = vmatprep.subr.mxu0 0.0
        %8980 = vmatpush1.xpose.msra.mxu0 %v8840
        %8981 = vmatprep.subr.mxu0 0.0
        %8982 = vmatpush1.xpose.msra.mxu0 %v8841
        %8983 = vmatprep.subr.mxu0 0.0
        %8984 = vmatpush1.xpose.msra.mxu0 %v8842
        %8985 = vmatprep.subr.mxu0 0.0
        %8986 = vmatpush1.xpose.msra.mxu0 %v8843
        %8987 = vmatprep.subr.mxu0 0.0
        %8988 = vmatpush1.xpose.msra.mxu0 %v8844
        %8989 = vmatprep.subr.mxu0 0.0
        %8990 = vmatpush1.xpose.msra.mxu0 %v8845
        %8991 = vmatprep.mubr.f32.mxu0 0.0
        %8992 = vmatmul.mubr.f32.gmra.mrb[0].mxu0 %v8781
        %v8993 = vpop.f32.mrb[0].mxu0
        %v8994 = vadd.f32 %v8855, %v8993
        %v8995 = vpop.f32.mrb[0].mxu0
        %v8996 = vadd.f32 %v8855, %v8995
        %8997 = vdwg.mxu0
        %v9002 = vcombine.low %v8923, %v8925
        %v9003 = vcombine.low %v8994, %v8996
        %v9005 = vunpack.c.l.s4 1966171168
        %v9006 = vunpack.c.0.s8 %v9005
        %v9007 = vlaneseq
        %v9008 = vshrl.u32 %v9007, 7
        %v9009 = vsub.s32 %v9006, %v9008
        %v9010 = vrot.slane %v9002, %v9009
        %v9012 = vunpack.c.l.s4 1966171168
        %v9013 = vunpack.c.0.s8 %v9012
        %v9014 = vlaneseq
        %v9015 = vshrl.u32 %v9014, 7
        %v9016 = vsub.s32 %v9013, %v9015
        %v9017 = vrot.slane %v9003, %v9016
        %v9018 = vcombine.low %v9010, %v9017
        %v9020 = vunpack.c.l.s4 1966171168
        %v9021 = vunpack.c.0.s8 %v9020
        %v9022 = vlaneseq
        %v9023 = vshrl.u32 %v9022, 7
        %v9024 = vsub.s32 %v9021, %v9023
        %v9025 = vrot.slane %v9018, %v9024
        %v9027 = vlaneseq
        %vm9028 = vcmp.ge.s32.totalorder %v9027, 0
        %vm9029 = vcmp.lt.s32.totalorder %v9027, 512
        %vm9030 = vmand %vm9028, %vm9029
        %9031 = vst.msk [vmem:[%s425] sm:$0xf] %vm9030, %v9025
        %s9032 = sand.u32 %s298, 1
        %s9033 = scalar_lea.sflag [#allocation4], %s9032
        %s9034 = sand.u32 %s298, 1
        %s9035 = smul.addr %s9034, 4
        %s9036 = scalar_lea.vmem [#allocation3], %s9035
        // Predicated region
        $region69: #{tpu_custom_call.1} parent=67 // pred_check
          %p9037 = pneg %p308
        $region70: #{tpu_custom_call.1} parent=67 // pred_check_branch
          %9039 = sbr.rel (%p9037) target = $region72
        $region71: #{tpu_custom_call.1} parent=67 // pred_region
          %s9040 = smul.u32 4, %s28
          %s9042 = ssub.s32 64, 64
          %9043 = vsyncadd %s9033, %s9042
          %s9044 = smul.addr %s9040, 16
          %s9045 = scalar_lea.hbm %s12, %s9044
          %s9047 = sshll.u32 %s9036, 4
          %s9048 = int_to_ptr.vmem [resolvable:$true] %s9047
          %9050 = dma.vmem_to_hbm [thread:$0]  %s9048, 64, %s9045, %s9033
        $region72: #{tpu_custom_call.1} parent=67 // pred_fallthru
          _
      $region68: #{tpu_custom_call.1} parent=5 // pred_fallthru
        _
      %p9051 = scmp.le.s32.totalorder 2, %s23
      // Predicated region
      $region73: #{tpu_custom_call.1} parent=5 // pred_check
        %p9052 = pneg %p9051
      $region74: #{tpu_custom_call.1} parent=5 // pred_check_branch
        %9054 = sbr.rel (%p9052) target = $region76
      $region75: #{tpu_custom_call.1} parent=5 // pred_region
        %s9055 = ssub.s32 %s23, 2
        // Predicated region
        $region77: #{tpu_custom_call.1} parent=75 // pred_check
          %p9056 = pneg %p314
        $region78: #{tpu_custom_call.1} parent=75 // pred_check_branch
          %9058 = sbr.rel (%p9056) target = $region80
        $region79: #{tpu_custom_call.1} parent=75 // pred_region
          %s9059 = sand.u32 %s299, 1
          %s9060 = scalar_lea.sflag [#allocation4], %s9059
          %s9061 = sand.u32 %s299, 1
          %s9062 = smul.addr %s9061, 4
          %s9063 = scalar_lea.vmem [#allocation3], %s9062
          %9064 = dma.done %s9060, 64
        $region80: #{tpu_custom_call.1} parent=75 // pred_fallthru
          _
      $region76: #{tpu_custom_call.1} parent=5 // pred_fallthru
        _
    $region6: #{tpu_custom_call.1} parent=1 // loop_footer
      %s27 = sadd.s32 1, %s23
    $region7: #{tpu_custom_call.1} parent=1 // loop_footer_branch
      %22 = sbr.rel target = $region3
    $region8: #{tpu_custom_call.1} parent=1 // loop_exit
      _
    %9065 = vsyncpa [#allocation4], 1
    %s9066 = scalar_lea.sflag [#allocation4], 1
    %9067 = vsyncpa %s9066, 1

</llo_original>
